<compile_context>
chip_gen: v6e
topology: v6e:2x2x1
jax: 0.10.0
libtpu: 0.0.40
codegen_flags: <defaults>
</compile_context>

<pallas_src>
import numpy as np
import jax
import jax.numpy as jnp
from jax import lax
from jax.experimental import pallas as pl
from jax.experimental.pallas import tpu as pltpu


# ----------------------------- weight preprocessing ---------------------------
def _spatial_toeplitz(w1, H, W, stride=2, pad=3):
    """Fold a (Cout, Cin, 1, KH, KW) conv (stride 2, pad 3) into (H*W*Cin, Ho*Wo*Cout).

    Feature layout is channels-last: f = (h*W + w)*C + c.  Zero padding included.
    """
    Cout, Cin, _, KH, KW = w1.shape
    Ho = (H + 2 * pad - KH) // stride + 1
    Wo = (W + 2 * pad - KW) // stride + 1

    Sh = np.zeros((H, Ho, KH), np.float32)
    for ho in range(Ho):
        for ky in range(KH):
            h = stride * ho + ky - pad
            if 0 <= h < H:
                Sh[h, ho, ky] = 1.0
    Sw = np.zeros((W, Wo, KW), np.float32)
    for wo in range(Wo):
        for kx in range(KW):
            w = stride * wo + kx - pad
            if 0 <= w < W:
                Sw[w, wo, kx] = 1.0

    w1s = w1[:, :, 0, :, :].astype(jnp.float32)              # (Cout, Cin, KH, KW)
    big = jnp.einsum('hoy,wpx,dcyx->hwcopd', Sh, Sw, w1s)    # (H,W,Cin,Ho,Wo,Cout)
    return big.reshape(H * W * Cin, Ho * Wo * Cout)


def _temporal_wide(w2, H, W):
    """Fold a (Cout, Cin, 3, 1, 1) temporal conv into (F, 3F), F = H*W*C.

    Columns are three consecutive kt-blocks of width F; each block is diagonal
    over the H*W spatial positions and carries w2[:, :, kt].
    """
    Cout, Cin, KT = w2.shape[0], w2.shape[1], w2.shape[2]
    w2t = jnp.transpose(w2[:, :, :, 0, 0], (2, 1, 0)).astype(jnp.float32)  # (KT,Cin,Cout)
    eye_hw = np.eye(H * W, dtype=np.float32)
    big = jnp.einsum('se,tcd->scted', eye_hw, w2t)           # (HW,Cin,KT,HW,Cout)
    return big.reshape(H * W * Cin, KT * H * W * Cout)


def _fold_group_square(m, group):
    """block_diag(m, ..., m) (`group` copies) == kron(I_group, m)."""
    return jnp.kron(jnp.eye(group, dtype=m.dtype), m)


def _fold_group_taps(m_wide, group, F):
    """Fold each of the KT (F, F) tap column-blocks block-diagonally; keep taps in
    consecutive column blocks of width group*F."""
    KT = m_wide.shape[1] // F
    taps = [_fold_group_square(m_wide[:, k * F:(k + 1) * F], group) for k in range(KT)]
    return jnp.concatenate(taps, axis=1)                     # (group*F, KT*group*F)


# ----------------------------------- kernel -----------------------------------
def _resblock3_kernel(x_ref, w1a_ref, w2a_ref, w1b_ref, w2b_ref, w1c_ref,
                      w2c_ref, o_ref):
    NB, T, F2 = x_ref.shape
    M = NB * T
    x = x_ref[...].reshape(M, F2)                 # leading-dim merge (layout-free, T=8)

    def block(h, w1_ref, w2_ref, relu_out):
        # conv1 (1,4,4)/s2/p3 == one Toeplitz matmul (K = F2 = 128), then ReLU.
        h1 = jnp.dot(h, w1_ref[...], preferred_element_type=jnp.float32)
        h1 = jnp.maximum(h1, 0.0)
        # conv2 (3,1,1)/p1: ONE wide matmul produces all three kt taps ...
        g = jnp.dot(h1, w2_ref[...], preferred_element_type=jnp.float32)   # (M, 3*F2)
        # ... taps are combined with +-1 temporal shifts (zero padded at the
        # sequence edges) via static sublane slice + zero-row concat — no MXU.
        g3 = g.reshape(NB, T, 3 * F2)
        zrow = jnp.zeros((NB, 1, F2), jnp.float32)
        prev = jnp.concatenate([zrow, g3[:, :T - 1, 0:F2]], axis=1)          # tap0 · h[t-1]
        nxt = jnp.concatenate([g3[:, 1:, 2 * F2:3 * F2], zrow], axis=1)      # tap2 · h[t+1]
        z = prev + g3[:, :, F2:2 * F2] + nxt
        z = z.reshape(M, F2)
        return jnp.maximum(z, 0.0) if relu_out else z

    y = block(x, w1a_ref, w2a_ref, True)
    y = block(y, w1b_ref, w2b_ref, True)
    y = block(y, w1c_ref, w2c_ref, False)
    o_ref[...] = (y + x).reshape(NB, T, F2)       # residual add, dense 128-lane store


# ---------------------------------- wrapper ------------------------------------
def resblock3_pallas(x_ncthw, params, *, nb_pairs=16, lane_group=2):
    """params: list of 3 tuples (w1, w2) in PyTorch layout
    w1: (C, C, 1, 4, 4), w2: (C, C, 3, 1, 1).  Input x: (N, C, T, H, W).

    lane_group: batch elements folded into the lane axis (2 -> 128 lanes at C=4;
    use 4 to target the 256-wide v6e/v7x MXU).  nb_pairs: folded pairs per grid
    step (16 -> 128 matmul rows at T=8)."""
    N, C, T, H, W = x_ncthw.shape
    if not (H == 4 and W == 4):
        # (k=4, s=2, p=3) only preserves the spatial size at H=W=4; anything else
        # makes the residual add shape-invalid (exactly as in the PyTorch module).
        raise ValueError("ResBlock3 requires H == W == 4 (spatial fixed point).")
    F = H * W * C
    G = lane_group
    F2 = G * F

    # NCTHW -> (N, T, H*W*C) channels-last, lane-dense.
    xf = jnp.transpose(x_ncthw, (0, 2, 3, 4, 1)).astype(jnp.float32).reshape(N, T, F)

    # Pad batch to a multiple of G and fold G batch elements into the lane axis.
    # (Zero-padded batches pass through untouched: bias-free convs of 0 are 0.)
    P = pl.cdiv(N, G)
    N_pad = P * G
    if N_pad != N:
        xf = jnp.concatenate([xf, jnp.zeros((N_pad - N, T, F), xf.dtype)], axis=0)
    xf2 = xf.reshape(P, G, T, F).transpose(0, 2, 1, 3).reshape(P, T, F2)

    # Sub-batch fold: NB folded groups per grid step; pad P to a multiple of NB.
    NB = max(1, min(nb_pairs, P))
    steps = pl.cdiv(P, NB)
    P_pad = steps * NB
    if P_pad != P:
        xf2 = jnp.concatenate([xf2, jnp.zeros((P_pad - P, T, F2), xf2.dtype)], axis=0)

    # Precompute folded weight matrices (grid-invariant; DMA'd into VMEM once).
    mats = []
    for (w1, w2) in params:
        m1 = _spatial_toeplitz(jnp.asarray(w1), H, W)          # (F, F)
        m2 = _temporal_wide(jnp.asarray(w2), H, W)             # (F, 3F)
        mats.append(_fold_group_square(m1, G))                 # (F2, F2)
        mats.append(_fold_group_taps(m2, G, F))                # (F2, 3*F2)

    act_in_spec = pl.BlockSpec((NB, T, F2), lambda i: (i, 0, 0))
    act_out_spec = pl.BlockSpec((NB, T, F2), lambda i: (i, 0, 0))
    w_specs = [pl.BlockSpec(m.shape, lambda i: (0, 0)) for m in mats]

    yf2 = pl.pallas_call(
        _resblock3_kernel,
        out_shape=jax.ShapeDtypeStruct((P_pad, T, F2), jnp.float32),
        grid=(steps,),
        in_specs=[act_in_spec] + w_specs,
        out_specs=act_out_spec,
        compiler_params=pltpu.CompilerParams(
            dimension_semantics=("parallel",)),
    )(xf2, *mats)

    # Unfold lanes back to batch, drop padding, restore NCTHW.
    y = yf2[:P].reshape(P, T, G, F).transpose(0, 2, 1, 3).reshape(N_pad, T, F)[:N]
    y = y.reshape(N, T, H, W, C)
    return jnp.transpose(y, (0, 4, 1, 2, 3))


# ----------------------------- pure-JAX reference ------------------------------
def _conv3d(x, w, strides, padding):
    return lax.conv_general_dilated(
        x, w, window_strides=strides, padding=padding,
        dimension_numbers=('NCDHW', 'OIDHW', 'NCDHW'),
        precision=lax.Precision.HIGHEST)


def resblock3_ref(x, params):
    y = x
    for i, (w1, w2) in enumerate(params):
        h = jax.nn.relu(_conv3d(y, w1, (1, 2, 2), [(0, 0), (3, 3), (3, 3)]))
        y = _conv3d(h, w2, (1, 1, 1), [(1, 1), (0, 0), (0, 0)])
        if i < 2:
            y = jax.nn.relu(y)
    return y + x


if __name__ == "__main__":
    # H=W=4 is the fixed point of (k=4, s=2, p=3), required by the residual add.
    N, C, T, H, W = 2, 4, 8, 4, 4
    key = jax.random.PRNGKey(0)
    kx, k1a, k1b, k2a, k2b, k3a, k3b = jax.random.split(key, 7)

    x = jax.random.normal(kx, (N, C, T, H, W), jnp.float32)

    def w_spatial(k):
        return 0.1 * jax.random.normal(k, (C, C, 1, 4, 4), jnp.float32)

    def w_temporal(k):
        return 0.1 * jax.random.normal(k, (C, C, 3, 1, 1), jnp.float32)

    params = [(w_spatial(k1a), w_temporal(k1b)),
              (w_spatial(k2a), w_temporal(k2b)),
              (w_spatial(k3a), w_temporal(k3b))]

    out = jax.block_until_ready(jax.jit(resblock3_pallas)(x, params))
    ref = resblock3_ref(x, params)

    assert out.shape == ref.shape == (N, C, T, H, W)
    max_err = float(jnp.max(jnp.abs(out - ref)))
    # All math stays f32 and the temporal shift is now exact (slice/concat rather
    # than MXU shift matmuls), so the tight tolerance is kept.
    assert bool(jnp.allclose(out, ref, rtol=5e-3, atol=5e-3)), max_err

    print("KERNEL_OK")
</pallas_src>

<mosaic_0001>
module attributes {stable_mosaic.version = 11 : i64} {
  func.func @_resblock3_kernel(%arg0: i32, %arg1: memref<1x8x128xf32, #tpu.memory_space<vmem>>, %arg2: memref<128x128xf32, #tpu.memory_space<vmem>>, %arg3: memref<128x384xf32, #tpu.memory_space<vmem>>, %arg4: memref<128x128xf32, #tpu.memory_space<vmem>>, %arg5: memref<128x384xf32, #tpu.memory_space<vmem>>, %arg6: memref<128x128xf32, #tpu.memory_space<vmem>>, %arg7: memref<128x384xf32, #tpu.memory_space<vmem>>, %arg8: memref<1x8x128xf32, #tpu.memory_space<vmem>>) attributes {dimension_semantics = [#tpu.dimension_semantics<parallel>], iteration_bounds = array<i64: 1>, scalar_prefetch = 0 : i64, scratch_operands = 0 : i64, tpu.core_type = #tpu.core_type<tc>, window_params = [{transform_indices = @transform_0, window_bounds = array<i64: 1, 8, 128>}, {pipeline_mode = #tpu.pipeline_mode<synchronous>, transform_indices = @transform_1, window_bounds = array<i64: 128, 128>}, {pipeline_mode = #tpu.pipeline_mode<synchronous>, transform_indices = @transform_2, window_bounds = array<i64: 128, 384>}, {pipeline_mode = #tpu.pipeline_mode<synchronous>, transform_indices = @transform_3, window_bounds = array<i64: 128, 128>}, {pipeline_mode = #tpu.pipeline_mode<synchronous>, transform_indices = @transform_4, window_bounds = array<i64: 128, 384>}, {pipeline_mode = #tpu.pipeline_mode<synchronous>, transform_indices = @transform_5, window_bounds = array<i64: 128, 128>}, {pipeline_mode = #tpu.pipeline_mode<synchronous>, transform_indices = @transform_6, window_bounds = array<i64: 128, 384>}, {transform_indices = @transform_7, window_bounds = array<i64: 1, 8, 128>}]} {
    %c0 = arith.constant 0 : index
    %c0_0 = arith.constant 0 : index
    %c0_1 = arith.constant 0 : index
    %0 = vector.load %arg1[%c0, %c0_0, %c0_1] : memref<1x8x128xf32, #tpu.memory_space<vmem>>, vector<1x8x128xf32>
    %1 = vector.shape_cast %0 : vector<1x8x128xf32> to vector<8x128xf32>
    %c0_2 = arith.constant 0 : index
    %c0_3 = arith.constant 0 : index
    %2 = vector.load %arg2[%c0_2, %c0_3] : memref<128x128xf32, #tpu.memory_space<vmem>>, vector<128x128xf32>
    %cst = arith.constant dense<0.000000e+00> : vector<8x128xf32>
    %3 = tpu.matmul %1, %2, %cst {dimension_numbers = #tpu.dot_dimension_numbers<[1], [0], [0], [1], [0, 0, 1, 1], [], []>} : vector<8x128xf32>, vector<128x128xf32>, vector<8x128xf32> -> vector<8x128xf32>
    %cst_4 = arith.constant 0.000000e+00 : f32
    %4 = vector.broadcast %cst_4 : f32 to vector<8x128xf32>
    %5 = arith.maximumf %3, %4 : vector<8x128xf32>
    %c0_5 = arith.constant 0 : index
    %c0_6 = arith.constant 0 : index
    %6 = vector.load %arg3[%c0_5, %c0_6] : memref<128x384xf32, #tpu.memory_space<vmem>>, vector<128x384xf32>
    %cst_7 = arith.constant dense<0.000000e+00> : vector<8x384xf32>
    %7 = tpu.matmul %5, %6, %cst_7 {dimension_numbers = #tpu.dot_dimension_numbers<[1], [0], [0], [1], [0, 0, 1, 1], [], []>} : vector<8x128xf32>, vector<128x384xf32>, vector<8x384xf32> -> vector<8x384xf32>
    %8 = vector.shape_cast %7 : vector<8x384xf32> to vector<1x8x384xf32>
    %cst_8 = arith.constant 0.000000e+00 : f32
    %9 = vector.broadcast %cst_8 : f32 to vector<1x1x128xf32>
    %10 = vector.extract_strided_slice %8 {offsets = [0, 0, 0], sizes = [1, 7, 128], strides = [1, 1, 1]} : vector<1x8x384xf32> to vector<1x7x128xf32>
    %11 = tpu.concatenate %9, %10 in 1 : vector<1x1x128xf32>, vector<1x7x128xf32> -> vector<1x8x128xf32>
    %12 = vector.extract_strided_slice %8 {offsets = [0, 1, 256], sizes = [1, 7, 128], strides = [1, 1, 1]} : vector<1x8x384xf32> to vector<1x7x128xf32>
    %13 = tpu.concatenate %12, %9 in 1 : vector<1x7x128xf32>, vector<1x1x128xf32> -> vector<1x8x128xf32>
    %14 = vector.extract_strided_slice %8 {offsets = [0, 0, 128], sizes = [1, 8, 128], strides = [1, 1, 1]} : vector<1x8x384xf32> to vector<1x8x128xf32>
    %15 = arith.addf %11, %14 : vector<1x8x128xf32>
    %16 = arith.addf %15, %13 : vector<1x8x128xf32>
    %17 = vector.shape_cast %16 : vector<1x8x128xf32> to vector<8x128xf32>
    %cst_9 = arith.constant 0.000000e+00 : f32
    %18 = vector.broadcast %cst_9 : f32 to vector<8x128xf32>
    %19 = arith.maximumf %17, %18 : vector<8x128xf32>
    %c0_10 = arith.constant 0 : index
    %c0_11 = arith.constant 0 : index
    %20 = vector.load %arg4[%c0_10, %c0_11] : memref<128x128xf32, #tpu.memory_space<vmem>>, vector<128x128xf32>
    %cst_12 = arith.constant dense<0.000000e+00> : vector<8x128xf32>
    %21 = tpu.matmul %19, %20, %cst_12 {dimension_numbers = #tpu.dot_dimension_numbers<[1], [0], [0], [1], [0, 0, 1, 1], [], []>} : vector<8x128xf32>, vector<128x128xf32>, vector<8x128xf32> -> vector<8x128xf32>
    %cst_13 = arith.constant 0.000000e+00 : f32
    %22 = vector.broadcast %cst_13 : f32 to vector<8x128xf32>
    %23 = arith.maximumf %21, %22 : vector<8x128xf32>
    %c0_14 = arith.constant 0 : index
    %c0_15 = arith.constant 0 : index
    %24 = vector.load %arg5[%c0_14, %c0_15] : memref<128x384xf32, #tpu.memory_space<vmem>>, vector<128x384xf32>
    %cst_16 = arith.constant dense<0.000000e+00> : vector<8x384xf32>
    %25 = tpu.matmul %23, %24, %cst_16 {dimension_numbers = #tpu.dot_dimension_numbers<[1], [0], [0], [1], [0, 0, 1, 1], [], []>} : vector<8x128xf32>, vector<128x384xf32>, vector<8x384xf32> -> vector<8x384xf32>
    %26 = vector.shape_cast %25 : vector<8x384xf32> to vector<1x8x384xf32>
    %cst_17 = arith.constant 0.000000e+00 : f32
    %27 = vector.broadcast %cst_17 : f32 to vector<1x1x128xf32>
    %28 = vector.extract_strided_slice %26 {offsets = [0, 0, 0], sizes = [1, 7, 128], strides = [1, 1, 1]} : vector<1x8x384xf32> to vector<1x7x128xf32>
    %29 = tpu.concatenate %27, %28 in 1 : vector<1x1x128xf32>, vector<1x7x128xf32> -> vector<1x8x128xf32>
    %30 = vector.extract_strided_slice %26 {offsets = [0, 1, 256], sizes = [1, 7, 128], strides = [1, 1, 1]} : vector<1x8x384xf32> to vector<1x7x128xf32>
    %31 = tpu.concatenate %30, %27 in 1 : vector<1x7x128xf32>, vector<1x1x128xf32> -> vector<1x8x128xf32>
    %32 = vector.extract_strided_slice %26 {offsets = [0, 0, 128], sizes = [1, 8, 128], strides = [1, 1, 1]} : vector<1x8x384xf32> to vector<1x8x128xf32>
    %33 = arith.addf %29, %32 : vector<1x8x128xf32>
    %34 = arith.addf %33, %31 : vector<1x8x128xf32>
    %35 = vector.shape_cast %34 : vector<1x8x128xf32> to vector<8x128xf32>
    %cst_18 = arith.constant 0.000000e+00 : f32
    %36 = vector.broadcast %cst_18 : f32 to vector<8x128xf32>
    %37 = arith.maximumf %35, %36 : vector<8x128xf32>
    %c0_19 = arith.constant 0 : index
    %c0_20 = arith.constant 0 : index
    %38 = vector.load %arg6[%c0_19, %c0_20] : memref<128x128xf32, #tpu.memory_space<vmem>>, vector<128x128xf32>
    %cst_21 = arith.constant dense<0.000000e+00> : vector<8x128xf32>
    %39 = tpu.matmul %37, %38, %cst_21 {dimension_numbers = #tpu.dot_dimension_numbers<[1], [0], [0], [1], [0, 0, 1, 1], [], []>} : vector<8x128xf32>, vector<128x128xf32>, vector<8x128xf32> -> vector<8x128xf32>
    %cst_22 = arith.constant 0.000000e+00 : f32
    %40 = vector.broadcast %cst_22 : f32 to vector<8x128xf32>
    %41 = arith.maximumf %39, %40 : vector<8x128xf32>
    %c0_23 = arith.constant 0 : index
    %c0_24 = arith.constant 0 : index
    %42 = vector.load %arg7[%c0_23, %c0_24] : memref<128x384xf32, #tpu.memory_space<vmem>>, vector<128x384xf32>
    %cst_25 = arith.constant dense<0.000000e+00> : vector<8x384xf32>
    %43 = tpu.matmul %41, %42, %cst_25 {dimension_numbers = #tpu.dot_dimension_numbers<[1], [0], [0], [1], [0, 0, 1, 1], [], []>} : vector<8x128xf32>, vector<128x384xf32>, vector<8x384xf32> -> vector<8x384xf32>
    %44 = vector.shape_cast %43 : vector<8x384xf32> to vector<1x8x384xf32>
    %cst_26 = arith.constant 0.000000e+00 : f32
    %45 = vector.broadcast %cst_26 : f32 to vector<1x1x128xf32>
    %46 = vector.extract_strided_slice %44 {offsets = [0, 0, 0], sizes = [1, 7, 128], strides = [1, 1, 1]} : vector<1x8x384xf32> to vector<1x7x128xf32>
    %47 = tpu.concatenate %45, %46 in 1 : vector<1x1x128xf32>, vector<1x7x128xf32> -> vector<1x8x128xf32>
    %48 = vector.extract_strided_slice %44 {offsets = [0, 1, 256], sizes = [1, 7, 128], strides = [1, 1, 1]} : vector<1x8x384xf32> to vector<1x7x128xf32>
    %49 = tpu.concatenate %48, %45 in 1 : vector<1x7x128xf32>, vector<1x1x128xf32> -> vector<1x8x128xf32>
    %50 = vector.extract_strided_slice %44 {offsets = [0, 0, 128], sizes = [1, 8, 128], strides = [1, 1, 1]} : vector<1x8x384xf32> to vector<1x8x128xf32>
    %51 = arith.addf %47, %50 : vector<1x8x128xf32>
    %52 = arith.addf %51, %49 : vector<1x8x128xf32>
    %53 = vector.shape_cast %52 : vector<1x8x128xf32> to vector<8x128xf32>
    %54 = arith.addf %53, %1 : vector<8x128xf32>
    %55 = vector.shape_cast %54 : vector<8x128xf32> to vector<1x8x128xf32>
    %c0_27 = arith.constant 0 : index
    %c0_28 = arith.constant 0 : index
    %c0_29 = arith.constant 0 : index
    %56 = vector.load %arg8[%c0_27, %c0_28, %c0_29] : memref<1x8x128xf32, #tpu.memory_space<vmem>>, vector<1x8x128xf32>
    tpu.vector_store %arg8[%c0_27, %c0_28, %c0_29], %55 {strides = array<i32>} : memref<1x8x128xf32, #tpu.memory_space<vmem>>, vector<1x8x128xf32>,
    return
  }
  func.func @transform_0(%arg0: i32) -> (i32, i32, i32) {
    %c0_i32 = arith.constant 0 : i32
    %c0_i32_0 = arith.constant 0 : i32
    %c0_i32_1 = arith.constant 0 : i32
    return %arg0, %c0_i32, %c0_i32_0 : i32, i32, i32
  }
  func.func @transform_1(%arg0: i32) -> (i32, i32) {
    %c0_i32 = arith.constant 0 : i32
    %c0_i32_0 = arith.constant 0 : i32
    %c0_i32_1 = arith.constant 0 : i32
    return %c0_i32, %c0_i32_0 : i32, i32
  }
  func.func @transform_2(%arg0: i32) -> (i32, i32) {
    %c0_i32 = arith.constant 0 : i32
    %c0_i32_0 = arith.constant 0 : i32
    %c0_i32_1 = arith.constant 0 : i32
    return %c0_i32, %c0_i32_0 : i32, i32
  }
  func.func @transform_3(%arg0: i32) -> (i32, i32) {
    %c0_i32 = arith.constant 0 : i32
    %c0_i32_0 = arith.constant 0 : i32
    %c0_i32_1 = arith.constant 0 : i32
    return %c0_i32, %c0_i32_0 : i32, i32
  }
  func.func @transform_4(%arg0: i32) -> (i32, i32) {
    %c0_i32 = arith.constant 0 : i32
    %c0_i32_0 = arith.constant 0 : i32
    %c0_i32_1 = arith.constant 0 : i32
    return %c0_i32, %c0_i32_0 : i32, i32
  }
  func.func @transform_5(%arg0: i32) -> (i32, i32) {
    %c0_i32 = arith.constant 0 : i32
    %c0_i32_0 = arith.constant 0 : i32
    %c0_i32_1 = arith.constant 0 : i32
    return %c0_i32, %c0_i32_0 : i32, i32
  }
  func.func @transform_6(%arg0: i32) -> (i32, i32) {
    %c0_i32 = arith.constant 0 : i32
    %c0_i32_0 = arith.constant 0 : i32
    %c0_i32_1 = arith.constant 0 : i32
    return %c0_i32, %c0_i32_0 : i32, i32
  }
  func.func @transform_7(%arg0: i32) -> (i32, i32, i32) {
    %c0_i32 = arith.constant 0 : i32
    %c0_i32_0 = arith.constant 0 : i32
    %c0_i32_1 = arith.constant 0 : i32
    return %arg0, %c0_i32, %c0_i32_0 : i32, i32, i32
  }
}

</mosaic_0001>

<llo_original>
// kernel: mul.39
$region0: #{mul.39}
  %s0 = inlined_call_operand.vmem [shape: f32[4,4,4,4,4,4], index: 0, kind: input, shape index: {}]
  %s1 = inlined_call_operand.vmem [shape: f32[64,64], index: 1, kind: output, shape index: {}]
  $region1: #{mul.39} parent=0
    #allocation0 [shape = 'u8[1048576]{0}', space=vmem, size = 0x100000, scoped, tag = 'scoped mem for input reshape']
    %s3 = sshll.u32 1, 4
    %s4 = ssub.s32 %s3, 1
    %s5 = smul.addr 4, 255
    %s6 = scalar_lea.vmem %s0, %s5
    %v7 = vld [vmem:[%s6] sm:%s4]
    %s8 = scalar_lea.vmem [#allocation0], 2040
    %9 = vst [vmem:[%s8] sm:%s4] %v7
    %s10 = smul.addr 4, 254
    %s11 = scalar_lea.vmem %s0, %s10
    %v12 = vld [vmem:[%s11] sm:%s4]
    %s13 = scalar_lea.vmem [#allocation0], 2032
    %14 = vst [vmem:[%s13] sm:%s4] %v12
    %s15 = smul.addr 4, 253
    %s16 = scalar_lea.vmem %s0, %s15
    %v17 = vld [vmem:[%s16] sm:%s4]
    %s18 = scalar_lea.vmem [#allocation0], 2024
    %19 = vst [vmem:[%s18] sm:%s4] %v17
    %s20 = smul.addr 4, 252
    %s21 = scalar_lea.vmem %s0, %s20
    %v22 = vld [vmem:[%s21] sm:%s4]
    %s23 = scalar_lea.vmem [#allocation0], 2016
    %24 = vst [vmem:[%s23] sm:%s4] %v22
    %s25 = smul.addr 4, 251
    %s26 = scalar_lea.vmem %s0, %s25
    %v27 = vld [vmem:[%s26] sm:%s4]
    %s28 = scalar_lea.vmem [#allocation0], 2008
    %29 = vst [vmem:[%s28] sm:%s4] %v27
    %s30 = smul.addr 4, 250
    %s31 = scalar_lea.vmem %s0, %s30
    %v32 = vld [vmem:[%s31] sm:%s4]
    %s33 = scalar_lea.vmem [#allocation0], 2000
    %34 = vst [vmem:[%s33] sm:%s4] %v32
    %s35 = smul.addr 4, 249
    %s36 = scalar_lea.vmem %s0, %s35
    %v37 = vld [vmem:[%s36] sm:%s4]
    %s38 = scalar_lea.vmem [#allocation0], 1992
    %39 = vst [vmem:[%s38] sm:%s4] %v37
    %s40 = smul.addr 4, 248
    %s41 = scalar_lea.vmem %s0, %s40
    %v42 = vld [vmem:[%s41] sm:%s4]
    %s43 = scalar_lea.vmem [#allocation0], 1984
    %44 = vst [vmem:[%s43] sm:%s4] %v42
    %s45 = smul.addr 4, 247
    %s46 = scalar_lea.vmem %s0, %s45
    %v47 = vld [vmem:[%s46] sm:%s4]
    %s48 = scalar_lea.vmem [#allocation0], 1976
    %49 = vst [vmem:[%s48] sm:%s4] %v47
    %s50 = smul.addr 4, 246
    %s51 = scalar_lea.vmem %s0, %s50
    %v52 = vld [vmem:[%s51] sm:%s4]
    %s53 = scalar_lea.vmem [#allocation0], 1968
    %54 = vst [vmem:[%s53] sm:%s4] %v52
    %s55 = smul.addr 4, 245
    %s56 = scalar_lea.vmem %s0, %s55
    %v57 = vld [vmem:[%s56] sm:%s4]
    %s58 = scalar_lea.vmem [#allocation0], 1960
    %59 = vst [vmem:[%s58] sm:%s4] %v57
    %s60 = smul.addr 4, 244
    %s61 = scalar_lea.vmem %s0, %s60
    %v62 = vld [vmem:[%s61] sm:%s4]
    %s63 = scalar_lea.vmem [#allocation0], 1952
    %64 = vst [vmem:[%s63] sm:%s4] %v62
    %s65 = smul.addr 4, 243
    %s66 = scalar_lea.vmem %s0, %s65
    %v67 = vld [vmem:[%s66] sm:%s4]
    %s68 = scalar_lea.vmem [#allocation0], 1944
    %69 = vst [vmem:[%s68] sm:%s4] %v67
    %s70 = smul.addr 4, 242
    %s71 = scalar_lea.vmem %s0, %s70
    %v72 = vld [vmem:[%s71] sm:%s4]
    %s73 = scalar_lea.vmem [#allocation0], 1936
    %74 = vst [vmem:[%s73] sm:%s4] %v72
    %s75 = smul.addr 4, 241
    %s76 = scalar_lea.vmem %s0, %s75
    %v77 = vld [vmem:[%s76] sm:%s4]
    %s78 = scalar_lea.vmem [#allocation0], 1928
    %79 = vst [vmem:[%s78] sm:%s4] %v77
    %s80 = smul.addr 4, 240
    %s81 = scalar_lea.vmem %s0, %s80
    %v82 = vld [vmem:[%s81] sm:%s4]
    %s83 = scalar_lea.vmem [#allocation0], 1920
    %84 = vst [vmem:[%s83] sm:%s4] %v82
    %s85 = smul.addr 4, 239
    %s86 = scalar_lea.vmem %s0, %s85
    %v87 = vld [vmem:[%s86] sm:%s4]
    %s88 = scalar_lea.vmem [#allocation0], 1912
    %89 = vst [vmem:[%s88] sm:%s4] %v87
    %s90 = smul.addr 4, 238
    %s91 = scalar_lea.vmem %s0, %s90
    %v92 = vld [vmem:[%s91] sm:%s4]
    %s93 = scalar_lea.vmem [#allocation0], 1904
    %94 = vst [vmem:[%s93] sm:%s4] %v92
    %s95 = smul.addr 4, 237
    %s96 = scalar_lea.vmem %s0, %s95
    %v97 = vld [vmem:[%s96] sm:%s4]
    %s98 = scalar_lea.vmem [#allocation0], 1896
    %99 = vst [vmem:[%s98] sm:%s4] %v97
    %s100 = smul.addr 4, 236
    %s101 = scalar_lea.vmem %s0, %s100
    %v102 = vld [vmem:[%s101] sm:%s4]
    %s103 = scalar_lea.vmem [#allocation0], 1888
    %104 = vst [vmem:[%s103] sm:%s4] %v102
    %s105 = smul.addr 4, 235
    %s106 = scalar_lea.vmem %s0, %s105
    %v107 = vld [vmem:[%s106] sm:%s4]
    %s108 = scalar_lea.vmem [#allocation0], 1880
    %109 = vst [vmem:[%s108] sm:%s4] %v107
    %s110 = smul.addr 4, 234
    %s111 = scalar_lea.vmem %s0, %s110
    %v112 = vld [vmem:[%s111] sm:%s4]
    %s113 = scalar_lea.vmem [#allocation0], 1872
    %114 = vst [vmem:[%s113] sm:%s4] %v112
    %s115 = smul.addr 4, 233
    %s116 = scalar_lea.vmem %s0, %s115
    %v117 = vld [vmem:[%s116] sm:%s4]
    %s118 = scalar_lea.vmem [#allocation0], 1864
    %119 = vst [vmem:[%s118] sm:%s4] %v117
    %s120 = smul.addr 4, 232
    %s121 = scalar_lea.vmem %s0, %s120
    %v122 = vld [vmem:[%s121] sm:%s4]
    %s123 = scalar_lea.vmem [#allocation0], 1856
    %124 = vst [vmem:[%s123] sm:%s4] %v122
    %s125 = smul.addr 4, 231
    %s126 = scalar_lea.vmem %s0, %s125
    %v127 = vld [vmem:[%s126] sm:%s4]
    %s128 = scalar_lea.vmem [#allocation0], 1848
    %129 = vst [vmem:[%s128] sm:%s4] %v127
    %s130 = smul.addr 4, 230
    %s131 = scalar_lea.vmem %s0, %s130
    %v132 = vld [vmem:[%s131] sm:%s4]
    %s133 = scalar_lea.vmem [#allocation0], 1840
    %134 = vst [vmem:[%s133] sm:%s4] %v132
    %s135 = smul.addr 4, 229
    %s136 = scalar_lea.vmem %s0, %s135
    %v137 = vld [vmem:[%s136] sm:%s4]
    %s138 = scalar_lea.vmem [#allocation0], 1832
    %139 = vst [vmem:[%s138] sm:%s4] %v137
    %s140 = smul.addr 4, 228
    %s141 = scalar_lea.vmem %s0, %s140
    %v142 = vld [vmem:[%s141] sm:%s4]
    %s143 = scalar_lea.vmem [#allocation0], 1824
    %144 = vst [vmem:[%s143] sm:%s4] %v142
    %s145 = smul.addr 4, 227
    %s146 = scalar_lea.vmem %s0, %s145
    %v147 = vld [vmem:[%s146] sm:%s4]
    %s148 = scalar_lea.vmem [#allocation0], 1816
    %149 = vst [vmem:[%s148] sm:%s4] %v147
    %s150 = smul.addr 4, 226
    %s151 = scalar_lea.vmem %s0, %s150
    %v152 = vld [vmem:[%s151] sm:%s4]
    %s153 = scalar_lea.vmem [#allocation0], 1808
    %154 = vst [vmem:[%s153] sm:%s4] %v152
    %s155 = smul.addr 4, 225
    %s156 = scalar_lea.vmem %s0, %s155
    %v157 = vld [vmem:[%s156] sm:%s4]
    %s158 = scalar_lea.vmem [#allocation0], 1800
    %159 = vst [vmem:[%s158] sm:%s4] %v157
    %s160 = smul.addr 4, 224
    %s161 = scalar_lea.vmem %s0, %s160
    %v162 = vld [vmem:[%s161] sm:%s4]
    %s163 = scalar_lea.vmem [#allocation0], 1792
    %164 = vst [vmem:[%s163] sm:%s4] %v162
    %s165 = smul.addr 4, 223
    %s166 = scalar_lea.vmem %s0, %s165
    %v167 = vld [vmem:[%s166] sm:%s4]
    %s168 = scalar_lea.vmem [#allocation0], 1784
    %169 = vst [vmem:[%s168] sm:%s4] %v167
    %s170 = smul.addr 4, 222
    %s171 = scalar_lea.vmem %s0, %s170
    %v172 = vld [vmem:[%s171] sm:%s4]
    %s173 = scalar_lea.vmem [#allocation0], 1776
    %174 = vst [vmem:[%s173] sm:%s4] %v172
    %s175 = smul.addr 4, 221
    %s176 = scalar_lea.vmem %s0, %s175
    %v177 = vld [vmem:[%s176] sm:%s4]
    %s178 = scalar_lea.vmem [#allocation0], 1768
    %179 = vst [vmem:[%s178] sm:%s4] %v177
    %s180 = smul.addr 4, 220
    %s181 = scalar_lea.vmem %s0, %s180
    %v182 = vld [vmem:[%s181] sm:%s4]
    %s183 = scalar_lea.vmem [#allocation0], 1760
    %184 = vst [vmem:[%s183] sm:%s4] %v182
    %s185 = smul.addr 4, 219
    %s186 = scalar_lea.vmem %s0, %s185
    %v187 = vld [vmem:[%s186] sm:%s4]
    %s188 = scalar_lea.vmem [#allocation0], 1752
    %189 = vst [vmem:[%s188] sm:%s4] %v187
    %s190 = smul.addr 4, 218
    %s191 = scalar_lea.vmem %s0, %s190
    %v192 = vld [vmem:[%s191] sm:%s4]
    %s193 = scalar_lea.vmem [#allocation0], 1744
    %194 = vst [vmem:[%s193] sm:%s4] %v192
    %s195 = smul.addr 4, 217
    %s196 = scalar_lea.vmem %s0, %s195
    %v197 = vld [vmem:[%s196] sm:%s4]
    %s198 = scalar_lea.vmem [#allocation0], 1736
    %199 = vst [vmem:[%s198] sm:%s4] %v197
    %s200 = smul.addr 4, 216
    %s201 = scalar_lea.vmem %s0, %s200
    %v202 = vld [vmem:[%s201] sm:%s4]
    %s203 = scalar_lea.vmem [#allocation0], 1728
    %204 = vst [vmem:[%s203] sm:%s4] %v202
    %s205 = smul.addr 4, 215
    %s206 = scalar_lea.vmem %s0, %s205
    %v207 = vld [vmem:[%s206] sm:%s4]
    %s208 = scalar_lea.vmem [#allocation0], 1720
    %209 = vst [vmem:[%s208] sm:%s4] %v207
    %s210 = smul.addr 4, 214
    %s211 = scalar_lea.vmem %s0, %s210
    %v212 = vld [vmem:[%s211] sm:%s4]
    %s213 = scalar_lea.vmem [#allocation0], 1712
    %214 = vst [vmem:[%s213] sm:%s4] %v212
    %s215 = smul.addr 4, 213
    %s216 = scalar_lea.vmem %s0, %s215
    %v217 = vld [vmem:[%s216] sm:%s4]
    %s218 = scalar_lea.vmem [#allocation0], 1704
    %219 = vst [vmem:[%s218] sm:%s4] %v217
    %s220 = smul.addr 4, 212
    %s221 = scalar_lea.vmem %s0, %s220
    %v222 = vld [vmem:[%s221] sm:%s4]
    %s223 = scalar_lea.vmem [#allocation0], 1696
    %224 = vst [vmem:[%s223] sm:%s4] %v222
    %s225 = smul.addr 4, 211
    %s226 = scalar_lea.vmem %s0, %s225
    %v227 = vld [vmem:[%s226] sm:%s4]
    %s228 = scalar_lea.vmem [#allocation0], 1688
    %229 = vst [vmem:[%s228] sm:%s4] %v227
    %s230 = smul.addr 4, 210
    %s231 = scalar_lea.vmem %s0, %s230
    %v232 = vld [vmem:[%s231] sm:%s4]
    %s233 = scalar_lea.vmem [#allocation0], 1680
    %234 = vst [vmem:[%s233] sm:%s4] %v232
    %s235 = smul.addr 4, 209
    %s236 = scalar_lea.vmem %s0, %s235
    %v237 = vld [vmem:[%s236] sm:%s4]
    %s238 = scalar_lea.vmem [#allocation0], 1672
    %239 = vst [vmem:[%s238] sm:%s4] %v237
    %s240 = smul.addr 4, 208
    %s241 = scalar_lea.vmem %s0, %s240
    %v242 = vld [vmem:[%s241] sm:%s4]
    %s243 = scalar_lea.vmem [#allocation0], 1664
    %244 = vst [vmem:[%s243] sm:%s4] %v242
    %s245 = smul.addr 4, 207
    %s246 = scalar_lea.vmem %s0, %s245
    %v247 = vld [vmem:[%s246] sm:%s4]
    %s248 = scalar_lea.vmem [#allocation0], 1656
    %249 = vst [vmem:[%s248] sm:%s4] %v247
    %s250 = smul.addr 4, 206
    %s251 = scalar_lea.vmem %s0, %s250
    %v252 = vld [vmem:[%s251] sm:%s4]
    %s253 = scalar_lea.vmem [#allocation0], 1648
    %254 = vst [vmem:[%s253] sm:%s4] %v252
    %s255 = smul.addr 4, 205
    %s256 = scalar_lea.vmem %s0, %s255
    %v257 = vld [vmem:[%s256] sm:%s4]
    %s258 = scalar_lea.vmem [#allocation0], 1640
    %259 = vst [vmem:[%s258] sm:%s4] %v257
    %s260 = smul.addr 4, 204
    %s261 = scalar_lea.vmem %s0, %s260
    %v262 = vld [vmem:[%s261] sm:%s4]
    %s263 = scalar_lea.vmem [#allocation0], 1632
    %264 = vst [vmem:[%s263] sm:%s4] %v262
    %s265 = smul.addr 4, 203
    %s266 = scalar_lea.vmem %s0, %s265
    %v267 = vld [vmem:[%s266] sm:%s4]
    %s268 = scalar_lea.vmem [#allocation0], 1624
    %269 = vst [vmem:[%s268] sm:%s4] %v267
    %s270 = smul.addr 4, 202
    %s271 = scalar_lea.vmem %s0, %s270
    %v272 = vld [vmem:[%s271] sm:%s4]
    %s273 = scalar_lea.vmem [#allocation0], 1616
    %274 = vst [vmem:[%s273] sm:%s4] %v272
    %s275 = smul.addr 4, 201
    %s276 = scalar_lea.vmem %s0, %s275
    %v277 = vld [vmem:[%s276] sm:%s4]
    %s278 = scalar_lea.vmem [#allocation0], 1608
    %279 = vst [vmem:[%s278] sm:%s4] %v277
    %s280 = smul.addr 4, 200
    %s281 = scalar_lea.vmem %s0, %s280
    %v282 = vld [vmem:[%s281] sm:%s4]
    %s283 = scalar_lea.vmem [#allocation0], 1600
    %284 = vst [vmem:[%s283] sm:%s4] %v282
    %s285 = smul.addr 4, 199
    %s286 = scalar_lea.vmem %s0, %s285
    %v287 = vld [vmem:[%s286] sm:%s4]
    %s288 = scalar_lea.vmem [#allocation0], 1592
    %289 = vst [vmem:[%s288] sm:%s4] %v287
    %s290 = smul.addr 4, 198
    %s291 = scalar_lea.vmem %s0, %s290
    %v292 = vld [vmem:[%s291] sm:%s4]
    %s293 = scalar_lea.vmem [#allocation0], 1584
    %294 = vst [vmem:[%s293] sm:%s4] %v292
    %s295 = smul.addr 4, 197
    %s296 = scalar_lea.vmem %s0, %s295
    %v297 = vld [vmem:[%s296] sm:%s4]
    %s298 = scalar_lea.vmem [#allocation0], 1576
    %299 = vst [vmem:[%s298] sm:%s4] %v297
    %s300 = smul.addr 4, 196
    %s301 = scalar_lea.vmem %s0, %s300
    %v302 = vld [vmem:[%s301] sm:%s4]
    %s303 = scalar_lea.vmem [#allocation0], 1568
    %304 = vst [vmem:[%s303] sm:%s4] %v302
    %s305 = smul.addr 4, 195
    %s306 = scalar_lea.vmem %s0, %s305
    %v307 = vld [vmem:[%s306] sm:%s4]
    %s308 = scalar_lea.vmem [#allocation0], 1560
    %309 = vst [vmem:[%s308] sm:%s4] %v307
    %s310 = smul.addr 4, 194
    %s311 = scalar_lea.vmem %s0, %s310
    %v312 = vld [vmem:[%s311] sm:%s4]
    %s313 = scalar_lea.vmem [#allocation0], 1552
    %314 = vst [vmem:[%s313] sm:%s4] %v312
    %s315 = smul.addr 4, 193
    %s316 = scalar_lea.vmem %s0, %s315
    %v317 = vld [vmem:[%s316] sm:%s4]
    %s318 = scalar_lea.vmem [#allocation0], 1544
    %319 = vst [vmem:[%s318] sm:%s4] %v317
    %s320 = smul.addr 4, 192
    %s321 = scalar_lea.vmem %s0, %s320
    %v322 = vld [vmem:[%s321] sm:%s4]
    %s323 = scalar_lea.vmem [#allocation0], 1536
    %324 = vst [vmem:[%s323] sm:%s4] %v322
    %s325 = smul.addr 4, 191
    %s326 = scalar_lea.vmem %s0, %s325
    %v327 = vld [vmem:[%s326] sm:%s4]
    %s328 = scalar_lea.vmem [#allocation0], 1528
    %329 = vst [vmem:[%s328] sm:%s4] %v327
    %s330 = smul.addr 4, 190
    %s331 = scalar_lea.vmem %s0, %s330
    %v332 = vld [vmem:[%s331] sm:%s4]
    %s333 = scalar_lea.vmem [#allocation0], 1520
    %334 = vst [vmem:[%s333] sm:%s4] %v332
    %s335 = smul.addr 4, 189
    %s336 = scalar_lea.vmem %s0, %s335
    %v337 = vld [vmem:[%s336] sm:%s4]
    %s338 = scalar_lea.vmem [#allocation0], 1512
    %339 = vst [vmem:[%s338] sm:%s4] %v337
    %s340 = smul.addr 4, 188
    %s341 = scalar_lea.vmem %s0, %s340
    %v342 = vld [vmem:[%s341] sm:%s4]
    %s343 = scalar_lea.vmem [#allocation0], 1504
    %344 = vst [vmem:[%s343] sm:%s4] %v342
    %s345 = smul.addr 4, 187
    %s346 = scalar_lea.vmem %s0, %s345
    %v347 = vld [vmem:[%s346] sm:%s4]
    %s348 = scalar_lea.vmem [#allocation0], 1496
    %349 = vst [vmem:[%s348] sm:%s4] %v347
    %s350 = smul.addr 4, 186
    %s351 = scalar_lea.vmem %s0, %s350
    %v352 = vld [vmem:[%s351] sm:%s4]
    %s353 = scalar_lea.vmem [#allocation0], 1488
    %354 = vst [vmem:[%s353] sm:%s4] %v352
    %s355 = smul.addr 4, 185
    %s356 = scalar_lea.vmem %s0, %s355
    %v357 = vld [vmem:[%s356] sm:%s4]
    %s358 = scalar_lea.vmem [#allocation0], 1480
    %359 = vst [vmem:[%s358] sm:%s4] %v357
    %s360 = smul.addr 4, 184
    %s361 = scalar_lea.vmem %s0, %s360
    %v362 = vld [vmem:[%s361] sm:%s4]
    %s363 = scalar_lea.vmem [#allocation0], 1472
    %364 = vst [vmem:[%s363] sm:%s4] %v362
    %s365 = smul.addr 4, 183
    %s366 = scalar_lea.vmem %s0, %s365
    %v367 = vld [vmem:[%s366] sm:%s4]
    %s368 = scalar_lea.vmem [#allocation0], 1464
    %369 = vst [vmem:[%s368] sm:%s4] %v367
    %s370 = smul.addr 4, 182
    %s371 = scalar_lea.vmem %s0, %s370
    %v372 = vld [vmem:[%s371] sm:%s4]
    %s373 = scalar_lea.vmem [#allocation0], 1456
    %374 = vst [vmem:[%s373] sm:%s4] %v372
    %s375 = smul.addr 4, 181
    %s376 = scalar_lea.vmem %s0, %s375
    %v377 = vld [vmem:[%s376] sm:%s4]
    %s378 = scalar_lea.vmem [#allocation0], 1448
    %379 = vst [vmem:[%s378] sm:%s4] %v377
    %s380 = smul.addr 4, 180
    %s381 = scalar_lea.vmem %s0, %s380
    %v382 = vld [vmem:[%s381] sm:%s4]
    %s383 = scalar_lea.vmem [#allocation0], 1440
    %384 = vst [vmem:[%s383] sm:%s4] %v382
    %s385 = smul.addr 4, 179
    %s386 = scalar_lea.vmem %s0, %s385
    %v387 = vld [vmem:[%s386] sm:%s4]
    %s388 = scalar_lea.vmem [#allocation0], 1432
    %389 = vst [vmem:[%s388] sm:%s4] %v387
    %s390 = smul.addr 4, 178
    %s391 = scalar_lea.vmem %s0, %s390
    %v392 = vld [vmem:[%s391] sm:%s4]
    %s393 = scalar_lea.vmem [#allocation0], 1424
    %394 = vst [vmem:[%s393] sm:%s4] %v392
    %s395 = smul.addr 4, 177
    %s396 = scalar_lea.vmem %s0, %s395
    %v397 = vld [vmem:[%s396] sm:%s4]
    %s398 = scalar_lea.vmem [#allocation0], 1416
    %399 = vst [vmem:[%s398] sm:%s4] %v397
    %s400 = smul.addr 4, 176
    %s401 = scalar_lea.vmem %s0, %s400
    %v402 = vld [vmem:[%s401] sm:%s4]
    %s403 = scalar_lea.vmem [#allocation0], 1408
    %404 = vst [vmem:[%s403] sm:%s4] %v402
    %s405 = smul.addr 4, 175
    %s406 = scalar_lea.vmem %s0, %s405
    %v407 = vld [vmem:[%s406] sm:%s4]
    %s408 = scalar_lea.vmem [#allocation0], 1400
    %409 = vst [vmem:[%s408] sm:%s4] %v407
    %s410 = smul.addr 4, 174
    %s411 = scalar_lea.vmem %s0, %s410
    %v412 = vld [vmem:[%s411] sm:%s4]
    %s413 = scalar_lea.vmem [#allocation0], 1392
    %414 = vst [vmem:[%s413] sm:%s4] %v412
    %s415 = smul.addr 4, 173
    %s416 = scalar_lea.vmem %s0, %s415
    %v417 = vld [vmem:[%s416] sm:%s4]
    %s418 = scalar_lea.vmem [#allocation0], 1384
    %419 = vst [vmem:[%s418] sm:%s4] %v417
    %s420 = smul.addr 4, 172
    %s421 = scalar_lea.vmem %s0, %s420
    %v422 = vld [vmem:[%s421] sm:%s4]
    %s423 = scalar_lea.vmem [#allocation0], 1376
    %424 = vst [vmem:[%s423] sm:%s4] %v422
    %s425 = smul.addr 4, 171
    %s426 = scalar_lea.vmem %s0, %s425
    %v427 = vld [vmem:[%s426] sm:%s4]
    %s428 = scalar_lea.vmem [#allocation0], 1368
    %429 = vst [vmem:[%s428] sm:%s4] %v427
    %s430 = smul.addr 4, 170
    %s431 = scalar_lea.vmem %s0, %s430
    %v432 = vld [vmem:[%s431] sm:%s4]
    %s433 = scalar_lea.vmem [#allocation0], 1360
    %434 = vst [vmem:[%s433] sm:%s4] %v432
    %s435 = smul.addr 4, 169
    %s436 = scalar_lea.vmem %s0, %s435
    %v437 = vld [vmem:[%s436] sm:%s4]
    %s438 = scalar_lea.vmem [#allocation0], 1352
    %439 = vst [vmem:[%s438] sm:%s4] %v437
    %s440 = smul.addr 4, 168
    %s441 = scalar_lea.vmem %s0, %s440
    %v442 = vld [vmem:[%s441] sm:%s4]
    %s443 = scalar_lea.vmem [#allocation0], 1344
    %444 = vst [vmem:[%s443] sm:%s4] %v442
    %s445 = smul.addr 4, 167
    %s446 = scalar_lea.vmem %s0, %s445
    %v447 = vld [vmem:[%s446] sm:%s4]
    %s448 = scalar_lea.vmem [#allocation0], 1336
    %449 = vst [vmem:[%s448] sm:%s4] %v447
    %s450 = smul.addr 4, 166
    %s451 = scalar_lea.vmem %s0, %s450
    %v452 = vld [vmem:[%s451] sm:%s4]
    %s453 = scalar_lea.vmem [#allocation0], 1328
    %454 = vst [vmem:[%s453] sm:%s4] %v452
    %s455 = smul.addr 4, 165
    %s456 = scalar_lea.vmem %s0, %s455
    %v457 = vld [vmem:[%s456] sm:%s4]
    %s458 = scalar_lea.vmem [#allocation0], 1320
    %459 = vst [vmem:[%s458] sm:%s4] %v457
    %s460 = smul.addr 4, 164
    %s461 = scalar_lea.vmem %s0, %s460
    %v462 = vld [vmem:[%s461] sm:%s4]
    %s463 = scalar_lea.vmem [#allocation0], 1312
    %464 = vst [vmem:[%s463] sm:%s4] %v462
    %s465 = smul.addr 4, 163
    %s466 = scalar_lea.vmem %s0, %s465
    %v467 = vld [vmem:[%s466] sm:%s4]
    %s468 = scalar_lea.vmem [#allocation0], 1304
    %469 = vst [vmem:[%s468] sm:%s4] %v467
    %s470 = smul.addr 4, 162
    %s471 = scalar_lea.vmem %s0, %s470
    %v472 = vld [vmem:[%s471] sm:%s4]
    %s473 = scalar_lea.vmem [#allocation0], 1296
    %474 = vst [vmem:[%s473] sm:%s4] %v472
    %s475 = smul.addr 4, 161
    %s476 = scalar_lea.vmem %s0, %s475
    %v477 = vld [vmem:[%s476] sm:%s4]
    %s478 = scalar_lea.vmem [#allocation0], 1288
    %479 = vst [vmem:[%s478] sm:%s4] %v477
    %s480 = smul.addr 4, 160
    %s481 = scalar_lea.vmem %s0, %s480
    %v482 = vld [vmem:[%s481] sm:%s4]
    %s483 = scalar_lea.vmem [#allocation0], 1280
    %484 = vst [vmem:[%s483] sm:%s4] %v482
    %s485 = smul.addr 4, 159
    %s486 = scalar_lea.vmem %s0, %s485
    %v487 = vld [vmem:[%s486] sm:%s4]
    %s488 = scalar_lea.vmem [#allocation0], 1272
    %489 = vst [vmem:[%s488] sm:%s4] %v487
    %s490 = smul.addr 4, 158
    %s491 = scalar_lea.vmem %s0, %s490
    %v492 = vld [vmem:[%s491] sm:%s4]
    %s493 = scalar_lea.vmem [#allocation0], 1264
    %494 = vst [vmem:[%s493] sm:%s4] %v492
    %s495 = smul.addr 4, 157
    %s496 = scalar_lea.vmem %s0, %s495
    %v497 = vld [vmem:[%s496] sm:%s4]
    %s498 = scalar_lea.vmem [#allocation0], 1256
    %499 = vst [vmem:[%s498] sm:%s4] %v497
    %s500 = smul.addr 4, 156
    %s501 = scalar_lea.vmem %s0, %s500
    %v502 = vld [vmem:[%s501] sm:%s4]
    %s503 = scalar_lea.vmem [#allocation0], 1248
    %504 = vst [vmem:[%s503] sm:%s4] %v502
    %s505 = smul.addr 4, 155
    %s506 = scalar_lea.vmem %s0, %s505
    %v507 = vld [vmem:[%s506] sm:%s4]
    %s508 = scalar_lea.vmem [#allocation0], 1240
    %509 = vst [vmem:[%s508] sm:%s4] %v507
    %s510 = smul.addr 4, 154
    %s511 = scalar_lea.vmem %s0, %s510
    %v512 = vld [vmem:[%s511] sm:%s4]
    %s513 = scalar_lea.vmem [#allocation0], 1232
    %514 = vst [vmem:[%s513] sm:%s4] %v512
    %s515 = smul.addr 4, 153
    %s516 = scalar_lea.vmem %s0, %s515
    %v517 = vld [vmem:[%s516] sm:%s4]
    %s518 = scalar_lea.vmem [#allocation0], 1224
    %519 = vst [vmem:[%s518] sm:%s4] %v517
    %s520 = smul.addr 4, 152
    %s521 = scalar_lea.vmem %s0, %s520
    %v522 = vld [vmem:[%s521] sm:%s4]
    %s523 = scalar_lea.vmem [#allocation0], 1216
    %524 = vst [vmem:[%s523] sm:%s4] %v522
    %s525 = smul.addr 4, 151
    %s526 = scalar_lea.vmem %s0, %s525
    %v527 = vld [vmem:[%s526] sm:%s4]
    %s528 = scalar_lea.vmem [#allocation0], 1208
    %529 = vst [vmem:[%s528] sm:%s4] %v527
    %s530 = smul.addr 4, 150
    %s531 = scalar_lea.vmem %s0, %s530
    %v532 = vld [vmem:[%s531] sm:%s4]
    %s533 = scalar_lea.vmem [#allocation0], 1200
    %534 = vst [vmem:[%s533] sm:%s4] %v532
    %s535 = smul.addr 4, 149
    %s536 = scalar_lea.vmem %s0, %s535
    %v537 = vld [vmem:[%s536] sm:%s4]
    %s538 = scalar_lea.vmem [#allocation0], 1192
    %539 = vst [vmem:[%s538] sm:%s4] %v537
    %s540 = smul.addr 4, 148
    %s541 = scalar_lea.vmem %s0, %s540
    %v542 = vld [vmem:[%s541] sm:%s4]
    %s543 = scalar_lea.vmem [#allocation0], 1184
    %544 = vst [vmem:[%s543] sm:%s4] %v542
    %s545 = smul.addr 4, 147
    %s546 = scalar_lea.vmem %s0, %s545
    %v547 = vld [vmem:[%s546] sm:%s4]
    %s548 = scalar_lea.vmem [#allocation0], 1176
    %549 = vst [vmem:[%s548] sm:%s4] %v547
    %s550 = smul.addr 4, 146
    %s551 = scalar_lea.vmem %s0, %s550
    %v552 = vld [vmem:[%s551] sm:%s4]
    %s553 = scalar_lea.vmem [#allocation0], 1168
    %554 = vst [vmem:[%s553] sm:%s4] %v552
    %s555 = smul.addr 4, 145
    %s556 = scalar_lea.vmem %s0, %s555
    %v557 = vld [vmem:[%s556] sm:%s4]
    %s558 = scalar_lea.vmem [#allocation0], 1160
    %559 = vst [vmem:[%s558] sm:%s4] %v557
    %s560 = smul.addr 4, 144
    %s561 = scalar_lea.vmem %s0, %s560
    %v562 = vld [vmem:[%s561] sm:%s4]
    %s563 = scalar_lea.vmem [#allocation0], 1152
    %564 = vst [vmem:[%s563] sm:%s4] %v562
    %s565 = smul.addr 4, 143
    %s566 = scalar_lea.vmem %s0, %s565
    %v567 = vld [vmem:[%s566] sm:%s4]
    %s568 = scalar_lea.vmem [#allocation0], 1144
    %569 = vst [vmem:[%s568] sm:%s4] %v567
    %s570 = smul.addr 4, 142
    %s571 = scalar_lea.vmem %s0, %s570
    %v572 = vld [vmem:[%s571] sm:%s4]
    %s573 = scalar_lea.vmem [#allocation0], 1136
    %574 = vst [vmem:[%s573] sm:%s4] %v572
    %s575 = smul.addr 4, 141
    %s576 = scalar_lea.vmem %s0, %s575
    %v577 = vld [vmem:[%s576] sm:%s4]
    %s578 = scalar_lea.vmem [#allocation0], 1128
    %579 = vst [vmem:[%s578] sm:%s4] %v577
    %s580 = smul.addr 4, 140
    %s581 = scalar_lea.vmem %s0, %s580
    %v582 = vld [vmem:[%s581] sm:%s4]
    %s583 = scalar_lea.vmem [#allocation0], 1120
    %584 = vst [vmem:[%s583] sm:%s4] %v582
    %s585 = smul.addr 4, 139
    %s586 = scalar_lea.vmem %s0, %s585
    %v587 = vld [vmem:[%s586] sm:%s4]
    %s588 = scalar_lea.vmem [#allocation0], 1112
    %589 = vst [vmem:[%s588] sm:%s4] %v587
    %s590 = smul.addr 4, 138
    %s591 = scalar_lea.vmem %s0, %s590
    %v592 = vld [vmem:[%s591] sm:%s4]
    %s593 = scalar_lea.vmem [#allocation0], 1104
    %594 = vst [vmem:[%s593] sm:%s4] %v592
    %s595 = smul.addr 4, 137
    %s596 = scalar_lea.vmem %s0, %s595
    %v597 = vld [vmem:[%s596] sm:%s4]
    %s598 = scalar_lea.vmem [#allocation0], 1096
    %599 = vst [vmem:[%s598] sm:%s4] %v597
    %s600 = smul.addr 4, 136
    %s601 = scalar_lea.vmem %s0, %s600
    %v602 = vld [vmem:[%s601] sm:%s4]
    %s603 = scalar_lea.vmem [#allocation0], 1088
    %604 = vst [vmem:[%s603] sm:%s4] %v602
    %s605 = smul.addr 4, 135
    %s606 = scalar_lea.vmem %s0, %s605
    %v607 = vld [vmem:[%s606] sm:%s4]
    %s608 = scalar_lea.vmem [#allocation0], 1080
    %609 = vst [vmem:[%s608] sm:%s4] %v607
    %s610 = smul.addr 4, 134
    %s611 = scalar_lea.vmem %s0, %s610
    %v612 = vld [vmem:[%s611] sm:%s4]
    %s613 = scalar_lea.vmem [#allocation0], 1072
    %614 = vst [vmem:[%s613] sm:%s4] %v612
    %s615 = smul.addr 4, 133
    %s616 = scalar_lea.vmem %s0, %s615
    %v617 = vld [vmem:[%s616] sm:%s4]
    %s618 = scalar_lea.vmem [#allocation0], 1064
    %619 = vst [vmem:[%s618] sm:%s4] %v617
    %s620 = smul.addr 4, 132
    %s621 = scalar_lea.vmem %s0, %s620
    %v622 = vld [vmem:[%s621] sm:%s4]
    %s623 = scalar_lea.vmem [#allocation0], 1056
    %624 = vst [vmem:[%s623] sm:%s4] %v622
    %s625 = smul.addr 4, 131
    %s626 = scalar_lea.vmem %s0, %s625
    %v627 = vld [vmem:[%s626] sm:%s4]
    %s628 = scalar_lea.vmem [#allocation0], 1048
    %629 = vst [vmem:[%s628] sm:%s4] %v627
    %s630 = smul.addr 4, 130
    %s631 = scalar_lea.vmem %s0, %s630
    %v632 = vld [vmem:[%s631] sm:%s4]
    %s633 = scalar_lea.vmem [#allocation0], 1040
    %634 = vst [vmem:[%s633] sm:%s4] %v632
    %s635 = smul.addr 4, 129
    %s636 = scalar_lea.vmem %s0, %s635
    %v637 = vld [vmem:[%s636] sm:%s4]
    %s638 = scalar_lea.vmem [#allocation0], 1032
    %639 = vst [vmem:[%s638] sm:%s4] %v637
    %s640 = smul.addr 4, 128
    %s641 = scalar_lea.vmem %s0, %s640
    %v642 = vld [vmem:[%s641] sm:%s4]
    %s643 = scalar_lea.vmem [#allocation0], 1024
    %644 = vst [vmem:[%s643] sm:%s4] %v642
    %s645 = smul.addr 4, 127
    %s646 = scalar_lea.vmem %s0, %s645
    %v647 = vld [vmem:[%s646] sm:%s4]
    %s648 = scalar_lea.vmem [#allocation0], 1016
    %649 = vst [vmem:[%s648] sm:%s4] %v647
    %s650 = smul.addr 4, 126
    %s651 = scalar_lea.vmem %s0, %s650
    %v652 = vld [vmem:[%s651] sm:%s4]
    %s653 = scalar_lea.vmem [#allocation0], 1008
    %654 = vst [vmem:[%s653] sm:%s4] %v652
    %s655 = smul.addr 4, 125
    %s656 = scalar_lea.vmem %s0, %s655
    %v657 = vld [vmem:[%s656] sm:%s4]
    %s658 = scalar_lea.vmem [#allocation0], 1000
    %659 = vst [vmem:[%s658] sm:%s4] %v657
    %s660 = smul.addr 4, 124
    %s661 = scalar_lea.vmem %s0, %s660
    %v662 = vld [vmem:[%s661] sm:%s4]
    %s663 = scalar_lea.vmem [#allocation0], 992
    %664 = vst [vmem:[%s663] sm:%s4] %v662
    %s665 = smul.addr 4, 123
    %s666 = scalar_lea.vmem %s0, %s665
    %v667 = vld [vmem:[%s666] sm:%s4]
    %s668 = scalar_lea.vmem [#allocation0], 984
    %669 = vst [vmem:[%s668] sm:%s4] %v667
    %s670 = smul.addr 4, 122
    %s671 = scalar_lea.vmem %s0, %s670
    %v672 = vld [vmem:[%s671] sm:%s4]
    %s673 = scalar_lea.vmem [#allocation0], 976
    %674 = vst [vmem:[%s673] sm:%s4] %v672
    %s675 = smul.addr 4, 121
    %s676 = scalar_lea.vmem %s0, %s675
    %v677 = vld [vmem:[%s676] sm:%s4]
    %s678 = scalar_lea.vmem [#allocation0], 968
    %679 = vst [vmem:[%s678] sm:%s4] %v677
    %s680 = smul.addr 4, 120
    %s681 = scalar_lea.vmem %s0, %s680
    %v682 = vld [vmem:[%s681] sm:%s4]
    %s683 = scalar_lea.vmem [#allocation0], 960
    %684 = vst [vmem:[%s683] sm:%s4] %v682
    %s685 = smul.addr 4, 119
    %s686 = scalar_lea.vmem %s0, %s685
    %v687 = vld [vmem:[%s686] sm:%s4]
    %s688 = scalar_lea.vmem [#allocation0], 952
    %689 = vst [vmem:[%s688] sm:%s4] %v687
    %s690 = smul.addr 4, 118
    %s691 = scalar_lea.vmem %s0, %s690
    %v692 = vld [vmem:[%s691] sm:%s4]
    %s693 = scalar_lea.vmem [#allocation0], 944
    %694 = vst [vmem:[%s693] sm:%s4] %v692
    %s695 = smul.addr 4, 117
    %s696 = scalar_lea.vmem %s0, %s695
    %v697 = vld [vmem:[%s696] sm:%s4]
    %s698 = scalar_lea.vmem [#allocation0], 936
    %699 = vst [vmem:[%s698] sm:%s4] %v697
    %s700 = smul.addr 4, 116
    %s701 = scalar_lea.vmem %s0, %s700
    %v702 = vld [vmem:[%s701] sm:%s4]
    %s703 = scalar_lea.vmem [#allocation0], 928
    %704 = vst [vmem:[%s703] sm:%s4] %v702
    %s705 = smul.addr 4, 115
    %s706 = scalar_lea.vmem %s0, %s705
    %v707 = vld [vmem:[%s706] sm:%s4]
    %s708 = scalar_lea.vmem [#allocation0], 920
    %709 = vst [vmem:[%s708] sm:%s4] %v707
    %s710 = smul.addr 4, 114
    %s711 = scalar_lea.vmem %s0, %s710
    %v712 = vld [vmem:[%s711] sm:%s4]
    %s713 = scalar_lea.vmem [#allocation0], 912
    %714 = vst [vmem:[%s713] sm:%s4] %v712
    %s715 = smul.addr 4, 113
    %s716 = scalar_lea.vmem %s0, %s715
    %v717 = vld [vmem:[%s716] sm:%s4]
    %s718 = scalar_lea.vmem [#allocation0], 904
    %719 = vst [vmem:[%s718] sm:%s4] %v717
    %s720 = smul.addr 4, 112
    %s721 = scalar_lea.vmem %s0, %s720
    %v722 = vld [vmem:[%s721] sm:%s4]
    %s723 = scalar_lea.vmem [#allocation0], 896
    %724 = vst [vmem:[%s723] sm:%s4] %v722
    %s725 = smul.addr 4, 111
    %s726 = scalar_lea.vmem %s0, %s725
    %v727 = vld [vmem:[%s726] sm:%s4]
    %s728 = scalar_lea.vmem [#allocation0], 888
    %729 = vst [vmem:[%s728] sm:%s4] %v727
    %s730 = smul.addr 4, 110
    %s731 = scalar_lea.vmem %s0, %s730
    %v732 = vld [vmem:[%s731] sm:%s4]
    %s733 = scalar_lea.vmem [#allocation0], 880
    %734 = vst [vmem:[%s733] sm:%s4] %v732
    %s735 = smul.addr 4, 109
    %s736 = scalar_lea.vmem %s0, %s735
    %v737 = vld [vmem:[%s736] sm:%s4]
    %s738 = scalar_lea.vmem [#allocation0], 872
    %739 = vst [vmem:[%s738] sm:%s4] %v737
    %s740 = smul.addr 4, 108
    %s741 = scalar_lea.vmem %s0, %s740
    %v742 = vld [vmem:[%s741] sm:%s4]
    %s743 = scalar_lea.vmem [#allocation0], 864
    %744 = vst [vmem:[%s743] sm:%s4] %v742
    %s745 = smul.addr 4, 107
    %s746 = scalar_lea.vmem %s0, %s745
    %v747 = vld [vmem:[%s746] sm:%s4]
    %s748 = scalar_lea.vmem [#allocation0], 856
    %749 = vst [vmem:[%s748] sm:%s4] %v747
    %s750 = smul.addr 4, 106
    %s751 = scalar_lea.vmem %s0, %s750
    %v752 = vld [vmem:[%s751] sm:%s4]
    %s753 = scalar_lea.vmem [#allocation0], 848
    %754 = vst [vmem:[%s753] sm:%s4] %v752
    %s755 = smul.addr 4, 105
    %s756 = scalar_lea.vmem %s0, %s755
    %v757 = vld [vmem:[%s756] sm:%s4]
    %s758 = scalar_lea.vmem [#allocation0], 840
    %759 = vst [vmem:[%s758] sm:%s4] %v757
    %s760 = smul.addr 4, 104
    %s761 = scalar_lea.vmem %s0, %s760
    %v762 = vld [vmem:[%s761] sm:%s4]
    %s763 = scalar_lea.vmem [#allocation0], 832
    %764 = vst [vmem:[%s763] sm:%s4] %v762
    %s765 = smul.addr 4, 103
    %s766 = scalar_lea.vmem %s0, %s765
    %v767 = vld [vmem:[%s766] sm:%s4]
    %s768 = scalar_lea.vmem [#allocation0], 824
    %769 = vst [vmem:[%s768] sm:%s4] %v767
    %s770 = smul.addr 4, 102
    %s771 = scalar_lea.vmem %s0, %s770
    %v772 = vld [vmem:[%s771] sm:%s4]
    %s773 = scalar_lea.vmem [#allocation0], 816
    %774 = vst [vmem:[%s773] sm:%s4] %v772
    %s775 = smul.addr 4, 101
    %s776 = scalar_lea.vmem %s0, %s775
    %v777 = vld [vmem:[%s776] sm:%s4]
    %s778 = scalar_lea.vmem [#allocation0], 808
    %779 = vst [vmem:[%s778] sm:%s4] %v777
    %s780 = smul.addr 4, 100
    %s781 = scalar_lea.vmem %s0, %s780
    %v782 = vld [vmem:[%s781] sm:%s4]
    %s783 = scalar_lea.vmem [#allocation0], 800
    %784 = vst [vmem:[%s783] sm:%s4] %v782
    %s785 = smul.addr 4, 99
    %s786 = scalar_lea.vmem %s0, %s785
    %v787 = vld [vmem:[%s786] sm:%s4]
    %s788 = scalar_lea.vmem [#allocation0], 792
    %789 = vst [vmem:[%s788] sm:%s4] %v787
    %s790 = smul.addr 4, 98
    %s791 = scalar_lea.vmem %s0, %s790
    %v792 = vld [vmem:[%s791] sm:%s4]
    %s793 = scalar_lea.vmem [#allocation0], 784
    %794 = vst [vmem:[%s793] sm:%s4] %v792
    %s795 = smul.addr 4, 97
    %s796 = scalar_lea.vmem %s0, %s795
    %v797 = vld [vmem:[%s796] sm:%s4]
    %s798 = scalar_lea.vmem [#allocation0], 776
    %799 = vst [vmem:[%s798] sm:%s4] %v797
    %s800 = smul.addr 4, 96
    %s801 = scalar_lea.vmem %s0, %s800
    %v802 = vld [vmem:[%s801] sm:%s4]
    %s803 = scalar_lea.vmem [#allocation0], 768
    %804 = vst [vmem:[%s803] sm:%s4] %v802
    %s805 = smul.addr 4, 95
    %s806 = scalar_lea.vmem %s0, %s805
    %v807 = vld [vmem:[%s806] sm:%s4]
    %s808 = scalar_lea.vmem [#allocation0], 760
    %809 = vst [vmem:[%s808] sm:%s4] %v807
    %s810 = smul.addr 4, 94
    %s811 = scalar_lea.vmem %s0, %s810
    %v812 = vld [vmem:[%s811] sm:%s4]
    %s813 = scalar_lea.vmem [#allocation0], 752
    %814 = vst [vmem:[%s813] sm:%s4] %v812
    %s815 = smul.addr 4, 93
    %s816 = scalar_lea.vmem %s0, %s815
    %v817 = vld [vmem:[%s816] sm:%s4]
    %s818 = scalar_lea.vmem [#allocation0], 744
    %819 = vst [vmem:[%s818] sm:%s4] %v817
    %s820 = smul.addr 4, 92
    %s821 = scalar_lea.vmem %s0, %s820
    %v822 = vld [vmem:[%s821] sm:%s4]
    %s823 = scalar_lea.vmem [#allocation0], 736
    %824 = vst [vmem:[%s823] sm:%s4] %v822
    %s825 = smul.addr 4, 91
    %s826 = scalar_lea.vmem %s0, %s825
    %v827 = vld [vmem:[%s826] sm:%s4]
    %s828 = scalar_lea.vmem [#allocation0], 728
    %829 = vst [vmem:[%s828] sm:%s4] %v827
    %s830 = smul.addr 4, 90
    %s831 = scalar_lea.vmem %s0, %s830
    %v832 = vld [vmem:[%s831] sm:%s4]
    %s833 = scalar_lea.vmem [#allocation0], 720
    %834 = vst [vmem:[%s833] sm:%s4] %v832
    %s835 = smul.addr 4, 89
    %s836 = scalar_lea.vmem %s0, %s835
    %v837 = vld [vmem:[%s836] sm:%s4]
    %s838 = scalar_lea.vmem [#allocation0], 712
    %839 = vst [vmem:[%s838] sm:%s4] %v837
    %s840 = smul.addr 4, 88
    %s841 = scalar_lea.vmem %s0, %s840
    %v842 = vld [vmem:[%s841] sm:%s4]
    %s843 = scalar_lea.vmem [#allocation0], 704
    %844 = vst [vmem:[%s843] sm:%s4] %v842
    %s845 = smul.addr 4, 87
    %s846 = scalar_lea.vmem %s0, %s845
    %v847 = vld [vmem:[%s846] sm:%s4]
    %s848 = scalar_lea.vmem [#allocation0], 696
    %849 = vst [vmem:[%s848] sm:%s4] %v847
    %s850 = smul.addr 4, 86
    %s851 = scalar_lea.vmem %s0, %s850
    %v852 = vld [vmem:[%s851] sm:%s4]
    %s853 = scalar_lea.vmem [#allocation0], 688
    %854 = vst [vmem:[%s853] sm:%s4] %v852
    %s855 = smul.addr 4, 85
    %s856 = scalar_lea.vmem %s0, %s855
    %v857 = vld [vmem:[%s856] sm:%s4]
    %s858 = scalar_lea.vmem [#allocation0], 680
    %859 = vst [vmem:[%s858] sm:%s4] %v857
    %s860 = smul.addr 4, 84
    %s861 = scalar_lea.vmem %s0, %s860
    %v862 = vld [vmem:[%s861] sm:%s4]
    %s863 = scalar_lea.vmem [#allocation0], 672
    %864 = vst [vmem:[%s863] sm:%s4] %v862
    %s865 = smul.addr 4, 83
    %s866 = scalar_lea.vmem %s0, %s865
    %v867 = vld [vmem:[%s866] sm:%s4]
    %s868 = scalar_lea.vmem [#allocation0], 664
    %869 = vst [vmem:[%s868] sm:%s4] %v867
    %s870 = smul.addr 4, 82
    %s871 = scalar_lea.vmem %s0, %s870
    %v872 = vld [vmem:[%s871] sm:%s4]
    %s873 = scalar_lea.vmem [#allocation0], 656
    %874 = vst [vmem:[%s873] sm:%s4] %v872
    %s875 = smul.addr 4, 81
    %s876 = scalar_lea.vmem %s0, %s875
    %v877 = vld [vmem:[%s876] sm:%s4]
    %s878 = scalar_lea.vmem [#allocation0], 648
    %879 = vst [vmem:[%s878] sm:%s4] %v877
    %s880 = smul.addr 4, 80
    %s881 = scalar_lea.vmem %s0, %s880
    %v882 = vld [vmem:[%s881] sm:%s4]
    %s883 = scalar_lea.vmem [#allocation0], 640
    %884 = vst [vmem:[%s883] sm:%s4] %v882
    %s885 = smul.addr 4, 79
    %s886 = scalar_lea.vmem %s0, %s885
    %v887 = vld [vmem:[%s886] sm:%s4]
    %s888 = scalar_lea.vmem [#allocation0], 632
    %889 = vst [vmem:[%s888] sm:%s4] %v887
    %s890 = smul.addr 4, 78
    %s891 = scalar_lea.vmem %s0, %s890
    %v892 = vld [vmem:[%s891] sm:%s4]
    %s893 = scalar_lea.vmem [#allocation0], 624
    %894 = vst [vmem:[%s893] sm:%s4] %v892
    %s895 = smul.addr 4, 77
    %s896 = scalar_lea.vmem %s0, %s895
    %v897 = vld [vmem:[%s896] sm:%s4]
    %s898 = scalar_lea.vmem [#allocation0], 616
    %899 = vst [vmem:[%s898] sm:%s4] %v897
    %s900 = smul.addr 4, 76
    %s901 = scalar_lea.vmem %s0, %s900
    %v902 = vld [vmem:[%s901] sm:%s4]
    %s903 = scalar_lea.vmem [#allocation0], 608
    %904 = vst [vmem:[%s903] sm:%s4] %v902
    %s905 = smul.addr 4, 75
    %s906 = scalar_lea.vmem %s0, %s905
    %v907 = vld [vmem:[%s906] sm:%s4]
    %s908 = scalar_lea.vmem [#allocation0], 600
    %909 = vst [vmem:[%s908] sm:%s4] %v907
    %s910 = smul.addr 4, 74
    %s911 = scalar_lea.vmem %s0, %s910
    %v912 = vld [vmem:[%s911] sm:%s4]
    %s913 = scalar_lea.vmem [#allocation0], 592
    %914 = vst [vmem:[%s913] sm:%s4] %v912
    %s915 = smul.addr 4, 73
    %s916 = scalar_lea.vmem %s0, %s915
    %v917 = vld [vmem:[%s916] sm:%s4]
    %s918 = scalar_lea.vmem [#allocation0], 584
    %919 = vst [vmem:[%s918] sm:%s4] %v917
    %s920 = smul.addr 4, 72
    %s921 = scalar_lea.vmem %s0, %s920
    %v922 = vld [vmem:[%s921] sm:%s4]
    %s923 = scalar_lea.vmem [#allocation0], 576
    %924 = vst [vmem:[%s923] sm:%s4] %v922
    %s925 = smul.addr 4, 71
    %s926 = scalar_lea.vmem %s0, %s925
    %v927 = vld [vmem:[%s926] sm:%s4]
    %s928 = scalar_lea.vmem [#allocation0], 568
    %929 = vst [vmem:[%s928] sm:%s4] %v927
    %s930 = smul.addr 4, 70
    %s931 = scalar_lea.vmem %s0, %s930
    %v932 = vld [vmem:[%s931] sm:%s4]
    %s933 = scalar_lea.vmem [#allocation0], 560
    %934 = vst [vmem:[%s933] sm:%s4] %v932
    %s935 = smul.addr 4, 69
    %s936 = scalar_lea.vmem %s0, %s935
    %v937 = vld [vmem:[%s936] sm:%s4]
    %s938 = scalar_lea.vmem [#allocation0], 552
    %939 = vst [vmem:[%s938] sm:%s4] %v937
    %s940 = smul.addr 4, 68
    %s941 = scalar_lea.vmem %s0, %s940
    %v942 = vld [vmem:[%s941] sm:%s4]
    %s943 = scalar_lea.vmem [#allocation0], 544
    %944 = vst [vmem:[%s943] sm:%s4] %v942
    %s945 = smul.addr 4, 67
    %s946 = scalar_lea.vmem %s0, %s945
    %v947 = vld [vmem:[%s946] sm:%s4]
    %s948 = scalar_lea.vmem [#allocation0], 536
    %949 = vst [vmem:[%s948] sm:%s4] %v947
    %s950 = smul.addr 4, 66
    %s951 = scalar_lea.vmem %s0, %s950
    %v952 = vld [vmem:[%s951] sm:%s4]
    %s953 = scalar_lea.vmem [#allocation0], 528
    %954 = vst [vmem:[%s953] sm:%s4] %v952
    %s955 = smul.addr 4, 65
    %s956 = scalar_lea.vmem %s0, %s955
    %v957 = vld [vmem:[%s956] sm:%s4]
    %s958 = scalar_lea.vmem [#allocation0], 520
    %959 = vst [vmem:[%s958] sm:%s4] %v957
    %s960 = smul.addr 4, 64
    %s961 = scalar_lea.vmem %s0, %s960
    %v962 = vld [vmem:[%s961] sm:%s4]
    %s963 = scalar_lea.vmem [#allocation0], 512
    %964 = vst [vmem:[%s963] sm:%s4] %v962
    %s965 = smul.addr 4, 63
    %s966 = scalar_lea.vmem %s0, %s965
    %v967 = vld [vmem:[%s966] sm:%s4]
    %s968 = scalar_lea.vmem [#allocation0], 504
    %969 = vst [vmem:[%s968] sm:%s4] %v967
    %s970 = smul.addr 4, 62
    %s971 = scalar_lea.vmem %s0, %s970
    %v972 = vld [vmem:[%s971] sm:%s4]
    %s973 = scalar_lea.vmem [#allocation0], 496
    %974 = vst [vmem:[%s973] sm:%s4] %v972
    %s975 = smul.addr 4, 61
    %s976 = scalar_lea.vmem %s0, %s975
    %v977 = vld [vmem:[%s976] sm:%s4]
    %s978 = scalar_lea.vmem [#allocation0], 488
    %979 = vst [vmem:[%s978] sm:%s4] %v977
    %s980 = smul.addr 4, 60
    %s981 = scalar_lea.vmem %s0, %s980
    %v982 = vld [vmem:[%s981] sm:%s4]
    %s983 = scalar_lea.vmem [#allocation0], 480
    %984 = vst [vmem:[%s983] sm:%s4] %v982
    %s985 = smul.addr 4, 59
    %s986 = scalar_lea.vmem %s0, %s985
    %v987 = vld [vmem:[%s986] sm:%s4]
    %s988 = scalar_lea.vmem [#allocation0], 472
    %989 = vst [vmem:[%s988] sm:%s4] %v987
    %s990 = smul.addr 4, 58
    %s991 = scalar_lea.vmem %s0, %s990
    %v992 = vld [vmem:[%s991] sm:%s4]
    %s993 = scalar_lea.vmem [#allocation0], 464
    %994 = vst [vmem:[%s993] sm:%s4] %v992
    %s995 = smul.addr 4, 57
    %s996 = scalar_lea.vmem %s0, %s995
    %v997 = vld [vmem:[%s996] sm:%s4]
    %s998 = scalar_lea.vmem [#allocation0], 456
    %999 = vst [vmem:[%s998] sm:%s4] %v997
    %s1000 = smul.addr 4, 56
    %s1001 = scalar_lea.vmem %s0, %s1000
    %v1002 = vld [vmem:[%s1001] sm:%s4]
    %s1003 = scalar_lea.vmem [#allocation0], 448
    %1004 = vst [vmem:[%s1003] sm:%s4] %v1002
    %s1005 = smul.addr 4, 55
    %s1006 = scalar_lea.vmem %s0, %s1005
    %v1007 = vld [vmem:[%s1006] sm:%s4]
    %s1008 = scalar_lea.vmem [#allocation0], 440
    %1009 = vst [vmem:[%s1008] sm:%s4] %v1007
    %s1010 = smul.addr 4, 54
    %s1011 = scalar_lea.vmem %s0, %s1010
    %v1012 = vld [vmem:[%s1011] sm:%s4]
    %s1013 = scalar_lea.vmem [#allocation0], 432
    %1014 = vst [vmem:[%s1013] sm:%s4] %v1012
    %s1015 = smul.addr 4, 53
    %s1016 = scalar_lea.vmem %s0, %s1015
    %v1017 = vld [vmem:[%s1016] sm:%s4]
    %s1018 = scalar_lea.vmem [#allocation0], 424
    %1019 = vst [vmem:[%s1018] sm:%s4] %v1017
    %s1020 = smul.addr 4, 52
    %s1021 = scalar_lea.vmem %s0, %s1020
    %v1022 = vld [vmem:[%s1021] sm:%s4]
    %s1023 = scalar_lea.vmem [#allocation0], 416
    %1024 = vst [vmem:[%s1023] sm:%s4] %v1022
    %s1025 = smul.addr 4, 51
    %s1026 = scalar_lea.vmem %s0, %s1025
    %v1027 = vld [vmem:[%s1026] sm:%s4]
    %s1028 = scalar_lea.vmem [#allocation0], 408
    %1029 = vst [vmem:[%s1028] sm:%s4] %v1027
    %s1030 = smul.addr 4, 50
    %s1031 = scalar_lea.vmem %s0, %s1030
    %v1032 = vld [vmem:[%s1031] sm:%s4]
    %s1033 = scalar_lea.vmem [#allocation0], 400
    %1034 = vst [vmem:[%s1033] sm:%s4] %v1032
    %s1035 = smul.addr 4, 49
    %s1036 = scalar_lea.vmem %s0, %s1035
    %v1037 = vld [vmem:[%s1036] sm:%s4]
    %s1038 = scalar_lea.vmem [#allocation0], 392
    %1039 = vst [vmem:[%s1038] sm:%s4] %v1037
    %s1040 = smul.addr 4, 48
    %s1041 = scalar_lea.vmem %s0, %s1040
    %v1042 = vld [vmem:[%s1041] sm:%s4]
    %s1043 = scalar_lea.vmem [#allocation0], 384
    %1044 = vst [vmem:[%s1043] sm:%s4] %v1042
    %s1045 = smul.addr 4, 47
    %s1046 = scalar_lea.vmem %s0, %s1045
    %v1047 = vld [vmem:[%s1046] sm:%s4]
    %s1048 = scalar_lea.vmem [#allocation0], 376
    %1049 = vst [vmem:[%s1048] sm:%s4] %v1047
    %s1050 = smul.addr 4, 46
    %s1051 = scalar_lea.vmem %s0, %s1050
    %v1052 = vld [vmem:[%s1051] sm:%s4]
    %s1053 = scalar_lea.vmem [#allocation0], 368
    %1054 = vst [vmem:[%s1053] sm:%s4] %v1052
    %s1055 = smul.addr 4, 45
    %s1056 = scalar_lea.vmem %s0, %s1055
    %v1057 = vld [vmem:[%s1056] sm:%s4]
    %s1058 = scalar_lea.vmem [#allocation0], 360
    %1059 = vst [vmem:[%s1058] sm:%s4] %v1057
    %s1060 = smul.addr 4, 44
    %s1061 = scalar_lea.vmem %s0, %s1060
    %v1062 = vld [vmem:[%s1061] sm:%s4]
    %s1063 = scalar_lea.vmem [#allocation0], 352
    %1064 = vst [vmem:[%s1063] sm:%s4] %v1062
    %s1065 = smul.addr 4, 43
    %s1066 = scalar_lea.vmem %s0, %s1065
    %v1067 = vld [vmem:[%s1066] sm:%s4]
    %s1068 = scalar_lea.vmem [#allocation0], 344
    %1069 = vst [vmem:[%s1068] sm:%s4] %v1067
    %s1070 = smul.addr 4, 42
    %s1071 = scalar_lea.vmem %s0, %s1070
    %v1072 = vld [vmem:[%s1071] sm:%s4]
    %s1073 = scalar_lea.vmem [#allocation0], 336
    %1074 = vst [vmem:[%s1073] sm:%s4] %v1072
    %s1075 = smul.addr 4, 41
    %s1076 = scalar_lea.vmem %s0, %s1075
    %v1077 = vld [vmem:[%s1076] sm:%s4]
    %s1078 = scalar_lea.vmem [#allocation0], 328
    %1079 = vst [vmem:[%s1078] sm:%s4] %v1077
    %s1080 = smul.addr 4, 40
    %s1081 = scalar_lea.vmem %s0, %s1080
    %v1082 = vld [vmem:[%s1081] sm:%s4]
    %s1083 = scalar_lea.vmem [#allocation0], 320
    %1084 = vst [vmem:[%s1083] sm:%s4] %v1082
    %s1085 = smul.addr 4, 39
    %s1086 = scalar_lea.vmem %s0, %s1085
    %v1087 = vld [vmem:[%s1086] sm:%s4]
    %s1088 = scalar_lea.vmem [#allocation0], 312
    %1089 = vst [vmem:[%s1088] sm:%s4] %v1087
    %s1090 = smul.addr 4, 38
    %s1091 = scalar_lea.vmem %s0, %s1090
    %v1092 = vld [vmem:[%s1091] sm:%s4]
    %s1093 = scalar_lea.vmem [#allocation0], 304
    %1094 = vst [vmem:[%s1093] sm:%s4] %v1092
    %s1095 = smul.addr 4, 37
    %s1096 = scalar_lea.vmem %s0, %s1095
    %v1097 = vld [vmem:[%s1096] sm:%s4]
    %s1098 = scalar_lea.vmem [#allocation0], 296
    %1099 = vst [vmem:[%s1098] sm:%s4] %v1097
    %s1100 = smul.addr 4, 36
    %s1101 = scalar_lea.vmem %s0, %s1100
    %v1102 = vld [vmem:[%s1101] sm:%s4]
    %s1103 = scalar_lea.vmem [#allocation0], 288
    %1104 = vst [vmem:[%s1103] sm:%s4] %v1102
    %s1105 = smul.addr 4, 35
    %s1106 = scalar_lea.vmem %s0, %s1105
    %v1107 = vld [vmem:[%s1106] sm:%s4]
    %s1108 = scalar_lea.vmem [#allocation0], 280
    %1109 = vst [vmem:[%s1108] sm:%s4] %v1107
    %s1110 = smul.addr 4, 34
    %s1111 = scalar_lea.vmem %s0, %s1110
    %v1112 = vld [vmem:[%s1111] sm:%s4]
    %s1113 = scalar_lea.vmem [#allocation0], 272
    %1114 = vst [vmem:[%s1113] sm:%s4] %v1112
    %s1115 = smul.addr 4, 33
    %s1116 = scalar_lea.vmem %s0, %s1115
    %v1117 = vld [vmem:[%s1116] sm:%s4]
    %s1118 = scalar_lea.vmem [#allocation0], 264
    %1119 = vst [vmem:[%s1118] sm:%s4] %v1117
    %s1120 = smul.addr 4, 32
    %s1121 = scalar_lea.vmem %s0, %s1120
    %v1122 = vld [vmem:[%s1121] sm:%s4]
    %s1123 = scalar_lea.vmem [#allocation0], 256
    %1124 = vst [vmem:[%s1123] sm:%s4] %v1122
    %s1125 = smul.addr 4, 31
    %s1126 = scalar_lea.vmem %s0, %s1125
    %v1127 = vld [vmem:[%s1126] sm:%s4]
    %s1128 = scalar_lea.vmem [#allocation0], 248
    %1129 = vst [vmem:[%s1128] sm:%s4] %v1127
    %s1130 = smul.addr 4, 30
    %s1131 = scalar_lea.vmem %s0, %s1130
    %v1132 = vld [vmem:[%s1131] sm:%s4]
    %s1133 = scalar_lea.vmem [#allocation0], 240
    %1134 = vst [vmem:[%s1133] sm:%s4] %v1132
    %s1135 = smul.addr 4, 29
    %s1136 = scalar_lea.vmem %s0, %s1135
    %v1137 = vld [vmem:[%s1136] sm:%s4]
    %s1138 = scalar_lea.vmem [#allocation0], 232
    %1139 = vst [vmem:[%s1138] sm:%s4] %v1137
    %s1140 = smul.addr 4, 28
    %s1141 = scalar_lea.vmem %s0, %s1140
    %v1142 = vld [vmem:[%s1141] sm:%s4]
    %s1143 = scalar_lea.vmem [#allocation0], 224
    %1144 = vst [vmem:[%s1143] sm:%s4] %v1142
    %s1145 = smul.addr 4, 27
    %s1146 = scalar_lea.vmem %s0, %s1145
    %v1147 = vld [vmem:[%s1146] sm:%s4]
    %s1148 = scalar_lea.vmem [#allocation0], 216
    %1149 = vst [vmem:[%s1148] sm:%s4] %v1147
    %s1150 = smul.addr 4, 26
    %s1151 = scalar_lea.vmem %s0, %s1150
    %v1152 = vld [vmem:[%s1151] sm:%s4]
    %s1153 = scalar_lea.vmem [#allocation0], 208
    %1154 = vst [vmem:[%s1153] sm:%s4] %v1152
    %s1155 = smul.addr 4, 25
    %s1156 = scalar_lea.vmem %s0, %s1155
    %v1157 = vld [vmem:[%s1156] sm:%s4]
    %s1158 = scalar_lea.vmem [#allocation0], 200
    %1159 = vst [vmem:[%s1158] sm:%s4] %v1157
    %s1160 = smul.addr 4, 24
    %s1161 = scalar_lea.vmem %s0, %s1160
    %v1162 = vld [vmem:[%s1161] sm:%s4]
    %s1163 = scalar_lea.vmem [#allocation0], 192
    %1164 = vst [vmem:[%s1163] sm:%s4] %v1162
    %s1165 = smul.addr 4, 23
    %s1166 = scalar_lea.vmem %s0, %s1165
    %v1167 = vld [vmem:[%s1166] sm:%s4]
    %s1168 = scalar_lea.vmem [#allocation0], 184
    %1169 = vst [vmem:[%s1168] sm:%s4] %v1167
    %s1170 = smul.addr 4, 22
    %s1171 = scalar_lea.vmem %s0, %s1170
    %v1172 = vld [vmem:[%s1171] sm:%s4]
    %s1173 = scalar_lea.vmem [#allocation0], 176
    %1174 = vst [vmem:[%s1173] sm:%s4] %v1172
    %s1175 = smul.addr 4, 21
    %s1176 = scalar_lea.vmem %s0, %s1175
    %v1177 = vld [vmem:[%s1176] sm:%s4]
    %s1178 = scalar_lea.vmem [#allocation0], 168
    %1179 = vst [vmem:[%s1178] sm:%s4] %v1177
    %s1180 = smul.addr 4, 20
    %s1181 = scalar_lea.vmem %s0, %s1180
    %v1182 = vld [vmem:[%s1181] sm:%s4]
    %s1183 = scalar_lea.vmem [#allocation0], 160
    %1184 = vst [vmem:[%s1183] sm:%s4] %v1182
    %s1185 = smul.addr 4, 19
    %s1186 = scalar_lea.vmem %s0, %s1185
    %v1187 = vld [vmem:[%s1186] sm:%s4]
    %s1188 = scalar_lea.vmem [#allocation0], 152
    %1189 = vst [vmem:[%s1188] sm:%s4] %v1187
    %s1190 = smul.addr 4, 18
    %s1191 = scalar_lea.vmem %s0, %s1190
    %v1192 = vld [vmem:[%s1191] sm:%s4]
    %s1193 = scalar_lea.vmem [#allocation0], 144
    %1194 = vst [vmem:[%s1193] sm:%s4] %v1192
    %s1195 = smul.addr 4, 17
    %s1196 = scalar_lea.vmem %s0, %s1195
    %v1197 = vld [vmem:[%s1196] sm:%s4]
    %s1198 = scalar_lea.vmem [#allocation0], 136
    %1199 = vst [vmem:[%s1198] sm:%s4] %v1197
    %s1200 = smul.addr 4, 16
    %s1201 = scalar_lea.vmem %s0, %s1200
    %v1202 = vld [vmem:[%s1201] sm:%s4]
    %s1203 = scalar_lea.vmem [#allocation0], 128
    %1204 = vst [vmem:[%s1203] sm:%s4] %v1202
    %s1205 = smul.addr 4, 15
    %s1206 = scalar_lea.vmem %s0, %s1205
    %v1207 = vld [vmem:[%s1206] sm:%s4]
    %s1208 = scalar_lea.vmem [#allocation0], 120
    %1209 = vst [vmem:[%s1208] sm:%s4] %v1207
    %s1210 = smul.addr 4, 14
    %s1211 = scalar_lea.vmem %s0, %s1210
    %v1212 = vld [vmem:[%s1211] sm:%s4]
    %s1213 = scalar_lea.vmem [#allocation0], 112
    %1214 = vst [vmem:[%s1213] sm:%s4] %v1212
    %s1215 = smul.addr 4, 13
    %s1216 = scalar_lea.vmem %s0, %s1215
    %v1217 = vld [vmem:[%s1216] sm:%s4]
    %s1218 = scalar_lea.vmem [#allocation0], 104
    %1219 = vst [vmem:[%s1218] sm:%s4] %v1217
    %s1220 = smul.addr 4, 12
    %s1221 = scalar_lea.vmem %s0, %s1220
    %v1222 = vld [vmem:[%s1221] sm:%s4]
    %s1223 = scalar_lea.vmem [#allocation0], 96
    %1224 = vst [vmem:[%s1223] sm:%s4] %v1222
    %s1225 = smul.addr 4, 11
    %s1226 = scalar_lea.vmem %s0, %s1225
    %v1227 = vld [vmem:[%s1226] sm:%s4]
    %s1228 = scalar_lea.vmem [#allocation0], 88
    %1229 = vst [vmem:[%s1228] sm:%s4] %v1227
    %s1230 = smul.addr 4, 10
    %s1231 = scalar_lea.vmem %s0, %s1230
    %v1232 = vld [vmem:[%s1231] sm:%s4]
    %s1233 = scalar_lea.vmem [#allocation0], 80
    %1234 = vst [vmem:[%s1233] sm:%s4] %v1232
    %s1235 = smul.addr 4, 9
    %s1236 = scalar_lea.vmem %s0, %s1235
    %v1237 = vld [vmem:[%s1236] sm:%s4]
    %s1238 = scalar_lea.vmem [#allocation0], 72
    %1239 = vst [vmem:[%s1238] sm:%s4] %v1237
    %s1240 = smul.addr 4, 8
    %s1241 = scalar_lea.vmem %s0, %s1240
    %v1242 = vld [vmem:[%s1241] sm:%s4]
    %s1243 = scalar_lea.vmem [#allocation0], 64
    %1244 = vst [vmem:[%s1243] sm:%s4] %v1242
    %s1245 = smul.addr 4, 7
    %s1246 = scalar_lea.vmem %s0, %s1245
    %v1247 = vld [vmem:[%s1246] sm:%s4]
    %s1248 = scalar_lea.vmem [#allocation0], 56
    %1249 = vst [vmem:[%s1248] sm:%s4] %v1247
    %s1250 = smul.addr 4, 6
    %s1251 = scalar_lea.vmem %s0, %s1250
    %v1252 = vld [vmem:[%s1251] sm:%s4]
    %s1253 = scalar_lea.vmem [#allocation0], 48
    %1254 = vst [vmem:[%s1253] sm:%s4] %v1252
    %s1255 = smul.addr 4, 5
    %s1256 = scalar_lea.vmem %s0, %s1255
    %v1257 = vld [vmem:[%s1256] sm:%s4]
    %s1258 = scalar_lea.vmem [#allocation0], 40
    %1259 = vst [vmem:[%s1258] sm:%s4] %v1257
    %s1260 = smul.addr 4, 4
    %s1261 = scalar_lea.vmem %s0, %s1260
    %v1262 = vld [vmem:[%s1261] sm:%s4]
    %s1263 = scalar_lea.vmem [#allocation0], 32
    %1264 = vst [vmem:[%s1263] sm:%s4] %v1262
    %s1265 = smul.addr 4, 3
    %s1266 = scalar_lea.vmem %s0, %s1265
    %v1267 = vld [vmem:[%s1266] sm:%s4]
    %s1268 = scalar_lea.vmem [#allocation0], 24
    %1269 = vst [vmem:[%s1268] sm:%s4] %v1267
    %s1270 = smul.addr 4, 2
    %s1271 = scalar_lea.vmem %s0, %s1270
    %v1272 = vld [vmem:[%s1271] sm:%s4]
    %s1273 = scalar_lea.vmem [#allocation0], 16
    %1274 = vst [vmem:[%s1273] sm:%s4] %v1272
    %s1275 = scalar_lea.vmem %s0, 4
    %v1276 = vld [vmem:[%s1275] sm:%s4]
    %s1277 = scalar_lea.vmem [#allocation0], 8
    %1278 = vst [vmem:[%s1277] sm:%s4] %v1276
    %v1279 = vld [vmem:[%s0] sm:%s4]
    %1280 = vst [vmem:[#allocation0] sm:%s4] %v1279
    %v1281 = vld [vmem:[#allocation0] sm:$0x1]
    %s1282 = scalar_lea.vmem [#allocation0], 31
    %v1283 = vld [vmem:[%s1282] sm:$0x2]
    %vm1284 = vcmask 1041409
    %v1285 = vsel %vm1284, %v1283, %v1281
    %s1286 = scalar_lea.vmem [#allocation0], 62
    %v1287 = vld [vmem:[%s1286] sm:$0x4]
    %vm1288 = vcmask 1042434
    %v1289 = vsel %vm1288, %v1287, %v1285
    %s1290 = scalar_lea.vmem [#allocation0], 93
    %v1291 = vld [vmem:[%s1290] sm:$0x8]
    %vm1292 = vcmask 1043459
    %v1293 = vsel %vm1292, %v1291, %v1289
    %s1294 = scalar_lea.vmem [#allocation0], 124
    %v1295 = vld [vmem:[%s1294] sm:$0x10]
    %vm1296 = vcmask 1044484
    %v1297 = vsel %vm1296, %v1295, %v1293
    %s1298 = scalar_lea.vmem [#allocation0], 155
    %v1299 = vld [vmem:[%s1298] sm:$0x20]
    %vm1300 = vcmask 1045509
    %v1301 = vsel %vm1300, %v1299, %v1297
    %s1302 = scalar_lea.vmem [#allocation0], 186
    %v1303 = vld [vmem:[%s1302] sm:$0x40]
    %vm1304 = vcmask 1046534
    %v1305 = vsel %vm1304, %v1303, %v1301
    %s1306 = scalar_lea.vmem [#allocation0], 217
    %v1307 = vld [vmem:[%s1306] sm:$0x80]
    %vm1308 = vcmask 1047559
    %v1309 = vsel %vm1308, %v1307, %v1305
    %vm1310 = vcmask 31744
    %1311 = vst.msk [vmem:[%s1] sm:$0xff] %vm1310, %v1309
    %s1312 = scalar_lea.vmem [#allocation0], 256
    %v1313 = vld [vmem:[%s1312] sm:$0x1]
    %s1314 = scalar_lea.vmem [#allocation0], 287
    %v1315 = vld [vmem:[%s1314] sm:$0x2]
    %vm1316 = vcmask 1041409
    %v1317 = vsel %vm1316, %v1315, %v1313
    %s1318 = scalar_lea.vmem [#allocation0], 318
    %v1319 = vld [vmem:[%s1318] sm:$0x4]
    %vm1320 = vcmask 1042434
    %v1321 = vsel %vm1320, %v1319, %v1317
    %s1322 = scalar_lea.vmem [#allocation0], 349
    %v1323 = vld [vmem:[%s1322] sm:$0x8]
    %vm1324 = vcmask 1043459
    %v1325 = vsel %vm1324, %v1323, %v1321
    %s1326 = scalar_lea.vmem [#allocation0], 380
    %v1327 = vld [vmem:[%s1326] sm:$0x10]
    %vm1328 = vcmask 1044484
    %v1329 = vsel %vm1328, %v1327, %v1325
    %s1330 = scalar_lea.vmem [#allocation0], 411
    %v1331 = vld [vmem:[%s1330] sm:$0x20]
    %vm1332 = vcmask 1045509
    %v1333 = vsel %vm1332, %v1331, %v1329
    %s1334 = scalar_lea.vmem [#allocation0], 442
    %v1335 = vld [vmem:[%s1334] sm:$0x40]
    %vm1336 = vcmask 1046534
    %v1337 = vsel %vm1336, %v1335, %v1333
    %s1338 = scalar_lea.vmem [#allocation0], 473
    %v1339 = vld [vmem:[%s1338] sm:$0x80]
    %vm1340 = vcmask 1047559
    %v1341 = vsel %vm1340, %v1339, %v1337
    %vm1342 = vcmask 31744
    %s1343 = scalar_lea.vmem %s1, 8
    %1344 = vst.msk [vmem:[%s1343] sm:$0xff] %vm1342, %v1341
    %s1345 = scalar_lea.vmem [#allocation0], 512
    %v1346 = vld [vmem:[%s1345] sm:$0x1]
    %s1347 = scalar_lea.vmem [#allocation0], 543
    %v1348 = vld [vmem:[%s1347] sm:$0x2]
    %vm1349 = vcmask 1041409
    %v1350 = vsel %vm1349, %v1348, %v1346
    %s1351 = scalar_lea.vmem [#allocation0], 574
    %v1352 = vld [vmem:[%s1351] sm:$0x4]
    %vm1353 = vcmask 1042434
    %v1354 = vsel %vm1353, %v1352, %v1350
    %s1355 = scalar_lea.vmem [#allocation0], 605
    %v1356 = vld [vmem:[%s1355] sm:$0x8]
    %vm1357 = vcmask 1043459
    %v1358 = vsel %vm1357, %v1356, %v1354
    %s1359 = scalar_lea.vmem [#allocation0], 636
    %v1360 = vld [vmem:[%s1359] sm:$0x10]
    %vm1361 = vcmask 1044484
    %v1362 = vsel %vm1361, %v1360, %v1358
    %s1363 = scalar_lea.vmem [#allocation0], 667
    %v1364 = vld [vmem:[%s1363] sm:$0x20]
    %vm1365 = vcmask 1045509
    %v1366 = vsel %vm1365, %v1364, %v1362
    %s1367 = scalar_lea.vmem [#allocation0], 698
    %v1368 = vld [vmem:[%s1367] sm:$0x40]
    %vm1369 = vcmask 1046534
    %v1370 = vsel %vm1369, %v1368, %v1366
    %s1371 = scalar_lea.vmem [#allocation0], 729
    %v1372 = vld [vmem:[%s1371] sm:$0x80]
    %vm1373 = vcmask 1047559
    %v1374 = vsel %vm1373, %v1372, %v1370
    %vm1375 = vcmask 31744
    %s1376 = scalar_lea.vmem %s1, 16
    %1377 = vst.msk [vmem:[%s1376] sm:$0xff] %vm1375, %v1374
    %s1378 = scalar_lea.vmem [#allocation0], 768
    %v1379 = vld [vmem:[%s1378] sm:$0x1]
    %s1380 = scalar_lea.vmem [#allocation0], 799
    %v1381 = vld [vmem:[%s1380] sm:$0x2]
    %vm1382 = vcmask 1041409
    %v1383 = vsel %vm1382, %v1381, %v1379
    %s1384 = scalar_lea.vmem [#allocation0], 830
    %v1385 = vld [vmem:[%s1384] sm:$0x4]
    %vm1386 = vcmask 1042434
    %v1387 = vsel %vm1386, %v1385, %v1383
    %s1388 = scalar_lea.vmem [#allocation0], 861
    %v1389 = vld [vmem:[%s1388] sm:$0x8]
    %vm1390 = vcmask 1043459
    %v1391 = vsel %vm1390, %v1389, %v1387
    %s1392 = scalar_lea.vmem [#allocation0], 892
    %v1393 = vld [vmem:[%s1392] sm:$0x10]
    %vm1394 = vcmask 1044484
    %v1395 = vsel %vm1394, %v1393, %v1391
    %s1396 = scalar_lea.vmem [#allocation0], 923
    %v1397 = vld [vmem:[%s1396] sm:$0x20]
    %vm1398 = vcmask 1045509
    %v1399 = vsel %vm1398, %v1397, %v1395
    %s1400 = scalar_lea.vmem [#allocation0], 954
    %v1401 = vld [vmem:[%s1400] sm:$0x40]
    %vm1402 = vcmask 1046534
    %v1403 = vsel %vm1402, %v1401, %v1399
    %s1404 = scalar_lea.vmem [#allocation0], 985
    %v1405 = vld [vmem:[%s1404] sm:$0x80]
    %vm1406 = vcmask 1047559
    %v1407 = vsel %vm1406, %v1405, %v1403
    %vm1408 = vcmask 31744
    %s1409 = scalar_lea.vmem %s1, 24
    %1410 = vst.msk [vmem:[%s1409] sm:$0xff] %vm1408, %v1407
    %s1411 = scalar_lea.vmem [#allocation0], 1024
    %v1412 = vld [vmem:[%s1411] sm:$0x1]
    %s1413 = scalar_lea.vmem [#allocation0], 1055
    %v1414 = vld [vmem:[%s1413] sm:$0x2]
    %vm1415 = vcmask 1041409
    %v1416 = vsel %vm1415, %v1414, %v1412
    %s1417 = scalar_lea.vmem [#allocation0], 1086
    %v1418 = vld [vmem:[%s1417] sm:$0x4]
    %vm1419 = vcmask 1042434
    %v1420 = vsel %vm1419, %v1418, %v1416
    %s1421 = scalar_lea.vmem [#allocation0], 1117
    %v1422 = vld [vmem:[%s1421] sm:$0x8]
    %vm1423 = vcmask 1043459
    %v1424 = vsel %vm1423, %v1422, %v1420
    %s1425 = scalar_lea.vmem [#allocation0], 1148
    %v1426 = vld [vmem:[%s1425] sm:$0x10]
    %vm1427 = vcmask 1044484
    %v1428 = vsel %vm1427, %v1426, %v1424
    %s1429 = scalar_lea.vmem [#allocation0], 1179
    %v1430 = vld [vmem:[%s1429] sm:$0x20]
    %vm1431 = vcmask 1045509
    %v1432 = vsel %vm1431, %v1430, %v1428
    %s1433 = scalar_lea.vmem [#allocation0], 1210
    %v1434 = vld [vmem:[%s1433] sm:$0x40]
    %vm1435 = vcmask 1046534
    %v1436 = vsel %vm1435, %v1434, %v1432
    %s1437 = scalar_lea.vmem [#allocation0], 1241
    %v1438 = vld [vmem:[%s1437] sm:$0x80]
    %vm1439 = vcmask 1047559
    %v1440 = vsel %vm1439, %v1438, %v1436
    %vm1441 = vcmask 31744
    %s1442 = scalar_lea.vmem %s1, 32
    %1443 = vst.msk [vmem:[%s1442] sm:$0xff] %vm1441, %v1440
    %s1444 = scalar_lea.vmem [#allocation0], 1280
    %v1445 = vld [vmem:[%s1444] sm:$0x1]
    %s1446 = scalar_lea.vmem [#allocation0], 1311
    %v1447 = vld [vmem:[%s1446] sm:$0x2]
    %vm1448 = vcmask 1041409
    %v1449 = vsel %vm1448, %v1447, %v1445
    %s1450 = scalar_lea.vmem [#allocation0], 1342
    %v1451 = vld [vmem:[%s1450] sm:$0x4]
    %vm1452 = vcmask 1042434
    %v1453 = vsel %vm1452, %v1451, %v1449
    %s1454 = scalar_lea.vmem [#allocation0], 1373
    %v1455 = vld [vmem:[%s1454] sm:$0x8]
    %vm1456 = vcmask 1043459
    %v1457 = vsel %vm1456, %v1455, %v1453
    %s1458 = scalar_lea.vmem [#allocation0], 1404
    %v1459 = vld [vmem:[%s1458] sm:$0x10]
    %vm1460 = vcmask 1044484
    %v1461 = vsel %vm1460, %v1459, %v1457
    %s1462 = scalar_lea.vmem [#allocation0], 1435
    %v1463 = vld [vmem:[%s1462] sm:$0x20]
    %vm1464 = vcmask 1045509
    %v1465 = vsel %vm1464, %v1463, %v1461
    %s1466 = scalar_lea.vmem [#allocation0], 1466
    %v1467 = vld [vmem:[%s1466] sm:$0x40]
    %vm1468 = vcmask 1046534
    %v1469 = vsel %vm1468, %v1467, %v1465
    %s1470 = scalar_lea.vmem [#allocation0], 1497
    %v1471 = vld [vmem:[%s1470] sm:$0x80]
    %vm1472 = vcmask 1047559
    %v1473 = vsel %vm1472, %v1471, %v1469
    %vm1474 = vcmask 31744
    %s1475 = scalar_lea.vmem %s1, 40
    %1476 = vst.msk [vmem:[%s1475] sm:$0xff] %vm1474, %v1473
    %s1477 = scalar_lea.vmem [#allocation0], 1536
    %v1478 = vld [vmem:[%s1477] sm:$0x1]
    %s1479 = scalar_lea.vmem [#allocation0], 1567
    %v1480 = vld [vmem:[%s1479] sm:$0x2]
    %vm1481 = vcmask 1041409
    %v1482 = vsel %vm1481, %v1480, %v1478
    %s1483 = scalar_lea.vmem [#allocation0], 1598
    %v1484 = vld [vmem:[%s1483] sm:$0x4]
    %vm1485 = vcmask 1042434
    %v1486 = vsel %vm1485, %v1484, %v1482
    %s1487 = scalar_lea.vmem [#allocation0], 1629
    %v1488 = vld [vmem:[%s1487] sm:$0x8]
    %vm1489 = vcmask 1043459
    %v1490 = vsel %vm1489, %v1488, %v1486
    %s1491 = scalar_lea.vmem [#allocation0], 1660
    %v1492 = vld [vmem:[%s1491] sm:$0x10]
    %vm1493 = vcmask 1044484
    %v1494 = vsel %vm1493, %v1492, %v1490
    %s1495 = scalar_lea.vmem [#allocation0], 1691
    %v1496 = vld [vmem:[%s1495] sm:$0x20]
    %vm1497 = vcmask 1045509
    %v1498 = vsel %vm1497, %v1496, %v1494
    %s1499 = scalar_lea.vmem [#allocation0], 1722
    %v1500 = vld [vmem:[%s1499] sm:$0x40]
    %vm1501 = vcmask 1046534
    %v1502 = vsel %vm1501, %v1500, %v1498
    %s1503 = scalar_lea.vmem [#allocation0], 1753
    %v1504 = vld [vmem:[%s1503] sm:$0x80]
    %vm1505 = vcmask 1047559
    %v1506 = vsel %vm1505, %v1504, %v1502
    %vm1507 = vcmask 31744
    %s1508 = scalar_lea.vmem %s1, 48
    %1509 = vst.msk [vmem:[%s1508] sm:$0xff] %vm1507, %v1506
    %s1510 = scalar_lea.vmem [#allocation0], 1792
    %v1511 = vld [vmem:[%s1510] sm:$0x1]
    %s1512 = scalar_lea.vmem [#allocation0], 1823
    %v1513 = vld [vmem:[%s1512] sm:$0x2]
    %vm1514 = vcmask 1041409
    %v1515 = vsel %vm1514, %v1513, %v1511
    %s1516 = scalar_lea.vmem [#allocation0], 1854
    %v1517 = vld [vmem:[%s1516] sm:$0x4]
    %vm1518 = vcmask 1042434
    %v1519 = vsel %vm1518, %v1517, %v1515
    %s1520 = scalar_lea.vmem [#allocation0], 1885
    %v1521 = vld [vmem:[%s1520] sm:$0x8]
    %vm1522 = vcmask 1043459
    %v1523 = vsel %vm1522, %v1521, %v1519
    %s1524 = scalar_lea.vmem [#allocation0], 1916
    %v1525 = vld [vmem:[%s1524] sm:$0x10]
    %vm1526 = vcmask 1044484
    %v1527 = vsel %vm1526, %v1525, %v1523
    %s1528 = scalar_lea.vmem [#allocation0], 1947
    %v1529 = vld [vmem:[%s1528] sm:$0x20]
    %vm1530 = vcmask 1045509
    %v1531 = vsel %vm1530, %v1529, %v1527
    %s1532 = scalar_lea.vmem [#allocation0], 1978
    %v1533 = vld [vmem:[%s1532] sm:$0x40]
    %vm1534 = vcmask 1046534
    %v1535 = vsel %vm1534, %v1533, %v1531
    %s1536 = scalar_lea.vmem [#allocation0], 2009
    %v1537 = vld [vmem:[%s1536] sm:$0x80]
    %vm1538 = vcmask 1047559
    %v1539 = vsel %vm1538, %v1537, %v1535
    %vm1540 = vcmask 31744
    %s1541 = scalar_lea.vmem %s1, 56
    %1542 = vst.msk [vmem:[%s1541] sm:$0xff] %vm1540, %v1539
    %s1543 = scalar_lea.vmem [#allocation0], 27
    %v1544 = vld [vmem:[%s1543] sm:$0x1]
    %s1545 = scalar_lea.vmem [#allocation0], 58
    %v1546 = vld [vmem:[%s1545] sm:$0x2]
    %vm1547 = vcmask 1041409
    %v1548 = vsel %vm1547, %v1546, %v1544
    %s1549 = scalar_lea.vmem [#allocation0], 89
    %v1550 = vld [vmem:[%s1549] sm:$0x4]
    %vm1551 = vcmask 1042434
    %v1552 = vsel %vm1551, %v1550, %v1548
    %s1553 = scalar_lea.vmem [#allocation0], 120
    %v1554 = vld [vmem:[%s1553] sm:$0x8]
    %vm1555 = vcmask 1043459
    %v1556 = vsel %vm1555, %v1554, %v1552
    %s1557 = scalar_lea.vmem [#allocation0], 151
    %v1558 = vld [vmem:[%s1557] sm:$0x10]
    %vm1559 = vcmask 1044484
    %v1560 = vsel %vm1559, %v1558, %v1556
    %s1561 = scalar_lea.vmem [#allocation0], 182
    %v1562 = vld [vmem:[%s1561] sm:$0x20]
    %vm1563 = vcmask 1045509
    %v1564 = vsel %vm1563, %v1562, %v1560
    %s1565 = scalar_lea.vmem [#allocation0], 213
    %v1566 = vld [vmem:[%s1565] sm:$0x40]
    %vm1567 = vcmask 1046534
    %v1568 = vsel %vm1567, %v1566, %v1564
    %s1569 = scalar_lea.vmem [#allocation0], 244
    %v1570 = vld [vmem:[%s1569] sm:$0x80]
    %vm1571 = vcmask 1047559
    %v1572 = vsel %vm1571, %v1570, %v1568
    %1573 = vrot.lane.b32.xlu0 %v1572, 60
    %v1574 = vpop.permute.xlu0 %1573
    %vm1575 = vcmask 523744
    %1576 = vst.msk [vmem:[%s1] sm:$0xff] %vm1575, %v1574
    %s1577 = scalar_lea.vmem [#allocation0], 1051
    %v1578 = vld [vmem:[%s1577] sm:$0x1]
    %s1579 = scalar_lea.vmem [#allocation0], 1082
    %v1580 = vld [vmem:[%s1579] sm:$0x2]
    %vm1581 = vcmask 1041409
    %v1582 = vsel %vm1581, %v1580, %v1578
    %s1583 = scalar_lea.vmem [#allocation0], 1113
    %v1584 = vld [vmem:[%s1583] sm:$0x4]
    %vm1585 = vcmask 1042434
    %v1586 = vsel %vm1585, %v1584, %v1582
    %s1587 = scalar_lea.vmem [#allocation0], 1144
    %v1588 = vld [vmem:[%s1587] sm:$0x8]
    %vm1589 = vcmask 1043459
    %v1590 = vsel %vm1589, %v1588, %v1586
    %s1591 = scalar_lea.vmem [#allocation0], 1175
    %v1592 = vld [vmem:[%s1591] sm:$0x10]
    %vm1593 = vcmask 1044484
    %v1594 = vsel %vm1593, %v1592, %v1590
    %s1595 = scalar_lea.vmem [#allocation0], 1206
    %v1596 = vld [vmem:[%s1595] sm:$0x20]
    %vm1597 = vcmask 1045509
    %v1598 = vsel %vm1597, %v1596, %v1594
    %s1599 = scalar_lea.vmem [#allocation0], 1237
    %v1600 = vld [vmem:[%s1599] sm:$0x40]
    %vm1601 = vcmask 1046534
    %v1602 = vsel %vm1601, %v1600, %v1598
    %s1603 = scalar_lea.vmem [#allocation0], 1268
    %v1604 = vld [vmem:[%s1603] sm:$0x80]
    %vm1605 = vcmask 1047559
    %v1606 = vsel %vm1605, %v1604, %v1602
    %1607 = vrot.lane.b32.xlu0 %v1606, 60
    %v1608 = vpop.permute.xlu0 %1607
    %vm1609 = vcmask 523744
    %s1610 = scalar_lea.vmem %s1, 32
    %1611 = vst.msk [vmem:[%s1610] sm:$0xff] %vm1609, %v1608
    %s1612 = scalar_lea.vmem [#allocation0], 283
    %v1613 = vld [vmem:[%s1612] sm:$0x1]
    %s1614 = scalar_lea.vmem [#allocation0], 314
    %v1615 = vld [vmem:[%s1614] sm:$0x2]
    %vm1616 = vcmask 1041409
    %v1617 = vsel %vm1616, %v1615, %v1613
    %s1618 = scalar_lea.vmem [#allocation0], 345
    %v1619 = vld [vmem:[%s1618] sm:$0x4]
    %vm1620 = vcmask 1042434
    %v1621 = vsel %vm1620, %v1619, %v1617
    %s1622 = scalar_lea.vmem [#allocation0], 376
    %v1623 = vld [vmem:[%s1622] sm:$0x8]
    %vm1624 = vcmask 1043459
    %v1625 = vsel %vm1624, %v1623, %v1621
    %s1626 = scalar_lea.vmem [#allocation0], 407
    %v1627 = vld [vmem:[%s1626] sm:$0x10]
    %vm1628 = vcmask 1044484
    %v1629 = vsel %vm1628, %v1627, %v1625
    %s1630 = scalar_lea.vmem [#allocation0], 438
    %v1631 = vld [vmem:[%s1630] sm:$0x20]
    %vm1632 = vcmask 1045509
    %v1633 = vsel %vm1632, %v1631, %v1629
    %s1634 = scalar_lea.vmem [#allocation0], 469
    %v1635 = vld [vmem:[%s1634] sm:$0x40]
    %vm1636 = vcmask 1046534
    %v1637 = vsel %vm1636, %v1635, %v1633
    %s1638 = scalar_lea.vmem [#allocation0], 500
    %v1639 = vld [vmem:[%s1638] sm:$0x80]
    %vm1640 = vcmask 1047559
    %v1641 = vsel %vm1640, %v1639, %v1637
    %1642 = vrot.lane.b32.xlu0 %v1641, 60
    %v1643 = vpop.permute.xlu0 %1642
    %vm1644 = vcmask 523744
    %s1645 = scalar_lea.vmem %s1, 8
    %1646 = vst.msk [vmem:[%s1645] sm:$0xff] %vm1644, %v1643
    %s1647 = scalar_lea.vmem [#allocation0], 1307
    %v1648 = vld [vmem:[%s1647] sm:$0x1]
    %s1649 = scalar_lea.vmem [#allocation0], 1338
    %v1650 = vld [vmem:[%s1649] sm:$0x2]
    %vm1651 = vcmask 1041409
    %v1652 = vsel %vm1651, %v1650, %v1648
    %s1653 = scalar_lea.vmem [#allocation0], 1369
    %v1654 = vld [vmem:[%s1653] sm:$0x4]
    %vm1655 = vcmask 1042434
    %v1656 = vsel %vm1655, %v1654, %v1652
    %s1657 = scalar_lea.vmem [#allocation0], 1400
    %v1658 = vld [vmem:[%s1657] sm:$0x8]
    %vm1659 = vcmask 1043459
    %v1660 = vsel %vm1659, %v1658, %v1656
    %s1661 = scalar_lea.vmem [#allocation0], 1431
    %v1662 = vld [vmem:[%s1661] sm:$0x10]
    %vm1663 = vcmask 1044484
    %v1664 = vsel %vm1663, %v1662, %v1660
    %s1665 = scalar_lea.vmem [#allocation0], 1462
    %v1666 = vld [vmem:[%s1665] sm:$0x20]
    %vm1667 = vcmask 1045509
    %v1668 = vsel %vm1667, %v1666, %v1664
    %s1669 = scalar_lea.vmem [#allocation0], 1493
    %v1670 = vld [vmem:[%s1669] sm:$0x40]
    %vm1671 = vcmask 1046534
    %v1672 = vsel %vm1671, %v1670, %v1668
    %s1673 = scalar_lea.vmem [#allocation0], 1524
    %v1674 = vld [vmem:[%s1673] sm:$0x80]
    %vm1675 = vcmask 1047559
    %v1676 = vsel %vm1675, %v1674, %v1672
    %1677 = vrot.lane.b32.xlu0 %v1676, 60
    %v1678 = vpop.permute.xlu0 %1677
    %vm1679 = vcmask 523744
    %s1680 = scalar_lea.vmem %s1, 40
    %1681 = vst.msk [vmem:[%s1680] sm:$0xff] %vm1679, %v1678
    %s1682 = scalar_lea.vmem [#allocation0], 539
    %v1683 = vld [vmem:[%s1682] sm:$0x1]
    %s1684 = scalar_lea.vmem [#allocation0], 570
    %v1685 = vld [vmem:[%s1684] sm:$0x2]
    %vm1686 = vcmask 1041409
    %v1687 = vsel %vm1686, %v1685, %v1683
    %s1688 = scalar_lea.vmem [#allocation0], 601
    %v1689 = vld [vmem:[%s1688] sm:$0x4]
    %vm1690 = vcmask 1042434
    %v1691 = vsel %vm1690, %v1689, %v1687
    %s1692 = scalar_lea.vmem [#allocation0], 632
    %v1693 = vld [vmem:[%s1692] sm:$0x8]
    %vm1694 = vcmask 1043459
    %v1695 = vsel %vm1694, %v1693, %v1691
    %s1696 = scalar_lea.vmem [#allocation0], 663
    %v1697 = vld [vmem:[%s1696] sm:$0x10]
    %vm1698 = vcmask 1044484
    %v1699 = vsel %vm1698, %v1697, %v1695
    %s1700 = scalar_lea.vmem [#allocation0], 694
    %v1701 = vld [vmem:[%s1700] sm:$0x20]
    %vm1702 = vcmask 1045509
    %v1703 = vsel %vm1702, %v1701, %v1699
    %s1704 = scalar_lea.vmem [#allocation0], 725
    %v1705 = vld [vmem:[%s1704] sm:$0x40]
    %vm1706 = vcmask 1046534
    %v1707 = vsel %vm1706, %v1705, %v1703
    %s1708 = scalar_lea.vmem [#allocation0], 756
    %v1709 = vld [vmem:[%s1708] sm:$0x80]
    %vm1710 = vcmask 1047559
    %v1711 = vsel %vm1710, %v1709, %v1707
    %1712 = vrot.lane.b32.xlu0 %v1711, 60
    %v1713 = vpop.permute.xlu0 %1712
    %vm1714 = vcmask 523744
    %s1715 = scalar_lea.vmem %s1, 16
    %1716 = vst.msk [vmem:[%s1715] sm:$0xff] %vm1714, %v1713
    %s1717 = scalar_lea.vmem [#allocation0], 1563
    %v1718 = vld [vmem:[%s1717] sm:$0x1]
    %s1719 = scalar_lea.vmem [#allocation0], 1594
    %v1720 = vld [vmem:[%s1719] sm:$0x2]
    %vm1721 = vcmask 1041409
    %v1722 = vsel %vm1721, %v1720, %v1718
    %s1723 = scalar_lea.vmem [#allocation0], 1625
    %v1724 = vld [vmem:[%s1723] sm:$0x4]
    %vm1725 = vcmask 1042434
    %v1726 = vsel %vm1725, %v1724, %v1722
    %s1727 = scalar_lea.vmem [#allocation0], 1656
    %v1728 = vld [vmem:[%s1727] sm:$0x8]
    %vm1729 = vcmask 1043459
    %v1730 = vsel %vm1729, %v1728, %v1726
    %s1731 = scalar_lea.vmem [#allocation0], 1687
    %v1732 = vld [vmem:[%s1731] sm:$0x10]
    %vm1733 = vcmask 1044484
    %v1734 = vsel %vm1733, %v1732, %v1730
    %s1735 = scalar_lea.vmem [#allocation0], 1718
    %v1736 = vld [vmem:[%s1735] sm:$0x20]
    %vm1737 = vcmask 1045509
    %v1738 = vsel %vm1737, %v1736, %v1734
    %s1739 = scalar_lea.vmem [#allocation0], 1749
    %v1740 = vld [vmem:[%s1739] sm:$0x40]
    %vm1741 = vcmask 1046534
    %v1742 = vsel %vm1741, %v1740, %v1738
    %s1743 = scalar_lea.vmem [#allocation0], 1780
    %v1744 = vld [vmem:[%s1743] sm:$0x80]
    %vm1745 = vcmask 1047559
    %v1746 = vsel %vm1745, %v1744, %v1742
    %1747 = vrot.lane.b32.xlu0 %v1746, 60
    %v1748 = vpop.permute.xlu0 %1747
    %vm1749 = vcmask 523744
    %s1750 = scalar_lea.vmem %s1, 48
    %1751 = vst.msk [vmem:[%s1750] sm:$0xff] %vm1749, %v1748
    %s1752 = scalar_lea.vmem [#allocation0], 795
    %v1753 = vld [vmem:[%s1752] sm:$0x1]
    %s1754 = scalar_lea.vmem [#allocation0], 826
    %v1755 = vld [vmem:[%s1754] sm:$0x2]
    %vm1756 = vcmask 1041409
    %v1757 = vsel %vm1756, %v1755, %v1753
    %s1758 = scalar_lea.vmem [#allocation0], 857
    %v1759 = vld [vmem:[%s1758] sm:$0x4]
    %vm1760 = vcmask 1042434
    %v1761 = vsel %vm1760, %v1759, %v1757
    %s1762 = scalar_lea.vmem [#allocation0], 888
    %v1763 = vld [vmem:[%s1762] sm:$0x8]
    %vm1764 = vcmask 1043459
    %v1765 = vsel %vm1764, %v1763, %v1761
    %s1766 = scalar_lea.vmem [#allocation0], 919
    %v1767 = vld [vmem:[%s1766] sm:$0x10]
    %vm1768 = vcmask 1044484
    %v1769 = vsel %vm1768, %v1767, %v1765
    %s1770 = scalar_lea.vmem [#allocation0], 950
    %v1771 = vld [vmem:[%s1770] sm:$0x20]
    %vm1772 = vcmask 1045509
    %v1773 = vsel %vm1772, %v1771, %v1769
    %s1774 = scalar_lea.vmem [#allocation0], 981
    %v1775 = vld [vmem:[%s1774] sm:$0x40]
    %vm1776 = vcmask 1046534
    %v1777 = vsel %vm1776, %v1775, %v1773
    %s1778 = scalar_lea.vmem [#allocation0], 1012
    %v1779 = vld [vmem:[%s1778] sm:$0x80]
    %vm1780 = vcmask 1047559
    %v1781 = vsel %vm1780, %v1779, %v1777
    %1782 = vrot.lane.b32.xlu0 %v1781, 60
    %v1783 = vpop.permute.xlu0 %1782
    %vm1784 = vcmask 523744
    %s1785 = scalar_lea.vmem %s1, 24
    %1786 = vst.msk [vmem:[%s1785] sm:$0xff] %vm1784, %v1783
    %s1787 = scalar_lea.vmem [#allocation0], 1819
    %v1788 = vld [vmem:[%s1787] sm:$0x1]
    %s1789 = scalar_lea.vmem [#allocation0], 1850
    %v1790 = vld [vmem:[%s1789] sm:$0x2]
    %vm1791 = vcmask 1041409
    %v1792 = vsel %vm1791, %v1790, %v1788
    %s1793 = scalar_lea.vmem [#allocation0], 1881
    %v1794 = vld [vmem:[%s1793] sm:$0x4]
    %vm1795 = vcmask 1042434
    %v1796 = vsel %vm1795, %v1794, %v1792
    %s1797 = scalar_lea.vmem [#allocation0], 1912
    %v1798 = vld [vmem:[%s1797] sm:$0x8]
    %vm1799 = vcmask 1043459
    %v1800 = vsel %vm1799, %v1798, %v1796
    %s1801 = scalar_lea.vmem [#allocation0], 1943
    %v1802 = vld [vmem:[%s1801] sm:$0x10]
    %vm1803 = vcmask 1044484
    %v1804 = vsel %vm1803, %v1802, %v1800
    %s1805 = scalar_lea.vmem [#allocation0], 1974
    %v1806 = vld [vmem:[%s1805] sm:$0x20]
    %vm1807 = vcmask 1045509
    %v1808 = vsel %vm1807, %v1806, %v1804
    %s1809 = scalar_lea.vmem [#allocation0], 2005
    %v1810 = vld [vmem:[%s1809] sm:$0x40]
    %vm1811 = vcmask 1046534
    %v1812 = vsel %vm1811, %v1810, %v1808
    %s1813 = scalar_lea.vmem [#allocation0], 2036
    %v1814 = vld [vmem:[%s1813] sm:$0x80]
    %vm1815 = vcmask 1047559
    %v1816 = vsel %vm1815, %v1814, %v1812
    %1817 = vrot.lane.b32.xlu0 %v1816, 60
    %v1818 = vpop.permute.xlu0 %1817
    %vm1819 = vcmask 523744
    %s1820 = scalar_lea.vmem %s1, 56
    %1821 = vst.msk [vmem:[%s1820] sm:$0xff] %vm1819, %v1818
    %s1822 = scalar_lea.vmem [#allocation0], 26
    %v1823 = vld [vmem:[%s1822] sm:$0x1]
    %s1824 = scalar_lea.vmem [#allocation0], 57
    %v1825 = vld [vmem:[%s1824] sm:$0x2]
    %vm1826 = vcmask 1041409
    %v1827 = vsel %vm1826, %v1825, %v1823
    %s1828 = scalar_lea.vmem [#allocation0], 88
    %v1829 = vld [vmem:[%s1828] sm:$0x4]
    %vm1830 = vcmask 1042434
    %v1831 = vsel %vm1830, %v1829, %v1827
    %s1832 = scalar_lea.vmem [#allocation0], 119
    %v1833 = vld [vmem:[%s1832] sm:$0x8]
    %vm1834 = vcmask 1043459
    %v1835 = vsel %vm1834, %v1833, %v1831
    %s1836 = scalar_lea.vmem [#allocation0], 150
    %v1837 = vld [vmem:[%s1836] sm:$0x10]
    %vm1838 = vcmask 1044484
    %v1839 = vsel %vm1838, %v1837, %v1835
    %s1840 = scalar_lea.vmem [#allocation0], 181
    %v1841 = vld [vmem:[%s1840] sm:$0x20]
    %vm1842 = vcmask 1045509
    %v1843 = vsel %vm1842, %v1841, %v1839
    %s1844 = scalar_lea.vmem [#allocation0], 212
    %v1845 = vld [vmem:[%s1844] sm:$0x40]
    %vm1846 = vcmask 1046534
    %v1847 = vsel %vm1846, %v1845, %v1843
    %s1848 = scalar_lea.vmem [#allocation0], 243
    %v1849 = vld [vmem:[%s1848] sm:$0x80]
    %vm1850 = vcmask 1047559
    %v1851 = vsel %vm1850, %v1849, %v1847
    %1852 = vrot.lane.b32.xlu0 %v1851, 56
    %v1853 = vpop.permute.xlu0 %1852
    %vm1854 = vcmask 490944
    %1855 = vst.msk [vmem:[%s1] sm:$0xff] %vm1854, %v1853
    %s1856 = scalar_lea.vmem [#allocation0], 1050
    %v1857 = vld [vmem:[%s1856] sm:$0x1]
    %s1858 = scalar_lea.vmem [#allocation0], 1081
    %v1859 = vld [vmem:[%s1858] sm:$0x2]
    %vm1860 = vcmask 1041409
    %v1861 = vsel %vm1860, %v1859, %v1857
    %s1862 = scalar_lea.vmem [#allocation0], 1112
    %v1863 = vld [vmem:[%s1862] sm:$0x4]
    %vm1864 = vcmask 1042434
    %v1865 = vsel %vm1864, %v1863, %v1861
    %s1866 = scalar_lea.vmem [#allocation0], 1143
    %v1867 = vld [vmem:[%s1866] sm:$0x8]
    %vm1868 = vcmask 1043459
    %v1869 = vsel %vm1868, %v1867, %v1865
    %s1870 = scalar_lea.vmem [#allocation0], 1174
    %v1871 = vld [vmem:[%s1870] sm:$0x10]
    %vm1872 = vcmask 1044484
    %v1873 = vsel %vm1872, %v1871, %v1869
    %s1874 = scalar_lea.vmem [#allocation0], 1205
    %v1875 = vld [vmem:[%s1874] sm:$0x20]
    %vm1876 = vcmask 1045509
    %v1877 = vsel %vm1876, %v1875, %v1873
    %s1878 = scalar_lea.vmem [#allocation0], 1236
    %v1879 = vld [vmem:[%s1878] sm:$0x40]
    %vm1880 = vcmask 1046534
    %v1881 = vsel %vm1880, %v1879, %v1877
    %s1882 = scalar_lea.vmem [#allocation0], 1267
    %v1883 = vld [vmem:[%s1882] sm:$0x80]
    %vm1884 = vcmask 1047559
    %v1885 = vsel %vm1884, %v1883, %v1881
    %1886 = vrot.lane.b32.xlu0 %v1885, 56
    %v1887 = vpop.permute.xlu0 %1886
    %vm1888 = vcmask 490944
    %s1889 = scalar_lea.vmem %s1, 32
    %1890 = vst.msk [vmem:[%s1889] sm:$0xff] %vm1888, %v1887
    %s1891 = scalar_lea.vmem [#allocation0], 282
    %v1892 = vld [vmem:[%s1891] sm:$0x1]
    %s1893 = scalar_lea.vmem [#allocation0], 313
    %v1894 = vld [vmem:[%s1893] sm:$0x2]
    %vm1895 = vcmask 1041409
    %v1896 = vsel %vm1895, %v1894, %v1892
    %s1897 = scalar_lea.vmem [#allocation0], 344
    %v1898 = vld [vmem:[%s1897] sm:$0x4]
    %vm1899 = vcmask 1042434
    %v1900 = vsel %vm1899, %v1898, %v1896
    %s1901 = scalar_lea.vmem [#allocation0], 375
    %v1902 = vld [vmem:[%s1901] sm:$0x8]
    %vm1903 = vcmask 1043459
    %v1904 = vsel %vm1903, %v1902, %v1900
    %s1905 = scalar_lea.vmem [#allocation0], 406
    %v1906 = vld [vmem:[%s1905] sm:$0x10]
    %vm1907 = vcmask 1044484
    %v1908 = vsel %vm1907, %v1906, %v1904
    %s1909 = scalar_lea.vmem [#allocation0], 437
    %v1910 = vld [vmem:[%s1909] sm:$0x20]
    %vm1911 = vcmask 1045509
    %v1912 = vsel %vm1911, %v1910, %v1908
    %s1913 = scalar_lea.vmem [#allocation0], 468
    %v1914 = vld [vmem:[%s1913] sm:$0x40]
    %vm1915 = vcmask 1046534
    %v1916 = vsel %vm1915, %v1914, %v1912
    %s1917 = scalar_lea.vmem [#allocation0], 499
    %v1918 = vld [vmem:[%s1917] sm:$0x80]
    %vm1919 = vcmask 1047559
    %v1920 = vsel %vm1919, %v1918, %v1916
    %1921 = vrot.lane.b32.xlu0 %v1920, 56
    %v1922 = vpop.permute.xlu0 %1921
    %vm1923 = vcmask 490944
    %s1924 = scalar_lea.vmem %s1, 8
    %1925 = vst.msk [vmem:[%s1924] sm:$0xff] %vm1923, %v1922
    %s1926 = scalar_lea.vmem [#allocation0], 1306
    %v1927 = vld [vmem:[%s1926] sm:$0x1]
    %s1928 = scalar_lea.vmem [#allocation0], 1337
    %v1929 = vld [vmem:[%s1928] sm:$0x2]
    %vm1930 = vcmask 1041409
    %v1931 = vsel %vm1930, %v1929, %v1927
    %s1932 = scalar_lea.vmem [#allocation0], 1368
    %v1933 = vld [vmem:[%s1932] sm:$0x4]
    %vm1934 = vcmask 1042434
    %v1935 = vsel %vm1934, %v1933, %v1931
    %s1936 = scalar_lea.vmem [#allocation0], 1399
    %v1937 = vld [vmem:[%s1936] sm:$0x8]
    %vm1938 = vcmask 1043459
    %v1939 = vsel %vm1938, %v1937, %v1935
    %s1940 = scalar_lea.vmem [#allocation0], 1430
    %v1941 = vld [vmem:[%s1940] sm:$0x10]
    %vm1942 = vcmask 1044484
    %v1943 = vsel %vm1942, %v1941, %v1939
    %s1944 = scalar_lea.vmem [#allocation0], 1461
    %v1945 = vld [vmem:[%s1944] sm:$0x20]
    %vm1946 = vcmask 1045509
    %v1947 = vsel %vm1946, %v1945, %v1943
    %s1948 = scalar_lea.vmem [#allocation0], 1492
    %v1949 = vld [vmem:[%s1948] sm:$0x40]
    %vm1950 = vcmask 1046534
    %v1951 = vsel %vm1950, %v1949, %v1947
    %s1952 = scalar_lea.vmem [#allocation0], 1523
    %v1953 = vld [vmem:[%s1952] sm:$0x80]
    %vm1954 = vcmask 1047559
    %v1955 = vsel %vm1954, %v1953, %v1951
    %1956 = vrot.lane.b32.xlu0 %v1955, 56
    %v1957 = vpop.permute.xlu0 %1956
    %vm1958 = vcmask 490944
    %s1959 = scalar_lea.vmem %s1, 40
    %1960 = vst.msk [vmem:[%s1959] sm:$0xff] %vm1958, %v1957
    %s1961 = scalar_lea.vmem [#allocation0], 538
    %v1962 = vld [vmem:[%s1961] sm:$0x1]
    %s1963 = scalar_lea.vmem [#allocation0], 569
    %v1964 = vld [vmem:[%s1963] sm:$0x2]
    %vm1965 = vcmask 1041409
    %v1966 = vsel %vm1965, %v1964, %v1962
    %s1967 = scalar_lea.vmem [#allocation0], 600
    %v1968 = vld [vmem:[%s1967] sm:$0x4]
    %vm1969 = vcmask 1042434
    %v1970 = vsel %vm1969, %v1968, %v1966
    %s1971 = scalar_lea.vmem [#allocation0], 631
    %v1972 = vld [vmem:[%s1971] sm:$0x8]
    %vm1973 = vcmask 1043459
    %v1974 = vsel %vm1973, %v1972, %v1970
    %s1975 = scalar_lea.vmem [#allocation0], 662
    %v1976 = vld [vmem:[%s1975] sm:$0x10]
    %vm1977 = vcmask 1044484
    %v1978 = vsel %vm1977, %v1976, %v1974
    %s1979 = scalar_lea.vmem [#allocation0], 693
    %v1980 = vld [vmem:[%s1979] sm:$0x20]
    %vm1981 = vcmask 1045509
    %v1982 = vsel %vm1981, %v1980, %v1978
    %s1983 = scalar_lea.vmem [#allocation0], 724
    %v1984 = vld [vmem:[%s1983] sm:$0x40]
    %vm1985 = vcmask 1046534
    %v1986 = vsel %vm1985, %v1984, %v1982
    %s1987 = scalar_lea.vmem [#allocation0], 755
    %v1988 = vld [vmem:[%s1987] sm:$0x80]
    %vm1989 = vcmask 1047559
    %v1990 = vsel %vm1989, %v1988, %v1986
    %1991 = vrot.lane.b32.xlu0 %v1990, 56
    %v1992 = vpop.permute.xlu0 %1991
    %vm1993 = vcmask 490944
    %s1994 = scalar_lea.vmem %s1, 16
    %1995 = vst.msk [vmem:[%s1994] sm:$0xff] %vm1993, %v1992
    %s1996 = scalar_lea.vmem [#allocation0], 1562
    %v1997 = vld [vmem:[%s1996] sm:$0x1]
    %s1998 = scalar_lea.vmem [#allocation0], 1593
    %v1999 = vld [vmem:[%s1998] sm:$0x2]
    %vm2000 = vcmask 1041409
    %v2001 = vsel %vm2000, %v1999, %v1997
    %s2002 = scalar_lea.vmem [#allocation0], 1624
    %v2003 = vld [vmem:[%s2002] sm:$0x4]
    %vm2004 = vcmask 1042434
    %v2005 = vsel %vm2004, %v2003, %v2001
    %s2006 = scalar_lea.vmem [#allocation0], 1655
    %v2007 = vld [vmem:[%s2006] sm:$0x8]
    %vm2008 = vcmask 1043459
    %v2009 = vsel %vm2008, %v2007, %v2005
    %s2010 = scalar_lea.vmem [#allocation0], 1686
    %v2011 = vld [vmem:[%s2010] sm:$0x10]
    %vm2012 = vcmask 1044484
    %v2013 = vsel %vm2012, %v2011, %v2009
    %s2014 = scalar_lea.vmem [#allocation0], 1717
    %v2015 = vld [vmem:[%s2014] sm:$0x20]
    %vm2016 = vcmask 1045509
    %v2017 = vsel %vm2016, %v2015, %v2013
    %s2018 = scalar_lea.vmem [#allocation0], 1748
    %v2019 = vld [vmem:[%s2018] sm:$0x40]
    %vm2020 = vcmask 1046534
    %v2021 = vsel %vm2020, %v2019, %v2017
    %s2022 = scalar_lea.vmem [#allocation0], 1779
    %v2023 = vld [vmem:[%s2022] sm:$0x80]
    %vm2024 = vcmask 1047559
    %v2025 = vsel %vm2024, %v2023, %v2021
    %2026 = vrot.lane.b32.xlu0 %v2025, 56
    %v2027 = vpop.permute.xlu0 %2026
    %vm2028 = vcmask 490944
    %s2029 = scalar_lea.vmem %s1, 48
    %2030 = vst.msk [vmem:[%s2029] sm:$0xff] %vm2028, %v2027
    %s2031 = scalar_lea.vmem [#allocation0], 794
    %v2032 = vld [vmem:[%s2031] sm:$0x1]
    %s2033 = scalar_lea.vmem [#allocation0], 825
    %v2034 = vld [vmem:[%s2033] sm:$0x2]
    %vm2035 = vcmask 1041409
    %v2036 = vsel %vm2035, %v2034, %v2032
    %s2037 = scalar_lea.vmem [#allocation0], 856
    %v2038 = vld [vmem:[%s2037] sm:$0x4]
    %vm2039 = vcmask 1042434
    %v2040 = vsel %vm2039, %v2038, %v2036
    %s2041 = scalar_lea.vmem [#allocation0], 887
    %v2042 = vld [vmem:[%s2041] sm:$0x8]
    %vm2043 = vcmask 1043459
    %v2044 = vsel %vm2043, %v2042, %v2040
    %s2045 = scalar_lea.vmem [#allocation0], 918
    %v2046 = vld [vmem:[%s2045] sm:$0x10]
    %vm2047 = vcmask 1044484
    %v2048 = vsel %vm2047, %v2046, %v2044
    %s2049 = scalar_lea.vmem [#allocation0], 949
    %v2050 = vld [vmem:[%s2049] sm:$0x20]
    %vm2051 = vcmask 1045509
    %v2052 = vsel %vm2051, %v2050, %v2048
    %s2053 = scalar_lea.vmem [#allocation0], 980
    %v2054 = vld [vmem:[%s2053] sm:$0x40]
    %vm2055 = vcmask 1046534
    %v2056 = vsel %vm2055, %v2054, %v2052
    %s2057 = scalar_lea.vmem [#allocation0], 1011
    %v2058 = vld [vmem:[%s2057] sm:$0x80]
    %vm2059 = vcmask 1047559
    %v2060 = vsel %vm2059, %v2058, %v2056
    %2061 = vrot.lane.b32.xlu0 %v2060, 56
    %v2062 = vpop.permute.xlu0 %2061
    %vm2063 = vcmask 490944
    %s2064 = scalar_lea.vmem %s1, 24
    %2065 = vst.msk [vmem:[%s2064] sm:$0xff] %vm2063, %v2062
    %s2066 = scalar_lea.vmem [#allocation0], 1818
    %v2067 = vld [vmem:[%s2066] sm:$0x1]
    %s2068 = scalar_lea.vmem [#allocation0], 1849
    %v2069 = vld [vmem:[%s2068] sm:$0x2]
    %vm2070 = vcmask 1041409
    %v2071 = vsel %vm2070, %v2069, %v2067
    %s2072 = scalar_lea.vmem [#allocation0], 1880
    %v2073 = vld [vmem:[%s2072] sm:$0x4]
    %vm2074 = vcmask 1042434
    %v2075 = vsel %vm2074, %v2073, %v2071
    %s2076 = scalar_lea.vmem [#allocation0], 1911
    %v2077 = vld [vmem:[%s2076] sm:$0x8]
    %vm2078 = vcmask 1043459
    %v2079 = vsel %vm2078, %v2077, %v2075
    %s2080 = scalar_lea.vmem [#allocation0], 1942
    %v2081 = vld [vmem:[%s2080] sm:$0x10]
    %vm2082 = vcmask 1044484
    %v2083 = vsel %vm2082, %v2081, %v2079
    %s2084 = scalar_lea.vmem [#allocation0], 1973
    %v2085 = vld [vmem:[%s2084] sm:$0x20]
    %vm2086 = vcmask 1045509
    %v2087 = vsel %vm2086, %v2085, %v2083
    %s2088 = scalar_lea.vmem [#allocation0], 2004
    %v2089 = vld [vmem:[%s2088] sm:$0x40]
    %vm2090 = vcmask 1046534
    %v2091 = vsel %vm2090, %v2089, %v2087
    %s2092 = scalar_lea.vmem [#allocation0], 2035
    %v2093 = vld [vmem:[%s2092] sm:$0x80]
    %vm2094 = vcmask 1047559
    %v2095 = vsel %vm2094, %v2093, %v2091
    %2096 = vrot.lane.b32.xlu0 %v2095, 56
    %v2097 = vpop.permute.xlu0 %2096
    %vm2098 = vcmask 490944
    %s2099 = scalar_lea.vmem %s1, 56
    %2100 = vst.msk [vmem:[%s2099] sm:$0xff] %vm2098, %v2097
    %s2101 = scalar_lea.vmem [#allocation0], 25
    %v2102 = vld [vmem:[%s2101] sm:$0x1]
    %s2103 = scalar_lea.vmem [#allocation0], 56
    %v2104 = vld [vmem:[%s2103] sm:$0x2]
    %vm2105 = vcmask 1041409
    %v2106 = vsel %vm2105, %v2104, %v2102
    %s2107 = scalar_lea.vmem [#allocation0], 87
    %v2108 = vld [vmem:[%s2107] sm:$0x4]
    %vm2109 = vcmask 1042434
    %v2110 = vsel %vm2109, %v2108, %v2106
    %s2111 = scalar_lea.vmem [#allocation0], 118
    %v2112 = vld [vmem:[%s2111] sm:$0x8]
    %vm2113 = vcmask 1043459
    %v2114 = vsel %vm2113, %v2112, %v2110
    %s2115 = scalar_lea.vmem [#allocation0], 149
    %v2116 = vld [vmem:[%s2115] sm:$0x10]
    %vm2117 = vcmask 1044484
    %v2118 = vsel %vm2117, %v2116, %v2114
    %s2119 = scalar_lea.vmem [#allocation0], 180
    %v2120 = vld [vmem:[%s2119] sm:$0x20]
    %vm2121 = vcmask 1045509
    %v2122 = vsel %vm2121, %v2120, %v2118
    %s2123 = scalar_lea.vmem [#allocation0], 211
    %v2124 = vld [vmem:[%s2123] sm:$0x40]
    %vm2125 = vcmask 1046534
    %v2126 = vsel %vm2125, %v2124, %v2122
    %s2127 = scalar_lea.vmem [#allocation0], 242
    %v2128 = vld [vmem:[%s2127] sm:$0x80]
    %vm2129 = vcmask 1047559
    %v2130 = vsel %vm2129, %v2128, %v2126
    %2131 = vrot.lane.b32.xlu0 %v2130, 52
    %v2132 = vpop.permute.xlu0 %2131
    %vm2133 = vcmask 458144
    %2134 = vst.msk [vmem:[%s1] sm:$0xff] %vm2133, %v2132
    %s2135 = scalar_lea.vmem [#allocation0], 1049
    %v2136 = vld [vmem:[%s2135] sm:$0x1]
    %s2137 = scalar_lea.vmem [#allocation0], 1080
    %v2138 = vld [vmem:[%s2137] sm:$0x2]
    %vm2139 = vcmask 1041409
    %v2140 = vsel %vm2139, %v2138, %v2136
    %s2141 = scalar_lea.vmem [#allocation0], 1111
    %v2142 = vld [vmem:[%s2141] sm:$0x4]
    %vm2143 = vcmask 1042434
    %v2144 = vsel %vm2143, %v2142, %v2140
    %s2145 = scalar_lea.vmem [#allocation0], 1142
    %v2146 = vld [vmem:[%s2145] sm:$0x8]
    %vm2147 = vcmask 1043459
    %v2148 = vsel %vm2147, %v2146, %v2144
    %s2149 = scalar_lea.vmem [#allocation0], 1173
    %v2150 = vld [vmem:[%s2149] sm:$0x10]
    %vm2151 = vcmask 1044484
    %v2152 = vsel %vm2151, %v2150, %v2148
    %s2153 = scalar_lea.vmem [#allocation0], 1204
    %v2154 = vld [vmem:[%s2153] sm:$0x20]
    %vm2155 = vcmask 1045509
    %v2156 = vsel %vm2155, %v2154, %v2152
    %s2157 = scalar_lea.vmem [#allocation0], 1235
    %v2158 = vld [vmem:[%s2157] sm:$0x40]
    %vm2159 = vcmask 1046534
    %v2160 = vsel %vm2159, %v2158, %v2156
    %s2161 = scalar_lea.vmem [#allocation0], 1266
    %v2162 = vld [vmem:[%s2161] sm:$0x80]
    %vm2163 = vcmask 1047559
    %v2164 = vsel %vm2163, %v2162, %v2160
    %2165 = vrot.lane.b32.xlu0 %v2164, 52
    %v2166 = vpop.permute.xlu0 %2165
    %vm2167 = vcmask 458144
    %s2168 = scalar_lea.vmem %s1, 32
    %2169 = vst.msk [vmem:[%s2168] sm:$0xff] %vm2167, %v2166
    %s2170 = scalar_lea.vmem [#allocation0], 281
    %v2171 = vld [vmem:[%s2170] sm:$0x1]
    %s2172 = scalar_lea.vmem [#allocation0], 312
    %v2173 = vld [vmem:[%s2172] sm:$0x2]
    %vm2174 = vcmask 1041409
    %v2175 = vsel %vm2174, %v2173, %v2171
    %s2176 = scalar_lea.vmem [#allocation0], 343
    %v2177 = vld [vmem:[%s2176] sm:$0x4]
    %vm2178 = vcmask 1042434
    %v2179 = vsel %vm2178, %v2177, %v2175
    %s2180 = scalar_lea.vmem [#allocation0], 374
    %v2181 = vld [vmem:[%s2180] sm:$0x8]
    %vm2182 = vcmask 1043459
    %v2183 = vsel %vm2182, %v2181, %v2179
    %s2184 = scalar_lea.vmem [#allocation0], 405
    %v2185 = vld [vmem:[%s2184] sm:$0x10]
    %vm2186 = vcmask 1044484
    %v2187 = vsel %vm2186, %v2185, %v2183
    %s2188 = scalar_lea.vmem [#allocation0], 436
    %v2189 = vld [vmem:[%s2188] sm:$0x20]
    %vm2190 = vcmask 1045509
    %v2191 = vsel %vm2190, %v2189, %v2187
    %s2192 = scalar_lea.vmem [#allocation0], 467
    %v2193 = vld [vmem:[%s2192] sm:$0x40]
    %vm2194 = vcmask 1046534
    %v2195 = vsel %vm2194, %v2193, %v2191
    %s2196 = scalar_lea.vmem [#allocation0], 498
    %v2197 = vld [vmem:[%s2196] sm:$0x80]
    %vm2198 = vcmask 1047559
    %v2199 = vsel %vm2198, %v2197, %v2195
    %2200 = vrot.lane.b32.xlu0 %v2199, 52
    %v2201 = vpop.permute.xlu0 %2200
    %vm2202 = vcmask 458144
    %s2203 = scalar_lea.vmem %s1, 8
    %2204 = vst.msk [vmem:[%s2203] sm:$0xff] %vm2202, %v2201
    %s2205 = scalar_lea.vmem [#allocation0], 1305
    %v2206 = vld [vmem:[%s2205] sm:$0x1]
    %s2207 = scalar_lea.vmem [#allocation0], 1336
    %v2208 = vld [vmem:[%s2207] sm:$0x2]
    %vm2209 = vcmask 1041409
    %v2210 = vsel %vm2209, %v2208, %v2206
    %s2211 = scalar_lea.vmem [#allocation0], 1367
    %v2212 = vld [vmem:[%s2211] sm:$0x4]
    %vm2213 = vcmask 1042434
    %v2214 = vsel %vm2213, %v2212, %v2210
    %s2215 = scalar_lea.vmem [#allocation0], 1398
    %v2216 = vld [vmem:[%s2215] sm:$0x8]
    %vm2217 = vcmask 1043459
    %v2218 = vsel %vm2217, %v2216, %v2214
    %s2219 = scalar_lea.vmem [#allocation0], 1429
    %v2220 = vld [vmem:[%s2219] sm:$0x10]
    %vm2221 = vcmask 1044484
    %v2222 = vsel %vm2221, %v2220, %v2218
    %s2223 = scalar_lea.vmem [#allocation0], 1460
    %v2224 = vld [vmem:[%s2223] sm:$0x20]
    %vm2225 = vcmask 1045509
    %v2226 = vsel %vm2225, %v2224, %v2222
    %s2227 = scalar_lea.vmem [#allocation0], 1491
    %v2228 = vld [vmem:[%s2227] sm:$0x40]
    %vm2229 = vcmask 1046534
    %v2230 = vsel %vm2229, %v2228, %v2226
    %s2231 = scalar_lea.vmem [#allocation0], 1522
    %v2232 = vld [vmem:[%s2231] sm:$0x80]
    %vm2233 = vcmask 1047559
    %v2234 = vsel %vm2233, %v2232, %v2230
    %2235 = vrot.lane.b32.xlu0 %v2234, 52
    %v2236 = vpop.permute.xlu0 %2235
    %vm2237 = vcmask 458144
    %s2238 = scalar_lea.vmem %s1, 40
    %2239 = vst.msk [vmem:[%s2238] sm:$0xff] %vm2237, %v2236
    %s2240 = scalar_lea.vmem [#allocation0], 537
    %v2241 = vld [vmem:[%s2240] sm:$0x1]
    %s2242 = scalar_lea.vmem [#allocation0], 568
    %v2243 = vld [vmem:[%s2242] sm:$0x2]
    %vm2244 = vcmask 1041409
    %v2245 = vsel %vm2244, %v2243, %v2241
    %s2246 = scalar_lea.vmem [#allocation0], 599
    %v2247 = vld [vmem:[%s2246] sm:$0x4]
    %vm2248 = vcmask 1042434
    %v2249 = vsel %vm2248, %v2247, %v2245
    %s2250 = scalar_lea.vmem [#allocation0], 630
    %v2251 = vld [vmem:[%s2250] sm:$0x8]
    %vm2252 = vcmask 1043459
    %v2253 = vsel %vm2252, %v2251, %v2249
    %s2254 = scalar_lea.vmem [#allocation0], 661
    %v2255 = vld [vmem:[%s2254] sm:$0x10]
    %vm2256 = vcmask 1044484
    %v2257 = vsel %vm2256, %v2255, %v2253
    %s2258 = scalar_lea.vmem [#allocation0], 692
    %v2259 = vld [vmem:[%s2258] sm:$0x20]
    %vm2260 = vcmask 1045509
    %v2261 = vsel %vm2260, %v2259, %v2257
    %s2262 = scalar_lea.vmem [#allocation0], 723
    %v2263 = vld [vmem:[%s2262] sm:$0x40]
    %vm2264 = vcmask 1046534
    %v2265 = vsel %vm2264, %v2263, %v2261
    %s2266 = scalar_lea.vmem [#allocation0], 754
    %v2267 = vld [vmem:[%s2266] sm:$0x80]
    %vm2268 = vcmask 1047559
    %v2269 = vsel %vm2268, %v2267, %v2265
    %2270 = vrot.lane.b32.xlu0 %v2269, 52
    %v2271 = vpop.permute.xlu0 %2270
    %vm2272 = vcmask 458144
    %s2273 = scalar_lea.vmem %s1, 16
    %2274 = vst.msk [vmem:[%s2273] sm:$0xff] %vm2272, %v2271
    %s2275 = scalar_lea.vmem [#allocation0], 1561
    %v2276 = vld [vmem:[%s2275] sm:$0x1]
    %s2277 = scalar_lea.vmem [#allocation0], 1592
    %v2278 = vld [vmem:[%s2277] sm:$0x2]
    %vm2279 = vcmask 1041409
    %v2280 = vsel %vm2279, %v2278, %v2276
    %s2281 = scalar_lea.vmem [#allocation0], 1623
    %v2282 = vld [vmem:[%s2281] sm:$0x4]
    %vm2283 = vcmask 1042434
    %v2284 = vsel %vm2283, %v2282, %v2280
    %s2285 = scalar_lea.vmem [#allocation0], 1654
    %v2286 = vld [vmem:[%s2285] sm:$0x8]
    %vm2287 = vcmask 1043459
    %v2288 = vsel %vm2287, %v2286, %v2284
    %s2289 = scalar_lea.vmem [#allocation0], 1685
    %v2290 = vld [vmem:[%s2289] sm:$0x10]
    %vm2291 = vcmask 1044484
    %v2292 = vsel %vm2291, %v2290, %v2288
    %s2293 = scalar_lea.vmem [#allocation0], 1716
    %v2294 = vld [vmem:[%s2293] sm:$0x20]
    %vm2295 = vcmask 1045509
    %v2296 = vsel %vm2295, %v2294, %v2292
    %s2297 = scalar_lea.vmem [#allocation0], 1747
    %v2298 = vld [vmem:[%s2297] sm:$0x40]
    %vm2299 = vcmask 1046534
    %v2300 = vsel %vm2299, %v2298, %v2296
    %s2301 = scalar_lea.vmem [#allocation0], 1778
    %v2302 = vld [vmem:[%s2301] sm:$0x80]
    %vm2303 = vcmask 1047559
    %v2304 = vsel %vm2303, %v2302, %v2300
    %2305 = vrot.lane.b32.xlu0 %v2304, 52
    %v2306 = vpop.permute.xlu0 %2305
    %vm2307 = vcmask 458144
    %s2308 = scalar_lea.vmem %s1, 48
    %2309 = vst.msk [vmem:[%s2308] sm:$0xff] %vm2307, %v2306
    %s2310 = scalar_lea.vmem [#allocation0], 793
    %v2311 = vld [vmem:[%s2310] sm:$0x1]
    %s2312 = scalar_lea.vmem [#allocation0], 824
    %v2313 = vld [vmem:[%s2312] sm:$0x2]
    %vm2314 = vcmask 1041409
    %v2315 = vsel %vm2314, %v2313, %v2311
    %s2316 = scalar_lea.vmem [#allocation0], 855
    %v2317 = vld [vmem:[%s2316] sm:$0x4]
    %vm2318 = vcmask 1042434
    %v2319 = vsel %vm2318, %v2317, %v2315
    %s2320 = scalar_lea.vmem [#allocation0], 886
    %v2321 = vld [vmem:[%s2320] sm:$0x8]
    %vm2322 = vcmask 1043459
    %v2323 = vsel %vm2322, %v2321, %v2319
    %s2324 = scalar_lea.vmem [#allocation0], 917
    %v2325 = vld [vmem:[%s2324] sm:$0x10]
    %vm2326 = vcmask 1044484
    %v2327 = vsel %vm2326, %v2325, %v2323
    %s2328 = scalar_lea.vmem [#allocation0], 948
    %v2329 = vld [vmem:[%s2328] sm:$0x20]
    %vm2330 = vcmask 1045509
    %v2331 = vsel %vm2330, %v2329, %v2327
    %s2332 = scalar_lea.vmem [#allocation0], 979
    %v2333 = vld [vmem:[%s2332] sm:$0x40]
    %vm2334 = vcmask 1046534
    %v2335 = vsel %vm2334, %v2333, %v2331
    %s2336 = scalar_lea.vmem [#allocation0], 1010
    %v2337 = vld [vmem:[%s2336] sm:$0x80]
    %vm2338 = vcmask 1047559
    %v2339 = vsel %vm2338, %v2337, %v2335
    %2340 = vrot.lane.b32.xlu0 %v2339, 52
    %v2341 = vpop.permute.xlu0 %2340
    %vm2342 = vcmask 458144
    %s2343 = scalar_lea.vmem %s1, 24
    %2344 = vst.msk [vmem:[%s2343] sm:$0xff] %vm2342, %v2341
    %s2345 = scalar_lea.vmem [#allocation0], 1817
    %v2346 = vld [vmem:[%s2345] sm:$0x1]
    %s2347 = scalar_lea.vmem [#allocation0], 1848
    %v2348 = vld [vmem:[%s2347] sm:$0x2]
    %vm2349 = vcmask 1041409
    %v2350 = vsel %vm2349, %v2348, %v2346
    %s2351 = scalar_lea.vmem [#allocation0], 1879
    %v2352 = vld [vmem:[%s2351] sm:$0x4]
    %vm2353 = vcmask 1042434
    %v2354 = vsel %vm2353, %v2352, %v2350
    %s2355 = scalar_lea.vmem [#allocation0], 1910
    %v2356 = vld [vmem:[%s2355] sm:$0x8]
    %vm2357 = vcmask 1043459
    %v2358 = vsel %vm2357, %v2356, %v2354
    %s2359 = scalar_lea.vmem [#allocation0], 1941
    %v2360 = vld [vmem:[%s2359] sm:$0x10]
    %vm2361 = vcmask 1044484
    %v2362 = vsel %vm2361, %v2360, %v2358
    %s2363 = scalar_lea.vmem [#allocation0], 1972
    %v2364 = vld [vmem:[%s2363] sm:$0x20]
    %vm2365 = vcmask 1045509
    %v2366 = vsel %vm2365, %v2364, %v2362
    %s2367 = scalar_lea.vmem [#allocation0], 2003
    %v2368 = vld [vmem:[%s2367] sm:$0x40]
    %vm2369 = vcmask 1046534
    %v2370 = vsel %vm2369, %v2368, %v2366
    %s2371 = scalar_lea.vmem [#allocation0], 2034
    %v2372 = vld [vmem:[%s2371] sm:$0x80]
    %vm2373 = vcmask 1047559
    %v2374 = vsel %vm2373, %v2372, %v2370
    %2375 = vrot.lane.b32.xlu0 %v2374, 52
    %v2376 = vpop.permute.xlu0 %2375
    %vm2377 = vcmask 458144
    %s2378 = scalar_lea.vmem %s1, 56
    %2379 = vst.msk [vmem:[%s2378] sm:$0xff] %vm2377, %v2376
    %s2380 = scalar_lea.vmem [#allocation0], 24
    %v2381 = vld [vmem:[%s2380] sm:$0x1]
    %s2382 = scalar_lea.vmem [#allocation0], 55
    %v2383 = vld [vmem:[%s2382] sm:$0x2]
    %vm2384 = vcmask 1041409
    %v2385 = vsel %vm2384, %v2383, %v2381
    %s2386 = scalar_lea.vmem [#allocation0], 86
    %v2387 = vld [vmem:[%s2386] sm:$0x4]
    %vm2388 = vcmask 1042434
    %v2389 = vsel %vm2388, %v2387, %v2385
    %s2390 = scalar_lea.vmem [#allocation0], 117
    %v2391 = vld [vmem:[%s2390] sm:$0x8]
    %vm2392 = vcmask 1043459
    %v2393 = vsel %vm2392, %v2391, %v2389
    %s2394 = scalar_lea.vmem [#allocation0], 148
    %v2395 = vld [vmem:[%s2394] sm:$0x10]
    %vm2396 = vcmask 1044484
    %v2397 = vsel %vm2396, %v2395, %v2393
    %s2398 = scalar_lea.vmem [#allocation0], 179
    %v2399 = vld [vmem:[%s2398] sm:$0x20]
    %vm2400 = vcmask 1045509
    %v2401 = vsel %vm2400, %v2399, %v2397
    %s2402 = scalar_lea.vmem [#allocation0], 210
    %v2403 = vld [vmem:[%s2402] sm:$0x40]
    %vm2404 = vcmask 1046534
    %v2405 = vsel %vm2404, %v2403, %v2401
    %s2406 = scalar_lea.vmem [#allocation0], 241
    %v2407 = vld [vmem:[%s2406] sm:$0x80]
    %vm2408 = vcmask 1047559
    %v2409 = vsel %vm2408, %v2407, %v2405
    %2410 = vrot.lane.b32.xlu0 %v2409, 48
    %v2411 = vpop.permute.xlu0 %2410
    %vm2412 = vcmask 425344
    %2413 = vst.msk [vmem:[%s1] sm:$0xff] %vm2412, %v2411
    %s2414 = scalar_lea.vmem [#allocation0], 1048
    %v2415 = vld [vmem:[%s2414] sm:$0x1]
    %s2416 = scalar_lea.vmem [#allocation0], 1079
    %v2417 = vld [vmem:[%s2416] sm:$0x2]
    %vm2418 = vcmask 1041409
    %v2419 = vsel %vm2418, %v2417, %v2415
    %s2420 = scalar_lea.vmem [#allocation0], 1110
    %v2421 = vld [vmem:[%s2420] sm:$0x4]
    %vm2422 = vcmask 1042434
    %v2423 = vsel %vm2422, %v2421, %v2419
    %s2424 = scalar_lea.vmem [#allocation0], 1141
    %v2425 = vld [vmem:[%s2424] sm:$0x8]
    %vm2426 = vcmask 1043459
    %v2427 = vsel %vm2426, %v2425, %v2423
    %s2428 = scalar_lea.vmem [#allocation0], 1172
    %v2429 = vld [vmem:[%s2428] sm:$0x10]
    %vm2430 = vcmask 1044484
    %v2431 = vsel %vm2430, %v2429, %v2427
    %s2432 = scalar_lea.vmem [#allocation0], 1203
    %v2433 = vld [vmem:[%s2432] sm:$0x20]
    %vm2434 = vcmask 1045509
    %v2435 = vsel %vm2434, %v2433, %v2431
    %s2436 = scalar_lea.vmem [#allocation0], 1234
    %v2437 = vld [vmem:[%s2436] sm:$0x40]
    %vm2438 = vcmask 1046534
    %v2439 = vsel %vm2438, %v2437, %v2435
    %s2440 = scalar_lea.vmem [#allocation0], 1265
    %v2441 = vld [vmem:[%s2440] sm:$0x80]
    %vm2442 = vcmask 1047559
    %v2443 = vsel %vm2442, %v2441, %v2439
    %2444 = vrot.lane.b32.xlu0 %v2443, 48
    %v2445 = vpop.permute.xlu0 %2444
    %vm2446 = vcmask 425344
    %s2447 = scalar_lea.vmem %s1, 32
    %2448 = vst.msk [vmem:[%s2447] sm:$0xff] %vm2446, %v2445
    %s2449 = scalar_lea.vmem [#allocation0], 280
    %v2450 = vld [vmem:[%s2449] sm:$0x1]
    %s2451 = scalar_lea.vmem [#allocation0], 311
    %v2452 = vld [vmem:[%s2451] sm:$0x2]
    %vm2453 = vcmask 1041409
    %v2454 = vsel %vm2453, %v2452, %v2450
    %s2455 = scalar_lea.vmem [#allocation0], 342
    %v2456 = vld [vmem:[%s2455] sm:$0x4]
    %vm2457 = vcmask 1042434
    %v2458 = vsel %vm2457, %v2456, %v2454
    %s2459 = scalar_lea.vmem [#allocation0], 373
    %v2460 = vld [vmem:[%s2459] sm:$0x8]
    %vm2461 = vcmask 1043459
    %v2462 = vsel %vm2461, %v2460, %v2458
    %s2463 = scalar_lea.vmem [#allocation0], 404
    %v2464 = vld [vmem:[%s2463] sm:$0x10]
    %vm2465 = vcmask 1044484
    %v2466 = vsel %vm2465, %v2464, %v2462
    %s2467 = scalar_lea.vmem [#allocation0], 435
    %v2468 = vld [vmem:[%s2467] sm:$0x20]
    %vm2469 = vcmask 1045509
    %v2470 = vsel %vm2469, %v2468, %v2466
    %s2471 = scalar_lea.vmem [#allocation0], 466
    %v2472 = vld [vmem:[%s2471] sm:$0x40]
    %vm2473 = vcmask 1046534
    %v2474 = vsel %vm2473, %v2472, %v2470
    %s2475 = scalar_lea.vmem [#allocation0], 497
    %v2476 = vld [vmem:[%s2475] sm:$0x80]
    %vm2477 = vcmask 1047559
    %v2478 = vsel %vm2477, %v2476, %v2474
    %2479 = vrot.lane.b32.xlu0 %v2478, 48
    %v2480 = vpop.permute.xlu0 %2479
    %vm2481 = vcmask 425344
    %s2482 = scalar_lea.vmem %s1, 8
    %2483 = vst.msk [vmem:[%s2482] sm:$0xff] %vm2481, %v2480
    %s2484 = scalar_lea.vmem [#allocation0], 1304
    %v2485 = vld [vmem:[%s2484] sm:$0x1]
    %s2486 = scalar_lea.vmem [#allocation0], 1335
    %v2487 = vld [vmem:[%s2486] sm:$0x2]
    %vm2488 = vcmask 1041409
    %v2489 = vsel %vm2488, %v2487, %v2485
    %s2490 = scalar_lea.vmem [#allocation0], 1366
    %v2491 = vld [vmem:[%s2490] sm:$0x4]
    %vm2492 = vcmask 1042434
    %v2493 = vsel %vm2492, %v2491, %v2489
    %s2494 = scalar_lea.vmem [#allocation0], 1397
    %v2495 = vld [vmem:[%s2494] sm:$0x8]
    %vm2496 = vcmask 1043459
    %v2497 = vsel %vm2496, %v2495, %v2493
    %s2498 = scalar_lea.vmem [#allocation0], 1428
    %v2499 = vld [vmem:[%s2498] sm:$0x10]
    %vm2500 = vcmask 1044484
    %v2501 = vsel %vm2500, %v2499, %v2497
    %s2502 = scalar_lea.vmem [#allocation0], 1459
    %v2503 = vld [vmem:[%s2502] sm:$0x20]
    %vm2504 = vcmask 1045509
    %v2505 = vsel %vm2504, %v2503, %v2501
    %s2506 = scalar_lea.vmem [#allocation0], 1490
    %v2507 = vld [vmem:[%s2506] sm:$0x40]
    %vm2508 = vcmask 1046534
    %v2509 = vsel %vm2508, %v2507, %v2505
    %s2510 = scalar_lea.vmem [#allocation0], 1521
    %v2511 = vld [vmem:[%s2510] sm:$0x80]
    %vm2512 = vcmask 1047559
    %v2513 = vsel %vm2512, %v2511, %v2509
    %2514 = vrot.lane.b32.xlu0 %v2513, 48
    %v2515 = vpop.permute.xlu0 %2514
    %vm2516 = vcmask 425344
    %s2517 = scalar_lea.vmem %s1, 40
    %2518 = vst.msk [vmem:[%s2517] sm:$0xff] %vm2516, %v2515
    %s2519 = scalar_lea.vmem [#allocation0], 536
    %v2520 = vld [vmem:[%s2519] sm:$0x1]
    %s2521 = scalar_lea.vmem [#allocation0], 567
    %v2522 = vld [vmem:[%s2521] sm:$0x2]
    %vm2523 = vcmask 1041409
    %v2524 = vsel %vm2523, %v2522, %v2520
    %s2525 = scalar_lea.vmem [#allocation0], 598
    %v2526 = vld [vmem:[%s2525] sm:$0x4]
    %vm2527 = vcmask 1042434
    %v2528 = vsel %vm2527, %v2526, %v2524
    %s2529 = scalar_lea.vmem [#allocation0], 629
    %v2530 = vld [vmem:[%s2529] sm:$0x8]
    %vm2531 = vcmask 1043459
    %v2532 = vsel %vm2531, %v2530, %v2528
    %s2533 = scalar_lea.vmem [#allocation0], 660
    %v2534 = vld [vmem:[%s2533] sm:$0x10]
    %vm2535 = vcmask 1044484
    %v2536 = vsel %vm2535, %v2534, %v2532
    %s2537 = scalar_lea.vmem [#allocation0], 691
    %v2538 = vld [vmem:[%s2537] sm:$0x20]
    %vm2539 = vcmask 1045509
    %v2540 = vsel %vm2539, %v2538, %v2536
    %s2541 = scalar_lea.vmem [#allocation0], 722
    %v2542 = vld [vmem:[%s2541] sm:$0x40]
    %vm2543 = vcmask 1046534
    %v2544 = vsel %vm2543, %v2542, %v2540
    %s2545 = scalar_lea.vmem [#allocation0], 753
    %v2546 = vld [vmem:[%s2545] sm:$0x80]
    %vm2547 = vcmask 1047559
    %v2548 = vsel %vm2547, %v2546, %v2544
    %2549 = vrot.lane.b32.xlu0 %v2548, 48
    %v2550 = vpop.permute.xlu0 %2549
    %vm2551 = vcmask 425344
    %s2552 = scalar_lea.vmem %s1, 16
    %2553 = vst.msk [vmem:[%s2552] sm:$0xff] %vm2551, %v2550
    %s2554 = scalar_lea.vmem [#allocation0], 1560
    %v2555 = vld [vmem:[%s2554] sm:$0x1]
    %s2556 = scalar_lea.vmem [#allocation0], 1591
    %v2557 = vld [vmem:[%s2556] sm:$0x2]
    %vm2558 = vcmask 1041409
    %v2559 = vsel %vm2558, %v2557, %v2555
    %s2560 = scalar_lea.vmem [#allocation0], 1622
    %v2561 = vld [vmem:[%s2560] sm:$0x4]
    %vm2562 = vcmask 1042434
    %v2563 = vsel %vm2562, %v2561, %v2559
    %s2564 = scalar_lea.vmem [#allocation0], 1653
    %v2565 = vld [vmem:[%s2564] sm:$0x8]
    %vm2566 = vcmask 1043459
    %v2567 = vsel %vm2566, %v2565, %v2563
    %s2568 = scalar_lea.vmem [#allocation0], 1684
    %v2569 = vld [vmem:[%s2568] sm:$0x10]
    %vm2570 = vcmask 1044484
    %v2571 = vsel %vm2570, %v2569, %v2567
    %s2572 = scalar_lea.vmem [#allocation0], 1715
    %v2573 = vld [vmem:[%s2572] sm:$0x20]
    %vm2574 = vcmask 1045509
    %v2575 = vsel %vm2574, %v2573, %v2571
    %s2576 = scalar_lea.vmem [#allocation0], 1746
    %v2577 = vld [vmem:[%s2576] sm:$0x40]
    %vm2578 = vcmask 1046534
    %v2579 = vsel %vm2578, %v2577, %v2575
    %s2580 = scalar_lea.vmem [#allocation0], 1777
    %v2581 = vld [vmem:[%s2580] sm:$0x80]
    %vm2582 = vcmask 1047559
    %v2583 = vsel %vm2582, %v2581, %v2579
    %2584 = vrot.lane.b32.xlu0 %v2583, 48
    %v2585 = vpop.permute.xlu0 %2584
    %vm2586 = vcmask 425344
    %s2587 = scalar_lea.vmem %s1, 48
    %2588 = vst.msk [vmem:[%s2587] sm:$0xff] %vm2586, %v2585
    %s2589 = scalar_lea.vmem [#allocation0], 792
    %v2590 = vld [vmem:[%s2589] sm:$0x1]
    %s2591 = scalar_lea.vmem [#allocation0], 823
    %v2592 = vld [vmem:[%s2591] sm:$0x2]
    %vm2593 = vcmask 1041409
    %v2594 = vsel %vm2593, %v2592, %v2590
    %s2595 = scalar_lea.vmem [#allocation0], 854
    %v2596 = vld [vmem:[%s2595] sm:$0x4]
    %vm2597 = vcmask 1042434
    %v2598 = vsel %vm2597, %v2596, %v2594
    %s2599 = scalar_lea.vmem [#allocation0], 885
    %v2600 = vld [vmem:[%s2599] sm:$0x8]
    %vm2601 = vcmask 1043459
    %v2602 = vsel %vm2601, %v2600, %v2598
    %s2603 = scalar_lea.vmem [#allocation0], 916
    %v2604 = vld [vmem:[%s2603] sm:$0x10]
    %vm2605 = vcmask 1044484
    %v2606 = vsel %vm2605, %v2604, %v2602
    %s2607 = scalar_lea.vmem [#allocation0], 947
    %v2608 = vld [vmem:[%s2607] sm:$0x20]
    %vm2609 = vcmask 1045509
    %v2610 = vsel %vm2609, %v2608, %v2606
    %s2611 = scalar_lea.vmem [#allocation0], 978
    %v2612 = vld [vmem:[%s2611] sm:$0x40]
    %vm2613 = vcmask 1046534
    %v2614 = vsel %vm2613, %v2612, %v2610
    %s2615 = scalar_lea.vmem [#allocation0], 1009
    %v2616 = vld [vmem:[%s2615] sm:$0x80]
    %vm2617 = vcmask 1047559
    %v2618 = vsel %vm2617, %v2616, %v2614
    %2619 = vrot.lane.b32.xlu0 %v2618, 48
    %v2620 = vpop.permute.xlu0 %2619
    %vm2621 = vcmask 425344
    %s2622 = scalar_lea.vmem %s1, 24
    %2623 = vst.msk [vmem:[%s2622] sm:$0xff] %vm2621, %v2620
    %s2624 = scalar_lea.vmem [#allocation0], 1816
    %v2625 = vld [vmem:[%s2624] sm:$0x1]
    %s2626 = scalar_lea.vmem [#allocation0], 1847
    %v2627 = vld [vmem:[%s2626] sm:$0x2]
    %vm2628 = vcmask 1041409
    %v2629 = vsel %vm2628, %v2627, %v2625
    %s2630 = scalar_lea.vmem [#allocation0], 1878
    %v2631 = vld [vmem:[%s2630] sm:$0x4]
    %vm2632 = vcmask 1042434
    %v2633 = vsel %vm2632, %v2631, %v2629
    %s2634 = scalar_lea.vmem [#allocation0], 1909
    %v2635 = vld [vmem:[%s2634] sm:$0x8]
    %vm2636 = vcmask 1043459
    %v2637 = vsel %vm2636, %v2635, %v2633
    %s2638 = scalar_lea.vmem [#allocation0], 1940
    %v2639 = vld [vmem:[%s2638] sm:$0x10]
    %vm2640 = vcmask 1044484
    %v2641 = vsel %vm2640, %v2639, %v2637
    %s2642 = scalar_lea.vmem [#allocation0], 1971
    %v2643 = vld [vmem:[%s2642] sm:$0x20]
    %vm2644 = vcmask 1045509
    %v2645 = vsel %vm2644, %v2643, %v2641
    %s2646 = scalar_lea.vmem [#allocation0], 2002
    %v2647 = vld [vmem:[%s2646] sm:$0x40]
    %vm2648 = vcmask 1046534
    %v2649 = vsel %vm2648, %v2647, %v2645
    %s2650 = scalar_lea.vmem [#allocation0], 2033
    %v2651 = vld [vmem:[%s2650] sm:$0x80]
    %vm2652 = vcmask 1047559
    %v2653 = vsel %vm2652, %v2651, %v2649
    %2654 = vrot.lane.b32.xlu0 %v2653, 48
    %v2655 = vpop.permute.xlu0 %2654
    %vm2656 = vcmask 425344
    %s2657 = scalar_lea.vmem %s1, 56
    %2658 = vst.msk [vmem:[%s2657] sm:$0xff] %vm2656, %v2655
    %s2659 = scalar_lea.vmem [#allocation0], 19
    %v2660 = vld [vmem:[%s2659] sm:$0x1]
    %s2661 = scalar_lea.vmem [#allocation0], 50
    %v2662 = vld [vmem:[%s2661] sm:$0x2]
    %vm2663 = vcmask 1041409
    %v2664 = vsel %vm2663, %v2662, %v2660
    %s2665 = scalar_lea.vmem [#allocation0], 81
    %v2666 = vld [vmem:[%s2665] sm:$0x4]
    %vm2667 = vcmask 1042434
    %v2668 = vsel %vm2667, %v2666, %v2664
    %s2669 = scalar_lea.vmem [#allocation0], 112
    %v2670 = vld [vmem:[%s2669] sm:$0x8]
    %vm2671 = vcmask 1043459
    %v2672 = vsel %vm2671, %v2670, %v2668
    %s2673 = scalar_lea.vmem [#allocation0], 143
    %v2674 = vld [vmem:[%s2673] sm:$0x10]
    %vm2675 = vcmask 1044484
    %v2676 = vsel %vm2675, %v2674, %v2672
    %s2677 = scalar_lea.vmem [#allocation0], 174
    %v2678 = vld [vmem:[%s2677] sm:$0x20]
    %vm2679 = vcmask 1045509
    %v2680 = vsel %vm2679, %v2678, %v2676
    %s2681 = scalar_lea.vmem [#allocation0], 205
    %v2682 = vld [vmem:[%s2681] sm:$0x40]
    %vm2683 = vcmask 1046534
    %v2684 = vsel %vm2683, %v2682, %v2680
    %s2685 = scalar_lea.vmem [#allocation0], 236
    %v2686 = vld [vmem:[%s2685] sm:$0x80]
    %vm2687 = vcmask 1047559
    %v2688 = vsel %vm2687, %v2686, %v2684
    %2689 = vrot.lane.b32.xlu0 %v2688, 44
    %v2690 = vpop.permute.xlu0 %2689
    %vm2691 = vcmask 392544
    %2692 = vst.msk [vmem:[%s1] sm:$0xff] %vm2691, %v2690
    %s2693 = scalar_lea.vmem [#allocation0], 1043
    %v2694 = vld [vmem:[%s2693] sm:$0x1]
    %s2695 = scalar_lea.vmem [#allocation0], 1074
    %v2696 = vld [vmem:[%s2695] sm:$0x2]
    %vm2697 = vcmask 1041409
    %v2698 = vsel %vm2697, %v2696, %v2694
    %s2699 = scalar_lea.vmem [#allocation0], 1105
    %v2700 = vld [vmem:[%s2699] sm:$0x4]
    %vm2701 = vcmask 1042434
    %v2702 = vsel %vm2701, %v2700, %v2698
    %s2703 = scalar_lea.vmem [#allocation0], 1136
    %v2704 = vld [vmem:[%s2703] sm:$0x8]
    %vm2705 = vcmask 1043459
    %v2706 = vsel %vm2705, %v2704, %v2702
    %s2707 = scalar_lea.vmem [#allocation0], 1167
    %v2708 = vld [vmem:[%s2707] sm:$0x10]
    %vm2709 = vcmask 1044484
    %v2710 = vsel %vm2709, %v2708, %v2706
    %s2711 = scalar_lea.vmem [#allocation0], 1198
    %v2712 = vld [vmem:[%s2711] sm:$0x20]
    %vm2713 = vcmask 1045509
    %v2714 = vsel %vm2713, %v2712, %v2710
    %s2715 = scalar_lea.vmem [#allocation0], 1229
    %v2716 = vld [vmem:[%s2715] sm:$0x40]
    %vm2717 = vcmask 1046534
    %v2718 = vsel %vm2717, %v2716, %v2714
    %s2719 = scalar_lea.vmem [#allocation0], 1260
    %v2720 = vld [vmem:[%s2719] sm:$0x80]
    %vm2721 = vcmask 1047559
    %v2722 = vsel %vm2721, %v2720, %v2718
    %2723 = vrot.lane.b32.xlu0 %v2722, 44
    %v2724 = vpop.permute.xlu0 %2723
    %vm2725 = vcmask 392544
    %s2726 = scalar_lea.vmem %s1, 32
    %2727 = vst.msk [vmem:[%s2726] sm:$0xff] %vm2725, %v2724
    %s2728 = scalar_lea.vmem [#allocation0], 275
    %v2729 = vld [vmem:[%s2728] sm:$0x1]
    %s2730 = scalar_lea.vmem [#allocation0], 306
    %v2731 = vld [vmem:[%s2730] sm:$0x2]
    %vm2732 = vcmask 1041409
    %v2733 = vsel %vm2732, %v2731, %v2729
    %s2734 = scalar_lea.vmem [#allocation0], 337
    %v2735 = vld [vmem:[%s2734] sm:$0x4]
    %vm2736 = vcmask 1042434
    %v2737 = vsel %vm2736, %v2735, %v2733
    %s2738 = scalar_lea.vmem [#allocation0], 368
    %v2739 = vld [vmem:[%s2738] sm:$0x8]
    %vm2740 = vcmask 1043459
    %v2741 = vsel %vm2740, %v2739, %v2737
    %s2742 = scalar_lea.vmem [#allocation0], 399
    %v2743 = vld [vmem:[%s2742] sm:$0x10]
    %vm2744 = vcmask 1044484
    %v2745 = vsel %vm2744, %v2743, %v2741
    %s2746 = scalar_lea.vmem [#allocation0], 430
    %v2747 = vld [vmem:[%s2746] sm:$0x20]
    %vm2748 = vcmask 1045509
    %v2749 = vsel %vm2748, %v2747, %v2745
    %s2750 = scalar_lea.vmem [#allocation0], 461
    %v2751 = vld [vmem:[%s2750] sm:$0x40]
    %vm2752 = vcmask 1046534
    %v2753 = vsel %vm2752, %v2751, %v2749
    %s2754 = scalar_lea.vmem [#allocation0], 492
    %v2755 = vld [vmem:[%s2754] sm:$0x80]
    %vm2756 = vcmask 1047559
    %v2757 = vsel %vm2756, %v2755, %v2753
    %2758 = vrot.lane.b32.xlu0 %v2757, 44
    %v2759 = vpop.permute.xlu0 %2758
    %vm2760 = vcmask 392544
    %s2761 = scalar_lea.vmem %s1, 8
    %2762 = vst.msk [vmem:[%s2761] sm:$0xff] %vm2760, %v2759
    %s2763 = scalar_lea.vmem [#allocation0], 1299
    %v2764 = vld [vmem:[%s2763] sm:$0x1]
    %s2765 = scalar_lea.vmem [#allocation0], 1330
    %v2766 = vld [vmem:[%s2765] sm:$0x2]
    %vm2767 = vcmask 1041409
    %v2768 = vsel %vm2767, %v2766, %v2764
    %s2769 = scalar_lea.vmem [#allocation0], 1361
    %v2770 = vld [vmem:[%s2769] sm:$0x4]
    %vm2771 = vcmask 1042434
    %v2772 = vsel %vm2771, %v2770, %v2768
    %s2773 = scalar_lea.vmem [#allocation0], 1392
    %v2774 = vld [vmem:[%s2773] sm:$0x8]
    %vm2775 = vcmask 1043459
    %v2776 = vsel %vm2775, %v2774, %v2772
    %s2777 = scalar_lea.vmem [#allocation0], 1423
    %v2778 = vld [vmem:[%s2777] sm:$0x10]
    %vm2779 = vcmask 1044484
    %v2780 = vsel %vm2779, %v2778, %v2776
    %s2781 = scalar_lea.vmem [#allocation0], 1454
    %v2782 = vld [vmem:[%s2781] sm:$0x20]
    %vm2783 = vcmask 1045509
    %v2784 = vsel %vm2783, %v2782, %v2780
    %s2785 = scalar_lea.vmem [#allocation0], 1485
    %v2786 = vld [vmem:[%s2785] sm:$0x40]
    %vm2787 = vcmask 1046534
    %v2788 = vsel %vm2787, %v2786, %v2784
    %s2789 = scalar_lea.vmem [#allocation0], 1516
    %v2790 = vld [vmem:[%s2789] sm:$0x80]
    %vm2791 = vcmask 1047559
    %v2792 = vsel %vm2791, %v2790, %v2788
    %2793 = vrot.lane.b32.xlu0 %v2792, 44
    %v2794 = vpop.permute.xlu0 %2793
    %vm2795 = vcmask 392544
    %s2796 = scalar_lea.vmem %s1, 40
    %2797 = vst.msk [vmem:[%s2796] sm:$0xff] %vm2795, %v2794
    %s2798 = scalar_lea.vmem [#allocation0], 531
    %v2799 = vld [vmem:[%s2798] sm:$0x1]
    %s2800 = scalar_lea.vmem [#allocation0], 562
    %v2801 = vld [vmem:[%s2800] sm:$0x2]
    %vm2802 = vcmask 1041409
    %v2803 = vsel %vm2802, %v2801, %v2799
    %s2804 = scalar_lea.vmem [#allocation0], 593
    %v2805 = vld [vmem:[%s2804] sm:$0x4]
    %vm2806 = vcmask 1042434
    %v2807 = vsel %vm2806, %v2805, %v2803
    %s2808 = scalar_lea.vmem [#allocation0], 624
    %v2809 = vld [vmem:[%s2808] sm:$0x8]
    %vm2810 = vcmask 1043459
    %v2811 = vsel %vm2810, %v2809, %v2807
    %s2812 = scalar_lea.vmem [#allocation0], 655
    %v2813 = vld [vmem:[%s2812] sm:$0x10]
    %vm2814 = vcmask 1044484
    %v2815 = vsel %vm2814, %v2813, %v2811
    %s2816 = scalar_lea.vmem [#allocation0], 686
    %v2817 = vld [vmem:[%s2816] sm:$0x20]
    %vm2818 = vcmask 1045509
    %v2819 = vsel %vm2818, %v2817, %v2815
    %s2820 = scalar_lea.vmem [#allocation0], 717
    %v2821 = vld [vmem:[%s2820] sm:$0x40]
    %vm2822 = vcmask 1046534
    %v2823 = vsel %vm2822, %v2821, %v2819
    %s2824 = scalar_lea.vmem [#allocation0], 748
    %v2825 = vld [vmem:[%s2824] sm:$0x80]
    %vm2826 = vcmask 1047559
    %v2827 = vsel %vm2826, %v2825, %v2823
    %2828 = vrot.lane.b32.xlu0 %v2827, 44
    %v2829 = vpop.permute.xlu0 %2828
    %vm2830 = vcmask 392544
    %s2831 = scalar_lea.vmem %s1, 16
    %2832 = vst.msk [vmem:[%s2831] sm:$0xff] %vm2830, %v2829
    %s2833 = scalar_lea.vmem [#allocation0], 1555
    %v2834 = vld [vmem:[%s2833] sm:$0x1]
    %s2835 = scalar_lea.vmem [#allocation0], 1586
    %v2836 = vld [vmem:[%s2835] sm:$0x2]
    %vm2837 = vcmask 1041409
    %v2838 = vsel %vm2837, %v2836, %v2834
    %s2839 = scalar_lea.vmem [#allocation0], 1617
    %v2840 = vld [vmem:[%s2839] sm:$0x4]
    %vm2841 = vcmask 1042434
    %v2842 = vsel %vm2841, %v2840, %v2838
    %s2843 = scalar_lea.vmem [#allocation0], 1648
    %v2844 = vld [vmem:[%s2843] sm:$0x8]
    %vm2845 = vcmask 1043459
    %v2846 = vsel %vm2845, %v2844, %v2842
    %s2847 = scalar_lea.vmem [#allocation0], 1679
    %v2848 = vld [vmem:[%s2847] sm:$0x10]
    %vm2849 = vcmask 1044484
    %v2850 = vsel %vm2849, %v2848, %v2846
    %s2851 = scalar_lea.vmem [#allocation0], 1710
    %v2852 = vld [vmem:[%s2851] sm:$0x20]
    %vm2853 = vcmask 1045509
    %v2854 = vsel %vm2853, %v2852, %v2850
    %s2855 = scalar_lea.vmem [#allocation0], 1741
    %v2856 = vld [vmem:[%s2855] sm:$0x40]
    %vm2857 = vcmask 1046534
    %v2858 = vsel %vm2857, %v2856, %v2854
    %s2859 = scalar_lea.vmem [#allocation0], 1772
    %v2860 = vld [vmem:[%s2859] sm:$0x80]
    %vm2861 = vcmask 1047559
    %v2862 = vsel %vm2861, %v2860, %v2858
    %2863 = vrot.lane.b32.xlu0 %v2862, 44
    %v2864 = vpop.permute.xlu0 %2863
    %vm2865 = vcmask 392544
    %s2866 = scalar_lea.vmem %s1, 48
    %2867 = vst.msk [vmem:[%s2866] sm:$0xff] %vm2865, %v2864
    %s2868 = scalar_lea.vmem [#allocation0], 787
    %v2869 = vld [vmem:[%s2868] sm:$0x1]
    %s2870 = scalar_lea.vmem [#allocation0], 818
    %v2871 = vld [vmem:[%s2870] sm:$0x2]
    %vm2872 = vcmask 1041409
    %v2873 = vsel %vm2872, %v2871, %v2869
    %s2874 = scalar_lea.vmem [#allocation0], 849
    %v2875 = vld [vmem:[%s2874] sm:$0x4]
    %vm2876 = vcmask 1042434
    %v2877 = vsel %vm2876, %v2875, %v2873
    %s2878 = scalar_lea.vmem [#allocation0], 880
    %v2879 = vld [vmem:[%s2878] sm:$0x8]
    %vm2880 = vcmask 1043459
    %v2881 = vsel %vm2880, %v2879, %v2877
    %s2882 = scalar_lea.vmem [#allocation0], 911
    %v2883 = vld [vmem:[%s2882] sm:$0x10]
    %vm2884 = vcmask 1044484
    %v2885 = vsel %vm2884, %v2883, %v2881
    %s2886 = scalar_lea.vmem [#allocation0], 942
    %v2887 = vld [vmem:[%s2886] sm:$0x20]
    %vm2888 = vcmask 1045509
    %v2889 = vsel %vm2888, %v2887, %v2885
    %s2890 = scalar_lea.vmem [#allocation0], 973
    %v2891 = vld [vmem:[%s2890] sm:$0x40]
    %vm2892 = vcmask 1046534
    %v2893 = vsel %vm2892, %v2891, %v2889
    %s2894 = scalar_lea.vmem [#allocation0], 1004
    %v2895 = vld [vmem:[%s2894] sm:$0x80]
    %vm2896 = vcmask 1047559
    %v2897 = vsel %vm2896, %v2895, %v2893
    %2898 = vrot.lane.b32.xlu0 %v2897, 44
    %v2899 = vpop.permute.xlu0 %2898
    %vm2900 = vcmask 392544
    %s2901 = scalar_lea.vmem %s1, 24
    %2902 = vst.msk [vmem:[%s2901] sm:$0xff] %vm2900, %v2899
    %s2903 = scalar_lea.vmem [#allocation0], 1811
    %v2904 = vld [vmem:[%s2903] sm:$0x1]
    %s2905 = scalar_lea.vmem [#allocation0], 1842
    %v2906 = vld [vmem:[%s2905] sm:$0x2]
    %vm2907 = vcmask 1041409
    %v2908 = vsel %vm2907, %v2906, %v2904
    %s2909 = scalar_lea.vmem [#allocation0], 1873
    %v2910 = vld [vmem:[%s2909] sm:$0x4]
    %vm2911 = vcmask 1042434
    %v2912 = vsel %vm2911, %v2910, %v2908
    %s2913 = scalar_lea.vmem [#allocation0], 1904
    %v2914 = vld [vmem:[%s2913] sm:$0x8]
    %vm2915 = vcmask 1043459
    %v2916 = vsel %vm2915, %v2914, %v2912
    %s2917 = scalar_lea.vmem [#allocation0], 1935
    %v2918 = vld [vmem:[%s2917] sm:$0x10]
    %vm2919 = vcmask 1044484
    %v2920 = vsel %vm2919, %v2918, %v2916
    %s2921 = scalar_lea.vmem [#allocation0], 1966
    %v2922 = vld [vmem:[%s2921] sm:$0x20]
    %vm2923 = vcmask 1045509
    %v2924 = vsel %vm2923, %v2922, %v2920
    %s2925 = scalar_lea.vmem [#allocation0], 1997
    %v2926 = vld [vmem:[%s2925] sm:$0x40]
    %vm2927 = vcmask 1046534
    %v2928 = vsel %vm2927, %v2926, %v2924
    %s2929 = scalar_lea.vmem [#allocation0], 2028
    %v2930 = vld [vmem:[%s2929] sm:$0x80]
    %vm2931 = vcmask 1047559
    %v2932 = vsel %vm2931, %v2930, %v2928
    %2933 = vrot.lane.b32.xlu0 %v2932, 44
    %v2934 = vpop.permute.xlu0 %2933
    %vm2935 = vcmask 392544
    %s2936 = scalar_lea.vmem %s1, 56
    %2937 = vst.msk [vmem:[%s2936] sm:$0xff] %vm2935, %v2934
    %s2938 = scalar_lea.vmem [#allocation0], 18
    %v2939 = vld [vmem:[%s2938] sm:$0x1]
    %s2940 = scalar_lea.vmem [#allocation0], 49
    %v2941 = vld [vmem:[%s2940] sm:$0x2]
    %vm2942 = vcmask 1041409
    %v2943 = vsel %vm2942, %v2941, %v2939
    %s2944 = scalar_lea.vmem [#allocation0], 80
    %v2945 = vld [vmem:[%s2944] sm:$0x4]
    %vm2946 = vcmask 1042434
    %v2947 = vsel %vm2946, %v2945, %v2943
    %s2948 = scalar_lea.vmem [#allocation0], 111
    %v2949 = vld [vmem:[%s2948] sm:$0x8]
    %vm2950 = vcmask 1043459
    %v2951 = vsel %vm2950, %v2949, %v2947
    %s2952 = scalar_lea.vmem [#allocation0], 142
    %v2953 = vld [vmem:[%s2952] sm:$0x10]
    %vm2954 = vcmask 1044484
    %v2955 = vsel %vm2954, %v2953, %v2951
    %s2956 = scalar_lea.vmem [#allocation0], 173
    %v2957 = vld [vmem:[%s2956] sm:$0x20]
    %vm2958 = vcmask 1045509
    %v2959 = vsel %vm2958, %v2957, %v2955
    %s2960 = scalar_lea.vmem [#allocation0], 204
    %v2961 = vld [vmem:[%s2960] sm:$0x40]
    %vm2962 = vcmask 1046534
    %v2963 = vsel %vm2962, %v2961, %v2959
    %s2964 = scalar_lea.vmem [#allocation0], 235
    %v2965 = vld [vmem:[%s2964] sm:$0x80]
    %vm2966 = vcmask 1047559
    %v2967 = vsel %vm2966, %v2965, %v2963
    %2968 = vrot.lane.b32.xlu0 %v2967, 40
    %v2969 = vpop.permute.xlu0 %2968
    %vm2970 = vcmask 359744
    %2971 = vst.msk [vmem:[%s1] sm:$0xff] %vm2970, %v2969
    %s2972 = scalar_lea.vmem [#allocation0], 1042
    %v2973 = vld [vmem:[%s2972] sm:$0x1]
    %s2974 = scalar_lea.vmem [#allocation0], 1073
    %v2975 = vld [vmem:[%s2974] sm:$0x2]
    %vm2976 = vcmask 1041409
    %v2977 = vsel %vm2976, %v2975, %v2973
    %s2978 = scalar_lea.vmem [#allocation0], 1104
    %v2979 = vld [vmem:[%s2978] sm:$0x4]
    %vm2980 = vcmask 1042434
    %v2981 = vsel %vm2980, %v2979, %v2977
    %s2982 = scalar_lea.vmem [#allocation0], 1135
    %v2983 = vld [vmem:[%s2982] sm:$0x8]
    %vm2984 = vcmask 1043459
    %v2985 = vsel %vm2984, %v2983, %v2981
    %s2986 = scalar_lea.vmem [#allocation0], 1166
    %v2987 = vld [vmem:[%s2986] sm:$0x10]
    %vm2988 = vcmask 1044484
    %v2989 = vsel %vm2988, %v2987, %v2985
    %s2990 = scalar_lea.vmem [#allocation0], 1197
    %v2991 = vld [vmem:[%s2990] sm:$0x20]
    %vm2992 = vcmask 1045509
    %v2993 = vsel %vm2992, %v2991, %v2989
    %s2994 = scalar_lea.vmem [#allocation0], 1228
    %v2995 = vld [vmem:[%s2994] sm:$0x40]
    %vm2996 = vcmask 1046534
    %v2997 = vsel %vm2996, %v2995, %v2993
    %s2998 = scalar_lea.vmem [#allocation0], 1259
    %v2999 = vld [vmem:[%s2998] sm:$0x80]
    %vm3000 = vcmask 1047559
    %v3001 = vsel %vm3000, %v2999, %v2997
    %3002 = vrot.lane.b32.xlu0 %v3001, 40
    %v3003 = vpop.permute.xlu0 %3002
    %vm3004 = vcmask 359744
    %s3005 = scalar_lea.vmem %s1, 32
    %3006 = vst.msk [vmem:[%s3005] sm:$0xff] %vm3004, %v3003
    %s3007 = scalar_lea.vmem [#allocation0], 274
    %v3008 = vld [vmem:[%s3007] sm:$0x1]
    %s3009 = scalar_lea.vmem [#allocation0], 305
    %v3010 = vld [vmem:[%s3009] sm:$0x2]
    %vm3011 = vcmask 1041409
    %v3012 = vsel %vm3011, %v3010, %v3008
    %s3013 = scalar_lea.vmem [#allocation0], 336
    %v3014 = vld [vmem:[%s3013] sm:$0x4]
    %vm3015 = vcmask 1042434
    %v3016 = vsel %vm3015, %v3014, %v3012
    %s3017 = scalar_lea.vmem [#allocation0], 367
    %v3018 = vld [vmem:[%s3017] sm:$0x8]
    %vm3019 = vcmask 1043459
    %v3020 = vsel %vm3019, %v3018, %v3016
    %s3021 = scalar_lea.vmem [#allocation0], 398
    %v3022 = vld [vmem:[%s3021] sm:$0x10]
    %vm3023 = vcmask 1044484
    %v3024 = vsel %vm3023, %v3022, %v3020
    %s3025 = scalar_lea.vmem [#allocation0], 429
    %v3026 = vld [vmem:[%s3025] sm:$0x20]
    %vm3027 = vcmask 1045509
    %v3028 = vsel %vm3027, %v3026, %v3024
    %s3029 = scalar_lea.vmem [#allocation0], 460
    %v3030 = vld [vmem:[%s3029] sm:$0x40]
    %vm3031 = vcmask 1046534
    %v3032 = vsel %vm3031, %v3030, %v3028
    %s3033 = scalar_lea.vmem [#allocation0], 491
    %v3034 = vld [vmem:[%s3033] sm:$0x80]
    %vm3035 = vcmask 1047559
    %v3036 = vsel %vm3035, %v3034, %v3032
    %3037 = vrot.lane.b32.xlu0 %v3036, 40
    %v3038 = vpop.permute.xlu0 %3037
    %vm3039 = vcmask 359744
    %s3040 = scalar_lea.vmem %s1, 8
    %3041 = vst.msk [vmem:[%s3040] sm:$0xff] %vm3039, %v3038
    %s3042 = scalar_lea.vmem [#allocation0], 1298
    %v3043 = vld [vmem:[%s3042] sm:$0x1]
    %s3044 = scalar_lea.vmem [#allocation0], 1329
    %v3045 = vld [vmem:[%s3044] sm:$0x2]
    %vm3046 = vcmask 1041409
    %v3047 = vsel %vm3046, %v3045, %v3043
    %s3048 = scalar_lea.vmem [#allocation0], 1360
    %v3049 = vld [vmem:[%s3048] sm:$0x4]
    %vm3050 = vcmask 1042434
    %v3051 = vsel %vm3050, %v3049, %v3047
    %s3052 = scalar_lea.vmem [#allocation0], 1391
    %v3053 = vld [vmem:[%s3052] sm:$0x8]
    %vm3054 = vcmask 1043459
    %v3055 = vsel %vm3054, %v3053, %v3051
    %s3056 = scalar_lea.vmem [#allocation0], 1422
    %v3057 = vld [vmem:[%s3056] sm:$0x10]
    %vm3058 = vcmask 1044484
    %v3059 = vsel %vm3058, %v3057, %v3055
    %s3060 = scalar_lea.vmem [#allocation0], 1453
    %v3061 = vld [vmem:[%s3060] sm:$0x20]
    %vm3062 = vcmask 1045509
    %v3063 = vsel %vm3062, %v3061, %v3059
    %s3064 = scalar_lea.vmem [#allocation0], 1484
    %v3065 = vld [vmem:[%s3064] sm:$0x40]
    %vm3066 = vcmask 1046534
    %v3067 = vsel %vm3066, %v3065, %v3063
    %s3068 = scalar_lea.vmem [#allocation0], 1515
    %v3069 = vld [vmem:[%s3068] sm:$0x80]
    %vm3070 = vcmask 1047559
    %v3071 = vsel %vm3070, %v3069, %v3067
    %3072 = vrot.lane.b32.xlu0 %v3071, 40
    %v3073 = vpop.permute.xlu0 %3072
    %vm3074 = vcmask 359744
    %s3075 = scalar_lea.vmem %s1, 40
    %3076 = vst.msk [vmem:[%s3075] sm:$0xff] %vm3074, %v3073
    %s3077 = scalar_lea.vmem [#allocation0], 530
    %v3078 = vld [vmem:[%s3077] sm:$0x1]
    %s3079 = scalar_lea.vmem [#allocation0], 561
    %v3080 = vld [vmem:[%s3079] sm:$0x2]
    %vm3081 = vcmask 1041409
    %v3082 = vsel %vm3081, %v3080, %v3078
    %s3083 = scalar_lea.vmem [#allocation0], 592
    %v3084 = vld [vmem:[%s3083] sm:$0x4]
    %vm3085 = vcmask 1042434
    %v3086 = vsel %vm3085, %v3084, %v3082
    %s3087 = scalar_lea.vmem [#allocation0], 623
    %v3088 = vld [vmem:[%s3087] sm:$0x8]
    %vm3089 = vcmask 1043459
    %v3090 = vsel %vm3089, %v3088, %v3086
    %s3091 = scalar_lea.vmem [#allocation0], 654
    %v3092 = vld [vmem:[%s3091] sm:$0x10]
    %vm3093 = vcmask 1044484
    %v3094 = vsel %vm3093, %v3092, %v3090
    %s3095 = scalar_lea.vmem [#allocation0], 685
    %v3096 = vld [vmem:[%s3095] sm:$0x20]
    %vm3097 = vcmask 1045509
    %v3098 = vsel %vm3097, %v3096, %v3094
    %s3099 = scalar_lea.vmem [#allocation0], 716
    %v3100 = vld [vmem:[%s3099] sm:$0x40]
    %vm3101 = vcmask 1046534
    %v3102 = vsel %vm3101, %v3100, %v3098
    %s3103 = scalar_lea.vmem [#allocation0], 747
    %v3104 = vld [vmem:[%s3103] sm:$0x80]
    %vm3105 = vcmask 1047559
    %v3106 = vsel %vm3105, %v3104, %v3102
    %3107 = vrot.lane.b32.xlu0 %v3106, 40
    %v3108 = vpop.permute.xlu0 %3107
    %vm3109 = vcmask 359744
    %s3110 = scalar_lea.vmem %s1, 16
    %3111 = vst.msk [vmem:[%s3110] sm:$0xff] %vm3109, %v3108
    %s3112 = scalar_lea.vmem [#allocation0], 1554
    %v3113 = vld [vmem:[%s3112] sm:$0x1]
    %s3114 = scalar_lea.vmem [#allocation0], 1585
    %v3115 = vld [vmem:[%s3114] sm:$0x2]
    %vm3116 = vcmask 1041409
    %v3117 = vsel %vm3116, %v3115, %v3113
    %s3118 = scalar_lea.vmem [#allocation0], 1616
    %v3119 = vld [vmem:[%s3118] sm:$0x4]
    %vm3120 = vcmask 1042434
    %v3121 = vsel %vm3120, %v3119, %v3117
    %s3122 = scalar_lea.vmem [#allocation0], 1647
    %v3123 = vld [vmem:[%s3122] sm:$0x8]
    %vm3124 = vcmask 1043459
    %v3125 = vsel %vm3124, %v3123, %v3121
    %s3126 = scalar_lea.vmem [#allocation0], 1678
    %v3127 = vld [vmem:[%s3126] sm:$0x10]
    %vm3128 = vcmask 1044484
    %v3129 = vsel %vm3128, %v3127, %v3125
    %s3130 = scalar_lea.vmem [#allocation0], 1709
    %v3131 = vld [vmem:[%s3130] sm:$0x20]
    %vm3132 = vcmask 1045509
    %v3133 = vsel %vm3132, %v3131, %v3129
    %s3134 = scalar_lea.vmem [#allocation0], 1740
    %v3135 = vld [vmem:[%s3134] sm:$0x40]
    %vm3136 = vcmask 1046534
    %v3137 = vsel %vm3136, %v3135, %v3133
    %s3138 = scalar_lea.vmem [#allocation0], 1771
    %v3139 = vld [vmem:[%s3138] sm:$0x80]
    %vm3140 = vcmask 1047559
    %v3141 = vsel %vm3140, %v3139, %v3137
    %3142 = vrot.lane.b32.xlu0 %v3141, 40
    %v3143 = vpop.permute.xlu0 %3142
    %vm3144 = vcmask 359744
    %s3145 = scalar_lea.vmem %s1, 48
    %3146 = vst.msk [vmem:[%s3145] sm:$0xff] %vm3144, %v3143
    %s3147 = scalar_lea.vmem [#allocation0], 786
    %v3148 = vld [vmem:[%s3147] sm:$0x1]
    %s3149 = scalar_lea.vmem [#allocation0], 817
    %v3150 = vld [vmem:[%s3149] sm:$0x2]
    %vm3151 = vcmask 1041409
    %v3152 = vsel %vm3151, %v3150, %v3148
    %s3153 = scalar_lea.vmem [#allocation0], 848
    %v3154 = vld [vmem:[%s3153] sm:$0x4]
    %vm3155 = vcmask 1042434
    %v3156 = vsel %vm3155, %v3154, %v3152
    %s3157 = scalar_lea.vmem [#allocation0], 879
    %v3158 = vld [vmem:[%s3157] sm:$0x8]
    %vm3159 = vcmask 1043459
    %v3160 = vsel %vm3159, %v3158, %v3156
    %s3161 = scalar_lea.vmem [#allocation0], 910
    %v3162 = vld [vmem:[%s3161] sm:$0x10]
    %vm3163 = vcmask 1044484
    %v3164 = vsel %vm3163, %v3162, %v3160
    %s3165 = scalar_lea.vmem [#allocation0], 941
    %v3166 = vld [vmem:[%s3165] sm:$0x20]
    %vm3167 = vcmask 1045509
    %v3168 = vsel %vm3167, %v3166, %v3164
    %s3169 = scalar_lea.vmem [#allocation0], 972
    %v3170 = vld [vmem:[%s3169] sm:$0x40]
    %vm3171 = vcmask 1046534
    %v3172 = vsel %vm3171, %v3170, %v3168
    %s3173 = scalar_lea.vmem [#allocation0], 1003
    %v3174 = vld [vmem:[%s3173] sm:$0x80]
    %vm3175 = vcmask 1047559
    %v3176 = vsel %vm3175, %v3174, %v3172
    %3177 = vrot.lane.b32.xlu0 %v3176, 40
    %v3178 = vpop.permute.xlu0 %3177
    %vm3179 = vcmask 359744
    %s3180 = scalar_lea.vmem %s1, 24
    %3181 = vst.msk [vmem:[%s3180] sm:$0xff] %vm3179, %v3178
    %s3182 = scalar_lea.vmem [#allocation0], 1810
    %v3183 = vld [vmem:[%s3182] sm:$0x1]
    %s3184 = scalar_lea.vmem [#allocation0], 1841
    %v3185 = vld [vmem:[%s3184] sm:$0x2]
    %vm3186 = vcmask 1041409
    %v3187 = vsel %vm3186, %v3185, %v3183
    %s3188 = scalar_lea.vmem [#allocation0], 1872
    %v3189 = vld [vmem:[%s3188] sm:$0x4]
    %vm3190 = vcmask 1042434
    %v3191 = vsel %vm3190, %v3189, %v3187
    %s3192 = scalar_lea.vmem [#allocation0], 1903
    %v3193 = vld [vmem:[%s3192] sm:$0x8]
    %vm3194 = vcmask 1043459
    %v3195 = vsel %vm3194, %v3193, %v3191
    %s3196 = scalar_lea.vmem [#allocation0], 1934
    %v3197 = vld [vmem:[%s3196] sm:$0x10]
    %vm3198 = vcmask 1044484
    %v3199 = vsel %vm3198, %v3197, %v3195
    %s3200 = scalar_lea.vmem [#allocation0], 1965
    %v3201 = vld [vmem:[%s3200] sm:$0x20]
    %vm3202 = vcmask 1045509
    %v3203 = vsel %vm3202, %v3201, %v3199
    %s3204 = scalar_lea.vmem [#allocation0], 1996
    %v3205 = vld [vmem:[%s3204] sm:$0x40]
    %vm3206 = vcmask 1046534
    %v3207 = vsel %vm3206, %v3205, %v3203
    %s3208 = scalar_lea.vmem [#allocation0], 2027
    %v3209 = vld [vmem:[%s3208] sm:$0x80]
    %vm3210 = vcmask 1047559
    %v3211 = vsel %vm3210, %v3209, %v3207
    %3212 = vrot.lane.b32.xlu0 %v3211, 40
    %v3213 = vpop.permute.xlu0 %3212
    %vm3214 = vcmask 359744
    %s3215 = scalar_lea.vmem %s1, 56
    %3216 = vst.msk [vmem:[%s3215] sm:$0xff] %vm3214, %v3213
    %s3217 = scalar_lea.vmem [#allocation0], 17
    %v3218 = vld [vmem:[%s3217] sm:$0x1]
    %s3219 = scalar_lea.vmem [#allocation0], 48
    %v3220 = vld [vmem:[%s3219] sm:$0x2]
    %vm3221 = vcmask 1041409
    %v3222 = vsel %vm3221, %v3220, %v3218
    %s3223 = scalar_lea.vmem [#allocation0], 79
    %v3224 = vld [vmem:[%s3223] sm:$0x4]
    %vm3225 = vcmask 1042434
    %v3226 = vsel %vm3225, %v3224, %v3222
    %s3227 = scalar_lea.vmem [#allocation0], 110
    %v3228 = vld [vmem:[%s3227] sm:$0x8]
    %vm3229 = vcmask 1043459
    %v3230 = vsel %vm3229, %v3228, %v3226
    %s3231 = scalar_lea.vmem [#allocation0], 141
    %v3232 = vld [vmem:[%s3231] sm:$0x10]
    %vm3233 = vcmask 1044484
    %v3234 = vsel %vm3233, %v3232, %v3230
    %s3235 = scalar_lea.vmem [#allocation0], 172
    %v3236 = vld [vmem:[%s3235] sm:$0x20]
    %vm3237 = vcmask 1045509
    %v3238 = vsel %vm3237, %v3236, %v3234
    %s3239 = scalar_lea.vmem [#allocation0], 203
    %v3240 = vld [vmem:[%s3239] sm:$0x40]
    %vm3241 = vcmask 1046534
    %v3242 = vsel %vm3241, %v3240, %v3238
    %s3243 = scalar_lea.vmem [#allocation0], 234
    %v3244 = vld [vmem:[%s3243] sm:$0x80]
    %vm3245 = vcmask 1047559
    %v3246 = vsel %vm3245, %v3244, %v3242
    %3247 = vrot.lane.b32.xlu0 %v3246, 36
    %v3248 = vpop.permute.xlu0 %3247
    %vm3249 = vcmask 326944
    %3250 = vst.msk [vmem:[%s1] sm:$0xff] %vm3249, %v3248
    %s3251 = scalar_lea.vmem [#allocation0], 1041
    %v3252 = vld [vmem:[%s3251] sm:$0x1]
    %s3253 = scalar_lea.vmem [#allocation0], 1072
    %v3254 = vld [vmem:[%s3253] sm:$0x2]
    %vm3255 = vcmask 1041409
    %v3256 = vsel %vm3255, %v3254, %v3252
    %s3257 = scalar_lea.vmem [#allocation0], 1103
    %v3258 = vld [vmem:[%s3257] sm:$0x4]
    %vm3259 = vcmask 1042434
    %v3260 = vsel %vm3259, %v3258, %v3256
    %s3261 = scalar_lea.vmem [#allocation0], 1134
    %v3262 = vld [vmem:[%s3261] sm:$0x8]
    %vm3263 = vcmask 1043459
    %v3264 = vsel %vm3263, %v3262, %v3260
    %s3265 = scalar_lea.vmem [#allocation0], 1165
    %v3266 = vld [vmem:[%s3265] sm:$0x10]
    %vm3267 = vcmask 1044484
    %v3268 = vsel %vm3267, %v3266, %v3264
    %s3269 = scalar_lea.vmem [#allocation0], 1196
    %v3270 = vld [vmem:[%s3269] sm:$0x20]
    %vm3271 = vcmask 1045509
    %v3272 = vsel %vm3271, %v3270, %v3268
    %s3273 = scalar_lea.vmem [#allocation0], 1227
    %v3274 = vld [vmem:[%s3273] sm:$0x40]
    %vm3275 = vcmask 1046534
    %v3276 = vsel %vm3275, %v3274, %v3272
    %s3277 = scalar_lea.vmem [#allocation0], 1258
    %v3278 = vld [vmem:[%s3277] sm:$0x80]
    %vm3279 = vcmask 1047559
    %v3280 = vsel %vm3279, %v3278, %v3276
    %3281 = vrot.lane.b32.xlu0 %v3280, 36
    %v3282 = vpop.permute.xlu0 %3281
    %vm3283 = vcmask 326944
    %s3284 = scalar_lea.vmem %s1, 32
    %3285 = vst.msk [vmem:[%s3284] sm:$0xff] %vm3283, %v3282
    %s3286 = scalar_lea.vmem [#allocation0], 273
    %v3287 = vld [vmem:[%s3286] sm:$0x1]
    %s3288 = scalar_lea.vmem [#allocation0], 304
    %v3289 = vld [vmem:[%s3288] sm:$0x2]
    %vm3290 = vcmask 1041409
    %v3291 = vsel %vm3290, %v3289, %v3287
    %s3292 = scalar_lea.vmem [#allocation0], 335
    %v3293 = vld [vmem:[%s3292] sm:$0x4]
    %vm3294 = vcmask 1042434
    %v3295 = vsel %vm3294, %v3293, %v3291
    %s3296 = scalar_lea.vmem [#allocation0], 366
    %v3297 = vld [vmem:[%s3296] sm:$0x8]
    %vm3298 = vcmask 1043459
    %v3299 = vsel %vm3298, %v3297, %v3295
    %s3300 = scalar_lea.vmem [#allocation0], 397
    %v3301 = vld [vmem:[%s3300] sm:$0x10]
    %vm3302 = vcmask 1044484
    %v3303 = vsel %vm3302, %v3301, %v3299
    %s3304 = scalar_lea.vmem [#allocation0], 428
    %v3305 = vld [vmem:[%s3304] sm:$0x20]
    %vm3306 = vcmask 1045509
    %v3307 = vsel %vm3306, %v3305, %v3303
    %s3308 = scalar_lea.vmem [#allocation0], 459
    %v3309 = vld [vmem:[%s3308] sm:$0x40]
    %vm3310 = vcmask 1046534
    %v3311 = vsel %vm3310, %v3309, %v3307
    %s3312 = scalar_lea.vmem [#allocation0], 490
    %v3313 = vld [vmem:[%s3312] sm:$0x80]
    %vm3314 = vcmask 1047559
    %v3315 = vsel %vm3314, %v3313, %v3311
    %3316 = vrot.lane.b32.xlu0 %v3315, 36
    %v3317 = vpop.permute.xlu0 %3316
    %vm3318 = vcmask 326944
    %s3319 = scalar_lea.vmem %s1, 8
    %3320 = vst.msk [vmem:[%s3319] sm:$0xff] %vm3318, %v3317
    %s3321 = scalar_lea.vmem [#allocation0], 1297
    %v3322 = vld [vmem:[%s3321] sm:$0x1]
    %s3323 = scalar_lea.vmem [#allocation0], 1328
    %v3324 = vld [vmem:[%s3323] sm:$0x2]
    %vm3325 = vcmask 1041409
    %v3326 = vsel %vm3325, %v3324, %v3322
    %s3327 = scalar_lea.vmem [#allocation0], 1359
    %v3328 = vld [vmem:[%s3327] sm:$0x4]
    %vm3329 = vcmask 1042434
    %v3330 = vsel %vm3329, %v3328, %v3326
    %s3331 = scalar_lea.vmem [#allocation0], 1390
    %v3332 = vld [vmem:[%s3331] sm:$0x8]
    %vm3333 = vcmask 1043459
    %v3334 = vsel %vm3333, %v3332, %v3330
    %s3335 = scalar_lea.vmem [#allocation0], 1421
    %v3336 = vld [vmem:[%s3335] sm:$0x10]
    %vm3337 = vcmask 1044484
    %v3338 = vsel %vm3337, %v3336, %v3334
    %s3339 = scalar_lea.vmem [#allocation0], 1452
    %v3340 = vld [vmem:[%s3339] sm:$0x20]
    %vm3341 = vcmask 1045509
    %v3342 = vsel %vm3341, %v3340, %v3338
    %s3343 = scalar_lea.vmem [#allocation0], 1483
    %v3344 = vld [vmem:[%s3343] sm:$0x40]
    %vm3345 = vcmask 1046534
    %v3346 = vsel %vm3345, %v3344, %v3342
    %s3347 = scalar_lea.vmem [#allocation0], 1514
    %v3348 = vld [vmem:[%s3347] sm:$0x80]
    %vm3349 = vcmask 1047559
    %v3350 = vsel %vm3349, %v3348, %v3346
    %3351 = vrot.lane.b32.xlu0 %v3350, 36
    %v3352 = vpop.permute.xlu0 %3351
    %vm3353 = vcmask 326944
    %s3354 = scalar_lea.vmem %s1, 40
    %3355 = vst.msk [vmem:[%s3354] sm:$0xff] %vm3353, %v3352
    %s3356 = scalar_lea.vmem [#allocation0], 529
    %v3357 = vld [vmem:[%s3356] sm:$0x1]
    %s3358 = scalar_lea.vmem [#allocation0], 560
    %v3359 = vld [vmem:[%s3358] sm:$0x2]
    %vm3360 = vcmask 1041409
    %v3361 = vsel %vm3360, %v3359, %v3357
    %s3362 = scalar_lea.vmem [#allocation0], 591
    %v3363 = vld [vmem:[%s3362] sm:$0x4]
    %vm3364 = vcmask 1042434
    %v3365 = vsel %vm3364, %v3363, %v3361
    %s3366 = scalar_lea.vmem [#allocation0], 622
    %v3367 = vld [vmem:[%s3366] sm:$0x8]
    %vm3368 = vcmask 1043459
    %v3369 = vsel %vm3368, %v3367, %v3365
    %s3370 = scalar_lea.vmem [#allocation0], 653
    %v3371 = vld [vmem:[%s3370] sm:$0x10]
    %vm3372 = vcmask 1044484
    %v3373 = vsel %vm3372, %v3371, %v3369
    %s3374 = scalar_lea.vmem [#allocation0], 684
    %v3375 = vld [vmem:[%s3374] sm:$0x20]
    %vm3376 = vcmask 1045509
    %v3377 = vsel %vm3376, %v3375, %v3373
    %s3378 = scalar_lea.vmem [#allocation0], 715
    %v3379 = vld [vmem:[%s3378] sm:$0x40]
    %vm3380 = vcmask 1046534
    %v3381 = vsel %vm3380, %v3379, %v3377
    %s3382 = scalar_lea.vmem [#allocation0], 746
    %v3383 = vld [vmem:[%s3382] sm:$0x80]
    %vm3384 = vcmask 1047559
    %v3385 = vsel %vm3384, %v3383, %v3381
    %3386 = vrot.lane.b32.xlu0 %v3385, 36
    %v3387 = vpop.permute.xlu0 %3386
    %vm3388 = vcmask 326944
    %s3389 = scalar_lea.vmem %s1, 16
    %3390 = vst.msk [vmem:[%s3389] sm:$0xff] %vm3388, %v3387
    %s3391 = scalar_lea.vmem [#allocation0], 1553
    %v3392 = vld [vmem:[%s3391] sm:$0x1]
    %s3393 = scalar_lea.vmem [#allocation0], 1584
    %v3394 = vld [vmem:[%s3393] sm:$0x2]
    %vm3395 = vcmask 1041409
    %v3396 = vsel %vm3395, %v3394, %v3392
    %s3397 = scalar_lea.vmem [#allocation0], 1615
    %v3398 = vld [vmem:[%s3397] sm:$0x4]
    %vm3399 = vcmask 1042434
    %v3400 = vsel %vm3399, %v3398, %v3396
    %s3401 = scalar_lea.vmem [#allocation0], 1646
    %v3402 = vld [vmem:[%s3401] sm:$0x8]
    %vm3403 = vcmask 1043459
    %v3404 = vsel %vm3403, %v3402, %v3400
    %s3405 = scalar_lea.vmem [#allocation0], 1677
    %v3406 = vld [vmem:[%s3405] sm:$0x10]
    %vm3407 = vcmask 1044484
    %v3408 = vsel %vm3407, %v3406, %v3404
    %s3409 = scalar_lea.vmem [#allocation0], 1708
    %v3410 = vld [vmem:[%s3409] sm:$0x20]
    %vm3411 = vcmask 1045509
    %v3412 = vsel %vm3411, %v3410, %v3408
    %s3413 = scalar_lea.vmem [#allocation0], 1739
    %v3414 = vld [vmem:[%s3413] sm:$0x40]
    %vm3415 = vcmask 1046534
    %v3416 = vsel %vm3415, %v3414, %v3412
    %s3417 = scalar_lea.vmem [#allocation0], 1770
    %v3418 = vld [vmem:[%s3417] sm:$0x80]
    %vm3419 = vcmask 1047559
    %v3420 = vsel %vm3419, %v3418, %v3416
    %3421 = vrot.lane.b32.xlu0 %v3420, 36
    %v3422 = vpop.permute.xlu0 %3421
    %vm3423 = vcmask 326944
    %s3424 = scalar_lea.vmem %s1, 48
    %3425 = vst.msk [vmem:[%s3424] sm:$0xff] %vm3423, %v3422
    %s3426 = scalar_lea.vmem [#allocation0], 785
    %v3427 = vld [vmem:[%s3426] sm:$0x1]
    %s3428 = scalar_lea.vmem [#allocation0], 816
    %v3429 = vld [vmem:[%s3428] sm:$0x2]
    %vm3430 = vcmask 1041409
    %v3431 = vsel %vm3430, %v3429, %v3427
    %s3432 = scalar_lea.vmem [#allocation0], 847
    %v3433 = vld [vmem:[%s3432] sm:$0x4]
    %vm3434 = vcmask 1042434
    %v3435 = vsel %vm3434, %v3433, %v3431
    %s3436 = scalar_lea.vmem [#allocation0], 878
    %v3437 = vld [vmem:[%s3436] sm:$0x8]
    %vm3438 = vcmask 1043459
    %v3439 = vsel %vm3438, %v3437, %v3435
    %s3440 = scalar_lea.vmem [#allocation0], 909
    %v3441 = vld [vmem:[%s3440] sm:$0x10]
    %vm3442 = vcmask 1044484
    %v3443 = vsel %vm3442, %v3441, %v3439
    %s3444 = scalar_lea.vmem [#allocation0], 940
    %v3445 = vld [vmem:[%s3444] sm:$0x20]
    %vm3446 = vcmask 1045509
    %v3447 = vsel %vm3446, %v3445, %v3443
    %s3448 = scalar_lea.vmem [#allocation0], 971
    %v3449 = vld [vmem:[%s3448] sm:$0x40]
    %vm3450 = vcmask 1046534
    %v3451 = vsel %vm3450, %v3449, %v3447
    %s3452 = scalar_lea.vmem [#allocation0], 1002
    %v3453 = vld [vmem:[%s3452] sm:$0x80]
    %vm3454 = vcmask 1047559
    %v3455 = vsel %vm3454, %v3453, %v3451
    %3456 = vrot.lane.b32.xlu0 %v3455, 36
    %v3457 = vpop.permute.xlu0 %3456
    %vm3458 = vcmask 326944
    %s3459 = scalar_lea.vmem %s1, 24
    %3460 = vst.msk [vmem:[%s3459] sm:$0xff] %vm3458, %v3457
    %s3461 = scalar_lea.vmem [#allocation0], 1809
    %v3462 = vld [vmem:[%s3461] sm:$0x1]
    %s3463 = scalar_lea.vmem [#allocation0], 1840
    %v3464 = vld [vmem:[%s3463] sm:$0x2]
    %vm3465 = vcmask 1041409
    %v3466 = vsel %vm3465, %v3464, %v3462
    %s3467 = scalar_lea.vmem [#allocation0], 1871
    %v3468 = vld [vmem:[%s3467] sm:$0x4]
    %vm3469 = vcmask 1042434
    %v3470 = vsel %vm3469, %v3468, %v3466
    %s3471 = scalar_lea.vmem [#allocation0], 1902
    %v3472 = vld [vmem:[%s3471] sm:$0x8]
    %vm3473 = vcmask 1043459
    %v3474 = vsel %vm3473, %v3472, %v3470
    %s3475 = scalar_lea.vmem [#allocation0], 1933
    %v3476 = vld [vmem:[%s3475] sm:$0x10]
    %vm3477 = vcmask 1044484
    %v3478 = vsel %vm3477, %v3476, %v3474
    %s3479 = scalar_lea.vmem [#allocation0], 1964
    %v3480 = vld [vmem:[%s3479] sm:$0x20]
    %vm3481 = vcmask 1045509
    %v3482 = vsel %vm3481, %v3480, %v3478
    %s3483 = scalar_lea.vmem [#allocation0], 1995
    %v3484 = vld [vmem:[%s3483] sm:$0x40]
    %vm3485 = vcmask 1046534
    %v3486 = vsel %vm3485, %v3484, %v3482
    %s3487 = scalar_lea.vmem [#allocation0], 2026
    %v3488 = vld [vmem:[%s3487] sm:$0x80]
    %vm3489 = vcmask 1047559
    %v3490 = vsel %vm3489, %v3488, %v3486
    %3491 = vrot.lane.b32.xlu0 %v3490, 36
    %v3492 = vpop.permute.xlu0 %3491
    %vm3493 = vcmask 326944
    %s3494 = scalar_lea.vmem %s1, 56
    %3495 = vst.msk [vmem:[%s3494] sm:$0xff] %vm3493, %v3492
    %s3496 = scalar_lea.vmem [#allocation0], 16
    %v3497 = vld [vmem:[%s3496] sm:$0x1]
    %s3498 = scalar_lea.vmem [#allocation0], 47
    %v3499 = vld [vmem:[%s3498] sm:$0x2]
    %vm3500 = vcmask 1041409
    %v3501 = vsel %vm3500, %v3499, %v3497
    %s3502 = scalar_lea.vmem [#allocation0], 78
    %v3503 = vld [vmem:[%s3502] sm:$0x4]
    %vm3504 = vcmask 1042434
    %v3505 = vsel %vm3504, %v3503, %v3501
    %s3506 = scalar_lea.vmem [#allocation0], 109
    %v3507 = vld [vmem:[%s3506] sm:$0x8]
    %vm3508 = vcmask 1043459
    %v3509 = vsel %vm3508, %v3507, %v3505
    %s3510 = scalar_lea.vmem [#allocation0], 140
    %v3511 = vld [vmem:[%s3510] sm:$0x10]
    %vm3512 = vcmask 1044484
    %v3513 = vsel %vm3512, %v3511, %v3509
    %s3514 = scalar_lea.vmem [#allocation0], 171
    %v3515 = vld [vmem:[%s3514] sm:$0x20]
    %vm3516 = vcmask 1045509
    %v3517 = vsel %vm3516, %v3515, %v3513
    %s3518 = scalar_lea.vmem [#allocation0], 202
    %v3519 = vld [vmem:[%s3518] sm:$0x40]
    %vm3520 = vcmask 1046534
    %v3521 = vsel %vm3520, %v3519, %v3517
    %s3522 = scalar_lea.vmem [#allocation0], 233
    %v3523 = vld [vmem:[%s3522] sm:$0x80]
    %vm3524 = vcmask 1047559
    %v3525 = vsel %vm3524, %v3523, %v3521
    %3526 = vrot.lane.b32.xlu0 %v3525, 32
    %v3527 = vpop.permute.xlu0 %3526
    %vm3528 = vcmask 294144
    %3529 = vst.msk [vmem:[%s1] sm:$0xff] %vm3528, %v3527
    %s3530 = scalar_lea.vmem [#allocation0], 1040
    %v3531 = vld [vmem:[%s3530] sm:$0x1]
    %s3532 = scalar_lea.vmem [#allocation0], 1071
    %v3533 = vld [vmem:[%s3532] sm:$0x2]
    %vm3534 = vcmask 1041409
    %v3535 = vsel %vm3534, %v3533, %v3531
    %s3536 = scalar_lea.vmem [#allocation0], 1102
    %v3537 = vld [vmem:[%s3536] sm:$0x4]
    %vm3538 = vcmask 1042434
    %v3539 = vsel %vm3538, %v3537, %v3535
    %s3540 = scalar_lea.vmem [#allocation0], 1133
    %v3541 = vld [vmem:[%s3540] sm:$0x8]
    %vm3542 = vcmask 1043459
    %v3543 = vsel %vm3542, %v3541, %v3539
    %s3544 = scalar_lea.vmem [#allocation0], 1164
    %v3545 = vld [vmem:[%s3544] sm:$0x10]
    %vm3546 = vcmask 1044484
    %v3547 = vsel %vm3546, %v3545, %v3543
    %s3548 = scalar_lea.vmem [#allocation0], 1195
    %v3549 = vld [vmem:[%s3548] sm:$0x20]
    %vm3550 = vcmask 1045509
    %v3551 = vsel %vm3550, %v3549, %v3547
    %s3552 = scalar_lea.vmem [#allocation0], 1226
    %v3553 = vld [vmem:[%s3552] sm:$0x40]
    %vm3554 = vcmask 1046534
    %v3555 = vsel %vm3554, %v3553, %v3551
    %s3556 = scalar_lea.vmem [#allocation0], 1257
    %v3557 = vld [vmem:[%s3556] sm:$0x80]
    %vm3558 = vcmask 1047559
    %v3559 = vsel %vm3558, %v3557, %v3555
    %3560 = vrot.lane.b32.xlu0 %v3559, 32
    %v3561 = vpop.permute.xlu0 %3560
    %vm3562 = vcmask 294144
    %s3563 = scalar_lea.vmem %s1, 32
    %3564 = vst.msk [vmem:[%s3563] sm:$0xff] %vm3562, %v3561
    %s3565 = scalar_lea.vmem [#allocation0], 272
    %v3566 = vld [vmem:[%s3565] sm:$0x1]
    %s3567 = scalar_lea.vmem [#allocation0], 303
    %v3568 = vld [vmem:[%s3567] sm:$0x2]
    %vm3569 = vcmask 1041409
    %v3570 = vsel %vm3569, %v3568, %v3566
    %s3571 = scalar_lea.vmem [#allocation0], 334
    %v3572 = vld [vmem:[%s3571] sm:$0x4]
    %vm3573 = vcmask 1042434
    %v3574 = vsel %vm3573, %v3572, %v3570
    %s3575 = scalar_lea.vmem [#allocation0], 365
    %v3576 = vld [vmem:[%s3575] sm:$0x8]
    %vm3577 = vcmask 1043459
    %v3578 = vsel %vm3577, %v3576, %v3574
    %s3579 = scalar_lea.vmem [#allocation0], 396
    %v3580 = vld [vmem:[%s3579] sm:$0x10]
    %vm3581 = vcmask 1044484
    %v3582 = vsel %vm3581, %v3580, %v3578
    %s3583 = scalar_lea.vmem [#allocation0], 427
    %v3584 = vld [vmem:[%s3583] sm:$0x20]
    %vm3585 = vcmask 1045509
    %v3586 = vsel %vm3585, %v3584, %v3582
    %s3587 = scalar_lea.vmem [#allocation0], 458
    %v3588 = vld [vmem:[%s3587] sm:$0x40]
    %vm3589 = vcmask 1046534
    %v3590 = vsel %vm3589, %v3588, %v3586
    %s3591 = scalar_lea.vmem [#allocation0], 489
    %v3592 = vld [vmem:[%s3591] sm:$0x80]
    %vm3593 = vcmask 1047559
    %v3594 = vsel %vm3593, %v3592, %v3590
    %3595 = vrot.lane.b32.xlu0 %v3594, 32
    %v3596 = vpop.permute.xlu0 %3595
    %vm3597 = vcmask 294144
    %s3598 = scalar_lea.vmem %s1, 8
    %3599 = vst.msk [vmem:[%s3598] sm:$0xff] %vm3597, %v3596
    %s3600 = scalar_lea.vmem [#allocation0], 1296
    %v3601 = vld [vmem:[%s3600] sm:$0x1]
    %s3602 = scalar_lea.vmem [#allocation0], 1327
    %v3603 = vld [vmem:[%s3602] sm:$0x2]
    %vm3604 = vcmask 1041409
    %v3605 = vsel %vm3604, %v3603, %v3601
    %s3606 = scalar_lea.vmem [#allocation0], 1358
    %v3607 = vld [vmem:[%s3606] sm:$0x4]
    %vm3608 = vcmask 1042434
    %v3609 = vsel %vm3608, %v3607, %v3605
    %s3610 = scalar_lea.vmem [#allocation0], 1389
    %v3611 = vld [vmem:[%s3610] sm:$0x8]
    %vm3612 = vcmask 1043459
    %v3613 = vsel %vm3612, %v3611, %v3609
    %s3614 = scalar_lea.vmem [#allocation0], 1420
    %v3615 = vld [vmem:[%s3614] sm:$0x10]
    %vm3616 = vcmask 1044484
    %v3617 = vsel %vm3616, %v3615, %v3613
    %s3618 = scalar_lea.vmem [#allocation0], 1451
    %v3619 = vld [vmem:[%s3618] sm:$0x20]
    %vm3620 = vcmask 1045509
    %v3621 = vsel %vm3620, %v3619, %v3617
    %s3622 = scalar_lea.vmem [#allocation0], 1482
    %v3623 = vld [vmem:[%s3622] sm:$0x40]
    %vm3624 = vcmask 1046534
    %v3625 = vsel %vm3624, %v3623, %v3621
    %s3626 = scalar_lea.vmem [#allocation0], 1513
    %v3627 = vld [vmem:[%s3626] sm:$0x80]
    %vm3628 = vcmask 1047559
    %v3629 = vsel %vm3628, %v3627, %v3625
    %3630 = vrot.lane.b32.xlu0 %v3629, 32
    %v3631 = vpop.permute.xlu0 %3630
    %vm3632 = vcmask 294144
    %s3633 = scalar_lea.vmem %s1, 40
    %3634 = vst.msk [vmem:[%s3633] sm:$0xff] %vm3632, %v3631
    %s3635 = scalar_lea.vmem [#allocation0], 528
    %v3636 = vld [vmem:[%s3635] sm:$0x1]
    %s3637 = scalar_lea.vmem [#allocation0], 559
    %v3638 = vld [vmem:[%s3637] sm:$0x2]
    %vm3639 = vcmask 1041409
    %v3640 = vsel %vm3639, %v3638, %v3636
    %s3641 = scalar_lea.vmem [#allocation0], 590
    %v3642 = vld [vmem:[%s3641] sm:$0x4]
    %vm3643 = vcmask 1042434
    %v3644 = vsel %vm3643, %v3642, %v3640
    %s3645 = scalar_lea.vmem [#allocation0], 621
    %v3646 = vld [vmem:[%s3645] sm:$0x8]
    %vm3647 = vcmask 1043459
    %v3648 = vsel %vm3647, %v3646, %v3644
    %s3649 = scalar_lea.vmem [#allocation0], 652
    %v3650 = vld [vmem:[%s3649] sm:$0x10]
    %vm3651 = vcmask 1044484
    %v3652 = vsel %vm3651, %v3650, %v3648
    %s3653 = scalar_lea.vmem [#allocation0], 683
    %v3654 = vld [vmem:[%s3653] sm:$0x20]
    %vm3655 = vcmask 1045509
    %v3656 = vsel %vm3655, %v3654, %v3652
    %s3657 = scalar_lea.vmem [#allocation0], 714
    %v3658 = vld [vmem:[%s3657] sm:$0x40]
    %vm3659 = vcmask 1046534
    %v3660 = vsel %vm3659, %v3658, %v3656
    %s3661 = scalar_lea.vmem [#allocation0], 745
    %v3662 = vld [vmem:[%s3661] sm:$0x80]
    %vm3663 = vcmask 1047559
    %v3664 = vsel %vm3663, %v3662, %v3660
    %3665 = vrot.lane.b32.xlu0 %v3664, 32
    %v3666 = vpop.permute.xlu0 %3665
    %vm3667 = vcmask 294144
    %s3668 = scalar_lea.vmem %s1, 16
    %3669 = vst.msk [vmem:[%s3668] sm:$0xff] %vm3667, %v3666
    %s3670 = scalar_lea.vmem [#allocation0], 1552
    %v3671 = vld [vmem:[%s3670] sm:$0x1]
    %s3672 = scalar_lea.vmem [#allocation0], 1583
    %v3673 = vld [vmem:[%s3672] sm:$0x2]
    %vm3674 = vcmask 1041409
    %v3675 = vsel %vm3674, %v3673, %v3671
    %s3676 = scalar_lea.vmem [#allocation0], 1614
    %v3677 = vld [vmem:[%s3676] sm:$0x4]
    %vm3678 = vcmask 1042434
    %v3679 = vsel %vm3678, %v3677, %v3675
    %s3680 = scalar_lea.vmem [#allocation0], 1645
    %v3681 = vld [vmem:[%s3680] sm:$0x8]
    %vm3682 = vcmask 1043459
    %v3683 = vsel %vm3682, %v3681, %v3679
    %s3684 = scalar_lea.vmem [#allocation0], 1676
    %v3685 = vld [vmem:[%s3684] sm:$0x10]
    %vm3686 = vcmask 1044484
    %v3687 = vsel %vm3686, %v3685, %v3683
    %s3688 = scalar_lea.vmem [#allocation0], 1707
    %v3689 = vld [vmem:[%s3688] sm:$0x20]
    %vm3690 = vcmask 1045509
    %v3691 = vsel %vm3690, %v3689, %v3687
    %s3692 = scalar_lea.vmem [#allocation0], 1738
    %v3693 = vld [vmem:[%s3692] sm:$0x40]
    %vm3694 = vcmask 1046534
    %v3695 = vsel %vm3694, %v3693, %v3691
    %s3696 = scalar_lea.vmem [#allocation0], 1769
    %v3697 = vld [vmem:[%s3696] sm:$0x80]
    %vm3698 = vcmask 1047559
    %v3699 = vsel %vm3698, %v3697, %v3695
    %3700 = vrot.lane.b32.xlu0 %v3699, 32
    %v3701 = vpop.permute.xlu0 %3700
    %vm3702 = vcmask 294144
    %s3703 = scalar_lea.vmem %s1, 48
    %3704 = vst.msk [vmem:[%s3703] sm:$0xff] %vm3702, %v3701
    %s3705 = scalar_lea.vmem [#allocation0], 784
    %v3706 = vld [vmem:[%s3705] sm:$0x1]
    %s3707 = scalar_lea.vmem [#allocation0], 815
    %v3708 = vld [vmem:[%s3707] sm:$0x2]
    %vm3709 = vcmask 1041409
    %v3710 = vsel %vm3709, %v3708, %v3706
    %s3711 = scalar_lea.vmem [#allocation0], 846
    %v3712 = vld [vmem:[%s3711] sm:$0x4]
    %vm3713 = vcmask 1042434
    %v3714 = vsel %vm3713, %v3712, %v3710
    %s3715 = scalar_lea.vmem [#allocation0], 877
    %v3716 = vld [vmem:[%s3715] sm:$0x8]
    %vm3717 = vcmask 1043459
    %v3718 = vsel %vm3717, %v3716, %v3714
    %s3719 = scalar_lea.vmem [#allocation0], 908
    %v3720 = vld [vmem:[%s3719] sm:$0x10]
    %vm3721 = vcmask 1044484
    %v3722 = vsel %vm3721, %v3720, %v3718
    %s3723 = scalar_lea.vmem [#allocation0], 939
    %v3724 = vld [vmem:[%s3723] sm:$0x20]
    %vm3725 = vcmask 1045509
    %v3726 = vsel %vm3725, %v3724, %v3722
    %s3727 = scalar_lea.vmem [#allocation0], 970
    %v3728 = vld [vmem:[%s3727] sm:$0x40]
    %vm3729 = vcmask 1046534
    %v3730 = vsel %vm3729, %v3728, %v3726
    %s3731 = scalar_lea.vmem [#allocation0], 1001
    %v3732 = vld [vmem:[%s3731] sm:$0x80]
    %vm3733 = vcmask 1047559
    %v3734 = vsel %vm3733, %v3732, %v3730
    %3735 = vrot.lane.b32.xlu0 %v3734, 32
    %v3736 = vpop.permute.xlu0 %3735
    %vm3737 = vcmask 294144
    %s3738 = scalar_lea.vmem %s1, 24
    %3739 = vst.msk [vmem:[%s3738] sm:$0xff] %vm3737, %v3736
    %s3740 = scalar_lea.vmem [#allocation0], 1808
    %v3741 = vld [vmem:[%s3740] sm:$0x1]
    %s3742 = scalar_lea.vmem [#allocation0], 1839
    %v3743 = vld [vmem:[%s3742] sm:$0x2]
    %vm3744 = vcmask 1041409
    %v3745 = vsel %vm3744, %v3743, %v3741
    %s3746 = scalar_lea.vmem [#allocation0], 1870
    %v3747 = vld [vmem:[%s3746] sm:$0x4]
    %vm3748 = vcmask 1042434
    %v3749 = vsel %vm3748, %v3747, %v3745
    %s3750 = scalar_lea.vmem [#allocation0], 1901
    %v3751 = vld [vmem:[%s3750] sm:$0x8]
    %vm3752 = vcmask 1043459
    %v3753 = vsel %vm3752, %v3751, %v3749
    %s3754 = scalar_lea.vmem [#allocation0], 1932
    %v3755 = vld [vmem:[%s3754] sm:$0x10]
    %vm3756 = vcmask 1044484
    %v3757 = vsel %vm3756, %v3755, %v3753
    %s3758 = scalar_lea.vmem [#allocation0], 1963
    %v3759 = vld [vmem:[%s3758] sm:$0x20]
    %vm3760 = vcmask 1045509
    %v3761 = vsel %vm3760, %v3759, %v3757
    %s3762 = scalar_lea.vmem [#allocation0], 1994
    %v3763 = vld [vmem:[%s3762] sm:$0x40]
    %vm3764 = vcmask 1046534
    %v3765 = vsel %vm3764, %v3763, %v3761
    %s3766 = scalar_lea.vmem [#allocation0], 2025
    %v3767 = vld [vmem:[%s3766] sm:$0x80]
    %vm3768 = vcmask 1047559
    %v3769 = vsel %vm3768, %v3767, %v3765
    %3770 = vrot.lane.b32.xlu0 %v3769, 32
    %v3771 = vpop.permute.xlu0 %3770
    %vm3772 = vcmask 294144
    %s3773 = scalar_lea.vmem %s1, 56
    %3774 = vst.msk [vmem:[%s3773] sm:$0xff] %vm3772, %v3771
    %s3775 = scalar_lea.vmem [#allocation0], 11
    %v3776 = vld [vmem:[%s3775] sm:$0x1]
    %s3777 = scalar_lea.vmem [#allocation0], 42
    %v3778 = vld [vmem:[%s3777] sm:$0x2]
    %vm3779 = vcmask 1041409
    %v3780 = vsel %vm3779, %v3778, %v3776
    %s3781 = scalar_lea.vmem [#allocation0], 73
    %v3782 = vld [vmem:[%s3781] sm:$0x4]
    %vm3783 = vcmask 1042434
    %v3784 = vsel %vm3783, %v3782, %v3780
    %s3785 = scalar_lea.vmem [#allocation0], 104
    %v3786 = vld [vmem:[%s3785] sm:$0x8]
    %vm3787 = vcmask 1043459
    %v3788 = vsel %vm3787, %v3786, %v3784
    %s3789 = scalar_lea.vmem [#allocation0], 135
    %v3790 = vld [vmem:[%s3789] sm:$0x10]
    %vm3791 = vcmask 1044484
    %v3792 = vsel %vm3791, %v3790, %v3788
    %s3793 = scalar_lea.vmem [#allocation0], 166
    %v3794 = vld [vmem:[%s3793] sm:$0x20]
    %vm3795 = vcmask 1045509
    %v3796 = vsel %vm3795, %v3794, %v3792
    %s3797 = scalar_lea.vmem [#allocation0], 197
    %v3798 = vld [vmem:[%s3797] sm:$0x40]
    %vm3799 = vcmask 1046534
    %v3800 = vsel %vm3799, %v3798, %v3796
    %s3801 = scalar_lea.vmem [#allocation0], 228
    %v3802 = vld [vmem:[%s3801] sm:$0x80]
    %vm3803 = vcmask 1047559
    %v3804 = vsel %vm3803, %v3802, %v3800
    %3805 = vrot.lane.b32.xlu0 %v3804, 28
    %v3806 = vpop.permute.xlu0 %3805
    %vm3807 = vcmask 261344
    %3808 = vst.msk [vmem:[%s1] sm:$0xff] %vm3807, %v3806
    %s3809 = scalar_lea.vmem [#allocation0], 1035
    %v3810 = vld [vmem:[%s3809] sm:$0x1]
    %s3811 = scalar_lea.vmem [#allocation0], 1066
    %v3812 = vld [vmem:[%s3811] sm:$0x2]
    %vm3813 = vcmask 1041409
    %v3814 = vsel %vm3813, %v3812, %v3810
    %s3815 = scalar_lea.vmem [#allocation0], 1097
    %v3816 = vld [vmem:[%s3815] sm:$0x4]
    %vm3817 = vcmask 1042434
    %v3818 = vsel %vm3817, %v3816, %v3814
    %s3819 = scalar_lea.vmem [#allocation0], 1128
    %v3820 = vld [vmem:[%s3819] sm:$0x8]
    %vm3821 = vcmask 1043459
    %v3822 = vsel %vm3821, %v3820, %v3818
    %s3823 = scalar_lea.vmem [#allocation0], 1159
    %v3824 = vld [vmem:[%s3823] sm:$0x10]
    %vm3825 = vcmask 1044484
    %v3826 = vsel %vm3825, %v3824, %v3822
    %s3827 = scalar_lea.vmem [#allocation0], 1190
    %v3828 = vld [vmem:[%s3827] sm:$0x20]
    %vm3829 = vcmask 1045509
    %v3830 = vsel %vm3829, %v3828, %v3826
    %s3831 = scalar_lea.vmem [#allocation0], 1221
    %v3832 = vld [vmem:[%s3831] sm:$0x40]
    %vm3833 = vcmask 1046534
    %v3834 = vsel %vm3833, %v3832, %v3830
    %s3835 = scalar_lea.vmem [#allocation0], 1252
    %v3836 = vld [vmem:[%s3835] sm:$0x80]
    %vm3837 = vcmask 1047559
    %v3838 = vsel %vm3837, %v3836, %v3834
    %3839 = vrot.lane.b32.xlu0 %v3838, 28
    %v3840 = vpop.permute.xlu0 %3839
    %vm3841 = vcmask 261344
    %s3842 = scalar_lea.vmem %s1, 32
    %3843 = vst.msk [vmem:[%s3842] sm:$0xff] %vm3841, %v3840
    %s3844 = scalar_lea.vmem [#allocation0], 267
    %v3845 = vld [vmem:[%s3844] sm:$0x1]
    %s3846 = scalar_lea.vmem [#allocation0], 298
    %v3847 = vld [vmem:[%s3846] sm:$0x2]
    %vm3848 = vcmask 1041409
    %v3849 = vsel %vm3848, %v3847, %v3845
    %s3850 = scalar_lea.vmem [#allocation0], 329
    %v3851 = vld [vmem:[%s3850] sm:$0x4]
    %vm3852 = vcmask 1042434
    %v3853 = vsel %vm3852, %v3851, %v3849
    %s3854 = scalar_lea.vmem [#allocation0], 360
    %v3855 = vld [vmem:[%s3854] sm:$0x8]
    %vm3856 = vcmask 1043459
    %v3857 = vsel %vm3856, %v3855, %v3853
    %s3858 = scalar_lea.vmem [#allocation0], 391
    %v3859 = vld [vmem:[%s3858] sm:$0x10]
    %vm3860 = vcmask 1044484
    %v3861 = vsel %vm3860, %v3859, %v3857
    %s3862 = scalar_lea.vmem [#allocation0], 422
    %v3863 = vld [vmem:[%s3862] sm:$0x20]
    %vm3864 = vcmask 1045509
    %v3865 = vsel %vm3864, %v3863, %v3861
    %s3866 = scalar_lea.vmem [#allocation0], 453
    %v3867 = vld [vmem:[%s3866] sm:$0x40]
    %vm3868 = vcmask 1046534
    %v3869 = vsel %vm3868, %v3867, %v3865
    %s3870 = scalar_lea.vmem [#allocation0], 484
    %v3871 = vld [vmem:[%s3870] sm:$0x80]
    %vm3872 = vcmask 1047559
    %v3873 = vsel %vm3872, %v3871, %v3869
    %3874 = vrot.lane.b32.xlu0 %v3873, 28
    %v3875 = vpop.permute.xlu0 %3874
    %vm3876 = vcmask 261344
    %s3877 = scalar_lea.vmem %s1, 8
    %3878 = vst.msk [vmem:[%s3877] sm:$0xff] %vm3876, %v3875
    %s3879 = scalar_lea.vmem [#allocation0], 1291
    %v3880 = vld [vmem:[%s3879] sm:$0x1]
    %s3881 = scalar_lea.vmem [#allocation0], 1322
    %v3882 = vld [vmem:[%s3881] sm:$0x2]
    %vm3883 = vcmask 1041409
    %v3884 = vsel %vm3883, %v3882, %v3880
    %s3885 = scalar_lea.vmem [#allocation0], 1353
    %v3886 = vld [vmem:[%s3885] sm:$0x4]
    %vm3887 = vcmask 1042434
    %v3888 = vsel %vm3887, %v3886, %v3884
    %s3889 = scalar_lea.vmem [#allocation0], 1384
    %v3890 = vld [vmem:[%s3889] sm:$0x8]
    %vm3891 = vcmask 1043459
    %v3892 = vsel %vm3891, %v3890, %v3888
    %s3893 = scalar_lea.vmem [#allocation0], 1415
    %v3894 = vld [vmem:[%s3893] sm:$0x10]
    %vm3895 = vcmask 1044484
    %v3896 = vsel %vm3895, %v3894, %v3892
    %s3897 = scalar_lea.vmem [#allocation0], 1446
    %v3898 = vld [vmem:[%s3897] sm:$0x20]
    %vm3899 = vcmask 1045509
    %v3900 = vsel %vm3899, %v3898, %v3896
    %s3901 = scalar_lea.vmem [#allocation0], 1477
    %v3902 = vld [vmem:[%s3901] sm:$0x40]
    %vm3903 = vcmask 1046534
    %v3904 = vsel %vm3903, %v3902, %v3900
    %s3905 = scalar_lea.vmem [#allocation0], 1508
    %v3906 = vld [vmem:[%s3905] sm:$0x80]
    %vm3907 = vcmask 1047559
    %v3908 = vsel %vm3907, %v3906, %v3904
    %3909 = vrot.lane.b32.xlu0 %v3908, 28
    %v3910 = vpop.permute.xlu0 %3909
    %vm3911 = vcmask 261344
    %s3912 = scalar_lea.vmem %s1, 40
    %3913 = vst.msk [vmem:[%s3912] sm:$0xff] %vm3911, %v3910
    %s3914 = scalar_lea.vmem [#allocation0], 523
    %v3915 = vld [vmem:[%s3914] sm:$0x1]
    %s3916 = scalar_lea.vmem [#allocation0], 554
    %v3917 = vld [vmem:[%s3916] sm:$0x2]
    %vm3918 = vcmask 1041409
    %v3919 = vsel %vm3918, %v3917, %v3915
    %s3920 = scalar_lea.vmem [#allocation0], 585
    %v3921 = vld [vmem:[%s3920] sm:$0x4]
    %vm3922 = vcmask 1042434
    %v3923 = vsel %vm3922, %v3921, %v3919
    %s3924 = scalar_lea.vmem [#allocation0], 616
    %v3925 = vld [vmem:[%s3924] sm:$0x8]
    %vm3926 = vcmask 1043459
    %v3927 = vsel %vm3926, %v3925, %v3923
    %s3928 = scalar_lea.vmem [#allocation0], 647
    %v3929 = vld [vmem:[%s3928] sm:$0x10]
    %vm3930 = vcmask 1044484
    %v3931 = vsel %vm3930, %v3929, %v3927
    %s3932 = scalar_lea.vmem [#allocation0], 678
    %v3933 = vld [vmem:[%s3932] sm:$0x20]
    %vm3934 = vcmask 1045509
    %v3935 = vsel %vm3934, %v3933, %v3931
    %s3936 = scalar_lea.vmem [#allocation0], 709
    %v3937 = vld [vmem:[%s3936] sm:$0x40]
    %vm3938 = vcmask 1046534
    %v3939 = vsel %vm3938, %v3937, %v3935
    %s3940 = scalar_lea.vmem [#allocation0], 740
    %v3941 = vld [vmem:[%s3940] sm:$0x80]
    %vm3942 = vcmask 1047559
    %v3943 = vsel %vm3942, %v3941, %v3939
    %3944 = vrot.lane.b32.xlu0 %v3943, 28
    %v3945 = vpop.permute.xlu0 %3944
    %vm3946 = vcmask 261344
    %s3947 = scalar_lea.vmem %s1, 16
    %3948 = vst.msk [vmem:[%s3947] sm:$0xff] %vm3946, %v3945
    %s3949 = scalar_lea.vmem [#allocation0], 1547
    %v3950 = vld [vmem:[%s3949] sm:$0x1]
    %s3951 = scalar_lea.vmem [#allocation0], 1578
    %v3952 = vld [vmem:[%s3951] sm:$0x2]
    %vm3953 = vcmask 1041409
    %v3954 = vsel %vm3953, %v3952, %v3950
    %s3955 = scalar_lea.vmem [#allocation0], 1609
    %v3956 = vld [vmem:[%s3955] sm:$0x4]
    %vm3957 = vcmask 1042434
    %v3958 = vsel %vm3957, %v3956, %v3954
    %s3959 = scalar_lea.vmem [#allocation0], 1640
    %v3960 = vld [vmem:[%s3959] sm:$0x8]
    %vm3961 = vcmask 1043459
    %v3962 = vsel %vm3961, %v3960, %v3958
    %s3963 = scalar_lea.vmem [#allocation0], 1671
    %v3964 = vld [vmem:[%s3963] sm:$0x10]
    %vm3965 = vcmask 1044484
    %v3966 = vsel %vm3965, %v3964, %v3962
    %s3967 = scalar_lea.vmem [#allocation0], 1702
    %v3968 = vld [vmem:[%s3967] sm:$0x20]
    %vm3969 = vcmask 1045509
    %v3970 = vsel %vm3969, %v3968, %v3966
    %s3971 = scalar_lea.vmem [#allocation0], 1733
    %v3972 = vld [vmem:[%s3971] sm:$0x40]
    %vm3973 = vcmask 1046534
    %v3974 = vsel %vm3973, %v3972, %v3970
    %s3975 = scalar_lea.vmem [#allocation0], 1764
    %v3976 = vld [vmem:[%s3975] sm:$0x80]
    %vm3977 = vcmask 1047559
    %v3978 = vsel %vm3977, %v3976, %v3974
    %3979 = vrot.lane.b32.xlu0 %v3978, 28
    %v3980 = vpop.permute.xlu0 %3979
    %vm3981 = vcmask 261344
    %s3982 = scalar_lea.vmem %s1, 48
    %3983 = vst.msk [vmem:[%s3982] sm:$0xff] %vm3981, %v3980
    %s3984 = scalar_lea.vmem [#allocation0], 779
    %v3985 = vld [vmem:[%s3984] sm:$0x1]
    %s3986 = scalar_lea.vmem [#allocation0], 810
    %v3987 = vld [vmem:[%s3986] sm:$0x2]
    %vm3988 = vcmask 1041409
    %v3989 = vsel %vm3988, %v3987, %v3985
    %s3990 = scalar_lea.vmem [#allocation0], 841
    %v3991 = vld [vmem:[%s3990] sm:$0x4]
    %vm3992 = vcmask 1042434
    %v3993 = vsel %vm3992, %v3991, %v3989
    %s3994 = scalar_lea.vmem [#allocation0], 872
    %v3995 = vld [vmem:[%s3994] sm:$0x8]
    %vm3996 = vcmask 1043459
    %v3997 = vsel %vm3996, %v3995, %v3993
    %s3998 = scalar_lea.vmem [#allocation0], 903
    %v3999 = vld [vmem:[%s3998] sm:$0x10]
    %vm4000 = vcmask 1044484
    %v4001 = vsel %vm4000, %v3999, %v3997
    %s4002 = scalar_lea.vmem [#allocation0], 934
    %v4003 = vld [vmem:[%s4002] sm:$0x20]
    %vm4004 = vcmask 1045509
    %v4005 = vsel %vm4004, %v4003, %v4001
    %s4006 = scalar_lea.vmem [#allocation0], 965
    %v4007 = vld [vmem:[%s4006] sm:$0x40]
    %vm4008 = vcmask 1046534
    %v4009 = vsel %vm4008, %v4007, %v4005
    %s4010 = scalar_lea.vmem [#allocation0], 996
    %v4011 = vld [vmem:[%s4010] sm:$0x80]
    %vm4012 = vcmask 1047559
    %v4013 = vsel %vm4012, %v4011, %v4009
    %4014 = vrot.lane.b32.xlu0 %v4013, 28
    %v4015 = vpop.permute.xlu0 %4014
    %vm4016 = vcmask 261344
    %s4017 = scalar_lea.vmem %s1, 24
    %4018 = vst.msk [vmem:[%s4017] sm:$0xff] %vm4016, %v4015
    %s4019 = scalar_lea.vmem [#allocation0], 1803
    %v4020 = vld [vmem:[%s4019] sm:$0x1]
    %s4021 = scalar_lea.vmem [#allocation0], 1834
    %v4022 = vld [vmem:[%s4021] sm:$0x2]
    %vm4023 = vcmask 1041409
    %v4024 = vsel %vm4023, %v4022, %v4020
    %s4025 = scalar_lea.vmem [#allocation0], 1865
    %v4026 = vld [vmem:[%s4025] sm:$0x4]
    %vm4027 = vcmask 1042434
    %v4028 = vsel %vm4027, %v4026, %v4024
    %s4029 = scalar_lea.vmem [#allocation0], 1896
    %v4030 = vld [vmem:[%s4029] sm:$0x8]
    %vm4031 = vcmask 1043459
    %v4032 = vsel %vm4031, %v4030, %v4028
    %s4033 = scalar_lea.vmem [#allocation0], 1927
    %v4034 = vld [vmem:[%s4033] sm:$0x10]
    %vm4035 = vcmask 1044484
    %v4036 = vsel %vm4035, %v4034, %v4032
    %s4037 = scalar_lea.vmem [#allocation0], 1958
    %v4038 = vld [vmem:[%s4037] sm:$0x20]
    %vm4039 = vcmask 1045509
    %v4040 = vsel %vm4039, %v4038, %v4036
    %s4041 = scalar_lea.vmem [#allocation0], 1989
    %v4042 = vld [vmem:[%s4041] sm:$0x40]
    %vm4043 = vcmask 1046534
    %v4044 = vsel %vm4043, %v4042, %v4040
    %s4045 = scalar_lea.vmem [#allocation0], 2020
    %v4046 = vld [vmem:[%s4045] sm:$0x80]
    %vm4047 = vcmask 1047559
    %v4048 = vsel %vm4047, %v4046, %v4044
    %4049 = vrot.lane.b32.xlu0 %v4048, 28
    %v4050 = vpop.permute.xlu0 %4049
    %vm4051 = vcmask 261344
    %s4052 = scalar_lea.vmem %s1, 56
    %4053 = vst.msk [vmem:[%s4052] sm:$0xff] %vm4051, %v4050
    %s4054 = scalar_lea.vmem [#allocation0], 10
    %v4055 = vld [vmem:[%s4054] sm:$0x1]
    %s4056 = scalar_lea.vmem [#allocation0], 41
    %v4057 = vld [vmem:[%s4056] sm:$0x2]
    %vm4058 = vcmask 1041409
    %v4059 = vsel %vm4058, %v4057, %v4055
    %s4060 = scalar_lea.vmem [#allocation0], 72
    %v4061 = vld [vmem:[%s4060] sm:$0x4]
    %vm4062 = vcmask 1042434
    %v4063 = vsel %vm4062, %v4061, %v4059
    %s4064 = scalar_lea.vmem [#allocation0], 103
    %v4065 = vld [vmem:[%s4064] sm:$0x8]
    %vm4066 = vcmask 1043459
    %v4067 = vsel %vm4066, %v4065, %v4063
    %s4068 = scalar_lea.vmem [#allocation0], 134
    %v4069 = vld [vmem:[%s4068] sm:$0x10]
    %vm4070 = vcmask 1044484
    %v4071 = vsel %vm4070, %v4069, %v4067
    %s4072 = scalar_lea.vmem [#allocation0], 165
    %v4073 = vld [vmem:[%s4072] sm:$0x20]
    %vm4074 = vcmask 1045509
    %v4075 = vsel %vm4074, %v4073, %v4071
    %s4076 = scalar_lea.vmem [#allocation0], 196
    %v4077 = vld [vmem:[%s4076] sm:$0x40]
    %vm4078 = vcmask 1046534
    %v4079 = vsel %vm4078, %v4077, %v4075
    %s4080 = scalar_lea.vmem [#allocation0], 227
    %v4081 = vld [vmem:[%s4080] sm:$0x80]
    %vm4082 = vcmask 1047559
    %v4083 = vsel %vm4082, %v4081, %v4079
    %4084 = vrot.lane.b32.xlu0 %v4083, 24
    %v4085 = vpop.permute.xlu0 %4084
    %vm4086 = vcmask 228544
    %4087 = vst.msk [vmem:[%s1] sm:$0xff] %vm4086, %v4085
    %s4088 = scalar_lea.vmem [#allocation0], 1034
    %v4089 = vld [vmem:[%s4088] sm:$0x1]
    %s4090 = scalar_lea.vmem [#allocation0], 1065
    %v4091 = vld [vmem:[%s4090] sm:$0x2]
    %vm4092 = vcmask 1041409
    %v4093 = vsel %vm4092, %v4091, %v4089
    %s4094 = scalar_lea.vmem [#allocation0], 1096
    %v4095 = vld [vmem:[%s4094] sm:$0x4]
    %vm4096 = vcmask 1042434
    %v4097 = vsel %vm4096, %v4095, %v4093
    %s4098 = scalar_lea.vmem [#allocation0], 1127
    %v4099 = vld [vmem:[%s4098] sm:$0x8]
    %vm4100 = vcmask 1043459
    %v4101 = vsel %vm4100, %v4099, %v4097
    %s4102 = scalar_lea.vmem [#allocation0], 1158
    %v4103 = vld [vmem:[%s4102] sm:$0x10]
    %vm4104 = vcmask 1044484
    %v4105 = vsel %vm4104, %v4103, %v4101
    %s4106 = scalar_lea.vmem [#allocation0], 1189
    %v4107 = vld [vmem:[%s4106] sm:$0x20]
    %vm4108 = vcmask 1045509
    %v4109 = vsel %vm4108, %v4107, %v4105
    %s4110 = scalar_lea.vmem [#allocation0], 1220
    %v4111 = vld [vmem:[%s4110] sm:$0x40]
    %vm4112 = vcmask 1046534
    %v4113 = vsel %vm4112, %v4111, %v4109
    %s4114 = scalar_lea.vmem [#allocation0], 1251
    %v4115 = vld [vmem:[%s4114] sm:$0x80]
    %vm4116 = vcmask 1047559
    %v4117 = vsel %vm4116, %v4115, %v4113
    %4118 = vrot.lane.b32.xlu0 %v4117, 24
    %v4119 = vpop.permute.xlu0 %4118
    %vm4120 = vcmask 228544
    %s4121 = scalar_lea.vmem %s1, 32
    %4122 = vst.msk [vmem:[%s4121] sm:$0xff] %vm4120, %v4119
    %s4123 = scalar_lea.vmem [#allocation0], 266
    %v4124 = vld [vmem:[%s4123] sm:$0x1]
    %s4125 = scalar_lea.vmem [#allocation0], 297
    %v4126 = vld [vmem:[%s4125] sm:$0x2]
    %vm4127 = vcmask 1041409
    %v4128 = vsel %vm4127, %v4126, %v4124
    %s4129 = scalar_lea.vmem [#allocation0], 328
    %v4130 = vld [vmem:[%s4129] sm:$0x4]
    %vm4131 = vcmask 1042434
    %v4132 = vsel %vm4131, %v4130, %v4128
    %s4133 = scalar_lea.vmem [#allocation0], 359
    %v4134 = vld [vmem:[%s4133] sm:$0x8]
    %vm4135 = vcmask 1043459
    %v4136 = vsel %vm4135, %v4134, %v4132
    %s4137 = scalar_lea.vmem [#allocation0], 390
    %v4138 = vld [vmem:[%s4137] sm:$0x10]
    %vm4139 = vcmask 1044484
    %v4140 = vsel %vm4139, %v4138, %v4136
    %s4141 = scalar_lea.vmem [#allocation0], 421
    %v4142 = vld [vmem:[%s4141] sm:$0x20]
    %vm4143 = vcmask 1045509
    %v4144 = vsel %vm4143, %v4142, %v4140
    %s4145 = scalar_lea.vmem [#allocation0], 452
    %v4146 = vld [vmem:[%s4145] sm:$0x40]
    %vm4147 = vcmask 1046534
    %v4148 = vsel %vm4147, %v4146, %v4144
    %s4149 = scalar_lea.vmem [#allocation0], 483
    %v4150 = vld [vmem:[%s4149] sm:$0x80]
    %vm4151 = vcmask 1047559
    %v4152 = vsel %vm4151, %v4150, %v4148
    %4153 = vrot.lane.b32.xlu0 %v4152, 24
    %v4154 = vpop.permute.xlu0 %4153
    %vm4155 = vcmask 228544
    %s4156 = scalar_lea.vmem %s1, 8
    %4157 = vst.msk [vmem:[%s4156] sm:$0xff] %vm4155, %v4154
    %s4158 = scalar_lea.vmem [#allocation0], 1290
    %v4159 = vld [vmem:[%s4158] sm:$0x1]
    %s4160 = scalar_lea.vmem [#allocation0], 1321
    %v4161 = vld [vmem:[%s4160] sm:$0x2]
    %vm4162 = vcmask 1041409
    %v4163 = vsel %vm4162, %v4161, %v4159
    %s4164 = scalar_lea.vmem [#allocation0], 1352
    %v4165 = vld [vmem:[%s4164] sm:$0x4]
    %vm4166 = vcmask 1042434
    %v4167 = vsel %vm4166, %v4165, %v4163
    %s4168 = scalar_lea.vmem [#allocation0], 1383
    %v4169 = vld [vmem:[%s4168] sm:$0x8]
    %vm4170 = vcmask 1043459
    %v4171 = vsel %vm4170, %v4169, %v4167
    %s4172 = scalar_lea.vmem [#allocation0], 1414
    %v4173 = vld [vmem:[%s4172] sm:$0x10]
    %vm4174 = vcmask 1044484
    %v4175 = vsel %vm4174, %v4173, %v4171
    %s4176 = scalar_lea.vmem [#allocation0], 1445
    %v4177 = vld [vmem:[%s4176] sm:$0x20]
    %vm4178 = vcmask 1045509
    %v4179 = vsel %vm4178, %v4177, %v4175
    %s4180 = scalar_lea.vmem [#allocation0], 1476
    %v4181 = vld [vmem:[%s4180] sm:$0x40]
    %vm4182 = vcmask 1046534
    %v4183 = vsel %vm4182, %v4181, %v4179
    %s4184 = scalar_lea.vmem [#allocation0], 1507
    %v4185 = vld [vmem:[%s4184] sm:$0x80]
    %vm4186 = vcmask 1047559
    %v4187 = vsel %vm4186, %v4185, %v4183
    %4188 = vrot.lane.b32.xlu0 %v4187, 24
    %v4189 = vpop.permute.xlu0 %4188
    %vm4190 = vcmask 228544
    %s4191 = scalar_lea.vmem %s1, 40
    %4192 = vst.msk [vmem:[%s4191] sm:$0xff] %vm4190, %v4189
    %s4193 = scalar_lea.vmem [#allocation0], 522
    %v4194 = vld [vmem:[%s4193] sm:$0x1]
    %s4195 = scalar_lea.vmem [#allocation0], 553
    %v4196 = vld [vmem:[%s4195] sm:$0x2]
    %vm4197 = vcmask 1041409
    %v4198 = vsel %vm4197, %v4196, %v4194
    %s4199 = scalar_lea.vmem [#allocation0], 584
    %v4200 = vld [vmem:[%s4199] sm:$0x4]
    %vm4201 = vcmask 1042434
    %v4202 = vsel %vm4201, %v4200, %v4198
    %s4203 = scalar_lea.vmem [#allocation0], 615
    %v4204 = vld [vmem:[%s4203] sm:$0x8]
    %vm4205 = vcmask 1043459
    %v4206 = vsel %vm4205, %v4204, %v4202
    %s4207 = scalar_lea.vmem [#allocation0], 646
    %v4208 = vld [vmem:[%s4207] sm:$0x10]
    %vm4209 = vcmask 1044484
    %v4210 = vsel %vm4209, %v4208, %v4206
    %s4211 = scalar_lea.vmem [#allocation0], 677
    %v4212 = vld [vmem:[%s4211] sm:$0x20]
    %vm4213 = vcmask 1045509
    %v4214 = vsel %vm4213, %v4212, %v4210
    %s4215 = scalar_lea.vmem [#allocation0], 708
    %v4216 = vld [vmem:[%s4215] sm:$0x40]
    %vm4217 = vcmask 1046534
    %v4218 = vsel %vm4217, %v4216, %v4214
    %s4219 = scalar_lea.vmem [#allocation0], 739
    %v4220 = vld [vmem:[%s4219] sm:$0x80]
    %vm4221 = vcmask 1047559
    %v4222 = vsel %vm4221, %v4220, %v4218
    %4223 = vrot.lane.b32.xlu0 %v4222, 24
    %v4224 = vpop.permute.xlu0 %4223
    %vm4225 = vcmask 228544
    %s4226 = scalar_lea.vmem %s1, 16
    %4227 = vst.msk [vmem:[%s4226] sm:$0xff] %vm4225, %v4224
    %s4228 = scalar_lea.vmem [#allocation0], 1546
    %v4229 = vld [vmem:[%s4228] sm:$0x1]
    %s4230 = scalar_lea.vmem [#allocation0], 1577
    %v4231 = vld [vmem:[%s4230] sm:$0x2]
    %vm4232 = vcmask 1041409
    %v4233 = vsel %vm4232, %v4231, %v4229
    %s4234 = scalar_lea.vmem [#allocation0], 1608
    %v4235 = vld [vmem:[%s4234] sm:$0x4]
    %vm4236 = vcmask 1042434
    %v4237 = vsel %vm4236, %v4235, %v4233
    %s4238 = scalar_lea.vmem [#allocation0], 1639
    %v4239 = vld [vmem:[%s4238] sm:$0x8]
    %vm4240 = vcmask 1043459
    %v4241 = vsel %vm4240, %v4239, %v4237
    %s4242 = scalar_lea.vmem [#allocation0], 1670
    %v4243 = vld [vmem:[%s4242] sm:$0x10]
    %vm4244 = vcmask 1044484
    %v4245 = vsel %vm4244, %v4243, %v4241
    %s4246 = scalar_lea.vmem [#allocation0], 1701
    %v4247 = vld [vmem:[%s4246] sm:$0x20]
    %vm4248 = vcmask 1045509
    %v4249 = vsel %vm4248, %v4247, %v4245
    %s4250 = scalar_lea.vmem [#allocation0], 1732
    %v4251 = vld [vmem:[%s4250] sm:$0x40]
    %vm4252 = vcmask 1046534
    %v4253 = vsel %vm4252, %v4251, %v4249
    %s4254 = scalar_lea.vmem [#allocation0], 1763
    %v4255 = vld [vmem:[%s4254] sm:$0x80]
    %vm4256 = vcmask 1047559
    %v4257 = vsel %vm4256, %v4255, %v4253
    %4258 = vrot.lane.b32.xlu0 %v4257, 24
    %v4259 = vpop.permute.xlu0 %4258
    %vm4260 = vcmask 228544
    %s4261 = scalar_lea.vmem %s1, 48
    %4262 = vst.msk [vmem:[%s4261] sm:$0xff] %vm4260, %v4259
    %s4263 = scalar_lea.vmem [#allocation0], 778
    %v4264 = vld [vmem:[%s4263] sm:$0x1]
    %s4265 = scalar_lea.vmem [#allocation0], 809
    %v4266 = vld [vmem:[%s4265] sm:$0x2]
    %vm4267 = vcmask 1041409
    %v4268 = vsel %vm4267, %v4266, %v4264
    %s4269 = scalar_lea.vmem [#allocation0], 840
    %v4270 = vld [vmem:[%s4269] sm:$0x4]
    %vm4271 = vcmask 1042434
    %v4272 = vsel %vm4271, %v4270, %v4268
    %s4273 = scalar_lea.vmem [#allocation0], 871
    %v4274 = vld [vmem:[%s4273] sm:$0x8]
    %vm4275 = vcmask 1043459
    %v4276 = vsel %vm4275, %v4274, %v4272
    %s4277 = scalar_lea.vmem [#allocation0], 902
    %v4278 = vld [vmem:[%s4277] sm:$0x10]
    %vm4279 = vcmask 1044484
    %v4280 = vsel %vm4279, %v4278, %v4276
    %s4281 = scalar_lea.vmem [#allocation0], 933
    %v4282 = vld [vmem:[%s4281] sm:$0x20]
    %vm4283 = vcmask 1045509
    %v4284 = vsel %vm4283, %v4282, %v4280
    %s4285 = scalar_lea.vmem [#allocation0], 964
    %v4286 = vld [vmem:[%s4285] sm:$0x40]
    %vm4287 = vcmask 1046534
    %v4288 = vsel %vm4287, %v4286, %v4284
    %s4289 = scalar_lea.vmem [#allocation0], 995
    %v4290 = vld [vmem:[%s4289] sm:$0x80]
    %vm4291 = vcmask 1047559
    %v4292 = vsel %vm4291, %v4290, %v4288
    %4293 = vrot.lane.b32.xlu0 %v4292, 24
    %v4294 = vpop.permute.xlu0 %4293
    %vm4295 = vcmask 228544
    %s4296 = scalar_lea.vmem %s1, 24
    %4297 = vst.msk [vmem:[%s4296] sm:$0xff] %vm4295, %v4294
    %s4298 = scalar_lea.vmem [#allocation0], 1802
    %v4299 = vld [vmem:[%s4298] sm:$0x1]
    %s4300 = scalar_lea.vmem [#allocation0], 1833
    %v4301 = vld [vmem:[%s4300] sm:$0x2]
    %vm4302 = vcmask 1041409
    %v4303 = vsel %vm4302, %v4301, %v4299
    %s4304 = scalar_lea.vmem [#allocation0], 1864
    %v4305 = vld [vmem:[%s4304] sm:$0x4]
    %vm4306 = vcmask 1042434
    %v4307 = vsel %vm4306, %v4305, %v4303
    %s4308 = scalar_lea.vmem [#allocation0], 1895
    %v4309 = vld [vmem:[%s4308] sm:$0x8]
    %vm4310 = vcmask 1043459
    %v4311 = vsel %vm4310, %v4309, %v4307
    %s4312 = scalar_lea.vmem [#allocation0], 1926
    %v4313 = vld [vmem:[%s4312] sm:$0x10]
    %vm4314 = vcmask 1044484
    %v4315 = vsel %vm4314, %v4313, %v4311
    %s4316 = scalar_lea.vmem [#allocation0], 1957
    %v4317 = vld [vmem:[%s4316] sm:$0x20]
    %vm4318 = vcmask 1045509
    %v4319 = vsel %vm4318, %v4317, %v4315
    %s4320 = scalar_lea.vmem [#allocation0], 1988
    %v4321 = vld [vmem:[%s4320] sm:$0x40]
    %vm4322 = vcmask 1046534
    %v4323 = vsel %vm4322, %v4321, %v4319
    %s4324 = scalar_lea.vmem [#allocation0], 2019
    %v4325 = vld [vmem:[%s4324] sm:$0x80]
    %vm4326 = vcmask 1047559
    %v4327 = vsel %vm4326, %v4325, %v4323
    %4328 = vrot.lane.b32.xlu0 %v4327, 24
    %v4329 = vpop.permute.xlu0 %4328
    %vm4330 = vcmask 228544
    %s4331 = scalar_lea.vmem %s1, 56
    %4332 = vst.msk [vmem:[%s4331] sm:$0xff] %vm4330, %v4329
    %s4333 = scalar_lea.vmem [#allocation0], 9
    %v4334 = vld [vmem:[%s4333] sm:$0x1]
    %s4335 = scalar_lea.vmem [#allocation0], 40
    %v4336 = vld [vmem:[%s4335] sm:$0x2]
    %vm4337 = vcmask 1041409
    %v4338 = vsel %vm4337, %v4336, %v4334
    %s4339 = scalar_lea.vmem [#allocation0], 71
    %v4340 = vld [vmem:[%s4339] sm:$0x4]
    %vm4341 = vcmask 1042434
    %v4342 = vsel %vm4341, %v4340, %v4338
    %s4343 = scalar_lea.vmem [#allocation0], 102
    %v4344 = vld [vmem:[%s4343] sm:$0x8]
    %vm4345 = vcmask 1043459
    %v4346 = vsel %vm4345, %v4344, %v4342
    %s4347 = scalar_lea.vmem [#allocation0], 133
    %v4348 = vld [vmem:[%s4347] sm:$0x10]
    %vm4349 = vcmask 1044484
    %v4350 = vsel %vm4349, %v4348, %v4346
    %s4351 = scalar_lea.vmem [#allocation0], 164
    %v4352 = vld [vmem:[%s4351] sm:$0x20]
    %vm4353 = vcmask 1045509
    %v4354 = vsel %vm4353, %v4352, %v4350
    %s4355 = scalar_lea.vmem [#allocation0], 195
    %v4356 = vld [vmem:[%s4355] sm:$0x40]
    %vm4357 = vcmask 1046534
    %v4358 = vsel %vm4357, %v4356, %v4354
    %s4359 = scalar_lea.vmem [#allocation0], 226
    %v4360 = vld [vmem:[%s4359] sm:$0x80]
    %vm4361 = vcmask 1047559
    %v4362 = vsel %vm4361, %v4360, %v4358
    %4363 = vrot.lane.b32.xlu0 %v4362, 20
    %v4364 = vpop.permute.xlu0 %4363
    %vm4365 = vcmask 195744
    %4366 = vst.msk [vmem:[%s1] sm:$0xff] %vm4365, %v4364
    %s4367 = scalar_lea.vmem [#allocation0], 1033
    %v4368 = vld [vmem:[%s4367] sm:$0x1]
    %s4369 = scalar_lea.vmem [#allocation0], 1064
    %v4370 = vld [vmem:[%s4369] sm:$0x2]
    %vm4371 = vcmask 1041409
    %v4372 = vsel %vm4371, %v4370, %v4368
    %s4373 = scalar_lea.vmem [#allocation0], 1095
    %v4374 = vld [vmem:[%s4373] sm:$0x4]
    %vm4375 = vcmask 1042434
    %v4376 = vsel %vm4375, %v4374, %v4372
    %s4377 = scalar_lea.vmem [#allocation0], 1126
    %v4378 = vld [vmem:[%s4377] sm:$0x8]
    %vm4379 = vcmask 1043459
    %v4380 = vsel %vm4379, %v4378, %v4376
    %s4381 = scalar_lea.vmem [#allocation0], 1157
    %v4382 = vld [vmem:[%s4381] sm:$0x10]
    %vm4383 = vcmask 1044484
    %v4384 = vsel %vm4383, %v4382, %v4380
    %s4385 = scalar_lea.vmem [#allocation0], 1188
    %v4386 = vld [vmem:[%s4385] sm:$0x20]
    %vm4387 = vcmask 1045509
    %v4388 = vsel %vm4387, %v4386, %v4384
    %s4389 = scalar_lea.vmem [#allocation0], 1219
    %v4390 = vld [vmem:[%s4389] sm:$0x40]
    %vm4391 = vcmask 1046534
    %v4392 = vsel %vm4391, %v4390, %v4388
    %s4393 = scalar_lea.vmem [#allocation0], 1250
    %v4394 = vld [vmem:[%s4393] sm:$0x80]
    %vm4395 = vcmask 1047559
    %v4396 = vsel %vm4395, %v4394, %v4392
    %4397 = vrot.lane.b32.xlu0 %v4396, 20
    %v4398 = vpop.permute.xlu0 %4397
    %vm4399 = vcmask 195744
    %s4400 = scalar_lea.vmem %s1, 32
    %4401 = vst.msk [vmem:[%s4400] sm:$0xff] %vm4399, %v4398
    %s4402 = scalar_lea.vmem [#allocation0], 265
    %v4403 = vld [vmem:[%s4402] sm:$0x1]
    %s4404 = scalar_lea.vmem [#allocation0], 296
    %v4405 = vld [vmem:[%s4404] sm:$0x2]
    %vm4406 = vcmask 1041409
    %v4407 = vsel %vm4406, %v4405, %v4403
    %s4408 = scalar_lea.vmem [#allocation0], 327
    %v4409 = vld [vmem:[%s4408] sm:$0x4]
    %vm4410 = vcmask 1042434
    %v4411 = vsel %vm4410, %v4409, %v4407
    %s4412 = scalar_lea.vmem [#allocation0], 358
    %v4413 = vld [vmem:[%s4412] sm:$0x8]
    %vm4414 = vcmask 1043459
    %v4415 = vsel %vm4414, %v4413, %v4411
    %s4416 = scalar_lea.vmem [#allocation0], 389
    %v4417 = vld [vmem:[%s4416] sm:$0x10]
    %vm4418 = vcmask 1044484
    %v4419 = vsel %vm4418, %v4417, %v4415
    %s4420 = scalar_lea.vmem [#allocation0], 420
    %v4421 = vld [vmem:[%s4420] sm:$0x20]
    %vm4422 = vcmask 1045509
    %v4423 = vsel %vm4422, %v4421, %v4419
    %s4424 = scalar_lea.vmem [#allocation0], 451
    %v4425 = vld [vmem:[%s4424] sm:$0x40]
    %vm4426 = vcmask 1046534
    %v4427 = vsel %vm4426, %v4425, %v4423
    %s4428 = scalar_lea.vmem [#allocation0], 482
    %v4429 = vld [vmem:[%s4428] sm:$0x80]
    %vm4430 = vcmask 1047559
    %v4431 = vsel %vm4430, %v4429, %v4427
    %4432 = vrot.lane.b32.xlu0 %v4431, 20
    %v4433 = vpop.permute.xlu0 %4432
    %vm4434 = vcmask 195744
    %s4435 = scalar_lea.vmem %s1, 8
    %4436 = vst.msk [vmem:[%s4435] sm:$0xff] %vm4434, %v4433
    %s4437 = scalar_lea.vmem [#allocation0], 1289
    %v4438 = vld [vmem:[%s4437] sm:$0x1]
    %s4439 = scalar_lea.vmem [#allocation0], 1320
    %v4440 = vld [vmem:[%s4439] sm:$0x2]
    %vm4441 = vcmask 1041409
    %v4442 = vsel %vm4441, %v4440, %v4438
    %s4443 = scalar_lea.vmem [#allocation0], 1351
    %v4444 = vld [vmem:[%s4443] sm:$0x4]
    %vm4445 = vcmask 1042434
    %v4446 = vsel %vm4445, %v4444, %v4442
    %s4447 = scalar_lea.vmem [#allocation0], 1382
    %v4448 = vld [vmem:[%s4447] sm:$0x8]
    %vm4449 = vcmask 1043459
    %v4450 = vsel %vm4449, %v4448, %v4446
    %s4451 = scalar_lea.vmem [#allocation0], 1413
    %v4452 = vld [vmem:[%s4451] sm:$0x10]
    %vm4453 = vcmask 1044484
    %v4454 = vsel %vm4453, %v4452, %v4450
    %s4455 = scalar_lea.vmem [#allocation0], 1444
    %v4456 = vld [vmem:[%s4455] sm:$0x20]
    %vm4457 = vcmask 1045509
    %v4458 = vsel %vm4457, %v4456, %v4454
    %s4459 = scalar_lea.vmem [#allocation0], 1475
    %v4460 = vld [vmem:[%s4459] sm:$0x40]
    %vm4461 = vcmask 1046534
    %v4462 = vsel %vm4461, %v4460, %v4458
    %s4463 = scalar_lea.vmem [#allocation0], 1506
    %v4464 = vld [vmem:[%s4463] sm:$0x80]
    %vm4465 = vcmask 1047559
    %v4466 = vsel %vm4465, %v4464, %v4462
    %4467 = vrot.lane.b32.xlu0 %v4466, 20
    %v4468 = vpop.permute.xlu0 %4467
    %vm4469 = vcmask 195744
    %s4470 = scalar_lea.vmem %s1, 40
    %4471 = vst.msk [vmem:[%s4470] sm:$0xff] %vm4469, %v4468
    %s4472 = scalar_lea.vmem [#allocation0], 521
    %v4473 = vld [vmem:[%s4472] sm:$0x1]
    %s4474 = scalar_lea.vmem [#allocation0], 552
    %v4475 = vld [vmem:[%s4474] sm:$0x2]
    %vm4476 = vcmask 1041409
    %v4477 = vsel %vm4476, %v4475, %v4473
    %s4478 = scalar_lea.vmem [#allocation0], 583
    %v4479 = vld [vmem:[%s4478] sm:$0x4]
    %vm4480 = vcmask 1042434
    %v4481 = vsel %vm4480, %v4479, %v4477
    %s4482 = scalar_lea.vmem [#allocation0], 614
    %v4483 = vld [vmem:[%s4482] sm:$0x8]
    %vm4484 = vcmask 1043459
    %v4485 = vsel %vm4484, %v4483, %v4481
    %s4486 = scalar_lea.vmem [#allocation0], 645
    %v4487 = vld [vmem:[%s4486] sm:$0x10]
    %vm4488 = vcmask 1044484
    %v4489 = vsel %vm4488, %v4487, %v4485
    %s4490 = scalar_lea.vmem [#allocation0], 676
    %v4491 = vld [vmem:[%s4490] sm:$0x20]
    %vm4492 = vcmask 1045509
    %v4493 = vsel %vm4492, %v4491, %v4489
    %s4494 = scalar_lea.vmem [#allocation0], 707
    %v4495 = vld [vmem:[%s4494] sm:$0x40]
    %vm4496 = vcmask 1046534
    %v4497 = vsel %vm4496, %v4495, %v4493
    %s4498 = scalar_lea.vmem [#allocation0], 738
    %v4499 = vld [vmem:[%s4498] sm:$0x80]
    %vm4500 = vcmask 1047559
    %v4501 = vsel %vm4500, %v4499, %v4497
    %4502 = vrot.lane.b32.xlu0 %v4501, 20
    %v4503 = vpop.permute.xlu0 %4502
    %vm4504 = vcmask 195744
    %s4505 = scalar_lea.vmem %s1, 16
    %4506 = vst.msk [vmem:[%s4505] sm:$0xff] %vm4504, %v4503
    %s4507 = scalar_lea.vmem [#allocation0], 1545
    %v4508 = vld [vmem:[%s4507] sm:$0x1]
    %s4509 = scalar_lea.vmem [#allocation0], 1576
    %v4510 = vld [vmem:[%s4509] sm:$0x2]
    %vm4511 = vcmask 1041409
    %v4512 = vsel %vm4511, %v4510, %v4508
    %s4513 = scalar_lea.vmem [#allocation0], 1607
    %v4514 = vld [vmem:[%s4513] sm:$0x4]
    %vm4515 = vcmask 1042434
    %v4516 = vsel %vm4515, %v4514, %v4512
    %s4517 = scalar_lea.vmem [#allocation0], 1638
    %v4518 = vld [vmem:[%s4517] sm:$0x8]
    %vm4519 = vcmask 1043459
    %v4520 = vsel %vm4519, %v4518, %v4516
    %s4521 = scalar_lea.vmem [#allocation0], 1669
    %v4522 = vld [vmem:[%s4521] sm:$0x10]
    %vm4523 = vcmask 1044484
    %v4524 = vsel %vm4523, %v4522, %v4520
    %s4525 = scalar_lea.vmem [#allocation0], 1700
    %v4526 = vld [vmem:[%s4525] sm:$0x20]
    %vm4527 = vcmask 1045509
    %v4528 = vsel %vm4527, %v4526, %v4524
    %s4529 = scalar_lea.vmem [#allocation0], 1731
    %v4530 = vld [vmem:[%s4529] sm:$0x40]
    %vm4531 = vcmask 1046534
    %v4532 = vsel %vm4531, %v4530, %v4528
    %s4533 = scalar_lea.vmem [#allocation0], 1762
    %v4534 = vld [vmem:[%s4533] sm:$0x80]
    %vm4535 = vcmask 1047559
    %v4536 = vsel %vm4535, %v4534, %v4532
    %4537 = vrot.lane.b32.xlu0 %v4536, 20
    %v4538 = vpop.permute.xlu0 %4537
    %vm4539 = vcmask 195744
    %s4540 = scalar_lea.vmem %s1, 48
    %4541 = vst.msk [vmem:[%s4540] sm:$0xff] %vm4539, %v4538
    %s4542 = scalar_lea.vmem [#allocation0], 777
    %v4543 = vld [vmem:[%s4542] sm:$0x1]
    %s4544 = scalar_lea.vmem [#allocation0], 808
    %v4545 = vld [vmem:[%s4544] sm:$0x2]
    %vm4546 = vcmask 1041409
    %v4547 = vsel %vm4546, %v4545, %v4543
    %s4548 = scalar_lea.vmem [#allocation0], 839
    %v4549 = vld [vmem:[%s4548] sm:$0x4]
    %vm4550 = vcmask 1042434
    %v4551 = vsel %vm4550, %v4549, %v4547
    %s4552 = scalar_lea.vmem [#allocation0], 870
    %v4553 = vld [vmem:[%s4552] sm:$0x8]
    %vm4554 = vcmask 1043459
    %v4555 = vsel %vm4554, %v4553, %v4551
    %s4556 = scalar_lea.vmem [#allocation0], 901
    %v4557 = vld [vmem:[%s4556] sm:$0x10]
    %vm4558 = vcmask 1044484
    %v4559 = vsel %vm4558, %v4557, %v4555
    %s4560 = scalar_lea.vmem [#allocation0], 932
    %v4561 = vld [vmem:[%s4560] sm:$0x20]
    %vm4562 = vcmask 1045509
    %v4563 = vsel %vm4562, %v4561, %v4559
    %s4564 = scalar_lea.vmem [#allocation0], 963
    %v4565 = vld [vmem:[%s4564] sm:$0x40]
    %vm4566 = vcmask 1046534
    %v4567 = vsel %vm4566, %v4565, %v4563
    %s4568 = scalar_lea.vmem [#allocation0], 994
    %v4569 = vld [vmem:[%s4568] sm:$0x80]
    %vm4570 = vcmask 1047559
    %v4571 = vsel %vm4570, %v4569, %v4567
    %4572 = vrot.lane.b32.xlu0 %v4571, 20
    %v4573 = vpop.permute.xlu0 %4572
    %vm4574 = vcmask 195744
    %s4575 = scalar_lea.vmem %s1, 24
    %4576 = vst.msk [vmem:[%s4575] sm:$0xff] %vm4574, %v4573
    %s4577 = scalar_lea.vmem [#allocation0], 1801
    %v4578 = vld [vmem:[%s4577] sm:$0x1]
    %s4579 = scalar_lea.vmem [#allocation0], 1832
    %v4580 = vld [vmem:[%s4579] sm:$0x2]
    %vm4581 = vcmask 1041409
    %v4582 = vsel %vm4581, %v4580, %v4578
    %s4583 = scalar_lea.vmem [#allocation0], 1863
    %v4584 = vld [vmem:[%s4583] sm:$0x4]
    %vm4585 = vcmask 1042434
    %v4586 = vsel %vm4585, %v4584, %v4582
    %s4587 = scalar_lea.vmem [#allocation0], 1894
    %v4588 = vld [vmem:[%s4587] sm:$0x8]
    %vm4589 = vcmask 1043459
    %v4590 = vsel %vm4589, %v4588, %v4586
    %s4591 = scalar_lea.vmem [#allocation0], 1925
    %v4592 = vld [vmem:[%s4591] sm:$0x10]
    %vm4593 = vcmask 1044484
    %v4594 = vsel %vm4593, %v4592, %v4590
    %s4595 = scalar_lea.vmem [#allocation0], 1956
    %v4596 = vld [vmem:[%s4595] sm:$0x20]
    %vm4597 = vcmask 1045509
    %v4598 = vsel %vm4597, %v4596, %v4594
    %s4599 = scalar_lea.vmem [#allocation0], 1987
    %v4600 = vld [vmem:[%s4599] sm:$0x40]
    %vm4601 = vcmask 1046534
    %v4602 = vsel %vm4601, %v4600, %v4598
    %s4603 = scalar_lea.vmem [#allocation0], 2018
    %v4604 = vld [vmem:[%s4603] sm:$0x80]
    %vm4605 = vcmask 1047559
    %v4606 = vsel %vm4605, %v4604, %v4602
    %4607 = vrot.lane.b32.xlu0 %v4606, 20
    %v4608 = vpop.permute.xlu0 %4607
    %vm4609 = vcmask 195744
    %s4610 = scalar_lea.vmem %s1, 56
    %4611 = vst.msk [vmem:[%s4610] sm:$0xff] %vm4609, %v4608
    %s4612 = scalar_lea.vmem [#allocation0], 8
    %v4613 = vld [vmem:[%s4612] sm:$0x1]
    %s4614 = scalar_lea.vmem [#allocation0], 39
    %v4615 = vld [vmem:[%s4614] sm:$0x2]
    %vm4616 = vcmask 1041409
    %v4617 = vsel %vm4616, %v4615, %v4613
    %s4618 = scalar_lea.vmem [#allocation0], 70
    %v4619 = vld [vmem:[%s4618] sm:$0x4]
    %vm4620 = vcmask 1042434
    %v4621 = vsel %vm4620, %v4619, %v4617
    %s4622 = scalar_lea.vmem [#allocation0], 101
    %v4623 = vld [vmem:[%s4622] sm:$0x8]
    %vm4624 = vcmask 1043459
    %v4625 = vsel %vm4624, %v4623, %v4621
    %s4626 = scalar_lea.vmem [#allocation0], 132
    %v4627 = vld [vmem:[%s4626] sm:$0x10]
    %vm4628 = vcmask 1044484
    %v4629 = vsel %vm4628, %v4627, %v4625
    %s4630 = scalar_lea.vmem [#allocation0], 163
    %v4631 = vld [vmem:[%s4630] sm:$0x20]
    %vm4632 = vcmask 1045509
    %v4633 = vsel %vm4632, %v4631, %v4629
    %s4634 = scalar_lea.vmem [#allocation0], 194
    %v4635 = vld [vmem:[%s4634] sm:$0x40]
    %vm4636 = vcmask 1046534
    %v4637 = vsel %vm4636, %v4635, %v4633
    %s4638 = scalar_lea.vmem [#allocation0], 225
    %v4639 = vld [vmem:[%s4638] sm:$0x80]
    %vm4640 = vcmask 1047559
    %v4641 = vsel %vm4640, %v4639, %v4637
    %4642 = vrot.lane.b32.xlu0 %v4641, 16
    %v4643 = vpop.permute.xlu0 %4642
    %vm4644 = vcmask 162944
    %4645 = vst.msk [vmem:[%s1] sm:$0xff] %vm4644, %v4643
    %s4646 = scalar_lea.vmem [#allocation0], 1032
    %v4647 = vld [vmem:[%s4646] sm:$0x1]
    %s4648 = scalar_lea.vmem [#allocation0], 1063
    %v4649 = vld [vmem:[%s4648] sm:$0x2]
    %vm4650 = vcmask 1041409
    %v4651 = vsel %vm4650, %v4649, %v4647
    %s4652 = scalar_lea.vmem [#allocation0], 1094
    %v4653 = vld [vmem:[%s4652] sm:$0x4]
    %vm4654 = vcmask 1042434
    %v4655 = vsel %vm4654, %v4653, %v4651
    %s4656 = scalar_lea.vmem [#allocation0], 1125
    %v4657 = vld [vmem:[%s4656] sm:$0x8]
    %vm4658 = vcmask 1043459
    %v4659 = vsel %vm4658, %v4657, %v4655
    %s4660 = scalar_lea.vmem [#allocation0], 1156
    %v4661 = vld [vmem:[%s4660] sm:$0x10]
    %vm4662 = vcmask 1044484
    %v4663 = vsel %vm4662, %v4661, %v4659
    %s4664 = scalar_lea.vmem [#allocation0], 1187
    %v4665 = vld [vmem:[%s4664] sm:$0x20]
    %vm4666 = vcmask 1045509
    %v4667 = vsel %vm4666, %v4665, %v4663
    %s4668 = scalar_lea.vmem [#allocation0], 1218
    %v4669 = vld [vmem:[%s4668] sm:$0x40]
    %vm4670 = vcmask 1046534
    %v4671 = vsel %vm4670, %v4669, %v4667
    %s4672 = scalar_lea.vmem [#allocation0], 1249
    %v4673 = vld [vmem:[%s4672] sm:$0x80]
    %vm4674 = vcmask 1047559
    %v4675 = vsel %vm4674, %v4673, %v4671
    %4676 = vrot.lane.b32.xlu0 %v4675, 16
    %v4677 = vpop.permute.xlu0 %4676
    %vm4678 = vcmask 162944
    %s4679 = scalar_lea.vmem %s1, 32
    %4680 = vst.msk [vmem:[%s4679] sm:$0xff] %vm4678, %v4677
    %s4681 = scalar_lea.vmem [#allocation0], 264
    %v4682 = vld [vmem:[%s4681] sm:$0x1]
    %s4683 = scalar_lea.vmem [#allocation0], 295
    %v4684 = vld [vmem:[%s4683] sm:$0x2]
    %vm4685 = vcmask 1041409
    %v4686 = vsel %vm4685, %v4684, %v4682
    %s4687 = scalar_lea.vmem [#allocation0], 326
    %v4688 = vld [vmem:[%s4687] sm:$0x4]
    %vm4689 = vcmask 1042434
    %v4690 = vsel %vm4689, %v4688, %v4686
    %s4691 = scalar_lea.vmem [#allocation0], 357
    %v4692 = vld [vmem:[%s4691] sm:$0x8]
    %vm4693 = vcmask 1043459
    %v4694 = vsel %vm4693, %v4692, %v4690
    %s4695 = scalar_lea.vmem [#allocation0], 388
    %v4696 = vld [vmem:[%s4695] sm:$0x10]
    %vm4697 = vcmask 1044484
    %v4698 = vsel %vm4697, %v4696, %v4694
    %s4699 = scalar_lea.vmem [#allocation0], 419
    %v4700 = vld [vmem:[%s4699] sm:$0x20]
    %vm4701 = vcmask 1045509
    %v4702 = vsel %vm4701, %v4700, %v4698
    %s4703 = scalar_lea.vmem [#allocation0], 450
    %v4704 = vld [vmem:[%s4703] sm:$0x40]
    %vm4705 = vcmask 1046534
    %v4706 = vsel %vm4705, %v4704, %v4702
    %s4707 = scalar_lea.vmem [#allocation0], 481
    %v4708 = vld [vmem:[%s4707] sm:$0x80]
    %vm4709 = vcmask 1047559
    %v4710 = vsel %vm4709, %v4708, %v4706
    %4711 = vrot.lane.b32.xlu0 %v4710, 16
    %v4712 = vpop.permute.xlu0 %4711
    %vm4713 = vcmask 162944
    %s4714 = scalar_lea.vmem %s1, 8
    %4715 = vst.msk [vmem:[%s4714] sm:$0xff] %vm4713, %v4712
    %s4716 = scalar_lea.vmem [#allocation0], 1288
    %v4717 = vld [vmem:[%s4716] sm:$0x1]
    %s4718 = scalar_lea.vmem [#allocation0], 1319
    %v4719 = vld [vmem:[%s4718] sm:$0x2]
    %vm4720 = vcmask 1041409
    %v4721 = vsel %vm4720, %v4719, %v4717
    %s4722 = scalar_lea.vmem [#allocation0], 1350
    %v4723 = vld [vmem:[%s4722] sm:$0x4]
    %vm4724 = vcmask 1042434
    %v4725 = vsel %vm4724, %v4723, %v4721
    %s4726 = scalar_lea.vmem [#allocation0], 1381
    %v4727 = vld [vmem:[%s4726] sm:$0x8]
    %vm4728 = vcmask 1043459
    %v4729 = vsel %vm4728, %v4727, %v4725
    %s4730 = scalar_lea.vmem [#allocation0], 1412
    %v4731 = vld [vmem:[%s4730] sm:$0x10]
    %vm4732 = vcmask 1044484
    %v4733 = vsel %vm4732, %v4731, %v4729
    %s4734 = scalar_lea.vmem [#allocation0], 1443
    %v4735 = vld [vmem:[%s4734] sm:$0x20]
    %vm4736 = vcmask 1045509
    %v4737 = vsel %vm4736, %v4735, %v4733
    %s4738 = scalar_lea.vmem [#allocation0], 1474
    %v4739 = vld [vmem:[%s4738] sm:$0x40]
    %vm4740 = vcmask 1046534
    %v4741 = vsel %vm4740, %v4739, %v4737
    %s4742 = scalar_lea.vmem [#allocation0], 1505
    %v4743 = vld [vmem:[%s4742] sm:$0x80]
    %vm4744 = vcmask 1047559
    %v4745 = vsel %vm4744, %v4743, %v4741
    %4746 = vrot.lane.b32.xlu0 %v4745, 16
    %v4747 = vpop.permute.xlu0 %4746
    %vm4748 = vcmask 162944
    %s4749 = scalar_lea.vmem %s1, 40
    %4750 = vst.msk [vmem:[%s4749] sm:$0xff] %vm4748, %v4747
    %s4751 = scalar_lea.vmem [#allocation0], 520
    %v4752 = vld [vmem:[%s4751] sm:$0x1]
    %s4753 = scalar_lea.vmem [#allocation0], 551
    %v4754 = vld [vmem:[%s4753] sm:$0x2]
    %vm4755 = vcmask 1041409
    %v4756 = vsel %vm4755, %v4754, %v4752
    %s4757 = scalar_lea.vmem [#allocation0], 582
    %v4758 = vld [vmem:[%s4757] sm:$0x4]
    %vm4759 = vcmask 1042434
    %v4760 = vsel %vm4759, %v4758, %v4756
    %s4761 = scalar_lea.vmem [#allocation0], 613
    %v4762 = vld [vmem:[%s4761] sm:$0x8]
    %vm4763 = vcmask 1043459
    %v4764 = vsel %vm4763, %v4762, %v4760
    %s4765 = scalar_lea.vmem [#allocation0], 644
    %v4766 = vld [vmem:[%s4765] sm:$0x10]
    %vm4767 = vcmask 1044484
    %v4768 = vsel %vm4767, %v4766, %v4764
    %s4769 = scalar_lea.vmem [#allocation0], 675
    %v4770 = vld [vmem:[%s4769] sm:$0x20]
    %vm4771 = vcmask 1045509
    %v4772 = vsel %vm4771, %v4770, %v4768
    %s4773 = scalar_lea.vmem [#allocation0], 706
    %v4774 = vld [vmem:[%s4773] sm:$0x40]
    %vm4775 = vcmask 1046534
    %v4776 = vsel %vm4775, %v4774, %v4772
    %s4777 = scalar_lea.vmem [#allocation0], 737
    %v4778 = vld [vmem:[%s4777] sm:$0x80]
    %vm4779 = vcmask 1047559
    %v4780 = vsel %vm4779, %v4778, %v4776
    %4781 = vrot.lane.b32.xlu0 %v4780, 16
    %v4782 = vpop.permute.xlu0 %4781
    %vm4783 = vcmask 162944
    %s4784 = scalar_lea.vmem %s1, 16
    %4785 = vst.msk [vmem:[%s4784] sm:$0xff] %vm4783, %v4782
    %s4786 = scalar_lea.vmem [#allocation0], 1544
    %v4787 = vld [vmem:[%s4786] sm:$0x1]
    %s4788 = scalar_lea.vmem [#allocation0], 1575
    %v4789 = vld [vmem:[%s4788] sm:$0x2]
    %vm4790 = vcmask 1041409
    %v4791 = vsel %vm4790, %v4789, %v4787
    %s4792 = scalar_lea.vmem [#allocation0], 1606
    %v4793 = vld [vmem:[%s4792] sm:$0x4]
    %vm4794 = vcmask 1042434
    %v4795 = vsel %vm4794, %v4793, %v4791
    %s4796 = scalar_lea.vmem [#allocation0], 1637
    %v4797 = vld [vmem:[%s4796] sm:$0x8]
    %vm4798 = vcmask 1043459
    %v4799 = vsel %vm4798, %v4797, %v4795
    %s4800 = scalar_lea.vmem [#allocation0], 1668
    %v4801 = vld [vmem:[%s4800] sm:$0x10]
    %vm4802 = vcmask 1044484
    %v4803 = vsel %vm4802, %v4801, %v4799
    %s4804 = scalar_lea.vmem [#allocation0], 1699
    %v4805 = vld [vmem:[%s4804] sm:$0x20]
    %vm4806 = vcmask 1045509
    %v4807 = vsel %vm4806, %v4805, %v4803
    %s4808 = scalar_lea.vmem [#allocation0], 1730
    %v4809 = vld [vmem:[%s4808] sm:$0x40]
    %vm4810 = vcmask 1046534
    %v4811 = vsel %vm4810, %v4809, %v4807
    %s4812 = scalar_lea.vmem [#allocation0], 1761
    %v4813 = vld [vmem:[%s4812] sm:$0x80]
    %vm4814 = vcmask 1047559
    %v4815 = vsel %vm4814, %v4813, %v4811
    %4816 = vrot.lane.b32.xlu0 %v4815, 16
    %v4817 = vpop.permute.xlu0 %4816
    %vm4818 = vcmask 162944
    %s4819 = scalar_lea.vmem %s1, 48
    %4820 = vst.msk [vmem:[%s4819] sm:$0xff] %vm4818, %v4817
    %s4821 = scalar_lea.vmem [#allocation0], 776
    %v4822 = vld [vmem:[%s4821] sm:$0x1]
    %s4823 = scalar_lea.vmem [#allocation0], 807
    %v4824 = vld [vmem:[%s4823] sm:$0x2]
    %vm4825 = vcmask 1041409
    %v4826 = vsel %vm4825, %v4824, %v4822
    %s4827 = scalar_lea.vmem [#allocation0], 838
    %v4828 = vld [vmem:[%s4827] sm:$0x4]
    %vm4829 = vcmask 1042434
    %v4830 = vsel %vm4829, %v4828, %v4826
    %s4831 = scalar_lea.vmem [#allocation0], 869
    %v4832 = vld [vmem:[%s4831] sm:$0x8]
    %vm4833 = vcmask 1043459
    %v4834 = vsel %vm4833, %v4832, %v4830
    %s4835 = scalar_lea.vmem [#allocation0], 900
    %v4836 = vld [vmem:[%s4835] sm:$0x10]
    %vm4837 = vcmask 1044484
    %v4838 = vsel %vm4837, %v4836, %v4834
    %s4839 = scalar_lea.vmem [#allocation0], 931
    %v4840 = vld [vmem:[%s4839] sm:$0x20]
    %vm4841 = vcmask 1045509
    %v4842 = vsel %vm4841, %v4840, %v4838
    %s4843 = scalar_lea.vmem [#allocation0], 962
    %v4844 = vld [vmem:[%s4843] sm:$0x40]
    %vm4845 = vcmask 1046534
    %v4846 = vsel %vm4845, %v4844, %v4842
    %s4847 = scalar_lea.vmem [#allocation0], 993
    %v4848 = vld [vmem:[%s4847] sm:$0x80]
    %vm4849 = vcmask 1047559
    %v4850 = vsel %vm4849, %v4848, %v4846
    %4851 = vrot.lane.b32.xlu0 %v4850, 16
    %v4852 = vpop.permute.xlu0 %4851
    %vm4853 = vcmask 162944
    %s4854 = scalar_lea.vmem %s1, 24
    %4855 = vst.msk [vmem:[%s4854] sm:$0xff] %vm4853, %v4852
    %s4856 = scalar_lea.vmem [#allocation0], 1800
    %v4857 = vld [vmem:[%s4856] sm:$0x1]
    %s4858 = scalar_lea.vmem [#allocation0], 1831
    %v4859 = vld [vmem:[%s4858] sm:$0x2]
    %vm4860 = vcmask 1041409
    %v4861 = vsel %vm4860, %v4859, %v4857
    %s4862 = scalar_lea.vmem [#allocation0], 1862
    %v4863 = vld [vmem:[%s4862] sm:$0x4]
    %vm4864 = vcmask 1042434
    %v4865 = vsel %vm4864, %v4863, %v4861
    %s4866 = scalar_lea.vmem [#allocation0], 1893
    %v4867 = vld [vmem:[%s4866] sm:$0x8]
    %vm4868 = vcmask 1043459
    %v4869 = vsel %vm4868, %v4867, %v4865
    %s4870 = scalar_lea.vmem [#allocation0], 1924
    %v4871 = vld [vmem:[%s4870] sm:$0x10]
    %vm4872 = vcmask 1044484
    %v4873 = vsel %vm4872, %v4871, %v4869
    %s4874 = scalar_lea.vmem [#allocation0], 1955
    %v4875 = vld [vmem:[%s4874] sm:$0x20]
    %vm4876 = vcmask 1045509
    %v4877 = vsel %vm4876, %v4875, %v4873
    %s4878 = scalar_lea.vmem [#allocation0], 1986
    %v4879 = vld [vmem:[%s4878] sm:$0x40]
    %vm4880 = vcmask 1046534
    %v4881 = vsel %vm4880, %v4879, %v4877
    %s4882 = scalar_lea.vmem [#allocation0], 2017
    %v4883 = vld [vmem:[%s4882] sm:$0x80]
    %vm4884 = vcmask 1047559
    %v4885 = vsel %vm4884, %v4883, %v4881
    %4886 = vrot.lane.b32.xlu0 %v4885, 16
    %v4887 = vpop.permute.xlu0 %4886
    %vm4888 = vcmask 162944
    %s4889 = scalar_lea.vmem %s1, 56
    %4890 = vst.msk [vmem:[%s4889] sm:$0xff] %vm4888, %v4887
    %s4891 = scalar_lea.vmem [#allocation0], 3
    %v4892 = vld [vmem:[%s4891] sm:$0x1]
    %s4893 = scalar_lea.vmem [#allocation0], 34
    %v4894 = vld [vmem:[%s4893] sm:$0x2]
    %vm4895 = vcmask 1041409
    %v4896 = vsel %vm4895, %v4894, %v4892
    %s4897 = scalar_lea.vmem [#allocation0], 65
    %v4898 = vld [vmem:[%s4897] sm:$0x4]
    %vm4899 = vcmask 1042434
    %v4900 = vsel %vm4899, %v4898, %v4896
    %s4901 = scalar_lea.vmem [#allocation0], 96
    %v4902 = vld [vmem:[%s4901] sm:$0x8]
    %vm4903 = vcmask 1043459
    %v4904 = vsel %vm4903, %v4902, %v4900
    %s4905 = scalar_lea.vmem [#allocation0], 127
    %v4906 = vld [vmem:[%s4905] sm:$0x10]
    %vm4907 = vcmask 1044484
    %v4908 = vsel %vm4907, %v4906, %v4904
    %s4909 = scalar_lea.vmem [#allocation0], 158
    %v4910 = vld [vmem:[%s4909] sm:$0x20]
    %vm4911 = vcmask 1045509
    %v4912 = vsel %vm4911, %v4910, %v4908
    %s4913 = scalar_lea.vmem [#allocation0], 189
    %v4914 = vld [vmem:[%s4913] sm:$0x40]
    %vm4915 = vcmask 1046534
    %v4916 = vsel %vm4915, %v4914, %v4912
    %s4917 = scalar_lea.vmem [#allocation0], 220
    %v4918 = vld [vmem:[%s4917] sm:$0x80]
    %vm4919 = vcmask 1047559
    %v4920 = vsel %vm4919, %v4918, %v4916
    %4921 = vrot.lane.b32.xlu0 %v4920, 12
    %v4922 = vpop.permute.xlu0 %4921
    %vm4923 = vcmask 130144
    %4924 = vst.msk [vmem:[%s1] sm:$0xff] %vm4923, %v4922
    %s4925 = scalar_lea.vmem [#allocation0], 1027
    %v4926 = vld [vmem:[%s4925] sm:$0x1]
    %s4927 = scalar_lea.vmem [#allocation0], 1058
    %v4928 = vld [vmem:[%s4927] sm:$0x2]
    %vm4929 = vcmask 1041409
    %v4930 = vsel %vm4929, %v4928, %v4926
    %s4931 = scalar_lea.vmem [#allocation0], 1089
    %v4932 = vld [vmem:[%s4931] sm:$0x4]
    %vm4933 = vcmask 1042434
    %v4934 = vsel %vm4933, %v4932, %v4930
    %s4935 = scalar_lea.vmem [#allocation0], 1120
    %v4936 = vld [vmem:[%s4935] sm:$0x8]
    %vm4937 = vcmask 1043459
    %v4938 = vsel %vm4937, %v4936, %v4934
    %s4939 = scalar_lea.vmem [#allocation0], 1151
    %v4940 = vld [vmem:[%s4939] sm:$0x10]
    %vm4941 = vcmask 1044484
    %v4942 = vsel %vm4941, %v4940, %v4938
    %s4943 = scalar_lea.vmem [#allocation0], 1182
    %v4944 = vld [vmem:[%s4943] sm:$0x20]
    %vm4945 = vcmask 1045509
    %v4946 = vsel %vm4945, %v4944, %v4942
    %s4947 = scalar_lea.vmem [#allocation0], 1213
    %v4948 = vld [vmem:[%s4947] sm:$0x40]
    %vm4949 = vcmask 1046534
    %v4950 = vsel %vm4949, %v4948, %v4946
    %s4951 = scalar_lea.vmem [#allocation0], 1244
    %v4952 = vld [vmem:[%s4951] sm:$0x80]
    %vm4953 = vcmask 1047559
    %v4954 = vsel %vm4953, %v4952, %v4950
    %4955 = vrot.lane.b32.xlu0 %v4954, 12
    %v4956 = vpop.permute.xlu0 %4955
    %vm4957 = vcmask 130144
    %s4958 = scalar_lea.vmem %s1, 32
    %4959 = vst.msk [vmem:[%s4958] sm:$0xff] %vm4957, %v4956
    %s4960 = scalar_lea.vmem [#allocation0], 259
    %v4961 = vld [vmem:[%s4960] sm:$0x1]
    %s4962 = scalar_lea.vmem [#allocation0], 290
    %v4963 = vld [vmem:[%s4962] sm:$0x2]
    %vm4964 = vcmask 1041409
    %v4965 = vsel %vm4964, %v4963, %v4961
    %s4966 = scalar_lea.vmem [#allocation0], 321
    %v4967 = vld [vmem:[%s4966] sm:$0x4]
    %vm4968 = vcmask 1042434
    %v4969 = vsel %vm4968, %v4967, %v4965
    %s4970 = scalar_lea.vmem [#allocation0], 352
    %v4971 = vld [vmem:[%s4970] sm:$0x8]
    %vm4972 = vcmask 1043459
    %v4973 = vsel %vm4972, %v4971, %v4969
    %s4974 = scalar_lea.vmem [#allocation0], 383
    %v4975 = vld [vmem:[%s4974] sm:$0x10]
    %vm4976 = vcmask 1044484
    %v4977 = vsel %vm4976, %v4975, %v4973
    %s4978 = scalar_lea.vmem [#allocation0], 414
    %v4979 = vld [vmem:[%s4978] sm:$0x20]
    %vm4980 = vcmask 1045509
    %v4981 = vsel %vm4980, %v4979, %v4977
    %s4982 = scalar_lea.vmem [#allocation0], 445
    %v4983 = vld [vmem:[%s4982] sm:$0x40]
    %vm4984 = vcmask 1046534
    %v4985 = vsel %vm4984, %v4983, %v4981
    %s4986 = scalar_lea.vmem [#allocation0], 476
    %v4987 = vld [vmem:[%s4986] sm:$0x80]
    %vm4988 = vcmask 1047559
    %v4989 = vsel %vm4988, %v4987, %v4985
    %4990 = vrot.lane.b32.xlu0 %v4989, 12
    %v4991 = vpop.permute.xlu0 %4990
    %vm4992 = vcmask 130144
    %s4993 = scalar_lea.vmem %s1, 8
    %4994 = vst.msk [vmem:[%s4993] sm:$0xff] %vm4992, %v4991
    %s4995 = scalar_lea.vmem [#allocation0], 1283
    %v4996 = vld [vmem:[%s4995] sm:$0x1]
    %s4997 = scalar_lea.vmem [#allocation0], 1314
    %v4998 = vld [vmem:[%s4997] sm:$0x2]
    %vm4999 = vcmask 1041409
    %v5000 = vsel %vm4999, %v4998, %v4996
    %s5001 = scalar_lea.vmem [#allocation0], 1345
    %v5002 = vld [vmem:[%s5001] sm:$0x4]
    %vm5003 = vcmask 1042434
    %v5004 = vsel %vm5003, %v5002, %v5000
    %s5005 = scalar_lea.vmem [#allocation0], 1376
    %v5006 = vld [vmem:[%s5005] sm:$0x8]
    %vm5007 = vcmask 1043459
    %v5008 = vsel %vm5007, %v5006, %v5004
    %s5009 = scalar_lea.vmem [#allocation0], 1407
    %v5010 = vld [vmem:[%s5009] sm:$0x10]
    %vm5011 = vcmask 1044484
    %v5012 = vsel %vm5011, %v5010, %v5008
    %s5013 = scalar_lea.vmem [#allocation0], 1438
    %v5014 = vld [vmem:[%s5013] sm:$0x20]
    %vm5015 = vcmask 1045509
    %v5016 = vsel %vm5015, %v5014, %v5012
    %s5017 = scalar_lea.vmem [#allocation0], 1469
    %v5018 = vld [vmem:[%s5017] sm:$0x40]
    %vm5019 = vcmask 1046534
    %v5020 = vsel %vm5019, %v5018, %v5016
    %s5021 = scalar_lea.vmem [#allocation0], 1500
    %v5022 = vld [vmem:[%s5021] sm:$0x80]
    %vm5023 = vcmask 1047559
    %v5024 = vsel %vm5023, %v5022, %v5020
    %5025 = vrot.lane.b32.xlu0 %v5024, 12
    %v5026 = vpop.permute.xlu0 %5025
    %vm5027 = vcmask 130144
    %s5028 = scalar_lea.vmem %s1, 40
    %5029 = vst.msk [vmem:[%s5028] sm:$0xff] %vm5027, %v5026
    %s5030 = scalar_lea.vmem [#allocation0], 515
    %v5031 = vld [vmem:[%s5030] sm:$0x1]
    %s5032 = scalar_lea.vmem [#allocation0], 546
    %v5033 = vld [vmem:[%s5032] sm:$0x2]
    %vm5034 = vcmask 1041409
    %v5035 = vsel %vm5034, %v5033, %v5031
    %s5036 = scalar_lea.vmem [#allocation0], 577
    %v5037 = vld [vmem:[%s5036] sm:$0x4]
    %vm5038 = vcmask 1042434
    %v5039 = vsel %vm5038, %v5037, %v5035
    %s5040 = scalar_lea.vmem [#allocation0], 608
    %v5041 = vld [vmem:[%s5040] sm:$0x8]
    %vm5042 = vcmask 1043459
    %v5043 = vsel %vm5042, %v5041, %v5039
    %s5044 = scalar_lea.vmem [#allocation0], 639
    %v5045 = vld [vmem:[%s5044] sm:$0x10]
    %vm5046 = vcmask 1044484
    %v5047 = vsel %vm5046, %v5045, %v5043
    %s5048 = scalar_lea.vmem [#allocation0], 670
    %v5049 = vld [vmem:[%s5048] sm:$0x20]
    %vm5050 = vcmask 1045509
    %v5051 = vsel %vm5050, %v5049, %v5047
    %s5052 = scalar_lea.vmem [#allocation0], 701
    %v5053 = vld [vmem:[%s5052] sm:$0x40]
    %vm5054 = vcmask 1046534
    %v5055 = vsel %vm5054, %v5053, %v5051
    %s5056 = scalar_lea.vmem [#allocation0], 732
    %v5057 = vld [vmem:[%s5056] sm:$0x80]
    %vm5058 = vcmask 1047559
    %v5059 = vsel %vm5058, %v5057, %v5055
    %5060 = vrot.lane.b32.xlu0 %v5059, 12
    %v5061 = vpop.permute.xlu0 %5060
    %vm5062 = vcmask 130144
    %s5063 = scalar_lea.vmem %s1, 16
    %5064 = vst.msk [vmem:[%s5063] sm:$0xff] %vm5062, %v5061
    %s5065 = scalar_lea.vmem [#allocation0], 1539
    %v5066 = vld [vmem:[%s5065] sm:$0x1]
    %s5067 = scalar_lea.vmem [#allocation0], 1570
    %v5068 = vld [vmem:[%s5067] sm:$0x2]
    %vm5069 = vcmask 1041409
    %v5070 = vsel %vm5069, %v5068, %v5066
    %s5071 = scalar_lea.vmem [#allocation0], 1601
    %v5072 = vld [vmem:[%s5071] sm:$0x4]
    %vm5073 = vcmask 1042434
    %v5074 = vsel %vm5073, %v5072, %v5070
    %s5075 = scalar_lea.vmem [#allocation0], 1632
    %v5076 = vld [vmem:[%s5075] sm:$0x8]
    %vm5077 = vcmask 1043459
    %v5078 = vsel %vm5077, %v5076, %v5074
    %s5079 = scalar_lea.vmem [#allocation0], 1663
    %v5080 = vld [vmem:[%s5079] sm:$0x10]
    %vm5081 = vcmask 1044484
    %v5082 = vsel %vm5081, %v5080, %v5078
    %s5083 = scalar_lea.vmem [#allocation0], 1694
    %v5084 = vld [vmem:[%s5083] sm:$0x20]
    %vm5085 = vcmask 1045509
    %v5086 = vsel %vm5085, %v5084, %v5082
    %s5087 = scalar_lea.vmem [#allocation0], 1725
    %v5088 = vld [vmem:[%s5087] sm:$0x40]
    %vm5089 = vcmask 1046534
    %v5090 = vsel %vm5089, %v5088, %v5086
    %s5091 = scalar_lea.vmem [#allocation0], 1756
    %v5092 = vld [vmem:[%s5091] sm:$0x80]
    %vm5093 = vcmask 1047559
    %v5094 = vsel %vm5093, %v5092, %v5090
    %5095 = vrot.lane.b32.xlu0 %v5094, 12
    %v5096 = vpop.permute.xlu0 %5095
    %vm5097 = vcmask 130144
    %s5098 = scalar_lea.vmem %s1, 48
    %5099 = vst.msk [vmem:[%s5098] sm:$0xff] %vm5097, %v5096
    %s5100 = scalar_lea.vmem [#allocation0], 771
    %v5101 = vld [vmem:[%s5100] sm:$0x1]
    %s5102 = scalar_lea.vmem [#allocation0], 802
    %v5103 = vld [vmem:[%s5102] sm:$0x2]
    %vm5104 = vcmask 1041409
    %v5105 = vsel %vm5104, %v5103, %v5101
    %s5106 = scalar_lea.vmem [#allocation0], 833
    %v5107 = vld [vmem:[%s5106] sm:$0x4]
    %vm5108 = vcmask 1042434
    %v5109 = vsel %vm5108, %v5107, %v5105
    %s5110 = scalar_lea.vmem [#allocation0], 864
    %v5111 = vld [vmem:[%s5110] sm:$0x8]
    %vm5112 = vcmask 1043459
    %v5113 = vsel %vm5112, %v5111, %v5109
    %s5114 = scalar_lea.vmem [#allocation0], 895
    %v5115 = vld [vmem:[%s5114] sm:$0x10]
    %vm5116 = vcmask 1044484
    %v5117 = vsel %vm5116, %v5115, %v5113
    %s5118 = scalar_lea.vmem [#allocation0], 926
    %v5119 = vld [vmem:[%s5118] sm:$0x20]
    %vm5120 = vcmask 1045509
    %v5121 = vsel %vm5120, %v5119, %v5117
    %s5122 = scalar_lea.vmem [#allocation0], 957
    %v5123 = vld [vmem:[%s5122] sm:$0x40]
    %vm5124 = vcmask 1046534
    %v5125 = vsel %vm5124, %v5123, %v5121
    %s5126 = scalar_lea.vmem [#allocation0], 988
    %v5127 = vld [vmem:[%s5126] sm:$0x80]
    %vm5128 = vcmask 1047559
    %v5129 = vsel %vm5128, %v5127, %v5125
    %5130 = vrot.lane.b32.xlu0 %v5129, 12
    %v5131 = vpop.permute.xlu0 %5130
    %vm5132 = vcmask 130144
    %s5133 = scalar_lea.vmem %s1, 24
    %5134 = vst.msk [vmem:[%s5133] sm:$0xff] %vm5132, %v5131
    %s5135 = scalar_lea.vmem [#allocation0], 1795
    %v5136 = vld [vmem:[%s5135] sm:$0x1]
    %s5137 = scalar_lea.vmem [#allocation0], 1826
    %v5138 = vld [vmem:[%s5137] sm:$0x2]
    %vm5139 = vcmask 1041409
    %v5140 = vsel %vm5139, %v5138, %v5136
    %s5141 = scalar_lea.vmem [#allocation0], 1857
    %v5142 = vld [vmem:[%s5141] sm:$0x4]
    %vm5143 = vcmask 1042434
    %v5144 = vsel %vm5143, %v5142, %v5140
    %s5145 = scalar_lea.vmem [#allocation0], 1888
    %v5146 = vld [vmem:[%s5145] sm:$0x8]
    %vm5147 = vcmask 1043459
    %v5148 = vsel %vm5147, %v5146, %v5144
    %s5149 = scalar_lea.vmem [#allocation0], 1919
    %v5150 = vld [vmem:[%s5149] sm:$0x10]
    %vm5151 = vcmask 1044484
    %v5152 = vsel %vm5151, %v5150, %v5148
    %s5153 = scalar_lea.vmem [#allocation0], 1950
    %v5154 = vld [vmem:[%s5153] sm:$0x20]
    %vm5155 = vcmask 1045509
    %v5156 = vsel %vm5155, %v5154, %v5152
    %s5157 = scalar_lea.vmem [#allocation0], 1981
    %v5158 = vld [vmem:[%s5157] sm:$0x40]
    %vm5159 = vcmask 1046534
    %v5160 = vsel %vm5159, %v5158, %v5156
    %s5161 = scalar_lea.vmem [#allocation0], 2012
    %v5162 = vld [vmem:[%s5161] sm:$0x80]
    %vm5163 = vcmask 1047559
    %v5164 = vsel %vm5163, %v5162, %v5160
    %5165 = vrot.lane.b32.xlu0 %v5164, 12
    %v5166 = vpop.permute.xlu0 %5165
    %vm5167 = vcmask 130144
    %s5168 = scalar_lea.vmem %s1, 56
    %5169 = vst.msk [vmem:[%s5168] sm:$0xff] %vm5167, %v5166
    %s5170 = scalar_lea.vmem [#allocation0], 2
    %v5171 = vld [vmem:[%s5170] sm:$0x1]
    %s5172 = scalar_lea.vmem [#allocation0], 33
    %v5173 = vld [vmem:[%s5172] sm:$0x2]
    %vm5174 = vcmask 1041409
    %v5175 = vsel %vm5174, %v5173, %v5171
    %s5176 = scalar_lea.vmem [#allocation0], 64
    %v5177 = vld [vmem:[%s5176] sm:$0x4]
    %vm5178 = vcmask 1042434
    %v5179 = vsel %vm5178, %v5177, %v5175
    %s5180 = scalar_lea.vmem [#allocation0], 95
    %v5181 = vld [vmem:[%s5180] sm:$0x8]
    %vm5182 = vcmask 1043459
    %v5183 = vsel %vm5182, %v5181, %v5179
    %s5184 = scalar_lea.vmem [#allocation0], 126
    %v5185 = vld [vmem:[%s5184] sm:$0x10]
    %vm5186 = vcmask 1044484
    %v5187 = vsel %vm5186, %v5185, %v5183
    %s5188 = scalar_lea.vmem [#allocation0], 157
    %v5189 = vld [vmem:[%s5188] sm:$0x20]
    %vm5190 = vcmask 1045509
    %v5191 = vsel %vm5190, %v5189, %v5187
    %s5192 = scalar_lea.vmem [#allocation0], 188
    %v5193 = vld [vmem:[%s5192] sm:$0x40]
    %vm5194 = vcmask 1046534
    %v5195 = vsel %vm5194, %v5193, %v5191
    %s5196 = scalar_lea.vmem [#allocation0], 219
    %v5197 = vld [vmem:[%s5196] sm:$0x80]
    %vm5198 = vcmask 1047559
    %v5199 = vsel %vm5198, %v5197, %v5195
    %5200 = vrot.lane.b32.xlu0 %v5199, 8
    %v5201 = vpop.permute.xlu0 %5200
    %vm5202 = vcmask 97344
    %5203 = vst.msk [vmem:[%s1] sm:$0xff] %vm5202, %v5201
    %s5204 = scalar_lea.vmem [#allocation0], 1026
    %v5205 = vld [vmem:[%s5204] sm:$0x1]
    %s5206 = scalar_lea.vmem [#allocation0], 1057
    %v5207 = vld [vmem:[%s5206] sm:$0x2]
    %vm5208 = vcmask 1041409
    %v5209 = vsel %vm5208, %v5207, %v5205
    %s5210 = scalar_lea.vmem [#allocation0], 1088
    %v5211 = vld [vmem:[%s5210] sm:$0x4]
    %vm5212 = vcmask 1042434
    %v5213 = vsel %vm5212, %v5211, %v5209
    %s5214 = scalar_lea.vmem [#allocation0], 1119
    %v5215 = vld [vmem:[%s5214] sm:$0x8]
    %vm5216 = vcmask 1043459
    %v5217 = vsel %vm5216, %v5215, %v5213
    %s5218 = scalar_lea.vmem [#allocation0], 1150
    %v5219 = vld [vmem:[%s5218] sm:$0x10]
    %vm5220 = vcmask 1044484
    %v5221 = vsel %vm5220, %v5219, %v5217
    %s5222 = scalar_lea.vmem [#allocation0], 1181
    %v5223 = vld [vmem:[%s5222] sm:$0x20]
    %vm5224 = vcmask 1045509
    %v5225 = vsel %vm5224, %v5223, %v5221
    %s5226 = scalar_lea.vmem [#allocation0], 1212
    %v5227 = vld [vmem:[%s5226] sm:$0x40]
    %vm5228 = vcmask 1046534
    %v5229 = vsel %vm5228, %v5227, %v5225
    %s5230 = scalar_lea.vmem [#allocation0], 1243
    %v5231 = vld [vmem:[%s5230] sm:$0x80]
    %vm5232 = vcmask 1047559
    %v5233 = vsel %vm5232, %v5231, %v5229
    %5234 = vrot.lane.b32.xlu0 %v5233, 8
    %v5235 = vpop.permute.xlu0 %5234
    %vm5236 = vcmask 97344
    %s5237 = scalar_lea.vmem %s1, 32
    %5238 = vst.msk [vmem:[%s5237] sm:$0xff] %vm5236, %v5235
    %s5239 = scalar_lea.vmem [#allocation0], 258
    %v5240 = vld [vmem:[%s5239] sm:$0x1]
    %s5241 = scalar_lea.vmem [#allocation0], 289
    %v5242 = vld [vmem:[%s5241] sm:$0x2]
    %vm5243 = vcmask 1041409
    %v5244 = vsel %vm5243, %v5242, %v5240
    %s5245 = scalar_lea.vmem [#allocation0], 320
    %v5246 = vld [vmem:[%s5245] sm:$0x4]
    %vm5247 = vcmask 1042434
    %v5248 = vsel %vm5247, %v5246, %v5244
    %s5249 = scalar_lea.vmem [#allocation0], 351
    %v5250 = vld [vmem:[%s5249] sm:$0x8]
    %vm5251 = vcmask 1043459
    %v5252 = vsel %vm5251, %v5250, %v5248
    %s5253 = scalar_lea.vmem [#allocation0], 382
    %v5254 = vld [vmem:[%s5253] sm:$0x10]
    %vm5255 = vcmask 1044484
    %v5256 = vsel %vm5255, %v5254, %v5252
    %s5257 = scalar_lea.vmem [#allocation0], 413
    %v5258 = vld [vmem:[%s5257] sm:$0x20]
    %vm5259 = vcmask 1045509
    %v5260 = vsel %vm5259, %v5258, %v5256
    %s5261 = scalar_lea.vmem [#allocation0], 444
    %v5262 = vld [vmem:[%s5261] sm:$0x40]
    %vm5263 = vcmask 1046534
    %v5264 = vsel %vm5263, %v5262, %v5260
    %s5265 = scalar_lea.vmem [#allocation0], 475
    %v5266 = vld [vmem:[%s5265] sm:$0x80]
    %vm5267 = vcmask 1047559
    %v5268 = vsel %vm5267, %v5266, %v5264
    %5269 = vrot.lane.b32.xlu0 %v5268, 8
    %v5270 = vpop.permute.xlu0 %5269
    %vm5271 = vcmask 97344
    %s5272 = scalar_lea.vmem %s1, 8
    %5273 = vst.msk [vmem:[%s5272] sm:$0xff] %vm5271, %v5270
    %s5274 = scalar_lea.vmem [#allocation0], 1282
    %v5275 = vld [vmem:[%s5274] sm:$0x1]
    %s5276 = scalar_lea.vmem [#allocation0], 1313
    %v5277 = vld [vmem:[%s5276] sm:$0x2]
    %vm5278 = vcmask 1041409
    %v5279 = vsel %vm5278, %v5277, %v5275
    %s5280 = scalar_lea.vmem [#allocation0], 1344
    %v5281 = vld [vmem:[%s5280] sm:$0x4]
    %vm5282 = vcmask 1042434
    %v5283 = vsel %vm5282, %v5281, %v5279
    %s5284 = scalar_lea.vmem [#allocation0], 1375
    %v5285 = vld [vmem:[%s5284] sm:$0x8]
    %vm5286 = vcmask 1043459
    %v5287 = vsel %vm5286, %v5285, %v5283
    %s5288 = scalar_lea.vmem [#allocation0], 1406
    %v5289 = vld [vmem:[%s5288] sm:$0x10]
    %vm5290 = vcmask 1044484
    %v5291 = vsel %vm5290, %v5289, %v5287
    %s5292 = scalar_lea.vmem [#allocation0], 1437
    %v5293 = vld [vmem:[%s5292] sm:$0x20]
    %vm5294 = vcmask 1045509
    %v5295 = vsel %vm5294, %v5293, %v5291
    %s5296 = scalar_lea.vmem [#allocation0], 1468
    %v5297 = vld [vmem:[%s5296] sm:$0x40]
    %vm5298 = vcmask 1046534
    %v5299 = vsel %vm5298, %v5297, %v5295
    %s5300 = scalar_lea.vmem [#allocation0], 1499
    %v5301 = vld [vmem:[%s5300] sm:$0x80]
    %vm5302 = vcmask 1047559
    %v5303 = vsel %vm5302, %v5301, %v5299
    %5304 = vrot.lane.b32.xlu0 %v5303, 8
    %v5305 = vpop.permute.xlu0 %5304
    %vm5306 = vcmask 97344
    %s5307 = scalar_lea.vmem %s1, 40
    %5308 = vst.msk [vmem:[%s5307] sm:$0xff] %vm5306, %v5305
    %s5309 = scalar_lea.vmem [#allocation0], 514
    %v5310 = vld [vmem:[%s5309] sm:$0x1]
    %s5311 = scalar_lea.vmem [#allocation0], 545
    %v5312 = vld [vmem:[%s5311] sm:$0x2]
    %vm5313 = vcmask 1041409
    %v5314 = vsel %vm5313, %v5312, %v5310
    %s5315 = scalar_lea.vmem [#allocation0], 576
    %v5316 = vld [vmem:[%s5315] sm:$0x4]
    %vm5317 = vcmask 1042434
    %v5318 = vsel %vm5317, %v5316, %v5314
    %s5319 = scalar_lea.vmem [#allocation0], 607
    %v5320 = vld [vmem:[%s5319] sm:$0x8]
    %vm5321 = vcmask 1043459
    %v5322 = vsel %vm5321, %v5320, %v5318
    %s5323 = scalar_lea.vmem [#allocation0], 638
    %v5324 = vld [vmem:[%s5323] sm:$0x10]
    %vm5325 = vcmask 1044484
    %v5326 = vsel %vm5325, %v5324, %v5322
    %s5327 = scalar_lea.vmem [#allocation0], 669
    %v5328 = vld [vmem:[%s5327] sm:$0x20]
    %vm5329 = vcmask 1045509
    %v5330 = vsel %vm5329, %v5328, %v5326
    %s5331 = scalar_lea.vmem [#allocation0], 700
    %v5332 = vld [vmem:[%s5331] sm:$0x40]
    %vm5333 = vcmask 1046534
    %v5334 = vsel %vm5333, %v5332, %v5330
    %s5335 = scalar_lea.vmem [#allocation0], 731
    %v5336 = vld [vmem:[%s5335] sm:$0x80]
    %vm5337 = vcmask 1047559
    %v5338 = vsel %vm5337, %v5336, %v5334
    %5339 = vrot.lane.b32.xlu0 %v5338, 8
    %v5340 = vpop.permute.xlu0 %5339
    %vm5341 = vcmask 97344
    %s5342 = scalar_lea.vmem %s1, 16
    %5343 = vst.msk [vmem:[%s5342] sm:$0xff] %vm5341, %v5340
    %s5344 = scalar_lea.vmem [#allocation0], 1538
    %v5345 = vld [vmem:[%s5344] sm:$0x1]
    %s5346 = scalar_lea.vmem [#allocation0], 1569
    %v5347 = vld [vmem:[%s5346] sm:$0x2]
    %vm5348 = vcmask 1041409
    %v5349 = vsel %vm5348, %v5347, %v5345
    %s5350 = scalar_lea.vmem [#allocation0], 1600
    %v5351 = vld [vmem:[%s5350] sm:$0x4]
    %vm5352 = vcmask 1042434
    %v5353 = vsel %vm5352, %v5351, %v5349
    %s5354 = scalar_lea.vmem [#allocation0], 1631
    %v5355 = vld [vmem:[%s5354] sm:$0x8]
    %vm5356 = vcmask 1043459
    %v5357 = vsel %vm5356, %v5355, %v5353
    %s5358 = scalar_lea.vmem [#allocation0], 1662
    %v5359 = vld [vmem:[%s5358] sm:$0x10]
    %vm5360 = vcmask 1044484
    %v5361 = vsel %vm5360, %v5359, %v5357
    %s5362 = scalar_lea.vmem [#allocation0], 1693
    %v5363 = vld [vmem:[%s5362] sm:$0x20]
    %vm5364 = vcmask 1045509
    %v5365 = vsel %vm5364, %v5363, %v5361
    %s5366 = scalar_lea.vmem [#allocation0], 1724
    %v5367 = vld [vmem:[%s5366] sm:$0x40]
    %vm5368 = vcmask 1046534
    %v5369 = vsel %vm5368, %v5367, %v5365
    %s5370 = scalar_lea.vmem [#allocation0], 1755
    %v5371 = vld [vmem:[%s5370] sm:$0x80]
    %vm5372 = vcmask 1047559
    %v5373 = vsel %vm5372, %v5371, %v5369
    %5374 = vrot.lane.b32.xlu0 %v5373, 8
    %v5375 = vpop.permute.xlu0 %5374
    %vm5376 = vcmask 97344
    %s5377 = scalar_lea.vmem %s1, 48
    %5378 = vst.msk [vmem:[%s5377] sm:$0xff] %vm5376, %v5375
    %s5379 = scalar_lea.vmem [#allocation0], 770
    %v5380 = vld [vmem:[%s5379] sm:$0x1]
    %s5381 = scalar_lea.vmem [#allocation0], 801
    %v5382 = vld [vmem:[%s5381] sm:$0x2]
    %vm5383 = vcmask 1041409
    %v5384 = vsel %vm5383, %v5382, %v5380
    %s5385 = scalar_lea.vmem [#allocation0], 832
    %v5386 = vld [vmem:[%s5385] sm:$0x4]
    %vm5387 = vcmask 1042434
    %v5388 = vsel %vm5387, %v5386, %v5384
    %s5389 = scalar_lea.vmem [#allocation0], 863
    %v5390 = vld [vmem:[%s5389] sm:$0x8]
    %vm5391 = vcmask 1043459
    %v5392 = vsel %vm5391, %v5390, %v5388
    %s5393 = scalar_lea.vmem [#allocation0], 894
    %v5394 = vld [vmem:[%s5393] sm:$0x10]
    %vm5395 = vcmask 1044484
    %v5396 = vsel %vm5395, %v5394, %v5392
    %s5397 = scalar_lea.vmem [#allocation0], 925
    %v5398 = vld [vmem:[%s5397] sm:$0x20]
    %vm5399 = vcmask 1045509
    %v5400 = vsel %vm5399, %v5398, %v5396
    %s5401 = scalar_lea.vmem [#allocation0], 956
    %v5402 = vld [vmem:[%s5401] sm:$0x40]
    %vm5403 = vcmask 1046534
    %v5404 = vsel %vm5403, %v5402, %v5400
    %s5405 = scalar_lea.vmem [#allocation0], 987
    %v5406 = vld [vmem:[%s5405] sm:$0x80]
    %vm5407 = vcmask 1047559
    %v5408 = vsel %vm5407, %v5406, %v5404
    %5409 = vrot.lane.b32.xlu0 %v5408, 8
    %v5410 = vpop.permute.xlu0 %5409
    %vm5411 = vcmask 97344
    %s5412 = scalar_lea.vmem %s1, 24
    %5413 = vst.msk [vmem:[%s5412] sm:$0xff] %vm5411, %v5410
    %s5414 = scalar_lea.vmem [#allocation0], 1794
    %v5415 = vld [vmem:[%s5414] sm:$0x1]
    %s5416 = scalar_lea.vmem [#allocation0], 1825
    %v5417 = vld [vmem:[%s5416] sm:$0x2]
    %vm5418 = vcmask 1041409
    %v5419 = vsel %vm5418, %v5417, %v5415
    %s5420 = scalar_lea.vmem [#allocation0], 1856
    %v5421 = vld [vmem:[%s5420] sm:$0x4]
    %vm5422 = vcmask 1042434
    %v5423 = vsel %vm5422, %v5421, %v5419
    %s5424 = scalar_lea.vmem [#allocation0], 1887
    %v5425 = vld [vmem:[%s5424] sm:$0x8]
    %vm5426 = vcmask 1043459
    %v5427 = vsel %vm5426, %v5425, %v5423
    %s5428 = scalar_lea.vmem [#allocation0], 1918
    %v5429 = vld [vmem:[%s5428] sm:$0x10]
    %vm5430 = vcmask 1044484
    %v5431 = vsel %vm5430, %v5429, %v5427
    %s5432 = scalar_lea.vmem [#allocation0], 1949
    %v5433 = vld [vmem:[%s5432] sm:$0x20]
    %vm5434 = vcmask 1045509
    %v5435 = vsel %vm5434, %v5433, %v5431
    %s5436 = scalar_lea.vmem [#allocation0], 1980
    %v5437 = vld [vmem:[%s5436] sm:$0x40]
    %vm5438 = vcmask 1046534
    %v5439 = vsel %vm5438, %v5437, %v5435
    %s5440 = scalar_lea.vmem [#allocation0], 2011
    %v5441 = vld [vmem:[%s5440] sm:$0x80]
    %vm5442 = vcmask 1047559
    %v5443 = vsel %vm5442, %v5441, %v5439
    %5444 = vrot.lane.b32.xlu0 %v5443, 8
    %v5445 = vpop.permute.xlu0 %5444
    %vm5446 = vcmask 97344
    %s5447 = scalar_lea.vmem %s1, 56
    %5448 = vst.msk [vmem:[%s5447] sm:$0xff] %vm5446, %v5445
    %s5449 = scalar_lea.vmem [#allocation0], 1
    %v5450 = vld [vmem:[%s5449] sm:$0x1]
    %s5451 = scalar_lea.vmem [#allocation0], 32
    %v5452 = vld [vmem:[%s5451] sm:$0x2]
    %vm5453 = vcmask 1041409
    %v5454 = vsel %vm5453, %v5452, %v5450
    %s5455 = scalar_lea.vmem [#allocation0], 63
    %v5456 = vld [vmem:[%s5455] sm:$0x4]
    %vm5457 = vcmask 1042434
    %v5458 = vsel %vm5457, %v5456, %v5454
    %s5459 = scalar_lea.vmem [#allocation0], 94
    %v5460 = vld [vmem:[%s5459] sm:$0x8]
    %vm5461 = vcmask 1043459
    %v5462 = vsel %vm5461, %v5460, %v5458
    %s5463 = scalar_lea.vmem [#allocation0], 125
    %v5464 = vld [vmem:[%s5463] sm:$0x10]
    %vm5465 = vcmask 1044484
    %v5466 = vsel %vm5465, %v5464, %v5462
    %s5467 = scalar_lea.vmem [#allocation0], 156
    %v5468 = vld [vmem:[%s5467] sm:$0x20]
    %vm5469 = vcmask 1045509
    %v5470 = vsel %vm5469, %v5468, %v5466
    %s5471 = scalar_lea.vmem [#allocation0], 187
    %v5472 = vld [vmem:[%s5471] sm:$0x40]
    %vm5473 = vcmask 1046534
    %v5474 = vsel %vm5473, %v5472, %v5470
    %s5475 = scalar_lea.vmem [#allocation0], 218
    %v5476 = vld [vmem:[%s5475] sm:$0x80]
    %vm5477 = vcmask 1047559
    %v5478 = vsel %vm5477, %v5476, %v5474
    %5479 = vrot.lane.b32.xlu0 %v5478, 4
    %v5480 = vpop.permute.xlu0 %5479
    %vm5481 = vcmask 64544
    %5482 = vst.msk [vmem:[%s1] sm:$0xff] %vm5481, %v5480
    %s5483 = scalar_lea.vmem [#allocation0], 1025
    %v5484 = vld [vmem:[%s5483] sm:$0x1]
    %s5485 = scalar_lea.vmem [#allocation0], 1056
    %v5486 = vld [vmem:[%s5485] sm:$0x2]
    %vm5487 = vcmask 1041409
    %v5488 = vsel %vm5487, %v5486, %v5484
    %s5489 = scalar_lea.vmem [#allocation0], 1087
    %v5490 = vld [vmem:[%s5489] sm:$0x4]
    %vm5491 = vcmask 1042434
    %v5492 = vsel %vm5491, %v5490, %v5488
    %s5493 = scalar_lea.vmem [#allocation0], 1118
    %v5494 = vld [vmem:[%s5493] sm:$0x8]
    %vm5495 = vcmask 1043459
    %v5496 = vsel %vm5495, %v5494, %v5492
    %s5497 = scalar_lea.vmem [#allocation0], 1149
    %v5498 = vld [vmem:[%s5497] sm:$0x10]
    %vm5499 = vcmask 1044484
    %v5500 = vsel %vm5499, %v5498, %v5496
    %s5501 = scalar_lea.vmem [#allocation0], 1180
    %v5502 = vld [vmem:[%s5501] sm:$0x20]
    %vm5503 = vcmask 1045509
    %v5504 = vsel %vm5503, %v5502, %v5500
    %s5505 = scalar_lea.vmem [#allocation0], 1211
    %v5506 = vld [vmem:[%s5505] sm:$0x40]
    %vm5507 = vcmask 1046534
    %v5508 = vsel %vm5507, %v5506, %v5504
    %s5509 = scalar_lea.vmem [#allocation0], 1242
    %v5510 = vld [vmem:[%s5509] sm:$0x80]
    %vm5511 = vcmask 1047559
    %v5512 = vsel %vm5511, %v5510, %v5508
    %5513 = vrot.lane.b32.xlu0 %v5512, 4
    %v5514 = vpop.permute.xlu0 %5513
    %vm5515 = vcmask 64544
    %s5516 = scalar_lea.vmem %s1, 32
    %5517 = vst.msk [vmem:[%s5516] sm:$0xff] %vm5515, %v5514
    %s5518 = scalar_lea.vmem [#allocation0], 257
    %v5519 = vld [vmem:[%s5518] sm:$0x1]
    %s5520 = scalar_lea.vmem [#allocation0], 288
    %v5521 = vld [vmem:[%s5520] sm:$0x2]
    %vm5522 = vcmask 1041409
    %v5523 = vsel %vm5522, %v5521, %v5519
    %s5524 = scalar_lea.vmem [#allocation0], 319
    %v5525 = vld [vmem:[%s5524] sm:$0x4]
    %vm5526 = vcmask 1042434
    %v5527 = vsel %vm5526, %v5525, %v5523
    %s5528 = scalar_lea.vmem [#allocation0], 350
    %v5529 = vld [vmem:[%s5528] sm:$0x8]
    %vm5530 = vcmask 1043459
    %v5531 = vsel %vm5530, %v5529, %v5527
    %s5532 = scalar_lea.vmem [#allocation0], 381
    %v5533 = vld [vmem:[%s5532] sm:$0x10]
    %vm5534 = vcmask 1044484
    %v5535 = vsel %vm5534, %v5533, %v5531
    %s5536 = scalar_lea.vmem [#allocation0], 412
    %v5537 = vld [vmem:[%s5536] sm:$0x20]
    %vm5538 = vcmask 1045509
    %v5539 = vsel %vm5538, %v5537, %v5535
    %s5540 = scalar_lea.vmem [#allocation0], 443
    %v5541 = vld [vmem:[%s5540] sm:$0x40]
    %vm5542 = vcmask 1046534
    %v5543 = vsel %vm5542, %v5541, %v5539
    %s5544 = scalar_lea.vmem [#allocation0], 474
    %v5545 = vld [vmem:[%s5544] sm:$0x80]
    %vm5546 = vcmask 1047559
    %v5547 = vsel %vm5546, %v5545, %v5543
    %5548 = vrot.lane.b32.xlu0 %v5547, 4
    %v5549 = vpop.permute.xlu0 %5548
    %vm5550 = vcmask 64544
    %s5551 = scalar_lea.vmem %s1, 8
    %5552 = vst.msk [vmem:[%s5551] sm:$0xff] %vm5550, %v5549
    %s5553 = scalar_lea.vmem [#allocation0], 1281
    %v5554 = vld [vmem:[%s5553] sm:$0x1]
    %s5555 = scalar_lea.vmem [#allocation0], 1312
    %v5556 = vld [vmem:[%s5555] sm:$0x2]
    %vm5557 = vcmask 1041409
    %v5558 = vsel %vm5557, %v5556, %v5554
    %s5559 = scalar_lea.vmem [#allocation0], 1343
    %v5560 = vld [vmem:[%s5559] sm:$0x4]
    %vm5561 = vcmask 1042434
    %v5562 = vsel %vm5561, %v5560, %v5558
    %s5563 = scalar_lea.vmem [#allocation0], 1374
    %v5564 = vld [vmem:[%s5563] sm:$0x8]
    %vm5565 = vcmask 1043459
    %v5566 = vsel %vm5565, %v5564, %v5562
    %s5567 = scalar_lea.vmem [#allocation0], 1405
    %v5568 = vld [vmem:[%s5567] sm:$0x10]
    %vm5569 = vcmask 1044484
    %v5570 = vsel %vm5569, %v5568, %v5566
    %s5571 = scalar_lea.vmem [#allocation0], 1436
    %v5572 = vld [vmem:[%s5571] sm:$0x20]
    %vm5573 = vcmask 1045509
    %v5574 = vsel %vm5573, %v5572, %v5570
    %s5575 = scalar_lea.vmem [#allocation0], 1467
    %v5576 = vld [vmem:[%s5575] sm:$0x40]
    %vm5577 = vcmask 1046534
    %v5578 = vsel %vm5577, %v5576, %v5574
    %s5579 = scalar_lea.vmem [#allocation0], 1498
    %v5580 = vld [vmem:[%s5579] sm:$0x80]
    %vm5581 = vcmask 1047559
    %v5582 = vsel %vm5581, %v5580, %v5578
    %5583 = vrot.lane.b32.xlu0 %v5582, 4
    %v5584 = vpop.permute.xlu0 %5583
    %vm5585 = vcmask 64544
    %s5586 = scalar_lea.vmem %s1, 40
    %5587 = vst.msk [vmem:[%s5586] sm:$0xff] %vm5585, %v5584
    %s5588 = scalar_lea.vmem [#allocation0], 513
    %v5589 = vld [vmem:[%s5588] sm:$0x1]
    %s5590 = scalar_lea.vmem [#allocation0], 544
    %v5591 = vld [vmem:[%s5590] sm:$0x2]
    %vm5592 = vcmask 1041409
    %v5593 = vsel %vm5592, %v5591, %v5589
    %s5594 = scalar_lea.vmem [#allocation0], 575
    %v5595 = vld [vmem:[%s5594] sm:$0x4]
    %vm5596 = vcmask 1042434
    %v5597 = vsel %vm5596, %v5595, %v5593
    %s5598 = scalar_lea.vmem [#allocation0], 606
    %v5599 = vld [vmem:[%s5598] sm:$0x8]
    %vm5600 = vcmask 1043459
    %v5601 = vsel %vm5600, %v5599, %v5597
    %s5602 = scalar_lea.vmem [#allocation0], 637
    %v5603 = vld [vmem:[%s5602] sm:$0x10]
    %vm5604 = vcmask 1044484
    %v5605 = vsel %vm5604, %v5603, %v5601
    %s5606 = scalar_lea.vmem [#allocation0], 668
    %v5607 = vld [vmem:[%s5606] sm:$0x20]
    %vm5608 = vcmask 1045509
    %v5609 = vsel %vm5608, %v5607, %v5605
    %s5610 = scalar_lea.vmem [#allocation0], 699
    %v5611 = vld [vmem:[%s5610] sm:$0x40]
    %vm5612 = vcmask 1046534
    %v5613 = vsel %vm5612, %v5611, %v5609
    %s5614 = scalar_lea.vmem [#allocation0], 730
    %v5615 = vld [vmem:[%s5614] sm:$0x80]
    %vm5616 = vcmask 1047559
    %v5617 = vsel %vm5616, %v5615, %v5613
    %5618 = vrot.lane.b32.xlu0 %v5617, 4
    %v5619 = vpop.permute.xlu0 %5618
    %vm5620 = vcmask 64544
    %s5621 = scalar_lea.vmem %s1, 16
    %5622 = vst.msk [vmem:[%s5621] sm:$0xff] %vm5620, %v5619
    %s5623 = scalar_lea.vmem [#allocation0], 1537
    %v5624 = vld [vmem:[%s5623] sm:$0x1]
    %s5625 = scalar_lea.vmem [#allocation0], 1568
    %v5626 = vld [vmem:[%s5625] sm:$0x2]
    %vm5627 = vcmask 1041409
    %v5628 = vsel %vm5627, %v5626, %v5624
    %s5629 = scalar_lea.vmem [#allocation0], 1599
    %v5630 = vld [vmem:[%s5629] sm:$0x4]
    %vm5631 = vcmask 1042434
    %v5632 = vsel %vm5631, %v5630, %v5628
    %s5633 = scalar_lea.vmem [#allocation0], 1630
    %v5634 = vld [vmem:[%s5633] sm:$0x8]
    %vm5635 = vcmask 1043459
    %v5636 = vsel %vm5635, %v5634, %v5632
    %s5637 = scalar_lea.vmem [#allocation0], 1661
    %v5638 = vld [vmem:[%s5637] sm:$0x10]
    %vm5639 = vcmask 1044484
    %v5640 = vsel %vm5639, %v5638, %v5636
    %s5641 = scalar_lea.vmem [#allocation0], 1692
    %v5642 = vld [vmem:[%s5641] sm:$0x20]
    %vm5643 = vcmask 1045509
    %v5644 = vsel %vm5643, %v5642, %v5640
    %s5645 = scalar_lea.vmem [#allocation0], 1723
    %v5646 = vld [vmem:[%s5645] sm:$0x40]
    %vm5647 = vcmask 1046534
    %v5648 = vsel %vm5647, %v5646, %v5644
    %s5649 = scalar_lea.vmem [#allocation0], 1754
    %v5650 = vld [vmem:[%s5649] sm:$0x80]
    %vm5651 = vcmask 1047559
    %v5652 = vsel %vm5651, %v5650, %v5648
    %5653 = vrot.lane.b32.xlu0 %v5652, 4
    %v5654 = vpop.permute.xlu0 %5653
    %vm5655 = vcmask 64544
    %s5656 = scalar_lea.vmem %s1, 48
    %5657 = vst.msk [vmem:[%s5656] sm:$0xff] %vm5655, %v5654
    %s5658 = scalar_lea.vmem [#allocation0], 769
    %v5659 = vld [vmem:[%s5658] sm:$0x1]
    %s5660 = scalar_lea.vmem [#allocation0], 800
    %v5661 = vld [vmem:[%s5660] sm:$0x2]
    %vm5662 = vcmask 1041409
    %v5663 = vsel %vm5662, %v5661, %v5659
    %s5664 = scalar_lea.vmem [#allocation0], 831
    %v5665 = vld [vmem:[%s5664] sm:$0x4]
    %vm5666 = vcmask 1042434
    %v5667 = vsel %vm5666, %v5665, %v5663
    %s5668 = scalar_lea.vmem [#allocation0], 862
    %v5669 = vld [vmem:[%s5668] sm:$0x8]
    %vm5670 = vcmask 1043459
    %v5671 = vsel %vm5670, %v5669, %v5667
    %s5672 = scalar_lea.vmem [#allocation0], 893
    %v5673 = vld [vmem:[%s5672] sm:$0x10]
    %vm5674 = vcmask 1044484
    %v5675 = vsel %vm5674, %v5673, %v5671
    %s5676 = scalar_lea.vmem [#allocation0], 924
    %v5677 = vld [vmem:[%s5676] sm:$0x20]
    %vm5678 = vcmask 1045509
    %v5679 = vsel %vm5678, %v5677, %v5675
    %s5680 = scalar_lea.vmem [#allocation0], 955
    %v5681 = vld [vmem:[%s5680] sm:$0x40]
    %vm5682 = vcmask 1046534
    %v5683 = vsel %vm5682, %v5681, %v5679
    %s5684 = scalar_lea.vmem [#allocation0], 986
    %v5685 = vld [vmem:[%s5684] sm:$0x80]
    %vm5686 = vcmask 1047559
    %v5687 = vsel %vm5686, %v5685, %v5683
    %5688 = vrot.lane.b32.xlu0 %v5687, 4
    %v5689 = vpop.permute.xlu0 %5688
    %vm5690 = vcmask 64544
    %s5691 = scalar_lea.vmem %s1, 24
    %5692 = vst.msk [vmem:[%s5691] sm:$0xff] %vm5690, %v5689
    %s5693 = scalar_lea.vmem [#allocation0], 1793
    %v5694 = vld [vmem:[%s5693] sm:$0x1]
    %s5695 = scalar_lea.vmem [#allocation0], 1824
    %v5696 = vld [vmem:[%s5695] sm:$0x2]
    %vm5697 = vcmask 1041409
    %v5698 = vsel %vm5697, %v5696, %v5694
    %s5699 = scalar_lea.vmem [#allocation0], 1855
    %v5700 = vld [vmem:[%s5699] sm:$0x4]
    %vm5701 = vcmask 1042434
    %v5702 = vsel %vm5701, %v5700, %v5698
    %s5703 = scalar_lea.vmem [#allocation0], 1886
    %v5704 = vld [vmem:[%s5703] sm:$0x8]
    %vm5705 = vcmask 1043459
    %v5706 = vsel %vm5705, %v5704, %v5702
    %s5707 = scalar_lea.vmem [#allocation0], 1917
    %v5708 = vld [vmem:[%s5707] sm:$0x10]
    %vm5709 = vcmask 1044484
    %v5710 = vsel %vm5709, %v5708, %v5706
    %s5711 = scalar_lea.vmem [#allocation0], 1948
    %v5712 = vld [vmem:[%s5711] sm:$0x20]
    %vm5713 = vcmask 1045509
    %v5714 = vsel %vm5713, %v5712, %v5710
    %s5715 = scalar_lea.vmem [#allocation0], 1979
    %v5716 = vld [vmem:[%s5715] sm:$0x40]
    %vm5717 = vcmask 1046534
    %v5718 = vsel %vm5717, %v5716, %v5714
    %s5719 = scalar_lea.vmem [#allocation0], 2010
    %v5720 = vld [vmem:[%s5719] sm:$0x80]
    %vm5721 = vcmask 1047559
    %v5722 = vsel %vm5721, %v5720, %v5718
    %5723 = vrot.lane.b32.xlu0 %v5722, 4
    %v5724 = vpop.permute.xlu0 %5723
    %vm5725 = vcmask 64544
    %s5726 = scalar_lea.vmem %s1, 56
    %5727 = vst.msk [vmem:[%s5726] sm:$0xff] %vm5725, %v5724

// kernel: resblock3_pallas.1
$region0: #{resblock3_pallas.1}
  #allocation0 [shape = 'u32[]', space=smem, size = 0x4, offset = 0x4, fixed_abs, tag = 'smem constant byte address 0x4 - core index']
  #allocation1 [shape = 'u32[144,128]{1,0:T(1,128)}', space=vmem, size = 0x12000, scoped, tag = 'internal scratch']
  %s0 = inlined_call_operand.vmem [shape: f32[1,8,128], index: 0, kind: input, shape index: {}]
  %s1 = inlined_call_operand.vmem [shape: f32[128,128], index: 1, kind: input, shape index: {}]
  %s2 = inlined_call_operand.vmem [shape: f32[128,384], index: 2, kind: input, shape index: {}]
  %s3 = inlined_call_operand.vmem [shape: f32[128,128], index: 3, kind: input, shape index: {}]
  %s4 = inlined_call_operand.vmem [shape: f32[128,384], index: 4, kind: input, shape index: {}]
  %s5 = inlined_call_operand.vmem [shape: f32[128,128], index: 5, kind: input, shape index: {}]
  %s6 = inlined_call_operand.vmem [shape: f32[128,384], index: 6, kind: input, shape index: {}]
  %s7 = inlined_call_operand.vmem [shape: f32[1,8,128], index: 7, kind: output, shape index: {}]
  %s8 = sld [smem:[#allocation0]]
  $region38: #{resblock3_pallas.1} parent=0
    _
  %s10 = ssub.s32 1, %s8
  %s11 = scalar_select 0, %s10, %s8
  // Predicated region
  $region2: #{resblock3_pallas.1} parent=0 // pred_check
    _
  $region3: #{resblock3_pallas.1} parent=0 // pred_check_branch
    %13 = sbr.rel (0) target = $region5
  $region4: #{resblock3_pallas.1} parent=0 // pred_region
    _
  $region5: #{resblock3_pallas.1} parent=0 // pred_fallthru
    _
  // Predicated region
  $region6: #{resblock3_pallas.1} parent=0 // pred_check
    _
  $region7: #{resblock3_pallas.1} parent=0 // pred_check_branch
    %15 = sbr.rel (0) target = $region9
  $region8: #{resblock3_pallas.1} parent=0 // pred_region
    _
  $region9: #{resblock3_pallas.1} parent=0 // pred_fallthru
    _
  // Predicated region
  $region10: #{resblock3_pallas.1} parent=0 // pred_check
    _
  $region11: #{resblock3_pallas.1} parent=0 // pred_check_branch
    %17 = sbr.rel (0) target = $region13
  $region12: #{resblock3_pallas.1} parent=0 // pred_region
    _
  $region13: #{resblock3_pallas.1} parent=0 // pred_fallthru
    _
  // Predicated region
  $region14: #{resblock3_pallas.1} parent=0 // pred_check
    _
  $region15: #{resblock3_pallas.1} parent=0 // pred_check_branch
    %19 = sbr.rel (0) target = $region17
  $region16: #{resblock3_pallas.1} parent=0 // pred_region
    _
  $region17: #{resblock3_pallas.1} parent=0 // pred_fallthru
    _
  // Predicated region
  $region18: #{resblock3_pallas.1} parent=0 // pred_check
    _
  $region19: #{resblock3_pallas.1} parent=0 // pred_check_branch
    %21 = sbr.rel (0) target = $region21
  $region20: #{resblock3_pallas.1} parent=0 // pred_region
    _
  $region21: #{resblock3_pallas.1} parent=0 // pred_fallthru
    _
  // Predicated region
  $region22: #{resblock3_pallas.1} parent=0 // pred_check
    _
  $region23: #{resblock3_pallas.1} parent=0 // pred_check_branch
    %23 = sbr.rel (0) target = $region25
  $region24: #{resblock3_pallas.1} parent=0 // pred_region
    _
  $region25: #{resblock3_pallas.1} parent=0 // pred_fallthru
    _
  // Predicated region
  $region26: #{resblock3_pallas.1} parent=0 // pred_check
    _
  $region27: #{resblock3_pallas.1} parent=0 // pred_check_branch
    %25 = sbr.rel (0) target = $region29
  $region28: #{resblock3_pallas.1} parent=0 // pred_region
    _
  $region29: #{resblock3_pallas.1} parent=0 // pred_fallthru
    _
  %v26 = vld [vmem:[%s0] sm:$0xff]
  %v27 = vld [vmem:[%s1] sm:$0xff]
  %v28 = vld [vmem:[%s1 + $0x8] sm:$0xff]
  %v29 = vld [vmem:[%s1 + $0x10] sm:$0xff]
  %v30 = vld [vmem:[%s1 + $0x18] sm:$0xff]
  %v31 = vld [vmem:[%s1 + $0x20] sm:$0xff]
  %v32 = vld [vmem:[%s1 + $0x28] sm:$0xff]
  %v33 = vld [vmem:[%s1 + $0x30] sm:$0xff]
  %v34 = vld [vmem:[%s1 + $0x38] sm:$0xff]
  %v35 = vld [vmem:[%s1 + $0x40] sm:$0xff]
  %v36 = vld [vmem:[%s1 + $0x48] sm:$0xff]
  %v37 = vld [vmem:[%s1 + $0x50] sm:$0xff]
  %v38 = vld [vmem:[%s1 + $0x58] sm:$0xff]
  %v39 = vld [vmem:[%s1 + $0x60] sm:$0xff]
  %v40 = vld [vmem:[%s1 + $0x68] sm:$0xff]
  %v41 = vld [vmem:[%s1 + $0x70] sm:$0xff]
  %v42 = vld [vmem:[%s1 + $0x78] sm:$0xff]
  %43 = vmatprep.subr.mxu0 0.0
  %44 = vmatpush1.msra.mxu0 %v42
  %45 = vmatprep.subr.mxu0 0.0
  %46 = vmatpush1.msra.mxu0 %v41
  %47 = vmatprep.subr.mxu0 0.0
  %48 = vmatpush1.msra.mxu0 %v40
  %49 = vmatprep.subr.mxu0 0.0
  %50 = vmatpush1.msra.mxu0 %v39
  %51 = vmatprep.subr.mxu0 0.0
  %52 = vmatpush1.msra.mxu0 %v38
  %53 = vmatprep.subr.mxu0 0.0
  %54 = vmatpush1.msra.mxu0 %v37
  %55 = vmatprep.subr.mxu0 0.0
  %56 = vmatpush1.msra.mxu0 %v36
  %57 = vmatprep.subr.mxu0 0.0
  %58 = vmatpush1.msra.mxu0 %v35
  %59 = vmatprep.subr.mxu0 0.0
  %60 = vmatpush1.msra.mxu0 %v34
  %61 = vmatprep.subr.mxu0 0.0
  %62 = vmatpush1.msra.mxu0 %v33
  %63 = vmatprep.subr.mxu0 0.0
  %64 = vmatpush1.msra.mxu0 %v32
  %65 = vmatprep.subr.mxu0 0.0
  %66 = vmatpush1.msra.mxu0 %v31
  %67 = vmatprep.subr.mxu0 0.0
  %68 = vmatpush1.msra.mxu0 %v30
  %69 = vmatprep.subr.mxu0 0.0
  %70 = vmatpush1.msra.mxu0 %v29
  %71 = vmatprep.subr.mxu0 0.0
  %72 = vmatpush1.msra.mxu0 %v28
  %73 = vmatprep.subr.mxu0 0.0
  %74 = vmatpush1.msra.mxu0 %v27
  %75 = vmatprep.subr.mxu0 0.0
  %76 = vmatpush2.msra.mxu0 0.0
  %77 = vmatprep.subr.mxu0 0.0
  %78 = vmatpush2.msra.mxu0 0.0
  %79 = vmatprep.subr.mxu0 0.0
  %80 = vmatpush2.msra.mxu0 0.0
  %81 = vmatprep.subr.mxu0 0.0
  %82 = vmatpush2.msra.mxu0 0.0
  %83 = vmatprep.subr.mxu0 0.0
  %84 = vmatpush2.msra.mxu0 0.0
  %85 = vmatprep.subr.mxu0 0.0
  %86 = vmatpush2.msra.mxu0 0.0
  %87 = vmatprep.subr.mxu0 0.0
  %88 = vmatpush2.msra.mxu0 0.0
  %89 = vmatprep.subr.mxu0 0.0
  %90 = vmatpush2.msra.mxu0 0.0
  %91 = vmatprep.subr.mxu0 0.0
  %92 = vmatpush2.msra.mxu0 0.0
  %93 = vmatprep.subr.mxu0 0.0
  %94 = vmatpush2.msra.mxu0 0.0
  %95 = vmatprep.subr.mxu0 0.0
  %96 = vmatpush2.msra.mxu0 0.0
  %97 = vmatprep.subr.mxu0 0.0
  %98 = vmatpush2.msra.mxu0 0.0
  %99 = vmatprep.subr.mxu0 0.0
  %100 = vmatpush2.msra.mxu0 0.0
  %101 = vmatprep.subr.mxu0 0.0
  %102 = vmatpush2.msra.mxu0 0.0
  %103 = vmatprep.subr.mxu0 0.0
  %104 = vmatpush2.msra.mxu0 0.0
  %105 = vmatprep.subr.mxu0 0.0
  %106 = vmatpush2.msra.mxu0 0.0
  %107 = vmatprep.mubr.f32.mxu0 0.0
  %108 = vmatmul.mubr.f32.gmra.mxu0 %v26
  %v109 = vpop.f32.mrf.mxu0
  %v110 = vadd.f32 0.0, %v109
  %v111 = vpop.f32.mrf.mxu0
  %112 = vdwg.mxu0
  %v113 = vmax.f32 %v110, 0.0
  %v114 = vld [vmem:[%s2] sm:$0xff]
  %v115 = vld [vmem:[%s2 + $0x8] sm:$0xff]
  %v116 = vld [vmem:[%s2 + $0x10] sm:$0xff]
  %v117 = vld [vmem:[%s2 + $0x18] sm:$0xff]
  %v118 = vld [vmem:[%s2 + $0x20] sm:$0xff]
  %v119 = vld [vmem:[%s2 + $0x28] sm:$0xff]
  %v120 = vld [vmem:[%s2 + $0x30] sm:$0xff]
  %v121 = vld [vmem:[%s2 + $0x38] sm:$0xff]
  %v122 = vld [vmem:[%s2 + $0x40] sm:$0xff]
  %v123 = vld [vmem:[%s2 + $0x48] sm:$0xff]
  %v124 = vld [vmem:[%s2 + $0x50] sm:$0xff]
  %v125 = vld [vmem:[%s2 + $0x58] sm:$0xff]
  %v126 = vld [vmem:[%s2 + $0x60] sm:$0xff]
  %v127 = vld [vmem:[%s2 + $0x68] sm:$0xff]
  %v128 = vld [vmem:[%s2 + $0x70] sm:$0xff]
  %v129 = vld [vmem:[%s2 + $0x78] sm:$0xff]
  %v130 = vld [vmem:[%s2 + $0x80] sm:$0xff]
  %v131 = vld [vmem:[%s2 + $0x88] sm:$0xff]
  %v132 = vld [vmem:[%s2 + $0x90] sm:$0xff]
  %v133 = vld [vmem:[%s2 + $0x98] sm:$0xff]
  %v134 = vld [vmem:[%s2 + $0xa0] sm:$0xff]
  %v135 = vld [vmem:[%s2 + $0xa8] sm:$0xff]
  %v136 = vld [vmem:[%s2 + $0xb0] sm:$0xff]
  %v137 = vld [vmem:[%s2 + $0xb8] sm:$0xff]
  %v138 = vld [vmem:[%s2 + $0xc0] sm:$0xff]
  %v139 = vld [vmem:[%s2 + $0xc8] sm:$0xff]
  %v140 = vld [vmem:[%s2 + $0xd0] sm:$0xff]
  %v141 = vld [vmem:[%s2 + $0xd8] sm:$0xff]
  %v142 = vld [vmem:[%s2 + $0xe0] sm:$0xff]
  %v143 = vld [vmem:[%s2 + $0xe8] sm:$0xff]
  %v144 = vld [vmem:[%s2 + $0xf0] sm:$0xff]
  %v145 = vld [vmem:[%s2 + $0xf8] sm:$0xff]
  %v146 = vld [vmem:[%s2 + $0x100] sm:$0xff]
  %v147 = vld [vmem:[%s2 + $0x108] sm:$0xff]
  %v148 = vld [vmem:[%s2 + $0x110] sm:$0xff]
  %v149 = vld [vmem:[%s2 + $0x118] sm:$0xff]
  %v150 = vld [vmem:[%s2 + $0x120] sm:$0xff]
  %v151 = vld [vmem:[%s2 + $0x128] sm:$0xff]
  %v152 = vld [vmem:[%s2 + $0x130] sm:$0xff]
  %v153 = vld [vmem:[%s2 + $0x138] sm:$0xff]
  %v154 = vld [vmem:[%s2 + $0x140] sm:$0xff]
  %v155 = vld [vmem:[%s2 + $0x148] sm:$0xff]
  %v156 = vld [vmem:[%s2 + $0x150] sm:$0xff]
  %v157 = vld [vmem:[%s2 + $0x158] sm:$0xff]
  %v158 = vld [vmem:[%s2 + $0x160] sm:$0xff]
  %v159 = vld [vmem:[%s2 + $0x168] sm:$0xff]
  %v160 = vld [vmem:[%s2 + $0x170] sm:$0xff]
  %v161 = vld [vmem:[%s2 + $0x178] sm:$0xff]
  %162 = vmatprep.subr.mxu0 %v160
  %163 = vmatpush1.msra.mxu0 %v159
  %164 = vmatprep.subr.mxu0 %v157
  %165 = vmatpush1.msra.mxu0 %v156
  %166 = vmatprep.subr.mxu0 %v154
  %167 = vmatpush1.msra.mxu0 %v153
  %168 = vmatprep.subr.mxu0 %v151
  %169 = vmatpush1.msra.mxu0 %v150
  %170 = vmatprep.subr.mxu0 %v148
  %171 = vmatpush1.msra.mxu0 %v147
  %172 = vmatprep.subr.mxu0 %v145
  %173 = vmatpush1.msra.mxu0 %v144
  %174 = vmatprep.subr.mxu0 %v142
  %175 = vmatpush1.msra.mxu0 %v141
  %176 = vmatprep.subr.mxu0 %v139
  %177 = vmatpush1.msra.mxu0 %v138
  %178 = vmatprep.subr.mxu0 %v136
  %179 = vmatpush1.msra.mxu0 %v135
  %180 = vmatprep.subr.mxu0 %v133
  %181 = vmatpush1.msra.mxu0 %v132
  %182 = vmatprep.subr.mxu0 %v130
  %183 = vmatpush1.msra.mxu0 %v129
  %184 = vmatprep.subr.mxu0 %v127
  %185 = vmatpush1.msra.mxu0 %v126
  %186 = vmatprep.subr.mxu0 %v124
  %187 = vmatpush1.msra.mxu0 %v123
  %188 = vmatprep.subr.mxu0 %v121
  %189 = vmatpush1.msra.mxu0 %v120
  %190 = vmatprep.subr.mxu0 %v118
  %191 = vmatpush1.msra.mxu0 %v117
  %192 = vmatprep.subr.mxu0 %v115
  %193 = vmatpush1.msra.mxu0 %v114
  %194 = vmatprep.subr.mxu0 0.0
  %195 = vmatpush2.msra.mxu0 0.0
  %196 = vmatprep.subr.mxu0 0.0
  %197 = vmatpush2.msra.mxu0 0.0
  %198 = vmatprep.subr.mxu0 0.0
  %199 = vmatpush2.msra.mxu0 0.0
  %200 = vmatprep.subr.mxu0 0.0
  %201 = vmatpush2.msra.mxu0 0.0
  %202 = vmatprep.subr.mxu0 0.0
  %203 = vmatpush2.msra.mxu0 0.0
  %204 = vmatprep.subr.mxu0 0.0
  %205 = vmatpush2.msra.mxu0 0.0
  %206 = vmatprep.subr.mxu0 0.0
  %207 = vmatpush2.msra.mxu0 0.0
  %208 = vmatprep.subr.mxu0 0.0
  %209 = vmatpush2.msra.mxu0 0.0
  %210 = vmatprep.subr.mxu0 0.0
  %211 = vmatpush2.msra.mxu0 0.0
  %212 = vmatprep.subr.mxu0 0.0
  %213 = vmatpush2.msra.mxu0 0.0
  %214 = vmatprep.subr.mxu0 0.0
  %215 = vmatpush2.msra.mxu0 0.0
  %216 = vmatprep.subr.mxu0 0.0
  %217 = vmatpush2.msra.mxu0 0.0
  %218 = vmatprep.subr.mxu0 0.0
  %219 = vmatpush2.msra.mxu0 0.0
  %220 = vmatprep.subr.mxu0 0.0
  %221 = vmatpush2.msra.mxu0 0.0
  %222 = vmatprep.subr.mxu0 0.0
  %223 = vmatpush2.msra.mxu0 0.0
  %224 = vmatprep.subr.mxu0 0.0
  %225 = vmatpush2.msra.mxu0 0.0
  %226 = vmatprep.mubr.f32.mxu0 0.0
  %227 = vmatmul.mubr.f32.gmra.mxu0 %v113
  %v228 = vpop.f32.mrf.mxu0
  %v229 = vadd.f32 0.0, %v228
  %v230 = vpop.f32.mrf.mxu0
  %v231 = vadd.f32 0.0, %v230
  %232 = vdwg.mxu0
  %233 = vmatprep.subr.mxu0 0.0
  %234 = vmatpush1.msra.mxu0 %v161
  %235 = vmatprep.subr.mxu0 0.0
  %236 = vmatpush1.msra.mxu0 %v158
  %237 = vmatprep.subr.mxu0 0.0
  %238 = vmatpush1.msra.mxu0 %v155
  %239 = vmatprep.subr.mxu0 0.0
  %240 = vmatpush1.msra.mxu0 %v152
  %241 = vmatprep.subr.mxu0 0.0
  %242 = vmatpush1.msra.mxu0 %v149
  %243 = vmatprep.subr.mxu0 0.0
  %244 = vmatpush1.msra.mxu0 %v146
  %245 = vmatprep.subr.mxu0 0.0
  %246 = vmatpush1.msra.mxu0 %v143
  %247 = vmatprep.subr.mxu0 0.0
  %248 = vmatpush1.msra.mxu0 %v140
  %249 = vmatprep.subr.mxu0 0.0
  %250 = vmatpush1.msra.mxu0 %v137
  %251 = vmatprep.subr.mxu0 0.0
  %252 = vmatpush1.msra.mxu0 %v134
  %253 = vmatprep.subr.mxu0 0.0
  %254 = vmatpush1.msra.mxu0 %v131
  %255 = vmatprep.subr.mxu0 0.0
  %256 = vmatpush1.msra.mxu0 %v128
  %257 = vmatprep.subr.mxu0 0.0
  %258 = vmatpush1.msra.mxu0 %v125
  %259 = vmatprep.subr.mxu0 0.0
  %260 = vmatpush1.msra.mxu0 %v122
  %261 = vmatprep.subr.mxu0 0.0
  %262 = vmatpush1.msra.mxu0 %v119
  %263 = vmatprep.subr.mxu0 0.0
  %264 = vmatpush1.msra.mxu0 %v116
  %265 = vmatprep.subr.mxu0 0.0
  %266 = vmatpush2.msra.mxu0 0.0
  %267 = vmatprep.subr.mxu0 0.0
  %268 = vmatpush2.msra.mxu0 0.0
  %269 = vmatprep.subr.mxu0 0.0
  %270 = vmatpush2.msra.mxu0 0.0
  %271 = vmatprep.subr.mxu0 0.0
  %272 = vmatpush2.msra.mxu0 0.0
  %273 = vmatprep.subr.mxu0 0.0
  %274 = vmatpush2.msra.mxu0 0.0
  %275 = vmatprep.subr.mxu0 0.0
  %276 = vmatpush2.msra.mxu0 0.0
  %277 = vmatprep.subr.mxu0 0.0
  %278 = vmatpush2.msra.mxu0 0.0
  %279 = vmatprep.subr.mxu0 0.0
  %280 = vmatpush2.msra.mxu0 0.0
  %281 = vmatprep.subr.mxu0 0.0
  %282 = vmatpush2.msra.mxu0 0.0
  %283 = vmatprep.subr.mxu0 0.0
  %284 = vmatpush2.msra.mxu0 0.0
  %285 = vmatprep.subr.mxu0 0.0
  %286 = vmatpush2.msra.mxu0 0.0
  %287 = vmatprep.subr.mxu0 0.0
  %288 = vmatpush2.msra.mxu0 0.0
  %289 = vmatprep.subr.mxu0 0.0
  %290 = vmatpush2.msra.mxu0 0.0
  %291 = vmatprep.subr.mxu0 0.0
  %292 = vmatpush2.msra.mxu0 0.0
  %293 = vmatprep.subr.mxu0 0.0
  %294 = vmatpush2.msra.mxu0 0.0
  %295 = vmatprep.subr.mxu0 0.0
  %296 = vmatpush2.msra.mxu0 0.0
  %297 = vmatprep.mubr.f32.mxu0 0.0
  %298 = vmatmul.mubr.f32.gmra.mxu0 %v113
  %v299 = vpop.f32.mrf.mxu0
  %v300 = vadd.f32 0.0, %v299
  %v301 = vpop.f32.mrf.mxu0
  %302 = vdwg.mxu0
  %v304 = vrot.slane %v229, 7
  %vm306 = vcmask 1040384
  %v307 = vsel %vm306, 0.0, %v304
  %v309 = vrot.slane %v300, 1
  %vm311 = vcmask 1046528
  %v312 = vsel %vm311, %v309, 0.0
  %v313 = vadd.f32 %v307, %v231
  %v314 = vadd.f32 %v313, %v312
  %v315 = vmax.f32 %v314, 0.0
  %v316 = vld [vmem:[%s3] sm:$0xff]
  %v317 = vld [vmem:[%s3 + $0x8] sm:$0xff]
  %v318 = vld [vmem:[%s3 + $0x10] sm:$0xff]
  %v319 = vld [vmem:[%s3 + $0x18] sm:$0xff]
  %v320 = vld [vmem:[%s3 + $0x20] sm:$0xff]
  %v321 = vld [vmem:[%s3 + $0x28] sm:$0xff]
  %v322 = vld [vmem:[%s3 + $0x30] sm:$0xff]
  %v323 = vld [vmem:[%s3 + $0x38] sm:$0xff]
  %v324 = vld [vmem:[%s3 + $0x40] sm:$0xff]
  %v325 = vld [vmem:[%s3 + $0x48] sm:$0xff]
  %v326 = vld [vmem:[%s3 + $0x50] sm:$0xff]
  %v327 = vld [vmem:[%s3 + $0x58] sm:$0xff]
  %v328 = vld [vmem:[%s3 + $0x60] sm:$0xff]
  %v329 = vld [vmem:[%s3 + $0x68] sm:$0xff]
  %v330 = vld [vmem:[%s3 + $0x70] sm:$0xff]
  %v331 = vld [vmem:[%s3 + $0x78] sm:$0xff]
  %332 = vmatprep.subr.mxu0 0.0
  %333 = vmatpush1.msra.mxu0 %v331
  %334 = vmatprep.subr.mxu0 0.0
  %335 = vmatpush1.msra.mxu0 %v330
  %336 = vmatprep.subr.mxu0 0.0
  %337 = vmatpush1.msra.mxu0 %v329
  %338 = vmatprep.subr.mxu0 0.0
  %339 = vmatpush1.msra.mxu0 %v328
  %340 = vmatprep.subr.mxu0 0.0
  %341 = vmatpush1.msra.mxu0 %v327
  %342 = vmatprep.subr.mxu0 0.0
  %343 = vmatpush1.msra.mxu0 %v326
  %344 = vmatprep.subr.mxu0 0.0
  %345 = vmatpush1.msra.mxu0 %v325
  %346 = vmatprep.subr.mxu0 0.0
  %347 = vmatpush1.msra.mxu0 %v324
  %348 = vmatprep.subr.mxu0 0.0
  %349 = vmatpush1.msra.mxu0 %v323
  %350 = vmatprep.subr.mxu0 0.0
  %351 = vmatpush1.msra.mxu0 %v322
  %352 = vmatprep.subr.mxu0 0.0
  %353 = vmatpush1.msra.mxu0 %v321
  %354 = vmatprep.subr.mxu0 0.0
  %355 = vmatpush1.msra.mxu0 %v320
  %356 = vmatprep.subr.mxu0 0.0
  %357 = vmatpush1.msra.mxu0 %v319
  %358 = vmatprep.subr.mxu0 0.0
  %359 = vmatpush1.msra.mxu0 %v318
  %360 = vmatprep.subr.mxu0 0.0
  %361 = vmatpush1.msra.mxu0 %v317
  %362 = vmatprep.subr.mxu0 0.0
  %363 = vmatpush1.msra.mxu0 %v316
  %364 = vmatprep.subr.mxu0 0.0
  %365 = vmatpush2.msra.mxu0 0.0
  %366 = vmatprep.subr.mxu0 0.0
  %367 = vmatpush2.msra.mxu0 0.0
  %368 = vmatprep.subr.mxu0 0.0
  %369 = vmatpush2.msra.mxu0 0.0
  %370 = vmatprep.subr.mxu0 0.0
  %371 = vmatpush2.msra.mxu0 0.0
  %372 = vmatprep.subr.mxu0 0.0
  %373 = vmatpush2.msra.mxu0 0.0
  %374 = vmatprep.subr.mxu0 0.0
  %375 = vmatpush2.msra.mxu0 0.0
  %376 = vmatprep.subr.mxu0 0.0
  %377 = vmatpush2.msra.mxu0 0.0
  %378 = vmatprep.subr.mxu0 0.0
  %379 = vmatpush2.msra.mxu0 0.0
  %380 = vmatprep.subr.mxu0 0.0
  %381 = vmatpush2.msra.mxu0 0.0
  %382 = vmatprep.subr.mxu0 0.0
  %383 = vmatpush2.msra.mxu0 0.0
  %384 = vmatprep.subr.mxu0 0.0
  %385 = vmatpush2.msra.mxu0 0.0
  %386 = vmatprep.subr.mxu0 0.0
  %387 = vmatpush2.msra.mxu0 0.0
  %388 = vmatprep.subr.mxu0 0.0
  %389 = vmatpush2.msra.mxu0 0.0
  %390 = vmatprep.subr.mxu0 0.0
  %391 = vmatpush2.msra.mxu0 0.0
  %392 = vmatprep.subr.mxu0 0.0
  %393 = vmatpush2.msra.mxu0 0.0
  %394 = vmatprep.subr.mxu0 0.0
  %395 = vmatpush2.msra.mxu0 0.0
  %396 = vmatprep.mubr.f32.mxu0 0.0
  %397 = vmatmul.mubr.f32.gmra.mxu0 %v315
  %v398 = vpop.f32.mrf.mxu0
  %v399 = vadd.f32 0.0, %v398
  %v400 = vpop.f32.mrf.mxu0
  %401 = vdwg.mxu0
  %v402 = vmax.f32 %v399, 0.0
  %v403 = vld [vmem:[%s4] sm:$0xff]
  %v404 = vld [vmem:[%s4 + $0x8] sm:$0xff]
  %v405 = vld [vmem:[%s4 + $0x10] sm:$0xff]
  %v406 = vld [vmem:[%s4 + $0x18] sm:$0xff]
  %v407 = vld [vmem:[%s4 + $0x20] sm:$0xff]
  %v408 = vld [vmem:[%s4 + $0x28] sm:$0xff]
  %v409 = vld [vmem:[%s4 + $0x30] sm:$0xff]
  %v410 = vld [vmem:[%s4 + $0x38] sm:$0xff]
  %v411 = vld [vmem:[%s4 + $0x40] sm:$0xff]
  %v412 = vld [vmem:[%s4 + $0x48] sm:$0xff]
  %v413 = vld [vmem:[%s4 + $0x50] sm:$0xff]
  %v414 = vld [vmem:[%s4 + $0x58] sm:$0xff]
  %v415 = vld [vmem:[%s4 + $0x60] sm:$0xff]
  %v416 = vld [vmem:[%s4 + $0x68] sm:$0xff]
  %v417 = vld [vmem:[%s4 + $0x70] sm:$0xff]
  %v418 = vld [vmem:[%s4 + $0x78] sm:$0xff]
  %v419 = vld [vmem:[%s4 + $0x80] sm:$0xff]
  %v420 = vld [vmem:[%s4 + $0x88] sm:$0xff]
  %v421 = vld [vmem:[%s4 + $0x90] sm:$0xff]
  %v422 = vld [vmem:[%s4 + $0x98] sm:$0xff]
  %v423 = vld [vmem:[%s4 + $0xa0] sm:$0xff]
  %v424 = vld [vmem:[%s4 + $0xa8] sm:$0xff]
  %v425 = vld [vmem:[%s4 + $0xb0] sm:$0xff]
  %v426 = vld [vmem:[%s4 + $0xb8] sm:$0xff]
  %v427 = vld [vmem:[%s4 + $0xc0] sm:$0xff]
  %v428 = vld [vmem:[%s4 + $0xc8] sm:$0xff]
  %v429 = vld [vmem:[%s4 + $0xd0] sm:$0xff]
  %v430 = vld [vmem:[%s4 + $0xd8] sm:$0xff]
  %v431 = vld [vmem:[%s4 + $0xe0] sm:$0xff]
  %v432 = vld [vmem:[%s4 + $0xe8] sm:$0xff]
  %v433 = vld [vmem:[%s4 + $0xf0] sm:$0xff]
  %v434 = vld [vmem:[%s4 + $0xf8] sm:$0xff]
  %v435 = vld [vmem:[%s4 + $0x100] sm:$0xff]
  %v436 = vld [vmem:[%s4 + $0x108] sm:$0xff]
  %v437 = vld [vmem:[%s4 + $0x110] sm:$0xff]
  %v438 = vld [vmem:[%s4 + $0x118] sm:$0xff]
  %v439 = vld [vmem:[%s4 + $0x120] sm:$0xff]
  %v440 = vld [vmem:[%s4 + $0x128] sm:$0xff]
  %v441 = vld [vmem:[%s4 + $0x130] sm:$0xff]
  %v442 = vld [vmem:[%s4 + $0x138] sm:$0xff]
  %v443 = vld [vmem:[%s4 + $0x140] sm:$0xff]
  %v444 = vld [vmem:[%s4 + $0x148] sm:$0xff]
  %v445 = vld [vmem:[%s4 + $0x150] sm:$0xff]
  %v446 = vld [vmem:[%s4 + $0x158] sm:$0xff]
  %v447 = vld [vmem:[%s4 + $0x160] sm:$0xff]
  %v448 = vld [vmem:[%s4 + $0x168] sm:$0xff]
  %v449 = vld [vmem:[%s4 + $0x170] sm:$0xff]
  %v450 = vld [vmem:[%s4 + $0x178] sm:$0xff]
  %451 = vmatprep.subr.mxu0 %v449
  %452 = vmatpush1.msra.mxu0 %v448
  %453 = vmatprep.subr.mxu0 %v446
  %454 = vmatpush1.msra.mxu0 %v445
  %455 = vmatprep.subr.mxu0 %v443
  %456 = vmatpush1.msra.mxu0 %v442
  %457 = vmatprep.subr.mxu0 %v440
  %458 = vmatpush1.msra.mxu0 %v439
  %459 = vmatprep.subr.mxu0 %v437
  %460 = vmatpush1.msra.mxu0 %v436
  %461 = vmatprep.subr.mxu0 %v434
  %462 = vmatpush1.msra.mxu0 %v433
  %463 = vmatprep.subr.mxu0 %v431
  %464 = vmatpush1.msra.mxu0 %v430
  %465 = vmatprep.subr.mxu0 %v428
  %466 = vmatpush1.msra.mxu0 %v427
  %467 = vmatprep.subr.mxu0 %v425
  %468 = vmatpush1.msra.mxu0 %v424
  %469 = vmatprep.subr.mxu0 %v422
  %470 = vmatpush1.msra.mxu0 %v421
  %471 = vmatprep.subr.mxu0 %v419
  %472 = vmatpush1.msra.mxu0 %v418
  %473 = vmatprep.subr.mxu0 %v416
  %474 = vmatpush1.msra.mxu0 %v415
  %475 = vmatprep.subr.mxu0 %v413
  %476 = vmatpush1.msra.mxu0 %v412
  %477 = vmatprep.subr.mxu0 %v410
  %478 = vmatpush1.msra.mxu0 %v409
  %479 = vmatprep.subr.mxu0 %v407
  %480 = vmatpush1.msra.mxu0 %v406
  %481 = vmatprep.subr.mxu0 %v404
  %482 = vmatpush1.msra.mxu0 %v403
  %483 = vmatprep.subr.mxu0 0.0
  %484 = vmatpush2.msra.mxu0 0.0
  %485 = vmatprep.subr.mxu0 0.0
  %486 = vmatpush2.msra.mxu0 0.0
  %487 = vmatprep.subr.mxu0 0.0
  %488 = vmatpush2.msra.mxu0 0.0
  %489 = vmatprep.subr.mxu0 0.0
  %490 = vmatpush2.msra.mxu0 0.0
  %491 = vmatprep.subr.mxu0 0.0
  %492 = vmatpush2.msra.mxu0 0.0
  %493 = vmatprep.subr.mxu0 0.0
  %494 = vmatpush2.msra.mxu0 0.0
  %495 = vmatprep.subr.mxu0 0.0
  %496 = vmatpush2.msra.mxu0 0.0
  %497 = vmatprep.subr.mxu0 0.0
  %498 = vmatpush2.msra.mxu0 0.0
  %499 = vmatprep.subr.mxu0 0.0
  %500 = vmatpush2.msra.mxu0 0.0
  %501 = vmatprep.subr.mxu0 0.0
  %502 = vmatpush2.msra.mxu0 0.0
  %503 = vmatprep.subr.mxu0 0.0
  %504 = vmatpush2.msra.mxu0 0.0
  %505 = vmatprep.subr.mxu0 0.0
  %506 = vmatpush2.msra.mxu0 0.0
  %507 = vmatprep.subr.mxu0 0.0
  %508 = vmatpush2.msra.mxu0 0.0
  %509 = vmatprep.subr.mxu0 0.0
  %510 = vmatpush2.msra.mxu0 0.0
  %511 = vmatprep.subr.mxu0 0.0
  %512 = vmatpush2.msra.mxu0 0.0
  %513 = vmatprep.subr.mxu0 0.0
  %514 = vmatpush2.msra.mxu0 0.0
  %515 = vmatprep.mubr.f32.mxu0 0.0
  %516 = vmatmul.mubr.f32.gmra.mxu0 %v402
  %v517 = vpop.f32.mrf.mxu0
  %v518 = vadd.f32 0.0, %v517
  %v519 = vpop.f32.mrf.mxu0
  %v520 = vadd.f32 0.0, %v519
  %521 = vdwg.mxu0
  %522 = vmatprep.subr.mxu0 0.0
  %523 = vmatpush1.msra.mxu0 %v450
  %524 = vmatprep.subr.mxu0 0.0
  %525 = vmatpush1.msra.mxu0 %v447
  %526 = vmatprep.subr.mxu0 0.0
  %527 = vmatpush1.msra.mxu0 %v444
  %528 = vmatprep.subr.mxu0 0.0
  %529 = vmatpush1.msra.mxu0 %v441
  %530 = vmatprep.subr.mxu0 0.0
  %531 = vmatpush1.msra.mxu0 %v438
  %532 = vmatprep.subr.mxu0 0.0
  %533 = vmatpush1.msra.mxu0 %v435
  %534 = vmatprep.subr.mxu0 0.0
  %535 = vmatpush1.msra.mxu0 %v432
  %536 = vmatprep.subr.mxu0 0.0
  %537 = vmatpush1.msra.mxu0 %v429
  %538 = vmatprep.subr.mxu0 0.0
  %539 = vmatpush1.msra.mxu0 %v426
  %540 = vmatprep.subr.mxu0 0.0
  %541 = vmatpush1.msra.mxu0 %v423
  %542 = vmatprep.subr.mxu0 0.0
  %543 = vmatpush1.msra.mxu0 %v420
  %544 = vmatprep.subr.mxu0 0.0
  %545 = vmatpush1.msra.mxu0 %v417
  %546 = vmatprep.subr.mxu0 0.0
  %547 = vmatpush1.msra.mxu0 %v414
  %548 = vmatprep.subr.mxu0 0.0
  %549 = vmatpush1.msra.mxu0 %v411
  %550 = vmatprep.subr.mxu0 0.0
  %551 = vmatpush1.msra.mxu0 %v408
  %552 = vmatprep.subr.mxu0 0.0
  %553 = vmatpush1.msra.mxu0 %v405
  %554 = vmatprep.subr.mxu0 0.0
  %555 = vmatpush2.msra.mxu0 0.0
  %556 = vmatprep.subr.mxu0 0.0
  %557 = vmatpush2.msra.mxu0 0.0
  %558 = vmatprep.subr.mxu0 0.0
  %559 = vmatpush2.msra.mxu0 0.0
  %560 = vmatprep.subr.mxu0 0.0
  %561 = vmatpush2.msra.mxu0 0.0
  %562 = vmatprep.subr.mxu0 0.0
  %563 = vmatpush2.msra.mxu0 0.0
  %564 = vmatprep.subr.mxu0 0.0
  %565 = vmatpush2.msra.mxu0 0.0
  %566 = vmatprep.subr.mxu0 0.0
  %567 = vmatpush2.msra.mxu0 0.0
  %568 = vmatprep.subr.mxu0 0.0
  %569 = vmatpush2.msra.mxu0 0.0
  %570 = vmatprep.subr.mxu0 0.0
  %571 = vmatpush2.msra.mxu0 0.0
  %572 = vmatprep.subr.mxu0 0.0
  %573 = vmatpush2.msra.mxu0 0.0
  %574 = vmatprep.subr.mxu0 0.0
  %575 = vmatpush2.msra.mxu0 0.0
  %576 = vmatprep.subr.mxu0 0.0
  %577 = vmatpush2.msra.mxu0 0.0
  %578 = vmatprep.subr.mxu0 0.0
  %579 = vmatpush2.msra.mxu0 0.0
  %580 = vmatprep.subr.mxu0 0.0
  %581 = vmatpush2.msra.mxu0 0.0
  %582 = vmatprep.subr.mxu0 0.0
  %583 = vmatpush2.msra.mxu0 0.0
  %584 = vmatprep.subr.mxu0 0.0
  %585 = vmatpush2.msra.mxu0 0.0
  %586 = vmatprep.mubr.f32.mxu0 0.0
  %587 = vmatmul.mubr.f32.gmra.mxu0 %v402
  %v588 = vpop.f32.mrf.mxu0
  %v589 = vadd.f32 0.0, %v588
  %v590 = vpop.f32.mrf.mxu0
  %591 = vdwg.mxu0
  %v593 = vrot.slane %v518, 7
  %v595 = vsel %vm306, 0.0, %v593
  %v597 = vrot.slane %v589, 1
  %v599 = vsel %vm311, %v597, 0.0
  %v600 = vadd.f32 %v595, %v520
  %v601 = vadd.f32 %v600, %v599
  %v602 = vmax.f32 %v601, 0.0
  %v603 = vld [vmem:[%s5] sm:$0xff]
  %v604 = vld [vmem:[%s5 + $0x8] sm:$0xff]
  %v605 = vld [vmem:[%s5 + $0x10] sm:$0xff]
  %v606 = vld [vmem:[%s5 + $0x18] sm:$0xff]
  %v607 = vld [vmem:[%s5 + $0x20] sm:$0xff]
  %v608 = vld [vmem:[%s5 + $0x28] sm:$0xff]
  %v609 = vld [vmem:[%s5 + $0x30] sm:$0xff]
  %v610 = vld [vmem:[%s5 + $0x38] sm:$0xff]
  %v611 = vld [vmem:[%s5 + $0x40] sm:$0xff]
  %v612 = vld [vmem:[%s5 + $0x48] sm:$0xff]
  %v613 = vld [vmem:[%s5 + $0x50] sm:$0xff]
  %v614 = vld [vmem:[%s5 + $0x58] sm:$0xff]
  %v615 = vld [vmem:[%s5 + $0x60] sm:$0xff]
  %v616 = vld [vmem:[%s5 + $0x68] sm:$0xff]
  %v617 = vld [vmem:[%s5 + $0x70] sm:$0xff]
  %v618 = vld [vmem:[%s5 + $0x78] sm:$0xff]
  %619 = vmatprep.subr.mxu0 0.0
  %620 = vmatpush1.msra.mxu0 %v618
  %621 = vmatprep.subr.mxu0 0.0
  %622 = vmatpush1.msra.mxu0 %v617
  %623 = vmatprep.subr.mxu0 0.0
  %624 = vmatpush1.msra.mxu0 %v616
  %625 = vmatprep.subr.mxu0 0.0
  %626 = vmatpush1.msra.mxu0 %v615
  %627 = vmatprep.subr.mxu0 0.0
  %628 = vmatpush1.msra.mxu0 %v614
  %629 = vmatprep.subr.mxu0 0.0
  %630 = vmatpush1.msra.mxu0 %v613
  %631 = vmatprep.subr.mxu0 0.0
  %632 = vmatpush1.msra.mxu0 %v612
  %633 = vmatprep.subr.mxu0 0.0
  %634 = vmatpush1.msra.mxu0 %v611
  %635 = vmatprep.subr.mxu0 0.0
  %636 = vmatpush1.msra.mxu0 %v610
  %637 = vmatprep.subr.mxu0 0.0
  %638 = vmatpush1.msra.mxu0 %v609
  %639 = vmatprep.subr.mxu0 0.0
  %640 = vmatpush1.msra.mxu0 %v608
  %641 = vmatprep.subr.mxu0 0.0
  %642 = vmatpush1.msra.mxu0 %v607
  %643 = vmatprep.subr.mxu0 0.0
  %644 = vmatpush1.msra.mxu0 %v606
  %645 = vmatprep.subr.mxu0 0.0
  %646 = vmatpush1.msra.mxu0 %v605
  %647 = vmatprep.subr.mxu0 0.0
  %648 = vmatpush1.msra.mxu0 %v604
  %649 = vmatprep.subr.mxu0 0.0
  %650 = vmatpush1.msra.mxu0 %v603
  %651 = vmatprep.subr.mxu0 0.0
  %652 = vmatpush2.msra.mxu0 0.0
  %653 = vmatprep.subr.mxu0 0.0
  %654 = vmatpush2.msra.mxu0 0.0
  %655 = vmatprep.subr.mxu0 0.0
  %656 = vmatpush2.msra.mxu0 0.0
  %657 = vmatprep.subr.mxu0 0.0
  %658 = vmatpush2.msra.mxu0 0.0
  %659 = vmatprep.subr.mxu0 0.0
  %660 = vmatpush2.msra.mxu0 0.0
  %661 = vmatprep.subr.mxu0 0.0
  %662 = vmatpush2.msra.mxu0 0.0
  %663 = vmatprep.subr.mxu0 0.0
  %664 = vmatpush2.msra.mxu0 0.0
  %665 = vmatprep.subr.mxu0 0.0
  %666 = vmatpush2.msra.mxu0 0.0
  %667 = vmatprep.subr.mxu0 0.0
  %668 = vmatpush2.msra.mxu0 0.0
  %669 = vmatprep.subr.mxu0 0.0
  %670 = vmatpush2.msra.mxu0 0.0
  %671 = vmatprep.subr.mxu0 0.0
  %672 = vmatpush2.msra.mxu0 0.0
  %673 = vmatprep.subr.mxu0 0.0
  %674 = vmatpush2.msra.mxu0 0.0
  %675 = vmatprep.subr.mxu0 0.0
  %676 = vmatpush2.msra.mxu0 0.0
  %677 = vmatprep.subr.mxu0 0.0
  %678 = vmatpush2.msra.mxu0 0.0
  %679 = vmatprep.subr.mxu0 0.0
  %680 = vmatpush2.msra.mxu0 0.0
  %681 = vmatprep.subr.mxu0 0.0
  %682 = vmatpush2.msra.mxu0 0.0
  %683 = vmatprep.mubr.f32.mxu0 0.0
  %684 = vmatmul.mubr.f32.gmra.mxu0 %v602
  %v685 = vpop.f32.mrf.mxu0
  %v686 = vadd.f32 0.0, %v685
  %v687 = vpop.f32.mrf.mxu0
  %688 = vdwg.mxu0
  %v689 = vmax.f32 %v686, 0.0
  %v690 = vld [vmem:[%s6] sm:$0xff]
  %v691 = vld [vmem:[%s6 + $0x8] sm:$0xff]
  %v692 = vld [vmem:[%s6 + $0x10] sm:$0xff]
  %v693 = vld [vmem:[%s6 + $0x18] sm:$0xff]
  %v694 = vld [vmem:[%s6 + $0x20] sm:$0xff]
  %v695 = vld [vmem:[%s6 + $0x28] sm:$0xff]
  %v696 = vld [vmem:[%s6 + $0x30] sm:$0xff]
  %v697 = vld [vmem:[%s6 + $0x38] sm:$0xff]
  %v698 = vld [vmem:[%s6 + $0x40] sm:$0xff]
  %v699 = vld [vmem:[%s6 + $0x48] sm:$0xff]
  %v700 = vld [vmem:[%s6 + $0x50] sm:$0xff]
  %v701 = vld [vmem:[%s6 + $0x58] sm:$0xff]
  %v702 = vld [vmem:[%s6 + $0x60] sm:$0xff]
  %v703 = vld [vmem:[%s6 + $0x68] sm:$0xff]
  %v704 = vld [vmem:[%s6 + $0x70] sm:$0xff]
  %v705 = vld [vmem:[%s6 + $0x78] sm:$0xff]
  %v706 = vld [vmem:[%s6 + $0x80] sm:$0xff]
  %v707 = vld [vmem:[%s6 + $0x88] sm:$0xff]
  %v708 = vld [vmem:[%s6 + $0x90] sm:$0xff]
  %v709 = vld [vmem:[%s6 + $0x98] sm:$0xff]
  %v710 = vld [vmem:[%s6 + $0xa0] sm:$0xff]
  %v711 = vld [vmem:[%s6 + $0xa8] sm:$0xff]
  %v712 = vld [vmem:[%s6 + $0xb0] sm:$0xff]
  %v713 = vld [vmem:[%s6 + $0xb8] sm:$0xff]
  %v714 = vld [vmem:[%s6 + $0xc0] sm:$0xff]
  %v715 = vld [vmem:[%s6 + $0xc8] sm:$0xff]
  %v716 = vld [vmem:[%s6 + $0xd0] sm:$0xff]
  %v717 = vld [vmem:[%s6 + $0xd8] sm:$0xff]
  %v718 = vld [vmem:[%s6 + $0xe0] sm:$0xff]
  %v719 = vld [vmem:[%s6 + $0xe8] sm:$0xff]
  %v720 = vld [vmem:[%s6 + $0xf0] sm:$0xff]
  %v721 = vld [vmem:[%s6 + $0xf8] sm:$0xff]
  %v722 = vld [vmem:[%s6 + $0x100] sm:$0xff]
  %v723 = vld [vmem:[%s6 + $0x108] sm:$0xff]
  %v724 = vld [vmem:[%s6 + $0x110] sm:$0xff]
  %v725 = vld [vmem:[%s6 + $0x118] sm:$0xff]
  %v726 = vld [vmem:[%s6 + $0x120] sm:$0xff]
  %v727 = vld [vmem:[%s6 + $0x128] sm:$0xff]
  %v728 = vld [vmem:[%s6 + $0x130] sm:$0xff]
  %v729 = vld [vmem:[%s6 + $0x138] sm:$0xff]
  %v730 = vld [vmem:[%s6 + $0x140] sm:$0xff]
  %v731 = vld [vmem:[%s6 + $0x148] sm:$0xff]
  %v732 = vld [vmem:[%s6 + $0x150] sm:$0xff]
  %v733 = vld [vmem:[%s6 + $0x158] sm:$0xff]
  %v734 = vld [vmem:[%s6 + $0x160] sm:$0xff]
  %v735 = vld [vmem:[%s6 + $0x168] sm:$0xff]
  %v736 = vld [vmem:[%s6 + $0x170] sm:$0xff]
  %v737 = vld [vmem:[%s6 + $0x178] sm:$0xff]
  %738 = vmatprep.subr.mxu0 %v736
  %739 = vmatpush1.msra.mxu0 %v735
  %740 = vmatprep.subr.mxu0 %v733
  %741 = vmatpush1.msra.mxu0 %v732
  %742 = vmatprep.subr.mxu0 %v730
  %743 = vmatpush1.msra.mxu0 %v729
  %744 = vmatprep.subr.mxu0 %v727
  %745 = vmatpush1.msra.mxu0 %v726
  %746 = vmatprep.subr.mxu0 %v724
  %747 = vmatpush1.msra.mxu0 %v723
  %748 = vmatprep.subr.mxu0 %v721
  %749 = vmatpush1.msra.mxu0 %v720
  %750 = vmatprep.subr.mxu0 %v718
  %751 = vmatpush1.msra.mxu0 %v717
  %752 = vmatprep.subr.mxu0 %v715
  %753 = vmatpush1.msra.mxu0 %v714
  %754 = vmatprep.subr.mxu0 %v712
  %755 = vmatpush1.msra.mxu0 %v711
  %756 = vmatprep.subr.mxu0 %v709
  %757 = vmatpush1.msra.mxu0 %v708
  %758 = vmatprep.subr.mxu0 %v706
  %759 = vmatpush1.msra.mxu0 %v705
  %760 = vmatprep.subr.mxu0 %v703
  %761 = vmatpush1.msra.mxu0 %v702
  %762 = vmatprep.subr.mxu0 %v700
  %763 = vmatpush1.msra.mxu0 %v699
  %764 = vmatprep.subr.mxu0 %v697
  %765 = vmatpush1.msra.mxu0 %v696
  %766 = vmatprep.subr.mxu0 %v694
  %767 = vmatpush1.msra.mxu0 %v693
  %768 = vmatprep.subr.mxu0 %v691
  %769 = vmatpush1.msra.mxu0 %v690
  %770 = vmatprep.subr.mxu0 0.0
  %771 = vmatpush2.msra.mxu0 0.0
  %772 = vmatprep.subr.mxu0 0.0
  %773 = vmatpush2.msra.mxu0 0.0
  %774 = vmatprep.subr.mxu0 0.0
  %775 = vmatpush2.msra.mxu0 0.0
  %776 = vmatprep.subr.mxu0 0.0
  %777 = vmatpush2.msra.mxu0 0.0
  %778 = vmatprep.subr.mxu0 0.0
  %779 = vmatpush2.msra.mxu0 0.0
  %780 = vmatprep.subr.mxu0 0.0
  %781 = vmatpush2.msra.mxu0 0.0
  %782 = vmatprep.subr.mxu0 0.0
  %783 = vmatpush2.msra.mxu0 0.0
  %784 = vmatprep.subr.mxu0 0.0
  %785 = vmatpush2.msra.mxu0 0.0
  %786 = vmatprep.subr.mxu0 0.0
  %787 = vmatpush2.msra.mxu0 0.0
  %788 = vmatprep.subr.mxu0 0.0
  %789 = vmatpush2.msra.mxu0 0.0
  %790 = vmatprep.subr.mxu0 0.0
  %791 = vmatpush2.msra.mxu0 0.0
  %792 = vmatprep.subr.mxu0 0.0
  %793 = vmatpush2.msra.mxu0 0.0
  %794 = vmatprep.subr.mxu0 0.0
  %795 = vmatpush2.msra.mxu0 0.0
  %796 = vmatprep.subr.mxu0 0.0
  %797 = vmatpush2.msra.mxu0 0.0
  %798 = vmatprep.subr.mxu0 0.0
  %799 = vmatpush2.msra.mxu0 0.0
  %800 = vmatprep.subr.mxu0 0.0
  %801 = vmatpush2.msra.mxu0 0.0
  %802 = vmatprep.mubr.f32.mxu0 0.0
  %803 = vmatmul.mubr.f32.gmra.mxu0 %v689
  %v804 = vpop.f32.mrf.mxu0
  %v805 = vadd.f32 0.0, %v804
  %v806 = vpop.f32.mrf.mxu0
  %v807 = vadd.f32 0.0, %v806
  %808 = vdwg.mxu0
  %809 = vmatprep.subr.mxu0 0.0
  %810 = vmatpush1.msra.mxu0 %v737
  %811 = vmatprep.subr.mxu0 0.0
  %812 = vmatpush1.msra.mxu0 %v734
  %813 = vmatprep.subr.mxu0 0.0
  %814 = vmatpush1.msra.mxu0 %v731
  %815 = vmatprep.subr.mxu0 0.0
  %816 = vmatpush1.msra.mxu0 %v728
  %817 = vmatprep.subr.mxu0 0.0
  %818 = vmatpush1.msra.mxu0 %v725
  %819 = vmatprep.subr.mxu0 0.0
  %820 = vmatpush1.msra.mxu0 %v722
  %821 = vmatprep.subr.mxu0 0.0
  %822 = vmatpush1.msra.mxu0 %v719
  %823 = vmatprep.subr.mxu0 0.0
  %824 = vmatpush1.msra.mxu0 %v716
  %825 = vmatprep.subr.mxu0 0.0
  %826 = vmatpush1.msra.mxu0 %v713
  %827 = vmatprep.subr.mxu0 0.0
  %828 = vmatpush1.msra.mxu0 %v710
  %829 = vmatprep.subr.mxu0 0.0
  %830 = vmatpush1.msra.mxu0 %v707
  %831 = vmatprep.subr.mxu0 0.0
  %832 = vmatpush1.msra.mxu0 %v704
  %833 = vmatprep.subr.mxu0 0.0
  %834 = vmatpush1.msra.mxu0 %v701
  %835 = vmatprep.subr.mxu0 0.0
  %836 = vmatpush1.msra.mxu0 %v698
  %837 = vmatprep.subr.mxu0 0.0
  %838 = vmatpush1.msra.mxu0 %v695
  %839 = vmatprep.subr.mxu0 0.0
  %840 = vmatpush1.msra.mxu0 %v692
  %841 = vmatprep.subr.mxu0 0.0
  %842 = vmatpush2.msra.mxu0 0.0
  %843 = vmatprep.subr.mxu0 0.0
  %844 = vmatpush2.msra.mxu0 0.0
  %845 = vmatprep.subr.mxu0 0.0
  %846 = vmatpush2.msra.mxu0 0.0
  %847 = vmatprep.subr.mxu0 0.0
  %848 = vmatpush2.msra.mxu0 0.0
  %849 = vmatprep.subr.mxu0 0.0
  %850 = vmatpush2.msra.mxu0 0.0
  %851 = vmatprep.subr.mxu0 0.0
  %852 = vmatpush2.msra.mxu0 0.0
  %853 = vmatprep.subr.mxu0 0.0
  %854 = vmatpush2.msra.mxu0 0.0
  %855 = vmatprep.subr.mxu0 0.0
  %856 = vmatpush2.msra.mxu0 0.0
  %857 = vmatprep.subr.mxu0 0.0
  %858 = vmatpush2.msra.mxu0 0.0
  %859 = vmatprep.subr.mxu0 0.0
  %860 = vmatpush2.msra.mxu0 0.0
  %861 = vmatprep.subr.mxu0 0.0
  %862 = vmatpush2.msra.mxu0 0.0
  %863 = vmatprep.subr.mxu0 0.0
  %864 = vmatpush2.msra.mxu0 0.0
  %865 = vmatprep.subr.mxu0 0.0
  %866 = vmatpush2.msra.mxu0 0.0
  %867 = vmatprep.subr.mxu0 0.0
  %868 = vmatpush2.msra.mxu0 0.0
  %869 = vmatprep.subr.mxu0 0.0
  %870 = vmatpush2.msra.mxu0 0.0
  %871 = vmatprep.subr.mxu0 0.0
  %872 = vmatpush2.msra.mxu0 0.0
  %873 = vmatprep.mubr.f32.mxu0 0.0
  %874 = vmatmul.mubr.f32.gmra.mxu0 %v689
  %v875 = vpop.f32.mrf.mxu0
  %v876 = vadd.f32 0.0, %v875
  %v877 = vpop.f32.mrf.mxu0
  %878 = vdwg.mxu0
  %v880 = vrot.slane %v805, 7
  %v882 = vsel %vm306, 0.0, %v880
  %v884 = vrot.slane %v876, 1
  %v886 = vsel %vm311, %v884, 0.0
  %v887 = vadd.f32 %v882, %v807
  %v888 = vadd.f32 %v887, %v886
  %v889 = vadd.f32 %v888, %v26
  %890 = vst [vmem:[%s7] sm:$0xff] %v889
  // Predicated region
  $region30: #{resblock3_pallas.1} parent=0 // pred_check
    _
  $region31: #{resblock3_pallas.1} parent=0 // pred_check_branch
    %892 = sbr.rel (0) target = $region33
  $region32: #{resblock3_pallas.1} parent=0 // pred_region
    _
  $region33: #{resblock3_pallas.1} parent=0 // pred_fallthru
    _
  // Predicated region
  $region34: #{resblock3_pallas.1} parent=0 // pred_check
    _
  $region35: #{resblock3_pallas.1} parent=0 // pred_check_branch
    %894 = sbr.rel (0) target = $region37
  $region36: #{resblock3_pallas.1} parent=0 // pred_region
    _
  $region37: #{resblock3_pallas.1} parent=0 // pred_fallthru
    _

</llo_original>
